<compile_context>
chip_gen: v5e
topology: v5e:2x2
jax: 0.10.0
libtpu: 0.0.40
codegen_flags: <defaults>
</compile_context>

<pallas_src>
import functools
import numpy as np
import jax
import jax.numpy as jnp
from jax.experimental import pallas as pl
from jax.experimental.pallas import tpu as pltpu

BN_EPS = 1e-5
BN_SCALE = float(1.0 / np.sqrt(1.0 + BN_EPS))   # eval-mode BN with fresh stats
NEG_INF = -1e9


# ----------------------------------------------------------------------------
# Pallas kernels
# ----------------------------------------------------------------------------
def _matmul_kernel(x_ref, w_ref, b_ref, o_ref, *, act):
    x = x_ref[...].astype(jnp.bfloat16)
    acc = jnp.dot(x, w_ref[...], preferred_element_type=jnp.float32) + b_ref[...]
    if act == "relu6":
        acc = jnp.clip(acc, 0.0, 6.0)
    o_ref[...] = acc.astype(o_ref.dtype)


def _double_matmul_kernel(x_ref, w1_ref, b1_ref, w2_ref, b2_ref, o_ref):
    """out = relu6(x @ w1 + b1) @ w2 + b2  (stem conv2(+BN+ReLU6) + conv3 fused)."""
    x = x_ref[...].astype(jnp.bfloat16)
    h = jnp.dot(x, w1_ref[...], preferred_element_type=jnp.float32) + b1_ref[...]
    h = jnp.clip(h, 0.0, 6.0)
    y = jnp.dot(h.astype(jnp.bfloat16), w2_ref[...],
                preferred_element_type=jnp.float32) + b2_ref[...]
    o_ref[...] = y.astype(o_ref.dtype)


def _block_kernel(x_ref, wqkv_ref, bias_ref, wproj_ref, bproj_ref,
                  sh_ref, sv_ref, dww_ref, w1_ref, b1_ref, w2_ref, b2_ref,
                  o_ref, *, nh, hd, ws, scale):
    """One full ShuffleTransformer Block on a VMEM-resident token matrix.

        x1 = x  + proj(window_attn(to_qkv(norm1 x)))
        x2 = x1 + dwconv_ws(norm2 x1)
        o  = x2 + fc2(relu6(fc1(norm3 x2)))

    norm1/norm2/norm3 (eval BN, fresh stats) are pre-folded into wqkv / the
    depthwise weights / fc1.  The window partition (regular or shuffled) is
    realized purely by the additive attention bias: same-window token pairs
    carry the relative-position bias, cross-window pairs carry -1e9.
    """
    T = x_ref.shape[1]
    C = x_ref.shape[2]
    pad = ws // 2

    x = x_ref[0].astype(jnp.float32)                                   # [T, C]

    # ---- attention branch ---------------------------------------------------
    qkv = jnp.dot(x.astype(jnp.bfloat16), wqkv_ref[...],
                  preferred_element_type=jnp.float32)                  # [T, 3C]
    proj = jnp.zeros((T, C), jnp.float32)
    for h in range(nh):                          # nh is 1..2 here: static unroll
        q = qkv[:, h * hd:(h + 1) * hd].astype(jnp.bfloat16)
        k = qkv[:, C + h * hd:C + (h + 1) * hd].astype(jnp.bfloat16)
        v = qkv[:, 2 * C + h * hd:2 * C + (h + 1) * hd].astype(jnp.bfloat16)
        dots = jnp.einsum("sd,td->st", q, k,
                          preferred_element_type=jnp.float32) * scale
        dots = dots + bias_ref[h]                                      # [T, T]
        m = jnp.max(dots, axis=-1, keepdims=True)
        e = jnp.exp(dots - m)
        inv = pl.reciprocal(jnp.sum(e, axis=-1, keepdims=True), approx=True)
        attn = (e * inv).astype(jnp.bfloat16)
        out_h = jnp.dot(attn, v, preferred_element_type=jnp.float32)   # [T, hd]
        # project each head with its row-slice of Wproj (no lane-dim concat)
        proj = proj + jnp.dot(out_h.astype(jnp.bfloat16),
                              wproj_ref[h * hd:(h + 1) * hd, :],
                              preferred_element_type=jnp.float32)
    x1 = x + proj + bproj_ref[...]

    # ---- local depthwise ws x ws conv branch --------------------------------
    # separable shift decomposition: horizontal taps via 0/1 shift matmuls,
    # per-tap channel scale on the VPU, vertical taps via shift matmuls.
    x1b = x1.astype(jnp.bfloat16)
    dww = dww_ref[...]                                                 # [ws*ws, C]
    hx = []
    for dx in range(ws):
        if dx == pad:
            hx.append(x1)
        else:
            j = dx if dx < pad else dx - 1
            hx.append(jnp.dot(sh_ref[j], x1b, preferred_element_type=jnp.float32))
    local = jnp.zeros((T, C), jnp.float32)
    for dy in range(ws):
        z = jnp.zeros((T, C), jnp.float32)
        for dx in range(ws):
            tap = dy * ws + dx
            z = z + hx[dx] * dww[tap:tap + 1, :]
        if dy == pad:
            local = local + z
        else:
            j = dy if dy < pad else dy - 1
            local = local + jnp.dot(sv_ref[j], z.astype(jnp.bfloat16),
                                    preferred_element_type=jnp.float32)
    x2 = x1 + local

    # ---- MLP branch ----------------------------------------------------------
    hmid = jnp.dot(x2.astype(jnp.bfloat16), w1_ref[...],
                   preferred_element_type=jnp.float32) + b1_ref[...]
    hmid = jnp.clip(hmid, 0.0, 6.0)
    y = jnp.dot(hmid.astype(jnp.bfloat16), w2_ref[...],
                preferred_element_type=jnp.float32) + b2_ref[...]
    o_ref[0] = (x2 + y).astype(o_ref.dtype)


# ----------------------------------------------------------------------------
# Kernel wrappers
# ----------------------------------------------------------------------------
def _const_spec(shape):
    rank = len(shape)
    return pl.BlockSpec(shape, lambda n: (0,) * rank)


def _row_split(M):
    """Two parallel row blocks when comfortably divisible (feeds v7x's 2nd TC)."""
    if M >= 256 and M % 16 == 0:
        return M // 2
    return M


def matmul(x, w, b=None, act=None, out_dtype=jnp.bfloat16):
    """x:[M,K] @ w:[K,N] (+b, optional ReLU6).  All call sites here have M<=1152
    so a resident block (or two parallel row blocks) always fits VMEM."""
    M, K = x.shape
    N = w.shape[1]
    if b is None:
        b = jnp.zeros((1, N), jnp.float32)
    tm = _row_split(M)
    return pl.pallas_call(
        functools.partial(_matmul_kernel, act=act),
        out_shape=jax.ShapeDtypeStruct((M, N), out_dtype),
        grid=(M // tm,),
        in_specs=[pl.BlockSpec((tm, K), lambda i: (i, 0)),
                  pl.BlockSpec((K, N), lambda i: (0, 0)),
                  pl.BlockSpec((1, N), lambda i: (0, 0))],
        out_specs=pl.BlockSpec((tm, N), lambda i: (i, 0)),
        compiler_params=pltpu.CompilerParams(dimension_semantics=("parallel",)),
    )(x, w, b)


def double_matmul(x, w1, b1, w2, b2, out_dtype=jnp.bfloat16):
    M, K = x.shape
    Hd = w1.shape[1]
    N = w2.shape[1]
    tm = _row_split(M)
    return pl.pallas_call(
        _double_matmul_kernel,
        out_shape=jax.ShapeDtypeStruct((M, N), out_dtype),
        grid=(M // tm,),
        in_specs=[pl.BlockSpec((tm, K), lambda i: (i, 0)),
                  pl.BlockSpec((K, Hd), lambda i: (0, 0)),
                  pl.BlockSpec((1, Hd), lambda i: (0, 0)),
                  pl.BlockSpec((Hd, N), lambda i: (0, 0)),
                  pl.BlockSpec((1, N), lambda i: (0, 0))],
        out_specs=pl.BlockSpec((tm, N), lambda i: (i, 0)),
        compiler_params=pltpu.CompilerParams(dimension_semantics=("parallel",)),
    )(x, w1, b1, w2, b2)


def block_fwd(x_tok, p, geom, nh, ws):
    """x_tok: [N, T, C] bf16 -> [N, T, C] bf16.  One fused pallas_call per Block."""
    N, T, C = x_tok.shape
    hd = C // nh
    scale = float(hd) ** -0.5
    hidden = p["fc1_w"].shape[1]
    nshift = geom["SH"].shape[0]
    kernel = functools.partial(_block_kernel, nh=nh, hd=hd, ws=ws, scale=scale)
    return pl.pallas_call(
        kernel,
        out_shape=jax.ShapeDtypeStruct((N, T, C), jnp.bfloat16),
        grid=(N,),
        in_specs=[
            pl.BlockSpec((1, T, C), lambda n: (n, 0, 0)),
            _const_spec((C, 3 * C)),           # wqkv (norm1 folded)
            _const_spec((nh, T, T)),           # token-pair attention bias / mask
            _const_spec((C, C)),               # wproj
            _const_spec((1, C)),               # bproj
            _const_spec((nshift, T, T)),       # horizontal shift matrices
            _const_spec((nshift, T, T)),       # vertical shift matrices
            _const_spec((ws * ws, C)),         # depthwise weights (norm2 folded)
            _const_spec((C, hidden)),          # fc1 (norm3 folded)
            _const_spec((1, hidden)),
            _const_spec((hidden, C)),          # fc2
            _const_spec((1, C)),
        ],
        out_specs=pl.BlockSpec((1, T, C), lambda n: (n, 0, 0)),
        compiler_params=pltpu.CompilerParams(dimension_semantics=("parallel",)),
    )(x_tok, p["wqkv"], p["attn_bias"], p["wproj"], p["bproj"],
      geom["SH"], geom["SV"], p["dw_w"],
      p["fc1_w"], p["fc1_b"], p["fc2_w"], p["fc2_b"])


# ----------------------------------------------------------------------------
# Model forward (only tiny, run-once layout work stays in XLA)
# ----------------------------------------------------------------------------
def _im2col_3x3_s2(x):
    # TODO(synk): the stem im2col stays in XLA — a halo-DMA conv kernel is not
    # worth it for two tiny stride-2 convolutions that run once per forward.
    N, H, W, C = x.shape
    Ho, Wo = H // 2, W // 2
    xp = jnp.pad(x, ((0, 0), (1, 1), (1, 1), (0, 0)))
    cols = [xp[:, dy:dy + 2 * Ho:2, dx:dx + 2 * Wo:2, :]
            for dy in range(3) for dx in range(3)]
    return jnp.concatenate(cols, axis=-1).reshape(N * Ho * Wo, 9 * C), Ho, Wo


def patch_embed_fwd(x, p):
    N = x.shape[0]
    patches, Ho, Wo = _im2col_3x3_s2(x)
    x = matmul(patches, p["w1"], p["b1"], act="relu6").reshape(N, Ho, Wo, -1)
    patches, Ho, Wo = _im2col_3x3_s2(x)
    y = double_matmul(patches, p["w2"], p["b2"], p["w3"], p["b3"])
    return y.reshape(N, Ho, Wo, -1)


def patch_merge_fwd(x_tok, p, H, W):
    # TODO(synk): the 2x2 pixel-unshuffle is pure layout and runs once per stage;
    # it stays in XLA feeding the Pallas reduction matmul.
    N, T, C = x_tok.shape
    y = x_tok.reshape(N, H // 2, 2, W // 2, 2, C).transpose(0, 1, 3, 2, 4, 5)
    y = y.reshape(N * (H // 2) * (W // 2), 4 * C)
    y = matmul(y, p["red_w"])                      # pre-norm folded into red_w
    return y.reshape(N, (H // 2) * (W // 2), -1)


def shuffle_transformer_forward(params, x_nchw, cfg):
    x = jnp.transpose(x_nchw, (0, 2, 3, 1)).astype(jnp.bfloat16)   # NCHW -> NHWC
    x = patch_embed_fwd(x, params["embed"])                        # [N, H, W, C]
    N, H, W, C = x.shape
    x = x.reshape(N, H * W, C)                                     # token matrix
    ws = cfg["window_size"]
    for si, st in enumerate(params["stages"]):
        nh = cfg["num_heads"][si]
        if st["merge"] is not None:
            x = patch_merge_fwd(x, st["merge"], H, W)
            H, W = H // 2, W // 2
        geom = st["geom"]
        for p_reg, p_shift in st["blocks"]:
            x = block_fwd(x, p_reg, geom, nh, ws)
            x = block_fwd(x, p_shift, geom, nh, ws)
    x = x.reshape(N, H, W, -1).astype(jnp.float32)
    return jnp.transpose(x, (0, 3, 1, 2))                          # back to NCHW


# ----------------------------------------------------------------------------
# Deterministic parameter construction (BN folded, weights bf16)
# ----------------------------------------------------------------------------
class KeyGen:
    def __init__(self, key):
        self.key = key

    def __call__(self):
        self.key, sub = jax.random.split(self.key)
        return sub


def trunc_normal(key, shape, std=0.02):
    return (jax.random.truncated_normal(key, -2.0, 2.0, shape) * std).astype(jnp.float32)


def relative_position_index(ws):
    coords = np.stack(np.meshgrid(np.arange(ws), np.arange(ws), indexing="ij"))
    flat = coords.reshape(2, -1)
    rel = flat[:, :, None] - flat[:, None, :]
    rel = rel.transpose(1, 2, 0).astype(np.int64)
    rel[:, :, 0] += ws - 1
    rel[:, :, 1] += ws - 1
    rel[:, :, 0] *= 2 * ws - 1
    return rel.sum(-1)


def build_token_attn_bias(H, W, ws, shuffle, rel_bias, neg=NEG_INF):
    """[nh, T, T] additive bias realizing (regular / shuffled) window attention."""
    nh = rel_bias.shape[0]
    T = H * W
    hh, ww = H // ws, W // ws
    win = np.zeros((H, W), np.int64)
    seq = np.zeros((H, W), np.int64)
    for h in range(H):
        for w in range(W):
            if shuffle:        # H index = ws1*hh + hi ; W index = ws2*ww + wi
                ws1, hi = h // hh, h % hh
                ws2, wi = w // ww, w % ww
            else:              # H index = hi*ws + ws1 ; W index = wi*ws + ws2
                hi, ws1 = h // ws, h % ws
                wi, ws2 = w // ws, w % ws
            win[h, w] = hi * ww + wi
            seq[h, w] = ws1 * ws + ws2
    win = win.reshape(T)
    seq = seq.reshape(T)
    same = win[:, None] == win[None, :]
    sidx, tidx = seq[:, None], seq[None, :]
    bias = np.empty((nh, T, T), np.float32)
    for h in range(nh):
        bias[h] = np.where(same, rel_bias[h][sidx, tidx], neg)
    return bias


def build_shift_mats(H, W, ws):
    """0/1 shift matrices for the separable depthwise conv (center tap excluded)."""
    T = H * W
    pad = ws // 2
    n = max(ws - 1, 1)
    SH = np.zeros((n, T, T), np.float32)
    SV = np.zeros((n, T, T), np.float32)
    for d in range(ws):
        if d == pad:
            continue
        j = d if d < pad else d - 1
        off = d - pad
        for h in range(H):
            for w in range(W):
                t = h * W + w
                w2 = w + off
                if 0 <= w2 < W:
                    SH[j, t, h * W + w2] = 1.0
                h2 = h + off
                if 0 <= h2 < H:
                    SV[j, t, h2 * W + w] = 1.0
    return SH, SV


def init_block_params(kg, dim, nh, ws, mlp_ratio, H, W, shuffle):
    hidden = int(dim * mlp_ratio)
    S = ws * ws
    p = {}
    # to_qkv (1x1, no bias); norm1 (scale BN_SCALE, shift 0) folded into rows.
    p["wqkv"] = (trunc_normal(kg(), (dim, 3 * dim)) * BN_SCALE).astype(jnp.bfloat16)
    p["wproj"] = trunc_normal(kg(), (dim, dim)).astype(jnp.bfloat16)
    p["bproj"] = jnp.zeros((1, dim), jnp.float32)
    # relative position bias -> token-pair bias with the window structure baked in
    table = trunc_normal(kg(), ((2 * ws - 1) ** 2, nh))
    idx = relative_position_index(ws).reshape(-1)
    rel = np.asarray(jnp.transpose(table[idx].reshape(S, S, nh), (2, 0, 1)),
                     dtype=np.float32)                               # [nh, S, S]
    p["attn_bias"] = jnp.asarray(build_token_attn_bias(H, W, ws, shuffle, rel),
                                 jnp.float32)                        # [nh, T, T]
    # depthwise ws x ws conv (no bias); norm2 scale folded in.
    p["dw_w"] = (trunc_normal(kg(), (ws * ws, dim)) * BN_SCALE).astype(jnp.float32)
    # MLP; norm3 scale folded into fc1 rows; biases zero.
    p["fc1_w"] = (trunc_normal(kg(), (dim, hidden)) * BN_SCALE).astype(jnp.bfloat16)
    p["fc1_b"] = jnp.zeros((1, hidden), jnp.float32)
    p["fc2_w"] = trunc_normal(kg(), (hidden, dim)).astype(jnp.bfloat16)
    p["fc2_b"] = jnp.zeros((1, dim), jnp.float32)
    return p


def init_params(key, cfg):
    kg = KeyGen(key)
    inc, td, ed = cfg["in_chans"], cfg["token_dim"], cfg["embed_dim"]
    ws = cfg["window_size"]
    embed = {
        "w1": (trunc_normal(kg(), (3, 3, inc, td)).reshape(9 * inc, td) * BN_SCALE).astype(jnp.bfloat16),
        "b1": jnp.zeros((1, td), jnp.float32),
        "w2": (trunc_normal(kg(), (3, 3, td, ed)).reshape(9 * td, ed) * BN_SCALE).astype(jnp.bfloat16),
        "b2": jnp.zeros((1, ed), jnp.float32),
        "w3": trunc_normal(kg(), (ed, ed)).astype(jnp.bfloat16),
        "b3": jnp.zeros((1, ed), jnp.float32),
    }
    dims = [h * 32 for h in cfg["num_heads"]]
    in_dims = [ed, dims[0], dims[1], dims[2]]
    Hc = cfg["img_size"] // 4
    stages = []
    for si in range(4):
        dim, out_dim = in_dims[si], dims[si]
        nh = cfg["num_heads"][si]
        st = {}
        if dim != out_dim:
            # PatchMerging: pre-norm scale folded into the bias-free reduction.
            st["merge"] = {"red_w": (trunc_normal(kg(), (4 * dim, out_dim))
                                     * BN_SCALE).astype(jnp.bfloat16)}
            Hc //= 2
        else:
            st["merge"] = None
        SH, SV = build_shift_mats(Hc, Hc, ws)
        st["geom"] = {"SH": jnp.asarray(SH, jnp.bfloat16),
                      "SV": jnp.asarray(SV, jnp.bfloat16)}
        blocks = []
        for _ in range(cfg["layers"][si] // 2):
            blocks.append((
                init_block_params(kg, out_dim, nh, ws, cfg["mlp_ratio"], Hc, Hc,
                                  shuffle=False),
                init_block_params(kg, out_dim, nh, ws, cfg["mlp_ratio"], Hc, Hc,
                                  shuffle=cfg["shuffle"]),
            ))
        st["blocks"] = blocks
        stages.append(st)
    return {"embed": embed, "stages": stages}


# ----------------------------------------------------------------------------
if __name__ == "__main__":
    # Small, window-size-compatible ShuffleTransformer configuration.
    cfg = dict(
        img_size=48, in_chans=3, token_dim=3, embed_dim=32,
        layers=[2, 2, 2, 2], num_heads=[1, 1, 2, 2],   # dims = [32, 32, 64, 64]
        window_size=3, mlp_ratio=2.0, shuffle=True,
    )
    params = init_params(jax.random.PRNGKey(1), cfg)
    x = jax.random.normal(jax.random.PRNGKey(0),
                          (2, cfg["in_chans"], cfg["img_size"], cfg["img_size"]),
                          jnp.float32)

    fwd = jax.jit(lambda p, xx: shuffle_transformer_forward(p, xx, cfg))
    out = jax.block_until_ready(fwd(params, x))

    expected = (2, cfg["num_heads"][-1] * 32, 6, 6)   # [B, dims[3], H/8, W/8]
    assert out.shape == expected, (out.shape, expected)
    assert bool(jnp.all(jnp.isfinite(out)))
    print("KERNEL_OK")
</pallas_src>

<mosaic_0001>
module attributes {stable_mosaic.version = 11 : i64} {
  func.func @_matmul_kernel(%arg0: i32, %arg1: memref<576x27xbf16, #tpu.memory_space<vmem>>, %arg2: memref<27x3xbf16, #tpu.memory_space<vmem>>, %arg3: memref<1x3xf32, #tpu.memory_space<vmem>>, %arg4: memref<576x3xbf16, #tpu.memory_space<vmem>>) attributes {dimension_semantics = [#tpu.dimension_semantics<parallel>], iteration_bounds = array<i64: 2>, scalar_prefetch = 0 : i64, scratch_operands = 0 : i64, tpu.core_type = #tpu.core_type<tc>, window_params = [{transform_indices = @transform_0, window_bounds = array<i64: 576, 27>}, {pipeline_mode = #tpu.pipeline_mode<synchronous>, transform_indices = @transform_1, window_bounds = array<i64: 27, 3>}, {pipeline_mode = #tpu.pipeline_mode<synchronous>, transform_indices = @transform_2, window_bounds = array<i64: 1, 3>}, {transform_indices = @transform_3, window_bounds = array<i64: 576, 3>}]} {
    %c0 = arith.constant 0 : index
    %c0_0 = arith.constant 0 : index
    %0 = vector.load %arg1[%c0, %c0_0] : memref<576x27xbf16, #tpu.memory_space<vmem>>, vector<576x27xbf16>
    %c0_1 = arith.constant 0 : index
    %c0_2 = arith.constant 0 : index
    %1 = vector.load %arg2[%c0_1, %c0_2] : memref<27x3xbf16, #tpu.memory_space<vmem>>, vector<27x3xbf16>
    %cst = arith.constant dense<0.000000e+00> : vector<576x3xf32>
    %2 = tpu.matmul %0, %1, %cst {dimension_numbers = #tpu.dot_dimension_numbers<[1], [0], [0], [1], [0, 0, 1, 1], [], []>} : vector<576x27xbf16>, vector<27x3xbf16>, vector<576x3xf32> -> vector<576x3xf32>
    %c0_3 = arith.constant 0 : index
    %c0_4 = arith.constant 0 : index
    %3 = vector.load %arg3[%c0_3, %c0_4] : memref<1x3xf32, #tpu.memory_space<vmem>>, vector<1x3xf32>
    %4 = vector.broadcast %3 : vector<1x3xf32> to vector<576x3xf32>
    %5 = arith.addf %2, %4 : vector<576x3xf32>
    %cst_5 = arith.constant 0.000000e+00 : f32
    %cst_6 = arith.constant 6.000000e+00 : f32
    %6 = vector.broadcast %cst_5 : f32 to vector<576x3xf32>
    %7 = arith.maximumf %6, %5 : vector<576x3xf32>
    %8 = vector.broadcast %cst_6 : f32 to vector<576x3xf32>
    %9 = arith.minimumf %8, %7 : vector<576x3xf32>
    %10 = arith.truncf %9 : vector<576x3xf32> to vector<576x3xbf16>
    %c0_7 = arith.constant 0 : index
    %c0_8 = arith.constant 0 : index
    %11 = vector.load %arg4[%c0_7, %c0_8] : memref<576x3xbf16, #tpu.memory_space<vmem>>, vector<576x3xbf16>
    tpu.vector_store %arg4[%c0_7, %c0_8], %10 {strides = array<i32>} : memref<576x3xbf16, #tpu.memory_space<vmem>>, vector<576x3xbf16>,
    return
  }
  func.func @transform_0(%arg0: i32) -> (i32, i32) {
    %c0_i32 = arith.constant 0 : i32
    %c0_i32_0 = arith.constant 0 : i32
    return %arg0, %c0_i32 : i32, i32
  }
  func.func @transform_1(%arg0: i32) -> (i32, i32) {
    %c0_i32 = arith.constant 0 : i32
    %c0_i32_0 = arith.constant 0 : i32
    %c0_i32_1 = arith.constant 0 : i32
    return %c0_i32, %c0_i32_0 : i32, i32
  }
  func.func @transform_2(%arg0: i32) -> (i32, i32) {
    %c0_i32 = arith.constant 0 : i32
    %c0_i32_0 = arith.constant 0 : i32
    %c0_i32_1 = arith.constant 0 : i32
    return %c0_i32, %c0_i32_0 : i32, i32
  }
  func.func @transform_3(%arg0: i32) -> (i32, i32) {
    %c0_i32 = arith.constant 0 : i32
    %c0_i32_0 = arith.constant 0 : i32
    return %arg0, %c0_i32 : i32, i32
  }
}

module attributes {stable_mosaic.version = 11 : i64} {
  func.func @_double_matmul_kernel(%arg0: i32, %arg1: memref<144x27xbf16, #tpu.memory_space<vmem>>, %arg2: memref<27x32xbf16, #tpu.memory_space<vmem>>, %arg3: memref<1x32xf32, #tpu.memory_space<vmem>>, %arg4: memref<32x32xbf16, #tpu.memory_space<vmem>>, %arg5: memref<1x32xf32, #tpu.memory_space<vmem>>, %arg6: memref<144x32xbf16, #tpu.memory_space<vmem>>) attributes {dimension_semantics = [#tpu.dimension_semantics<parallel>], iteration_bounds = array<i64: 2>, scalar_prefetch = 0 : i64, scratch_operands = 0 : i64, tpu.core_type = #tpu.core_type<tc>, window_params = [{transform_indices = @transform_0, window_bounds = array<i64: 144, 27>}, {pipeline_mode = #tpu.pipeline_mode<synchronous>, transform_indices = @transform_1, window_bounds = array<i64: 27, 32>}, {pipeline_mode = #tpu.pipeline_mode<synchronous>, transform_indices = @transform_2, window_bounds = array<i64: 1, 32>}, {pipeline_mode = #tpu.pipeline_mode<synchronous>, transform_indices = @transform_3, window_bounds = array<i64: 32, 32>}, {pipeline_mode = #tpu.pipeline_mode<synchronous>, transform_indices = @transform_4, window_bounds = array<i64: 1, 32>}, {transform_indices = @transform_5, window_bounds = array<i64: 144, 32>}]} {
    %c0 = arith.constant 0 : index
    %c0_0 = arith.constant 0 : index
    %0 = vector.load %arg1[%c0, %c0_0] : memref<144x27xbf16, #tpu.memory_space<vmem>>, vector<144x27xbf16>
    %c0_1 = arith.constant 0 : index
    %c0_2 = arith.constant 0 : index
    %1 = vector.load %arg2[%c0_1, %c0_2] : memref<27x32xbf16, #tpu.memory_space<vmem>>, vector<27x32xbf16>
    %cst = arith.constant dense<0.000000e+00> : vector<144x32xf32>
    %2 = tpu.matmul %0, %1, %cst {dimension_numbers = #tpu.dot_dimension_numbers<[1], [0], [0], [1], [0, 0, 1, 1], [], []>} : vector<144x27xbf16>, vector<27x32xbf16>, vector<144x32xf32> -> vector<144x32xf32>
    %c0_3 = arith.constant 0 : index
    %c0_4 = arith.constant 0 : index
    %3 = vector.load %arg3[%c0_3, %c0_4] : memref<1x32xf32, #tpu.memory_space<vmem>>, vector<1x32xf32>
    %4 = vector.broadcast %3 : vector<1x32xf32> to vector<144x32xf32>
    %5 = arith.addf %2, %4 : vector<144x32xf32>
    %cst_5 = arith.constant 0.000000e+00 : f32
    %cst_6 = arith.constant 6.000000e+00 : f32
    %6 = vector.broadcast %cst_5 : f32 to vector<144x32xf32>
    %7 = arith.maximumf %6, %5 : vector<144x32xf32>
    %8 = vector.broadcast %cst_6 : f32 to vector<144x32xf32>
    %9 = arith.minimumf %8, %7 : vector<144x32xf32>
    %10 = arith.truncf %9 : vector<144x32xf32> to vector<144x32xbf16>
    %c0_7 = arith.constant 0 : index
    %c0_8 = arith.constant 0 : index
    %11 = vector.load %arg4[%c0_7, %c0_8] : memref<32x32xbf16, #tpu.memory_space<vmem>>, vector<32x32xbf16>
    %cst_9 = arith.constant dense<0.000000e+00> : vector<144x32xf32>
    %12 = tpu.matmul %10, %11, %cst_9 {dimension_numbers = #tpu.dot_dimension_numbers<[1], [0], [0], [1], [0, 0, 1, 1], [], []>} : vector<144x32xbf16>, vector<32x32xbf16>, vector<144x32xf32> -> vector<144x32xf32>
    %c0_10 = arith.constant 0 : index
    %c0_11 = arith.constant 0 : index
    %13 = vector.load %arg5[%c0_10, %c0_11] : memref<1x32xf32, #tpu.memory_space<vmem>>, vector<1x32xf32>
    %14 = vector.broadcast %13 : vector<1x32xf32> to vector<144x32xf32>
    %15 = arith.addf %12, %14 : vector<144x32xf32>
    %16 = arith.truncf %15 : vector<144x32xf32> to vector<144x32xbf16>
    %c0_12 = arith.constant 0 : index
    %c0_13 = arith.constant 0 : index
    %17 = vector.load %arg6[%c0_12, %c0_13] : memref<144x32xbf16, #tpu.memory_space<vmem>>, vector<144x32xbf16>
    tpu.vector_store %arg6[%c0_12, %c0_13], %16 {strides = array<i32>} : memref<144x32xbf16, #tpu.memory_space<vmem>>, vector<144x32xbf16>,
    return
  }
  func.func @transform_0(%arg0: i32) -> (i32, i32) {
    %c0_i32 = arith.constant 0 : i32
    %c0_i32_0 = arith.constant 0 : i32
    return %arg0, %c0_i32 : i32, i32
  }
  func.func @transform_1(%arg0: i32) -> (i32, i32) {
    %c0_i32 = arith.constant 0 : i32
    %c0_i32_0 = arith.constant 0 : i32
    %c0_i32_1 = arith.constant 0 : i32
    return %c0_i32, %c0_i32_0 : i32, i32
  }
  func.func @transform_2(%arg0: i32) -> (i32, i32) {
    %c0_i32 = arith.constant 0 : i32
    %c0_i32_0 = arith.constant 0 : i32
    %c0_i32_1 = arith.constant 0 : i32
    return %c0_i32, %c0_i32_0 : i32, i32
  }
  func.func @transform_3(%arg0: i32) -> (i32, i32) {
    %c0_i32 = arith.constant 0 : i32
    %c0_i32_0 = arith.constant 0 : i32
    %c0_i32_1 = arith.constant 0 : i32
    return %c0_i32, %c0_i32_0 : i32, i32
  }
  func.func @transform_4(%arg0: i32) -> (i32, i32) {
    %c0_i32 = arith.constant 0 : i32
    %c0_i32_0 = arith.constant 0 : i32
    %c0_i32_1 = arith.constant 0 : i32
    return %c0_i32, %c0_i32_0 : i32, i32
  }
  func.func @transform_5(%arg0: i32) -> (i32, i32) {
    %c0_i32 = arith.constant 0 : i32
    %c0_i32_0 = arith.constant 0 : i32
    return %arg0, %c0_i32 : i32, i32
  }
}

module attributes {stable_mosaic.version = 11 : i64} {
  func.func @_block_kernel(%arg0: i32, %arg1: memref<1x144x32xbf16, #tpu.memory_space<vmem>>, %arg2: memref<32x96xbf16, #tpu.memory_space<vmem>>, %arg3: memref<1x144x144xf32, #tpu.memory_space<vmem>>, %arg4: memref<32x32xbf16, #tpu.memory_space<vmem>>, %arg5: memref<1x32xf32, #tpu.memory_space<vmem>>, %arg6: memref<2x144x144xbf16, #tpu.memory_space<vmem>>, %arg7: memref<2x144x144xbf16, #tpu.memory_space<vmem>>, %arg8: memref<9x32xf32, #tpu.memory_space<vmem>>, %arg9: memref<32x64xbf16, #tpu.memory_space<vmem>>, %arg10: memref<1x64xf32, #tpu.memory_space<vmem>>, %arg11: memref<64x32xbf16, #tpu.memory_space<vmem>>, %arg12: memref<1x32xf32, #tpu.memory_space<vmem>>, %arg13: memref<1x144x32xbf16, #tpu.memory_space<vmem>>) attributes {dimension_semantics = [#tpu.dimension_semantics<parallel>], iteration_bounds = array<i64: 2>, scalar_prefetch = 0 : i64, scratch_operands = 0 : i64, tpu.core_type = #tpu.core_type<tc>, window_params = [{transform_indices = @transform_0, window_bounds = array<i64: 1, 144, 32>}, {pipeline_mode = #tpu.pipeline_mode<synchronous>, transform_indices = @transform_1, window_bounds = array<i64: 32, 96>}, {pipeline_mode = #tpu.pipeline_mode<synchronous>, transform_indices = @transform_2, window_bounds = array<i64: 1, 144, 144>}, {pipeline_mode = #tpu.pipeline_mode<synchronous>, transform_indices = @transform_3, window_bounds = array<i64: 32, 32>}, {pipeline_mode = #tpu.pipeline_mode<synchronous>, transform_indices = @transform_4, window_bounds = array<i64: 1, 32>}, {pipeline_mode = #tpu.pipeline_mode<synchronous>, transform_indices = @transform_5, window_bounds = array<i64: 2, 144, 144>}, {pipeline_mode = #tpu.pipeline_mode<synchronous>, transform_indices = @transform_6, window_bounds = array<i64: 2, 144, 144>}, {pipeline_mode = #tpu.pipeline_mode<synchronous>, transform_indices = @transform_7, window_bounds = array<i64: 9, 32>}, {pipeline_mode = #tpu.pipeline_mode<synchronous>, transform_indices = @transform_8, window_bounds = array<i64: 32, 64>}, {pipeline_mode = #tpu.pipeline_mode<synchronous>, transform_indices = @transform_9, window_bounds = array<i64: 1, 64>}, {pipeline_mode = #tpu.pipeline_mode<synchronous>, transform_indices = @transform_10, window_bounds = array<i64: 64, 32>}, {pipeline_mode = #tpu.pipeline_mode<synchronous>, transform_indices = @transform_11, window_bounds = array<i64: 1, 32>}, {transform_indices = @transform_12, window_bounds = array<i64: 1, 144, 32>}]} {
    %c0 = arith.constant 0 : index
    %c0_0 = arith.constant 0 : index
    %c0_1 = arith.constant 0 : index
    %0 = vector.load %arg1[%c0, %c0_0, %c0_1] : memref<1x144x32xbf16, #tpu.memory_space<vmem>>, vector<1x144x32xbf16>
    %1 = vector.shape_cast %0 : vector<1x144x32xbf16> to vector<144x32xbf16>
    %2 = arith.extf %1 : vector<144x32xbf16> to vector<144x32xf32>
    %3 = arith.truncf %2 : vector<144x32xf32> to vector<144x32xbf16>
    %c0_2 = arith.constant 0 : index
    %c0_3 = arith.constant 0 : index
    %4 = vector.load %arg2[%c0_2, %c0_3] : memref<32x96xbf16, #tpu.memory_space<vmem>>, vector<32x96xbf16>
    %cst = arith.constant dense<0.000000e+00> : vector<144x96xf32>
    %5 = tpu.matmul %3, %4, %cst {dimension_numbers = #tpu.dot_dimension_numbers<[1], [0], [0], [1], [0, 0, 1, 1], [], []>} : vector<144x32xbf16>, vector<32x96xbf16>, vector<144x96xf32> -> vector<144x96xf32>
    %cst_4 = arith.constant 0.000000e+00 : f32
    %6 = vector.broadcast %cst_4 : f32 to vector<144x32xf32>
    %7 = vector.extract_strided_slice %5 {offsets = [0, 0], sizes = [144, 32], strides = [1, 1]} : vector<144x96xf32> to vector<144x32xf32>
    %8 = arith.truncf %7 : vector<144x32xf32> to vector<144x32xbf16>
    %9 = vector.extract_strided_slice %5 {offsets = [0, 32], sizes = [144, 32], strides = [1, 1]} : vector<144x96xf32> to vector<144x32xf32>
    %10 = arith.truncf %9 : vector<144x32xf32> to vector<144x32xbf16>
    %11 = vector.extract_strided_slice %5 {offsets = [0, 64], sizes = [144, 32], strides = [1, 1]} : vector<144x96xf32> to vector<144x32xf32>
    %12 = arith.truncf %11 : vector<144x32xf32> to vector<144x32xbf16>
    "tpu.trace_start"() <{level = 10 : i32, message = "sd,td->st"}> : () -> ()
    %cst_5 = arith.constant dense<0.000000e+00> : vector<144x144xf32>
    %13 = tpu.matmul %8, %10, %cst_5 {dimension_numbers = #tpu.dot_dimension_numbers<[1], [1], [0], [0], [0, 0, 1, 0], [], []>} : vector<144x32xbf16>, vector<144x32xbf16>, vector<144x144xf32> -> vector<144x144xf32>
    "tpu.trace_stop"() : () -> ()
    %cst_6 = arith.constant 0.176776692 : f32
    %14 = vector.broadcast %cst_6 : f32 to vector<144x144xf32>
    %15 = arith.mulf %13, %14 : vector<144x144xf32>
    %c0_7 = arith.constant 0 : index
    %c0_8 = arith.constant 0 : index
    %c0_9 = arith.constant 0 : index
    %16 = vector.load %arg3[%c0_7, %c0_8, %c0_9] : memref<1x144x144xf32, #tpu.memory_space<vmem>>, vector<1x144x144xf32>
    %17 = vector.shape_cast %16 : vector<1x144x144xf32> to vector<144x144xf32>
    %18 = arith.addf %15, %17 : vector<144x144xf32>
    %cst_10 = arith.constant dense<0xFF800000> : vector<144xf32>
    %19 = vector.multi_reduction <maximumf>, %18, %cst_10 [1] : vector<144x144xf32> to vector<144xf32>
    %20 = vector.shape_cast %19 : vector<144xf32> to vector<144x1xf32>
    %21 = vector.broadcast %20 : vector<144x1xf32> to vector<144x144xf32>
    %22 = arith.subf %18, %21 : vector<144x144xf32>
    %23 = math.exp %22 : vector<144x144xf32>
    %cst_11 = arith.constant dense<0.000000e+00> : vector<144xf32>
    %24 = vector.multi_reduction <add>, %23, %cst_11 [1] : vector<144x144xf32> to vector<144xf32>
    %25 = vector.shape_cast %24 : vector<144xf32> to vector<144x1xf32>
    %26 = tpu.reciprocal %25 {approx = true} : vector<144x1xf32> -> vector<144x1xf32>
    %27 = vector.broadcast %26 : vector<144x1xf32> to vector<144x144xf32>
    %28 = arith.mulf %23, %27 : vector<144x144xf32>
    %29 = arith.truncf %28 : vector<144x144xf32> to vector<144x144xbf16>
    %cst_12 = arith.constant dense<0.000000e+00> : vector<144x32xf32>
    %30 = tpu.matmul %29, %12, %cst_12 {dimension_numbers = #tpu.dot_dimension_numbers<[1], [0], [0], [1], [0, 0, 1, 1], [], []>} : vector<144x144xbf16>, vector<144x32xbf16>, vector<144x32xf32> -> vector<144x32xf32>
    %31 = arith.truncf %30 : vector<144x32xf32> to vector<144x32xbf16>
    %c0_13 = arith.constant 0 : index
    %c0_14 = arith.constant 0 : index
    %32 = vector.load %arg4[%c0_13, %c0_14] : memref<32x32xbf16, #tpu.memory_space<vmem>>, vector<32x32xbf16>
    %cst_15 = arith.constant dense<0.000000e+00> : vector<144x32xf32>
    %33 = tpu.matmul %31, %32, %cst_15 {dimension_numbers = #tpu.dot_dimension_numbers<[1], [0], [0], [1], [0, 0, 1, 1], [], []>} : vector<144x32xbf16>, vector<32x32xbf16>, vector<144x32xf32> -> vector<144x32xf32>
    %34 = arith.addf %6, %33 : vector<144x32xf32>
    %35 = arith.addf %2, %34 : vector<144x32xf32>
    %c0_16 = arith.constant 0 : index
    %c0_17 = arith.constant 0 : index
    %36 = vector.load %arg5[%c0_16, %c0_17] : memref<1x32xf32, #tpu.memory_space<vmem>>, vector<1x32xf32>
    %37 = vector.broadcast %36 : vector<1x32xf32> to vector<144x32xf32>
    %38 = arith.addf %35, %37 : vector<144x32xf32>
    %39 = arith.truncf %38 : vector<144x32xf32> to vector<144x32xbf16>
    %c0_18 = arith.constant 0 : index
    %c0_19 = arith.constant 0 : index
    %40 = vector.load %arg8[%c0_18, %c0_19] : memref<9x32xf32, #tpu.memory_space<vmem>>, vector<9x32xf32>
    %c0_20 = arith.constant 0 : index
    %c0_21 = arith.constant 0 : index
    %c0_22 = arith.constant 0 : index
    %41 = vector.load %arg6[%c0_20, %c0_21, %c0_22] : memref<2x144x144xbf16, #tpu.memory_space<vmem>>, vector<1x144x144xbf16>
    %42 = vector.shape_cast %41 : vector<1x144x144xbf16> to vector<144x144xbf16>
    %cst_23 = arith.constant dense<0.000000e+00> : vector<144x32xf32>
    %43 = tpu.matmul %42, %39, %cst_23 {dimension_numbers = #tpu.dot_dimension_numbers<[1], [0], [0], [1], [0, 0, 1, 1], [], []>} : vector<144x144xbf16>, vector<144x32xbf16>, vector<144x32xf32> -> vector<144x32xf32>
    %c1 = arith.constant 1 : index
    %c0_24 = arith.constant 0 : index
    %c0_25 = arith.constant 0 : index
    %44 = vector.load %arg6[%c1, %c0_24, %c0_25] : memref<2x144x144xbf16, #tpu.memory_space<vmem>>, vector<1x144x144xbf16>
    %45 = vector.shape_cast %44 : vector<1x144x144xbf16> to vector<144x144xbf16>
    %cst_26 = arith.constant dense<0.000000e+00> : vector<144x32xf32>
    %46 = tpu.matmul %45, %39, %cst_26 {dimension_numbers = #tpu.dot_dimension_numbers<[1], [0], [0], [1], [0, 0, 1, 1], [], []>} : vector<144x144xbf16>, vector<144x32xbf16>, vector<144x32xf32> -> vector<144x32xf32>
    %cst_27 = arith.constant 0.000000e+00 : f32
    %47 = vector.broadcast %cst_27 : f32 to vector<144x32xf32>
    %cst_28 = arith.constant 0.000000e+00 : f32
    %48 = vector.broadcast %cst_28 : f32 to vector<144x32xf32>
    %49 = vector.extract_strided_slice %40 {offsets = [0, 0], sizes = [1, 32], strides = [1, 1]} : vector<9x32xf32> to vector<1x32xf32>
    %50 = vector.broadcast %49 : vector<1x32xf32> to vector<144x32xf32>
    %51 = arith.mulf %43, %50 : vector<144x32xf32>
    %52 = arith.addf %48, %51 : vector<144x32xf32>
    %53 = vector.extract_strided_slice %40 {offsets = [1, 0], sizes = [1, 32], strides = [1, 1]} : vector<9x32xf32> to vector<1x32xf32>
    %54 = vector.broadcast %53 : vector<1x32xf32> to vector<144x32xf32>
    %55 = arith.mulf %38, %54 : vector<144x32xf32>
    %56 = arith.addf %52, %55 : vector<144x32xf32>
    %57 = vector.extract_strided_slice %40 {offsets = [2, 0], sizes = [1, 32], strides = [1, 1]} : vector<9x32xf32> to vector<1x32xf32>
    %58 = vector.broadcast %57 : vector<1x32xf32> to vector<144x32xf32>
    %59 = arith.mulf %46, %58 : vector<144x32xf32>
    %60 = arith.addf %56, %59 : vector<144x32xf32>
    %c0_29 = arith.constant 0 : index
    %c0_30 = arith.constant 0 : index
    %c0_31 = arith.constant 0 : index
    %61 = vector.load %arg7[%c0_29, %c0_30, %c0_31] : memref<2x144x144xbf16, #tpu.memory_space<vmem>>, vector<1x144x144xbf16>
    %62 = vector.shape_cast %61 : vector<1x144x144xbf16> to vector<144x144xbf16>
    %63 = arith.truncf %60 : vector<144x32xf32> to vector<144x32xbf16>
    %cst_32 = arith.constant dense<0.000000e+00> : vector<144x32xf32>
    %64 = tpu.matmul %62, %63, %cst_32 {dimension_numbers = #tpu.dot_dimension_numbers<[1], [0], [0], [1], [0, 0, 1, 1], [], []>} : vector<144x144xbf16>, vector<144x32xbf16>, vector<144x32xf32> -> vector<144x32xf32>
    %65 = arith.addf %47, %64 : vector<144x32xf32>
    %cst_33 = arith.constant 0.000000e+00 : f32
    %66 = vector.broadcast %cst_33 : f32 to vector<144x32xf32>
    %67 = vector.extract_strided_slice %40 {offsets = [3, 0], sizes = [1, 32], strides = [1, 1]} : vector<9x32xf32> to vector<1x32xf32>
    %68 = vector.broadcast %67 : vector<1x32xf32> to vector<144x32xf32>
    %69 = arith.mulf %43, %68 : vector<144x32xf32>
    %70 = arith.addf %66, %69 : vector<144x32xf32>
    %71 = vector.extract_strided_slice %40 {offsets = [4, 0], sizes = [1, 32], strides = [1, 1]} : vector<9x32xf32> to vector<1x32xf32>
    %72 = vector.broadcast %71 : vector<1x32xf32> to vector<144x32xf32>
    %73 = arith.mulf %38, %72 : vector<144x32xf32>
    %74 = arith.addf %70, %73 : vector<144x32xf32>
    %75 = vector.extract_strided_slice %40 {offsets = [5, 0], sizes = [1, 32], strides = [1, 1]} : vector<9x32xf32> to vector<1x32xf32>
    %76 = vector.broadcast %75 : vector<1x32xf32> to vector<144x32xf32>
    %77 = arith.mulf %46, %76 : vector<144x32xf32>
    %78 = arith.addf %74, %77 : vector<144x32xf32>
    %79 = arith.addf %65, %78 : vector<144x32xf32>
    %cst_34 = arith.constant 0.000000e+00 : f32
    %80 = vector.broadcast %cst_34 : f32 to vector<144x32xf32>
    %81 = vector.extract_strided_slice %40 {offsets = [6, 0], sizes = [1, 32], strides = [1, 1]} : vector<9x32xf32> to vector<1x32xf32>
    %82 = vector.broadcast %81 : vector<1x32xf32> to vector<144x32xf32>
    %83 = arith.mulf %43, %82 : vector<144x32xf32>
    %84 = arith.addf %80, %83 : vector<144x32xf32>
    %85 = vector.extract_strided_slice %40 {offsets = [7, 0], sizes = [1, 32], strides = [1, 1]} : vector<9x32xf32> to vector<1x32xf32>
    %86 = vector.broadcast %85 : vector<1x32xf32> to vector<144x32xf32>
    %87 = arith.mulf %38, %86 : vector<144x32xf32>
    %88 = arith.addf %84, %87 : vector<144x32xf32>
    %89 = vector.extract_strided_slice %40 {offsets = [8, 0], sizes = [1, 32], strides = [1, 1]} : vector<9x32xf32> to vector<1x32xf32>
    %90 = vector.broadcast %89 : vector<1x32xf32> to vector<144x32xf32>
    %91 = arith.mulf %46, %90 : vector<144x32xf32>
    %92 = arith.addf %88, %91 : vector<144x32xf32>
    %c1_35 = arith.constant 1 : index
    %c0_36 = arith.constant 0 : index
    %c0_37 = arith.constant 0 : index
    %93 = vector.load %arg7[%c1_35, %c0_36, %c0_37] : memref<2x144x144xbf16, #tpu.memory_space<vmem>>, vector<1x144x144xbf16>
    %94 = vector.shape_cast %93 : vector<1x144x144xbf16> to vector<144x144xbf16>
    %95 = arith.truncf %92 : vector<144x32xf32> to vector<144x32xbf16>
    %cst_38 = arith.constant dense<0.000000e+00> : vector<144x32xf32>
    %96 = tpu.matmul %94, %95, %cst_38 {dimension_numbers = #tpu.dot_dimension_numbers<[1], [0], [0], [1], [0, 0, 1, 1], [], []>} : vector<144x144xbf16>, vector<144x32xbf16>, vector<144x32xf32> -> vector<144x32xf32>
    %97 = arith.addf %79, %96 : vector<144x32xf32>
    %98 = arith.addf %38, %97 : vector<144x32xf32>
    %99 = arith.truncf %98 : vector<144x32xf32> to vector<144x32xbf16>
    %c0_39 = arith.constant 0 : index
    %c0_40 = arith.constant 0 : index
    %100 = vector.load %arg9[%c0_39, %c0_40] : memref<32x64xbf16, #tpu.memory_space<vmem>>, vector<32x64xbf16>
    %cst_41 = arith.constant dense<0.000000e+00> : vector<144x64xf32>
    %101 = tpu.matmul %99, %100, %cst_41 {dimension_numbers = #tpu.dot_dimension_numbers<[1], [0], [0], [1], [0, 0, 1, 1], [], []>} : vector<144x32xbf16>, vector<32x64xbf16>, vector<144x64xf32> -> vector<144x64xf32>
    %c0_42 = arith.constant 0 : index
    %c0_43 = arith.constant 0 : index
    %102 = vector.load %arg10[%c0_42, %c0_43] : memref<1x64xf32, #tpu.memory_space<vmem>>, vector<1x64xf32>
    %103 = vector.broadcast %102 : vector<1x64xf32> to vector<144x64xf32>
    %104 = arith.addf %101, %103 : vector<144x64xf32>
    %cst_44 = arith.constant 0.000000e+00 : f32
    %cst_45 = arith.constant 6.000000e+00 : f32
    %105 = vector.broadcast %cst_44 : f32 to vector<144x64xf32>
    %106 = arith.maximumf %105, %104 : vector<144x64xf32>
    %107 = vector.broadcast %cst_45 : f32 to vector<144x64xf32>
    %108 = arith.minimumf %107, %106 : vector<144x64xf32>
    %109 = arith.truncf %108 : vector<144x64xf32> to vector<144x64xbf16>
    %c0_46 = arith.constant 0 : index
    %c0_47 = arith.constant 0 : index
    %110 = vector.load %arg11[%c0_46, %c0_47] : memref<64x32xbf16, #tpu.memory_space<vmem>>, vector<64x32xbf16>
    %cst_48 = arith.constant dense<0.000000e+00> : vector<144x32xf32>
    %111 = tpu.matmul %109, %110, %cst_48 {dimension_numbers = #tpu.dot_dimension_numbers<[1], [0], [0], [1], [0, 0, 1, 1], [], []>} : vector<144x64xbf16>, vector<64x32xbf16>, vector<144x32xf32> -> vector<144x32xf32>
    %c0_49 = arith.constant 0 : index
    %c0_50 = arith.constant 0 : index
    %112 = vector.load %arg12[%c0_49, %c0_50] : memref<1x32xf32, #tpu.memory_space<vmem>>, vector<1x32xf32>
    %113 = vector.broadcast %112 : vector<1x32xf32> to vector<144x32xf32>
    %114 = arith.addf %111, %113 : vector<144x32xf32>
    %115 = arith.addf %98, %114 : vector<144x32xf32>
    %116 = arith.truncf %115 : vector<144x32xf32> to vector<144x32xbf16>
    %c0_51 = arith.constant 0 : index
    %c0_52 = arith.constant 0 : index
    %c0_53 = arith.constant 0 : index
    %117 = vector.load %arg13[%c0_51, %c0_52, %c0_53] : memref<1x144x32xbf16, #tpu.memory_space<vmem>>, vector<1x144x32xbf16>
    %118 = vector.shape_cast %117 : vector<1x144x32xbf16> to vector<144x32xbf16>
    %119 = vector.shape_cast %116 : vector<144x32xbf16> to vector<1x144x32xbf16>
    tpu.vector_store %arg13[%c0_51, %c0_52, %c0_53], %119 {strides = array<i32>} : memref<1x144x32xbf16, #tpu.memory_space<vmem>>, vector<1x144x32xbf16>,
    return
  }
  func.func @transform_0(%arg0: i32) -> (i32, i32, i32) {
    %c0_i32 = arith.constant 0 : i32
    %c0_i32_0 = arith.constant 0 : i32
    %c0_i32_1 = arith.constant 0 : i32
    return %arg0, %c0_i32, %c0_i32_0 : i32, i32, i32
  }
  func.func @transform_1(%arg0: i32) -> (i32, i32) {
    %c0_i32 = arith.constant 0 : i32
    %c0_i32_0 = arith.constant 0 : i32
    %c0_i32_1 = arith.constant 0 : i32
    return %c0_i32, %c0_i32_0 : i32, i32
  }
  func.func @transform_2(%arg0: i32) -> (i32, i32, i32) {
    %c0_i32 = arith.constant 0 : i32
    %c0_i32_0 = arith.constant 0 : i32
    %c0_i32_1 = arith.constant 0 : i32
    %c0_i32_2 = arith.constant 0 : i32
    return %c0_i32, %c0_i32_0, %c0_i32_1 : i32, i32, i32
  }
  func.func @transform_3(%arg0: i32) -> (i32, i32) {
    %c0_i32 = arith.constant 0 : i32
    %c0_i32_0 = arith.constant 0 : i32
    %c0_i32_1 = arith.constant 0 : i32
    return %c0_i32, %c0_i32_0 : i32, i32
  }
  func.func @transform_4(%arg0: i32) -> (i32, i32) {
    %c0_i32 = arith.constant 0 : i32
    %c0_i32_0 = arith.constant 0 : i32
    %c0_i32_1 = arith.constant 0 : i32
    return %c0_i32, %c0_i32_0 : i32, i32
  }
  func.func @transform_5(%arg0: i32) -> (i32, i32, i32) {
    %c0_i32 = arith.constant 0 : i32
    %c0_i32_0 = arith.constant 0 : i32
    %c0_i32_1 = arith.constant 0 : i32
    %c0_i32_2 = arith.constant 0 : i32
    return %c0_i32, %c0_i32_0, %c0_i32_1 : i32, i32, i32
  }
  func.func @transform_6(%arg0: i32) -> (i32, i32, i32) {
    %c0_i32 = arith.constant 0 : i32
    %c0_i32_0 = arith.constant 0 : i32
    %c0_i32_1 = arith.constant 0 : i32
    %c0_i32_2 = arith.constant 0 : i32
    return %c0_i32, %c0_i32_0, %c0_i32_1 : i32, i32, i32
  }
  func.func @transform_7(%arg0: i32) -> (i32, i32) {
    %c0_i32 = arith.constant 0 : i32
    %c0_i32_0 = arith.constant 0 : i32
    %c0_i32_1 = arith.constant 0 : i32
    return %c0_i32, %c0_i32_0 : i32, i32
  }
  func.func @transform_8(%arg0: i32) -> (i32, i32) {
    %c0_i32 = arith.constant 0 : i32
    %c0_i32_0 = arith.constant 0 : i32
    %c0_i32_1 = arith.constant 0 : i32
    return %c0_i32, %c0_i32_0 : i32, i32
  }
  func.func @transform_9(%arg0: i32) -> (i32, i32) {
    %c0_i32 = arith.constant 0 : i32
    %c0_i32_0 = arith.constant 0 : i32
    %c0_i32_1 = arith.constant 0 : i32
    return %c0_i32, %c0_i32_0 : i32, i32
  }
  func.func @transform_10(%arg0: i32) -> (i32, i32) {
    %c0_i32 = arith.constant 0 : i32
    %c0_i32_0 = arith.constant 0 : i32
    %c0_i32_1 = arith.constant 0 : i32
    return %c0_i32, %c0_i32_0 : i32, i32
  }
  func.func @transform_11(%arg0: i32) -> (i32, i32) {
    %c0_i32 = arith.constant 0 : i32
    %c0_i32_0 = arith.constant 0 : i32
    %c0_i32_1 = arith.constant 0 : i32
    return %c0_i32, %c0_i32_0 : i32, i32
  }
  func.func @transform_12(%arg0: i32) -> (i32, i32, i32) {
    %c0_i32 = arith.constant 0 : i32
    %c0_i32_0 = arith.constant 0 : i32
    %c0_i32_1 = arith.constant 0 : i32
    return %arg0, %c0_i32, %c0_i32_0 : i32, i32, i32
  }
}

module attributes {stable_mosaic.version = 11 : i64} {
  func.func @_block_kernel(%arg0: i32, %arg1: memref<1x144x32xbf16, #tpu.memory_space<vmem>>, %arg2: memref<32x96xbf16, #tpu.memory_space<vmem>>, %arg3: memref<1x144x144xf32, #tpu.memory_space<vmem>>, %arg4: memref<32x32xbf16, #tpu.memory_space<vmem>>, %arg5: memref<1x32xf32, #tpu.memory_space<vmem>>, %arg6: memref<2x144x144xbf16, #tpu.memory_space<vmem>>, %arg7: memref<2x144x144xbf16, #tpu.memory_space<vmem>>, %arg8: memref<9x32xf32, #tpu.memory_space<vmem>>, %arg9: memref<32x64xbf16, #tpu.memory_space<vmem>>, %arg10: memref<1x64xf32, #tpu.memory_space<vmem>>, %arg11: memref<64x32xbf16, #tpu.memory_space<vmem>>, %arg12: memref<1x32xf32, #tpu.memory_space<vmem>>, %arg13: memref<1x144x32xbf16, #tpu.memory_space<vmem>>) attributes {dimension_semantics = [#tpu.dimension_semantics<parallel>], iteration_bounds = array<i64: 2>, scalar_prefetch = 0 : i64, scratch_operands = 0 : i64, tpu.core_type = #tpu.core_type<tc>, window_params = [{transform_indices = @transform_0, window_bounds = array<i64: 1, 144, 32>}, {pipeline_mode = #tpu.pipeline_mode<synchronous>, transform_indices = @transform_1, window_bounds = array<i64: 32, 96>}, {pipeline_mode = #tpu.pipeline_mode<synchronous>, transform_indices = @transform_2, window_bounds = array<i64: 1, 144, 144>}, {pipeline_mode = #tpu.pipeline_mode<synchronous>, transform_indices = @transform_3, window_bounds = array<i64: 32, 32>}, {pipeline_mode = #tpu.pipeline_mode<synchronous>, transform_indices = @transform_4, window_bounds = array<i64: 1, 32>}, {pipeline_mode = #tpu.pipeline_mode<synchronous>, transform_indices = @transform_5, window_bounds = array<i64: 2, 144, 144>}, {pipeline_mode = #tpu.pipeline_mode<synchronous>, transform_indices = @transform_6, window_bounds = array<i64: 2, 144, 144>}, {pipeline_mode = #tpu.pipeline_mode<synchronous>, transform_indices = @transform_7, window_bounds = array<i64: 9, 32>}, {pipeline_mode = #tpu.pipeline_mode<synchronous>, transform_indices = @transform_8, window_bounds = array<i64: 32, 64>}, {pipeline_mode = #tpu.pipeline_mode<synchronous>, transform_indices = @transform_9, window_bounds = array<i64: 1, 64>}, {pipeline_mode = #tpu.pipeline_mode<synchronous>, transform_indices = @transform_10, window_bounds = array<i64: 64, 32>}, {pipeline_mode = #tpu.pipeline_mode<synchronous>, transform_indices = @transform_11, window_bounds = array<i64: 1, 32>}, {transform_indices = @transform_12, window_bounds = array<i64: 1, 144, 32>}]} {
    %c0 = arith.constant 0 : index
    %c0_0 = arith.constant 0 : index
    %c0_1 = arith.constant 0 : index
    %0 = vector.load %arg1[%c0, %c0_0, %c0_1] : memref<1x144x32xbf16, #tpu.memory_space<vmem>>, vector<1x144x32xbf16>
    %1 = vector.shape_cast %0 : vector<1x144x32xbf16> to vector<144x32xbf16>
    %2 = arith.extf %1 : vector<144x32xbf16> to vector<144x32xf32>
    %3 = arith.truncf %2 : vector<144x32xf32> to vector<144x32xbf16>
    %c0_2 = arith.constant 0 : index
    %c0_3 = arith.constant 0 : index
    %4 = vector.load %arg2[%c0_2, %c0_3] : memref<32x96xbf16, #tpu.memory_space<vmem>>, vector<32x96xbf16>
    %cst = arith.constant dense<0.000000e+00> : vector<144x96xf32>
    %5 = tpu.matmul %3, %4, %cst {dimension_numbers = #tpu.dot_dimension_numbers<[1], [0], [0], [1], [0, 0, 1, 1], [], []>} : vector<144x32xbf16>, vector<32x96xbf16>, vector<144x96xf32> -> vector<144x96xf32>
    %cst_4 = arith.constant 0.000000e+00 : f32
    %6 = vector.broadcast %cst_4 : f32 to vector<144x32xf32>
    %7 = vector.extract_strided_slice %5 {offsets = [0, 0], sizes = [144, 32], strides = [1, 1]} : vector<144x96xf32> to vector<144x32xf32>
    %8 = arith.truncf %7 : vector<144x32xf32> to vector<144x32xbf16>
    %9 = vector.extract_strided_slice %5 {offsets = [0, 32], sizes = [144, 32], strides = [1, 1]} : vector<144x96xf32> to vector<144x32xf32>
    %10 = arith.truncf %9 : vector<144x32xf32> to vector<144x32xbf16>
    %11 = vector.extract_strided_slice %5 {offsets = [0, 64], sizes = [144, 32], strides = [1, 1]} : vector<144x96xf32> to vector<144x32xf32>
    %12 = arith.truncf %11 : vector<144x32xf32> to vector<144x32xbf16>
    "tpu.trace_start"() <{level = 10 : i32, message = "sd,td->st"}> : () -> ()
    %cst_5 = arith.constant dense<0.000000e+00> : vector<144x144xf32>
    %13 = tpu.matmul %8, %10, %cst_5 {dimension_numbers = #tpu.dot_dimension_numbers<[1], [1], [0], [0], [0, 0, 1, 0], [], []>} : vector<144x32xbf16>, vector<144x32xbf16>, vector<144x144xf32> -> vector<144x144xf32>
    "tpu.trace_stop"() : () -> ()
    %cst_6 = arith.constant 0.176776692 : f32
    %14 = vector.broadcast %cst_6 : f32 to vector<144x144xf32>
    %15 = arith.mulf %13, %14 : vector<144x144xf32>
    %c0_7 = arith.constant 0 : index
    %c0_8 = arith.constant 0 : index
    %c0_9 = arith.constant 0 : index
    %16 = vector.load %arg3[%c0_7, %c0_8, %c0_9] : memref<1x144x144xf32, #tpu.memory_space<vmem>>, vector<1x144x144xf32>
    %17 = vector.shape_cast %16 : vector<1x144x144xf32> to vector<144x144xf32>
    %18 = arith.addf %15, %17 : vector<144x144xf32>
    %cst_10 = arith.constant dense<0xFF800000> : vector<144xf32>
    %19 = vector.multi_reduction <maximumf>, %18, %cst_10 [1] : vector<144x144xf32> to vector<144xf32>
    %20 = vector.shape_cast %19 : vector<144xf32> to vector<144x1xf32>
    %21 = vector.broadcast %20 : vector<144x1xf32> to vector<144x144xf32>
    %22 = arith.subf %18, %21 : vector<144x144xf32>
    %23 = math.exp %22 : vector<144x144xf32>
    %cst_11 = arith.constant dense<0.000000e+00> : vector<144xf32>
    %24 = vector.multi_reduction <add>, %23, %cst_11 [1] : vector<144x144xf32> to vector<144xf32>
    %25 = vector.shape_cast %24 : vector<144xf32> to vector<144x1xf32>
    %26 = tpu.reciprocal %25 {approx = true} : vector<144x1xf32> -> vector<144x1xf32>
    %27 = vector.broadcast %26 : vector<144x1xf32> to vector<144x144xf32>
    %28 = arith.mulf %23, %27 : vector<144x144xf32>
    %29 = arith.truncf %28 : vector<144x144xf32> to vector<144x144xbf16>
    %cst_12 = arith.constant dense<0.000000e+00> : vector<144x32xf32>
    %30 = tpu.matmul %29, %12, %cst_12 {dimension_numbers = #tpu.dot_dimension_numbers<[1], [0], [0], [1], [0, 0, 1, 1], [], []>} : vector<144x144xbf16>, vector<144x32xbf16>, vector<144x32xf32> -> vector<144x32xf32>
    %31 = arith.truncf %30 : vector<144x32xf32> to vector<144x32xbf16>
    %c0_13 = arith.constant 0 : index
    %c0_14 = arith.constant 0 : index
    %32 = vector.load %arg4[%c0_13, %c0_14] : memref<32x32xbf16, #tpu.memory_space<vmem>>, vector<32x32xbf16>
    %cst_15 = arith.constant dense<0.000000e+00> : vector<144x32xf32>
    %33 = tpu.matmul %31, %32, %cst_15 {dimension_numbers = #tpu.dot_dimension_numbers<[1], [0], [0], [1], [0, 0, 1, 1], [], []>} : vector<144x32xbf16>, vector<32x32xbf16>, vector<144x32xf32> -> vector<144x32xf32>
    %34 = arith.addf %6, %33 : vector<144x32xf32>
    %35 = arith.addf %2, %34 : vector<144x32xf32>
    %c0_16 = arith.constant 0 : index
    %c0_17 = arith.constant 0 : index
    %36 = vector.load %arg5[%c0_16, %c0_17] : memref<1x32xf32, #tpu.memory_space<vmem>>, vector<1x32xf32>
    %37 = vector.broadcast %36 : vector<1x32xf32> to vector<144x32xf32>
    %38 = arith.addf %35, %37 : vector<144x32xf32>
    %39 = arith.truncf %38 : vector<144x32xf32> to vector<144x32xbf16>
    %c0_18 = arith.constant 0 : index
    %c0_19 = arith.constant 0 : index
    %40 = vector.load %arg8[%c0_18, %c0_19] : memref<9x32xf32, #tpu.memory_space<vmem>>, vector<9x32xf32>
    %c0_20 = arith.constant 0 : index
    %c0_21 = arith.constant 0 : index
    %c0_22 = arith.constant 0 : index
    %41 = vector.load %arg6[%c0_20, %c0_21, %c0_22] : memref<2x144x144xbf16, #tpu.memory_space<vmem>>, vector<1x144x144xbf16>
    %42 = vector.shape_cast %41 : vector<1x144x144xbf16> to vector<144x144xbf16>
    %cst_23 = arith.constant dense<0.000000e+00> : vector<144x32xf32>
    %43 = tpu.matmul %42, %39, %cst_23 {dimension_numbers = #tpu.dot_dimension_numbers<[1], [0], [0], [1], [0, 0, 1, 1], [], []>} : vector<144x144xbf16>, vector<144x32xbf16>, vector<144x32xf32> -> vector<144x32xf32>
    %c1 = arith.constant 1 : index
    %c0_24 = arith.constant 0 : index
    %c0_25 = arith.constant 0 : index
    %44 = vector.load %arg6[%c1, %c0_24, %c0_25] : memref<2x144x144xbf16, #tpu.memory_space<vmem>>, vector<1x144x144xbf16>
    %45 = vector.shape_cast %44 : vector<1x144x144xbf16> to vector<144x144xbf16>
    %cst_26 = arith.constant dense<0.000000e+00> : vector<144x32xf32>
    %46 = tpu.matmul %45, %39, %cst_26 {dimension_numbers = #tpu.dot_dimension_numbers<[1], [0], [0], [1], [0, 0, 1, 1], [], []>} : vector<144x144xbf16>, vector<144x32xbf16>, vector<144x32xf32> -> vector<144x32xf32>
    %cst_27 = arith.constant 0.000000e+00 : f32
    %47 = vector.broadcast %cst_27 : f32 to vector<144x32xf32>
    %cst_28 = arith.constant 0.000000e+00 : f32
    %48 = vector.broadcast %cst_28 : f32 to vector<144x32xf32>
    %49 = vector.extract_strided_slice %40 {offsets = [0, 0], sizes = [1, 32], strides = [1, 1]} : vector<9x32xf32> to vector<1x32xf32>
    %50 = vector.broadcast %49 : vector<1x32xf32> to vector<144x32xf32>
    %51 = arith.mulf %43, %50 : vector<144x32xf32>
    %52 = arith.addf %48, %51 : vector<144x32xf32>
    %53 = vector.extract_strided_slice %40 {offsets = [1, 0], sizes = [1, 32], strides = [1, 1]} : vector<9x32xf32> to vector<1x32xf32>
    %54 = vector.broadcast %53 : vector<1x32xf32> to vector<144x32xf32>
    %55 = arith.mulf %38, %54 : vector<144x32xf32>
    %56 = arith.addf %52, %55 : vector<144x32xf32>
    %57 = vector.extract_strided_slice %40 {offsets = [2, 0], sizes = [1, 32], strides = [1, 1]} : vector<9x32xf32> to vector<1x32xf32>
    %58 = vector.broadcast %57 : vector<1x32xf32> to vector<144x32xf32>
    %59 = arith.mulf %46, %58 : vector<144x32xf32>
    %60 = arith.addf %56, %59 : vector<144x32xf32>
    %c0_29 = arith.constant 0 : index
    %c0_30 = arith.constant 0 : index
    %c0_31 = arith.constant 0 : index
    %61 = vector.load %arg7[%c0_29, %c0_30, %c0_31] : memref<2x144x144xbf16, #tpu.memory_space<vmem>>, vector<1x144x144xbf16>
    %62 = vector.shape_cast %61 : vector<1x144x144xbf16> to vector<144x144xbf16>
    %63 = arith.truncf %60 : vector<144x32xf32> to vector<144x32xbf16>
    %cst_32 = arith.constant dense<0.000000e+00> : vector<144x32xf32>
    %64 = tpu.matmul %62, %63, %cst_32 {dimension_numbers = #tpu.dot_dimension_numbers<[1], [0], [0], [1], [0, 0, 1, 1], [], []>} : vector<144x144xbf16>, vector<144x32xbf16>, vector<144x32xf32> -> vector<144x32xf32>
    %65 = arith.addf %47, %64 : vector<144x32xf32>
    %cst_33 = arith.constant 0.000000e+00 : f32
    %66 = vector.broadcast %cst_33 : f32 to vector<144x32xf32>
    %67 = vector.extract_strided_slice %40 {offsets = [3, 0], sizes = [1, 32], strides = [1, 1]} : vector<9x32xf32> to vector<1x32xf32>
    %68 = vector.broadcast %67 : vector<1x32xf32> to vector<144x32xf32>
    %69 = arith.mulf %43, %68 : vector<144x32xf32>
    %70 = arith.addf %66, %69 : vector<144x32xf32>
    %71 = vector.extract_strided_slice %40 {offsets = [4, 0], sizes = [1, 32], strides = [1, 1]} : vector<9x32xf32> to vector<1x32xf32>
    %72 = vector.broadcast %71 : vector<1x32xf32> to vector<144x32xf32>
    %73 = arith.mulf %38, %72 : vector<144x32xf32>
    %74 = arith.addf %70, %73 : vector<144x32xf32>
    %75 = vector.extract_strided_slice %40 {offsets = [5, 0], sizes = [1, 32], strides = [1, 1]} : vector<9x32xf32> to vector<1x32xf32>
    %76 = vector.broadcast %75 : vector<1x32xf32> to vector<144x32xf32>
    %77 = arith.mulf %46, %76 : vector<144x32xf32>
    %78 = arith.addf %74, %77 : vector<144x32xf32>
    %79 = arith.addf %65, %78 : vector<144x32xf32>
    %cst_34 = arith.constant 0.000000e+00 : f32
    %80 = vector.broadcast %cst_34 : f32 to vector<144x32xf32>
    %81 = vector.extract_strided_slice %40 {offsets = [6, 0], sizes = [1, 32], strides = [1, 1]} : vector<9x32xf32> to vector<1x32xf32>
    %82 = vector.broadcast %81 : vector<1x32xf32> to vector<144x32xf32>
    %83 = arith.mulf %43, %82 : vector<144x32xf32>
    %84 = arith.addf %80, %83 : vector<144x32xf32>
    %85 = vector.extract_strided_slice %40 {offsets = [7, 0], sizes = [1, 32], strides = [1, 1]} : vector<9x32xf32> to vector<1x32xf32>
    %86 = vector.broadcast %85 : vector<1x32xf32> to vector<144x32xf32>
    %87 = arith.mulf %38, %86 : vector<144x32xf32>
    %88 = arith.addf %84, %87 : vector<144x32xf32>
    %89 = vector.extract_strided_slice %40 {offsets = [8, 0], sizes = [1, 32], strides = [1, 1]} : vector<9x32xf32> to vector<1x32xf32>
    %90 = vector.broadcast %89 : vector<1x32xf32> to vector<144x32xf32>
    %91 = arith.mulf %46, %90 : vector<144x32xf32>
    %92 = arith.addf %88, %91 : vector<144x32xf32>
    %c1_35 = arith.constant 1 : index
    %c0_36 = arith.constant 0 : index
    %c0_37 = arith.constant 0 : index
    %93 = vector.load %arg7[%c1_35, %c0_36, %c0_37] : memref<2x144x144xbf16, #tpu.memory_space<vmem>>, vector<1x144x144xbf16>
    %94 = vector.shape_cast %93 : vector<1x144x144xbf16> to vector<144x144xbf16>
    %95 = arith.truncf %92 : vector<144x32xf32> to vector<144x32xbf16>
    %cst_38 = arith.constant dense<0.000000e+00> : vector<144x32xf32>
    %96 = tpu.matmul %94, %95, %cst_38 {dimension_numbers = #tpu.dot_dimension_numbers<[1], [0], [0], [1], [0, 0, 1, 1], [], []>} : vector<144x144xbf16>, vector<144x32xbf16>, vector<144x32xf32> -> vector<144x32xf32>
    %97 = arith.addf %79, %96 : vector<144x32xf32>
    %98 = arith.addf %38, %97 : vector<144x32xf32>
    %99 = arith.truncf %98 : vector<144x32xf32> to vector<144x32xbf16>
    %c0_39 = arith.constant 0 : index
    %c0_40 = arith.constant 0 : index
    %100 = vector.load %arg9[%c0_39, %c0_40] : memref<32x64xbf16, #tpu.memory_space<vmem>>, vector<32x64xbf16>
    %cst_41 = arith.constant dense<0.000000e+00> : vector<144x64xf32>
    %101 = tpu.matmul %99, %100, %cst_41 {dimension_numbers = #tpu.dot_dimension_numbers<[1], [0], [0], [1], [0, 0, 1, 1], [], []>} : vector<144x32xbf16>, vector<32x64xbf16>, vector<144x64xf32> -> vector<144x64xf32>
    %c0_42 = arith.constant 0 : index
    %c0_43 = arith.constant 0 : index
    %102 = vector.load %arg10[%c0_42, %c0_43] : memref<1x64xf32, #tpu.memory_space<vmem>>, vector<1x64xf32>
    %103 = vector.broadcast %102 : vector<1x64xf32> to vector<144x64xf32>
    %104 = arith.addf %101, %103 : vector<144x64xf32>
    %cst_44 = arith.constant 0.000000e+00 : f32
    %cst_45 = arith.constant 6.000000e+00 : f32
    %105 = vector.broadcast %cst_44 : f32 to vector<144x64xf32>
    %106 = arith.maximumf %105, %104 : vector<144x64xf32>
    %107 = vector.broadcast %cst_45 : f32 to vector<144x64xf32>
    %108 = arith.minimumf %107, %106 : vector<144x64xf32>
    %109 = arith.truncf %108 : vector<144x64xf32> to vector<144x64xbf16>
    %c0_46 = arith.constant 0 : index
    %c0_47 = arith.constant 0 : index
    %110 = vector.load %arg11[%c0_46, %c0_47] : memref<64x32xbf16, #tpu.memory_space<vmem>>, vector<64x32xbf16>
    %cst_48 = arith.constant dense<0.000000e+00> : vector<144x32xf32>
    %111 = tpu.matmul %109, %110, %cst_48 {dimension_numbers = #tpu.dot_dimension_numbers<[1], [0], [0], [1], [0, 0, 1, 1], [], []>} : vector<144x64xbf16>, vector<64x32xbf16>, vector<144x32xf32> -> vector<144x32xf32>
    %c0_49 = arith.constant 0 : index
    %c0_50 = arith.constant 0 : index
    %112 = vector.load %arg12[%c0_49, %c0_50] : memref<1x32xf32, #tpu.memory_space<vmem>>, vector<1x32xf32>
    %113 = vector.broadcast %112 : vector<1x32xf32> to vector<144x32xf32>
    %114 = arith.addf %111, %113 : vector<144x32xf32>
    %115 = arith.addf %98, %114 : vector<144x32xf32>
    %116 = arith.truncf %115 : vector<144x32xf32> to vector<144x32xbf16>
    %c0_51 = arith.constant 0 : index
    %c0_52 = arith.constant 0 : index
    %c0_53 = arith.constant 0 : index
    %117 = vector.load %arg13[%c0_51, %c0_52, %c0_53] : memref<1x144x32xbf16, #tpu.memory_space<vmem>>, vector<1x144x32xbf16>
    %118 = vector.shape_cast %117 : vector<1x144x32xbf16> to vector<144x32xbf16>
    %119 = vector.shape_cast %116 : vector<144x32xbf16> to vector<1x144x32xbf16>
    tpu.vector_store %arg13[%c0_51, %c0_52, %c0_53], %119 {strides = array<i32>} : memref<1x144x32xbf16, #tpu.memory_space<vmem>>, vector<1x144x32xbf16>,
    return
  }
  func.func @transform_0(%arg0: i32) -> (i32, i32, i32) {
    %c0_i32 = arith.constant 0 : i32
    %c0_i32_0 = arith.constant 0 : i32
    %c0_i32_1 = arith.constant 0 : i32
    return %arg0, %c0_i32, %c0_i32_0 : i32, i32, i32
  }
  func.func @transform_1(%arg0: i32) -> (i32, i32) {
    %c0_i32 = arith.constant 0 : i32
    %c0_i32_0 = arith.constant 0 : i32
    %c0_i32_1 = arith.constant 0 : i32
    return %c0_i32, %c0_i32_0 : i32, i32
  }
  func.func @transform_2(%arg0: i32) -> (i32, i32, i32) {
    %c0_i32 = arith.constant 0 : i32
    %c0_i32_0 = arith.constant 0 : i32
    %c0_i32_1 = arith.constant 0 : i32
    %c0_i32_2 = arith.constant 0 : i32
    return %c0_i32, %c0_i32_0, %c0_i32_1 : i32, i32, i32
  }
  func.func @transform_3(%arg0: i32) -> (i32, i32) {
    %c0_i32 = arith.constant 0 : i32
    %c0_i32_0 = arith.constant 0 : i32
    %c0_i32_1 = arith.constant 0 : i32
    return %c0_i32, %c0_i32_0 : i32, i32
  }
  func.func @transform_4(%arg0: i32) -> (i32, i32) {
    %c0_i32 = arith.constant 0 : i32
    %c0_i32_0 = arith.constant 0 : i32
    %c0_i32_1 = arith.constant 0 : i32
    return %c0_i32, %c0_i32_0 : i32, i32
  }
  func.func @transform_5(%arg0: i32) -> (i32, i32, i32) {
    %c0_i32 = arith.constant 0 : i32
    %c0_i32_0 = arith.constant 0 : i32
    %c0_i32_1 = arith.constant 0 : i32
    %c0_i32_2 = arith.constant 0 : i32
    return %c0_i32, %c0_i32_0, %c0_i32_1 : i32, i32, i32
  }
  func.func @transform_6(%arg0: i32) -> (i32, i32, i32) {
    %c0_i32 = arith.constant 0 : i32
    %c0_i32_0 = arith.constant 0 : i32
    %c0_i32_1 = arith.constant 0 : i32
    %c0_i32_2 = arith.constant 0 : i32
    return %c0_i32, %c0_i32_0, %c0_i32_1 : i32, i32, i32
  }
  func.func @transform_7(%arg0: i32) -> (i32, i32) {
    %c0_i32 = arith.constant 0 : i32
    %c0_i32_0 = arith.constant 0 : i32
    %c0_i32_1 = arith.constant 0 : i32
    return %c0_i32, %c0_i32_0 : i32, i32
  }
  func.func @transform_8(%arg0: i32) -> (i32, i32) {
    %c0_i32 = arith.constant 0 : i32
    %c0_i32_0 = arith.constant 0 : i32
    %c0_i32_1 = arith.constant 0 : i32
    return %c0_i32, %c0_i32_0 : i32, i32
  }
  func.func @transform_9(%arg0: i32) -> (i32, i32) {
    %c0_i32 = arith.constant 0 : i32
    %c0_i32_0 = arith.constant 0 : i32
    %c0_i32_1 = arith.constant 0 : i32
    return %c0_i32, %c0_i32_0 : i32, i32
  }
  func.func @transform_10(%arg0: i32) -> (i32, i32) {
    %c0_i32 = arith.constant 0 : i32
    %c0_i32_0 = arith.constant 0 : i32
    %c0_i32_1 = arith.constant 0 : i32
    return %c0_i32, %c0_i32_0 : i32, i32
  }
  func.func @transform_11(%arg0: i32) -> (i32, i32) {
    %c0_i32 = arith.constant 0 : i32
    %c0_i32_0 = arith.constant 0 : i32
    %c0_i32_1 = arith.constant 0 : i32
    return %c0_i32, %c0_i32_0 : i32, i32
  }
  func.func @transform_12(%arg0: i32) -> (i32, i32, i32) {
    %c0_i32 = arith.constant 0 : i32
    %c0_i32_0 = arith.constant 0 : i32
    %c0_i32_1 = arith.constant 0 : i32
    return %arg0, %c0_i32, %c0_i32_0 : i32, i32, i32
  }
}

module attributes {stable_mosaic.version = 11 : i64} {
  func.func @_matmul_kernel(%arg0: i32, %arg1: memref<72x128xbf16, #tpu.memory_space<vmem>>, %arg2: memref<128x64xbf16, #tpu.memory_space<vmem>>, %arg3: memref<1x64xf32, #tpu.memory_space<vmem>>, %arg4: memref<72x64xbf16, #tpu.memory_space<vmem>>) attributes {dimension_semantics = [#tpu.dimension_semantics<parallel>], iteration_bounds = array<i64: 1>, scalar_prefetch = 0 : i64, scratch_operands = 0 : i64, tpu.core_type = #tpu.core_type<tc>, window_params = [{transform_indices = @transform_0, window_bounds = array<i64: 72, 128>}, {pipeline_mode = #tpu.pipeline_mode<synchronous>, transform_indices = @transform_1, window_bounds = array<i64: 128, 64>}, {pipeline_mode = #tpu.pipeline_mode<synchronous>, transform_indices = @transform_2, window_bounds = array<i64: 1, 64>}, {transform_indices = @transform_3, window_bounds = array<i64: 72, 64>}]} {
    %c0 = arith.constant 0 : index
    %c0_0 = arith.constant 0 : index
    %0 = vector.load %arg1[%c0, %c0_0] : memref<72x128xbf16, #tpu.memory_space<vmem>>, vector<72x128xbf16>
    %c0_1 = arith.constant 0 : index
    %c0_2 = arith.constant 0 : index
    %1 = vector.load %arg2[%c0_1, %c0_2] : memref<128x64xbf16, #tpu.memory_space<vmem>>, vector<128x64xbf16>
    %cst = arith.constant dense<0.000000e+00> : vector<72x64xf32>
    %2 = tpu.matmul %0, %1, %cst {dimension_numbers = #tpu.dot_dimension_numbers<[1], [0], [0], [1], [0, 0, 1, 1], [], []>} : vector<72x128xbf16>, vector<128x64xbf16>, vector<72x64xf32> -> vector<72x64xf32>
    %c0_3 = arith.constant 0 : index
    %c0_4 = arith.constant 0 : index
    %3 = vector.load %arg3[%c0_3, %c0_4] : memref<1x64xf32, #tpu.memory_space<vmem>>, vector<1x64xf32>
    %4 = vector.broadcast %3 : vector<1x64xf32> to vector<72x64xf32>
    %5 = arith.addf %2, %4 : vector<72x64xf32>
    %6 = arith.truncf %5 : vector<72x64xf32> to vector<72x64xbf16>
    %c0_5 = arith.constant 0 : index
    %c0_6 = arith.constant 0 : index
    %7 = vector.load %arg4[%c0_5, %c0_6] : memref<72x64xbf16, #tpu.memory_space<vmem>>, vector<72x64xbf16>
    tpu.vector_store %arg4[%c0_5, %c0_6], %6 {strides = array<i32>} : memref<72x64xbf16, #tpu.memory_space<vmem>>, vector<72x64xbf16>,
    return
  }
  func.func @transform_0(%arg0: i32) -> (i32, i32) {
    %c0_i32 = arith.constant 0 : i32
    %c0_i32_0 = arith.constant 0 : i32
    return %arg0, %c0_i32 : i32, i32
  }
  func.func @transform_1(%arg0: i32) -> (i32, i32) {
    %c0_i32 = arith.constant 0 : i32
    %c0_i32_0 = arith.constant 0 : i32
    %c0_i32_1 = arith.constant 0 : i32
    return %c0_i32, %c0_i32_0 : i32, i32
  }
  func.func @transform_2(%arg0: i32) -> (i32, i32) {
    %c0_i32 = arith.constant 0 : i32
    %c0_i32_0 = arith.constant 0 : i32
    %c0_i32_1 = arith.constant 0 : i32
    return %c0_i32, %c0_i32_0 : i32, i32
  }
  func.func @transform_3(%arg0: i32) -> (i32, i32) {
    %c0_i32 = arith.constant 0 : i32
    %c0_i32_0 = arith.constant 0 : i32
    return %arg0, %c0_i32 : i32, i32
  }
}

module attributes {stable_mosaic.version = 11 : i64} {
  func.func @_block_kernel(%arg0: i32, %arg1: memref<1x36x64xbf16, #tpu.memory_space<vmem>>, %arg2: memref<64x192xbf16, #tpu.memory_space<vmem>>, %arg3: memref<2x36x36xf32, #tpu.memory_space<vmem>>, %arg4: memref<64x64xbf16, #tpu.memory_space<vmem>>, %arg5: memref<1x64xf32, #tpu.memory_space<vmem>>, %arg6: memref<2x36x36xbf16, #tpu.memory_space<vmem>>, %arg7: memref<2x36x36xbf16, #tpu.memory_space<vmem>>, %arg8: memref<9x64xf32, #tpu.memory_space<vmem>>, %arg9: memref<64x128xbf16, #tpu.memory_space<vmem>>, %arg10: memref<1x128xf32, #tpu.memory_space<vmem>>, %arg11: memref<128x64xbf16, #tpu.memory_space<vmem>>, %arg12: memref<1x64xf32, #tpu.memory_space<vmem>>, %arg13: memref<1x36x64xbf16, #tpu.memory_space<vmem>>) attributes {dimension_semantics = [#tpu.dimension_semantics<parallel>], iteration_bounds = array<i64: 2>, scalar_prefetch = 0 : i64, scratch_operands = 0 : i64, tpu.core_type = #tpu.core_type<tc>, window_params = [{transform_indices = @transform_0, window_bounds = array<i64: 1, 36, 64>}, {pipeline_mode = #tpu.pipeline_mode<synchronous>, transform_indices = @transform_1, window_bounds = array<i64: 64, 192>}, {pipeline_mode = #tpu.pipeline_mode<synchronous>, transform_indices = @transform_2, window_bounds = array<i64: 2, 36, 36>}, {pipeline_mode = #tpu.pipeline_mode<synchronous>, transform_indices = @transform_3, window_bounds = array<i64: 64, 64>}, {pipeline_mode = #tpu.pipeline_mode<synchronous>, transform_indices = @transform_4, window_bounds = array<i64: 1, 64>}, {pipeline_mode = #tpu.pipeline_mode<synchronous>, transform_indices = @transform_5, window_bounds = array<i64: 2, 36, 36>}, {pipeline_mode = #tpu.pipeline_mode<synchronous>, transform_indices = @transform_6, window_bounds = array<i64: 2, 36, 36>}, {pipeline_mode = #tpu.pipeline_mode<synchronous>, transform_indices = @transform_7, window_bounds = array<i64: 9, 64>}, {pipeline_mode = #tpu.pipeline_mode<synchronous>, transform_indices = @transform_8, window_bounds = array<i64: 64, 128>}, {pipeline_mode = #tpu.pipeline_mode<synchronous>, transform_indices = @transform_9, window_bounds = array<i64: 1, 128>}, {pipeline_mode = #tpu.pipeline_mode<synchronous>, transform_indices = @transform_10, window_bounds = array<i64: 128, 64>}, {pipeline_mode = #tpu.pipeline_mode<synchronous>, transform_indices = @transform_11, window_bounds = array<i64: 1, 64>}, {transform_indices = @transform_12, window_bounds = array<i64: 1, 36, 64>}]} {
    %c0 = arith.constant 0 : index
    %c0_0 = arith.constant 0 : index
    %c0_1 = arith.constant 0 : index
    %0 = vector.load %arg1[%c0, %c0_0, %c0_1] : memref<1x36x64xbf16, #tpu.memory_space<vmem>>, vector<1x36x64xbf16>
    %1 = vector.shape_cast %0 : vector<1x36x64xbf16> to vector<36x64xbf16>
    %2 = arith.extf %1 : vector<36x64xbf16> to vector<36x64xf32>
    %3 = arith.truncf %2 : vector<36x64xf32> to vector<36x64xbf16>
    %c0_2 = arith.constant 0 : index
    %c0_3 = arith.constant 0 : index
    %4 = vector.load %arg2[%c0_2, %c0_3] : memref<64x192xbf16, #tpu.memory_space<vmem>>, vector<64x192xbf16>
    %cst = arith.constant dense<0.000000e+00> : vector<36x192xf32>
    %5 = tpu.matmul %3, %4, %cst {dimension_numbers = #tpu.dot_dimension_numbers<[1], [0], [0], [1], [0, 0, 1, 1], [], []>} : vector<36x64xbf16>, vector<64x192xbf16>, vector<36x192xf32> -> vector<36x192xf32>
    %cst_4 = arith.constant 0.000000e+00 : f32
    %6 = vector.broadcast %cst_4 : f32 to vector<36x64xf32>
    %7 = vector.extract_strided_slice %5 {offsets = [0, 0], sizes = [36, 32], strides = [1, 1]} : vector<36x192xf32> to vector<36x32xf32>
    %8 = arith.truncf %7 : vector<36x32xf32> to vector<36x32xbf16>
    %9 = vector.extract_strided_slice %5 {offsets = [0, 64], sizes = [36, 32], strides = [1, 1]} : vector<36x192xf32> to vector<36x32xf32>
    %10 = arith.truncf %9 : vector<36x32xf32> to vector<36x32xbf16>
    %11 = vector.extract_strided_slice %5 {offsets = [0, 128], sizes = [36, 32], strides = [1, 1]} : vector<36x192xf32> to vector<36x32xf32>
    %12 = arith.truncf %11 : vector<36x32xf32> to vector<36x32xbf16>
    "tpu.trace_start"() <{level = 10 : i32, message = "sd,td->st"}> : () -> ()
    %cst_5 = arith.constant dense<0.000000e+00> : vector<36x36xf32>
    %13 = tpu.matmul %8, %10, %cst_5 {dimension_numbers = #tpu.dot_dimension_numbers<[1], [1], [0], [0], [0, 0, 1, 0], [], []>} : vector<36x32xbf16>, vector<36x32xbf16>, vector<36x36xf32> -> vector<36x36xf32>
    "tpu.trace_stop"() : () -> ()
    %cst_6 = arith.constant 0.176776692 : f32
    %14 = vector.broadcast %cst_6 : f32 to vector<36x36xf32>
    %15 = arith.mulf %13, %14 : vector<36x36xf32>
    %c0_7 = arith.constant 0 : index
    %c0_8 = arith.constant 0 : index
    %c0_9 = arith.constant 0 : index
    %16 = vector.load %arg3[%c0_7, %c0_8, %c0_9] : memref<2x36x36xf32, #tpu.memory_space<vmem>>, vector<1x36x36xf32>
    %17 = vector.shape_cast %16 : vector<1x36x36xf32> to vector<36x36xf32>
    %18 = arith.addf %15, %17 : vector<36x36xf32>
    %cst_10 = arith.constant dense<0xFF800000> : vector<36xf32>
    %19 = vector.multi_reduction <maximumf>, %18, %cst_10 [1] : vector<36x36xf32> to vector<36xf32>
    %20 = vector.shape_cast %19 : vector<36xf32> to vector<36x1xf32>
    %21 = vector.broadcast %20 : vector<36x1xf32> to vector<36x36xf32>
    %22 = arith.subf %18, %21 : vector<36x36xf32>
    %23 = math.exp %22 : vector<36x36xf32>
    %cst_11 = arith.constant dense<0.000000e+00> : vector<36xf32>
    %24 = vector.multi_reduction <add>, %23, %cst_11 [1] : vector<36x36xf32> to vector<36xf32>
    %25 = vector.shape_cast %24 : vector<36xf32> to vector<36x1xf32>
    %26 = tpu.reciprocal %25 {approx = true} : vector<36x1xf32> -> vector<36x1xf32>
    %27 = vector.broadcast %26 : vector<36x1xf32> to vector<36x36xf32>
    %28 = arith.mulf %23, %27 : vector<36x36xf32>
    %29 = arith.truncf %28 : vector<36x36xf32> to vector<36x36xbf16>
    %cst_12 = arith.constant dense<0.000000e+00> : vector<36x32xf32>
    %30 = tpu.matmul %29, %12, %cst_12 {dimension_numbers = #tpu.dot_dimension_numbers<[1], [0], [0], [1], [0, 0, 1, 1], [], []>} : vector<36x36xbf16>, vector<36x32xbf16>, vector<36x32xf32> -> vector<36x32xf32>
    %31 = arith.truncf %30 : vector<36x32xf32> to vector<36x32xbf16>
    %c0_13 = arith.constant 0 : index
    %c0_14 = arith.constant 0 : index
    %32 = vector.load %arg4[%c0_13, %c0_14] : memref<64x64xbf16, #tpu.memory_space<vmem>>, vector<32x64xbf16>
    %cst_15 = arith.constant dense<0.000000e+00> : vector<36x64xf32>
    %33 = tpu.matmul %31, %32, %cst_15 {dimension_numbers = #tpu.dot_dimension_numbers<[1], [0], [0], [1], [0, 0, 1, 1], [], []>} : vector<36x32xbf16>, vector<32x64xbf16>, vector<36x64xf32> -> vector<36x64xf32>
    %34 = arith.addf %6, %33 : vector<36x64xf32>
    %35 = vector.extract_strided_slice %5 {offsets = [0, 32], sizes = [36, 32], strides = [1, 1]} : vector<36x192xf32> to vector<36x32xf32>
    %36 = arith.truncf %35 : vector<36x32xf32> to vector<36x32xbf16>
    %37 = vector.extract_strided_slice %5 {offsets = [0, 96], sizes = [36, 32], strides = [1, 1]} : vector<36x192xf32> to vector<36x32xf32>
    %38 = arith.truncf %37 : vector<36x32xf32> to vector<36x32xbf16>
    %39 = vector.extract_strided_slice %5 {offsets = [0, 160], sizes = [36, 32], strides = [1, 1]} : vector<36x192xf32> to vector<36x32xf32>
    %40 = arith.truncf %39 : vector<36x32xf32> to vector<36x32xbf16>
    "tpu.trace_start"() <{level = 10 : i32, message = "sd,td->st"}> : () -> ()
    %cst_16 = arith.constant dense<0.000000e+00> : vector<36x36xf32>
    %41 = tpu.matmul %36, %38, %cst_16 {dimension_numbers = #tpu.dot_dimension_numbers<[1], [1], [0], [0], [0, 0, 1, 0], [], []>} : vector<36x32xbf16>, vector<36x32xbf16>, vector<36x36xf32> -> vector<36x36xf32>
    "tpu.trace_stop"() : () -> ()
    %cst_17 = arith.constant 0.176776692 : f32
    %42 = vector.broadcast %cst_17 : f32 to vector<36x36xf32>
    %43 = arith.mulf %41, %42 : vector<36x36xf32>
    %c1 = arith.constant 1 : index
    %c0_18 = arith.constant 0 : index
    %c0_19 = arith.constant 0 : index
    %44 = vector.load %arg3[%c1, %c0_18, %c0_19] : memref<2x36x36xf32, #tpu.memory_space<vmem>>, vector<1x36x36xf32>
    %45 = vector.shape_cast %44 : vector<1x36x36xf32> to vector<36x36xf32>
    %46 = arith.addf %43, %45 : vector<36x36xf32>
    %cst_20 = arith.constant dense<0xFF800000> : vector<36xf32>
    %47 = vector.multi_reduction <maximumf>, %46, %cst_20 [1] : vector<36x36xf32> to vector<36xf32>
    %48 = vector.shape_cast %47 : vector<36xf32> to vector<36x1xf32>
    %49 = vector.broadcast %48 : vector<36x1xf32> to vector<36x36xf32>
    %50 = arith.subf %46, %49 : vector<36x36xf32>
    %51 = math.exp %50 : vector<36x36xf32>
    %cst_21 = arith.constant dense<0.000000e+00> : vector<36xf32>
    %52 = vector.multi_reduction <add>, %51, %cst_21 [1] : vector<36x36xf32> to vector<36xf32>
    %53 = vector.shape_cast %52 : vector<36xf32> to vector<36x1xf32>
    %54 = tpu.reciprocal %53 {approx = true} : vector<36x1xf32> -> vector<36x1xf32>
    %55 = vector.broadcast %54 : vector<36x1xf32> to vector<36x36xf32>
    %56 = arith.mulf %51, %55 : vector<36x36xf32>
    %57 = arith.truncf %56 : vector<36x36xf32> to vector<36x36xbf16>
    %cst_22 = arith.constant dense<0.000000e+00> : vector<36x32xf32>
    %58 = tpu.matmul %57, %40, %cst_22 {dimension_numbers = #tpu.dot_dimension_numbers<[1], [0], [0], [1], [0, 0, 1, 1], [], []>} : vector<36x36xbf16>, vector<36x32xbf16>, vector<36x32xf32> -> vector<36x32xf32>
    %59 = arith.truncf %58 : vector<36x32xf32> to vector<36x32xbf16>
    %c32 = arith.constant 32 : index
    %c0_23 = arith.constant 0 : index
    %60 = vector.load %arg4[%c32, %c0_23] : memref<64x64xbf16, #tpu.memory_space<vmem>>, vector<32x64xbf16>
    %cst_24 = arith.constant dense<0.000000e+00> : vector<36x64xf32>
    %61 = tpu.matmul %59, %60, %cst_24 {dimension_numbers = #tpu.dot_dimension_numbers<[1], [0], [0], [1], [0, 0, 1, 1], [], []>} : vector<36x32xbf16>, vector<32x64xbf16>, vector<36x64xf32> -> vector<36x64xf32>
    %62 = arith.addf %34, %61 : vector<36x64xf32>
    %63 = arith.addf %2, %62 : vector<36x64xf32>
    %c0_25 = arith.constant 0 : index
    %c0_26 = arith.constant 0 : index
    %64 = vector.load %arg5[%c0_25, %c0_26] : memref<1x64xf32, #tpu.memory_space<vmem>>, vector<1x64xf32>
    %65 = vector.broadcast %64 : vector<1x64xf32> to vector<36x64xf32>
    %66 = arith.addf %63, %65 : vector<36x64xf32>
    %67 = arith.truncf %66 : vector<36x64xf32> to vector<36x64xbf16>
    %c0_27 = arith.constant 0 : index
    %c0_28 = arith.constant 0 : index
    %68 = vector.load %arg8[%c0_27, %c0_28] : memref<9x64xf32, #tpu.memory_space<vmem>>, vector<9x64xf32>
    %c0_29 = arith.constant 0 : index
    %c0_30 = arith.constant 0 : index
    %c0_31 = arith.constant 0 : index
    %69 = vector.load %arg6[%c0_29, %c0_30, %c0_31] : memref<2x36x36xbf16, #tpu.memory_space<vmem>>, vector<1x36x36xbf16>
    %70 = vector.shape_cast %69 : vector<1x36x36xbf16> to vector<36x36xbf16>
    %cst_32 = arith.constant dense<0.000000e+00> : vector<36x64xf32>
    %71 = tpu.matmul %70, %67, %cst_32 {dimension_numbers = #tpu.dot_dimension_numbers<[1], [0], [0], [1], [0, 0, 1, 1], [], []>} : vector<36x36xbf16>, vector<36x64xbf16>, vector<36x64xf32> -> vector<36x64xf32>
    %c1_33 = arith.constant 1 : index
    %c0_34 = arith.constant 0 : index
    %c0_35 = arith.constant 0 : index
    %72 = vector.load %arg6[%c1_33, %c0_34, %c0_35] : memref<2x36x36xbf16, #tpu.memory_space<vmem>>, vector<1x36x36xbf16>
    %73 = vector.shape_cast %72 : vector<1x36x36xbf16> to vector<36x36xbf16>
    %cst_36 = arith.constant dense<0.000000e+00> : vector<36x64xf32>
    %74 = tpu.matmul %73, %67, %cst_36 {dimension_numbers = #tpu.dot_dimension_numbers<[1], [0], [0], [1], [0, 0, 1, 1], [], []>} : vector<36x36xbf16>, vector<36x64xbf16>, vector<36x64xf32> -> vector<36x64xf32>
    %cst_37 = arith.constant 0.000000e+00 : f32
    %75 = vector.broadcast %cst_37 : f32 to vector<36x64xf32>
    %cst_38 = arith.constant 0.000000e+00 : f32
    %76 = vector.broadcast %cst_38 : f32 to vector<36x64xf32>
    %77 = vector.extract_strided_slice %68 {offsets = [0, 0], sizes = [1, 64], strides = [1, 1]} : vector<9x64xf32> to vector<1x64xf32>
    %78 = vector.broadcast %77 : vector<1x64xf32> to vector<36x64xf32>
    %79 = arith.mulf %71, %78 : vector<36x64xf32>
    %80 = arith.addf %76, %79 : vector<36x64xf32>
    %81 = vector.extract_strided_slice %68 {offsets = [1, 0], sizes = [1, 64], strides = [1, 1]} : vector<9x64xf32> to vector<1x64xf32>
    %82 = vector.broadcast %81 : vector<1x64xf32> to vector<36x64xf32>
    %83 = arith.mulf %66, %82 : vector<36x64xf32>
    %84 = arith.addf %80, %83 : vector<36x64xf32>
    %85 = vector.extract_strided_slice %68 {offsets = [2, 0], sizes = [1, 64], strides = [1, 1]} : vector<9x64xf32> to vector<1x64xf32>
    %86 = vector.broadcast %85 : vector<1x64xf32> to vector<36x64xf32>
    %87 = arith.mulf %74, %86 : vector<36x64xf32>
    %88 = arith.addf %84, %87 : vector<36x64xf32>
    %c0_39 = arith.constant 0 : index
    %c0_40 = arith.constant 0 : index
    %c0_41 = arith.constant 0 : index
    %89 = vector.load %arg7[%c0_39, %c0_40, %c0_41] : memref<2x36x36xbf16, #tpu.memory_space<vmem>>, vector<1x36x36xbf16>
    %90 = vector.shape_cast %89 : vector<1x36x36xbf16> to vector<36x36xbf16>
    %91 = arith.truncf %88 : vector<36x64xf32> to vector<36x64xbf16>
    %cst_42 = arith.constant dense<0.000000e+00> : vector<36x64xf32>
    %92 = tpu.matmul %90, %91, %cst_42 {dimension_numbers = #tpu.dot_dimension_numbers<[1], [0], [0], [1], [0, 0, 1, 1], [], []>} : vector<36x36xbf16>, vector<36x64xbf16>, vector<36x64xf32> -> vector<36x64xf32>
    %93 = arith.addf %75, %92 : vector<36x64xf32>
    %cst_43 = arith.constant 0.000000e+00 : f32
    %94 = vector.broadcast %cst_43 : f32 to vector<36x64xf32>
    %95 = vector.extract_strided_slice %68 {offsets = [3, 0], sizes = [1, 64], strides = [1, 1]} : vector<9x64xf32> to vector<1x64xf32>
    %96 = vector.broadcast %95 : vector<1x64xf32> to vector<36x64xf32>
    %97 = arith.mulf %71, %96 : vector<36x64xf32>
    %98 = arith.addf %94, %97 : vector<36x64xf32>
    %99 = vector.extract_strided_slice %68 {offsets = [4, 0], sizes = [1, 64], strides = [1, 1]} : vector<9x64xf32> to vector<1x64xf32>
    %100 = vector.broadcast %99 : vector<1x64xf32> to vector<36x64xf32>
    %101 = arith.mulf %66, %100 : vector<36x64xf32>
    %102 = arith.addf %98, %101 : vector<36x64xf32>
    %103 = vector.extract_strided_slice %68 {offsets = [5, 0], sizes = [1, 64], strides = [1, 1]} : vector<9x64xf32> to vector<1x64xf32>
    %104 = vector.broadcast %103 : vector<1x64xf32> to vector<36x64xf32>
    %105 = arith.mulf %74, %104 : vector<36x64xf32>
    %106 = arith.addf %102, %105 : vector<36x64xf32>
    %107 = arith.addf %93, %106 : vector<36x64xf32>
    %cst_44 = arith.constant 0.000000e+00 : f32
    %108 = vector.broadcast %cst_44 : f32 to vector<36x64xf32>
    %109 = vector.extract_strided_slice %68 {offsets = [6, 0], sizes = [1, 64], strides = [1, 1]} : vector<9x64xf32> to vector<1x64xf32>
    %110 = vector.broadcast %109 : vector<1x64xf32> to vector<36x64xf32>
    %111 = arith.mulf %71, %110 : vector<36x64xf32>
    %112 = arith.addf %108, %111 : vector<36x64xf32>
    %113 = vector.extract_strided_slice %68 {offsets = [7, 0], sizes = [1, 64], strides = [1, 1]} : vector<9x64xf32> to vector<1x64xf32>
    %114 = vector.broadcast %113 : vector<1x64xf32> to vector<36x64xf32>
    %115 = arith.mulf %66, %114 : vector<36x64xf32>
    %116 = arith.addf %112, %115 : vector<36x64xf32>
    %117 = vector.extract_strided_slice %68 {offsets = [8, 0], sizes = [1, 64], strides = [1, 1]} : vector<9x64xf32> to vector<1x64xf32>
    %118 = vector.broadcast %117 : vector<1x64xf32> to vector<36x64xf32>
    %119 = arith.mulf %74, %118 : vector<36x64xf32>
    %120 = arith.addf %116, %119 : vector<36x64xf32>
    %c1_45 = arith.constant 1 : index
    %c0_46 = arith.constant 0 : index
    %c0_47 = arith.constant 0 : index
    %121 = vector.load %arg7[%c1_45, %c0_46, %c0_47] : memref<2x36x36xbf16, #tpu.memory_space<vmem>>, vector<1x36x36xbf16>
    %122 = vector.shape_cast %121 : vector<1x36x36xbf16> to vector<36x36xbf16>
    %123 = arith.truncf %120 : vector<36x64xf32> to vector<36x64xbf16>
    %cst_48 = arith.constant dense<0.000000e+00> : vector<36x64xf32>
    %124 = tpu.matmul %122, %123, %cst_48 {dimension_numbers = #tpu.dot_dimension_numbers<[1], [0], [0], [1], [0, 0, 1, 1], [], []>} : vector<36x36xbf16>, vector<36x64xbf16>, vector<36x64xf32> -> vector<36x64xf32>
    %125 = arith.addf %107, %124 : vector<36x64xf32>
    %126 = arith.addf %66, %125 : vector<36x64xf32>
    %127 = arith.truncf %126 : vector<36x64xf32> to vector<36x64xbf16>
    %c0_49 = arith.constant 0 : index
    %c0_50 = arith.constant 0 : index
    %128 = vector.load %arg9[%c0_49, %c0_50] : memref<64x128xbf16, #tpu.memory_space<vmem>>, vector<64x128xbf16>
    %cst_51 = arith.constant dense<0.000000e+00> : vector<36x128xf32>
    %129 = tpu.matmul %127, %128, %cst_51 {dimension_numbers = #tpu.dot_dimension_numbers<[1], [0], [0], [1], [0, 0, 1, 1], [], []>} : vector<36x64xbf16>, vector<64x128xbf16>, vector<36x128xf32> -> vector<36x128xf32>
    %c0_52 = arith.constant 0 : index
    %c0_53 = arith.constant 0 : index
    %130 = vector.load %arg10[%c0_52, %c0_53] : memref<1x128xf32, #tpu.memory_space<vmem>>, vector<1x128xf32>
    %131 = vector.broadcast %130 : vector<1x128xf32> to vector<36x128xf32>
    %132 = arith.addf %129, %131 : vector<36x128xf32>
    %cst_54 = arith.constant 0.000000e+00 : f32
    %cst_55 = arith.constant 6.000000e+00 : f32
    %133 = vector.broadcast %cst_54 : f32 to vector<36x128xf32>
    %134 = arith.maximumf %133, %132 : vector<36x128xf32>
    %135 = vector.broadcast %cst_55 : f32 to vector<36x128xf32>
    %136 = arith.minimumf %135, %134 : vector<36x128xf32>
    %137 = arith.truncf %136 : vector<36x128xf32> to vector<36x128xbf16>
    %c0_56 = arith.constant 0 : index
    %c0_57 = arith.constant 0 : index
    %138 = vector.load %arg11[%c0_56, %c0_57] : memref<128x64xbf16, #tpu.memory_space<vmem>>, vector<128x64xbf16>
    %cst_58 = arith.constant dense<0.000000e+00> : vector<36x64xf32>
    %139 = tpu.matmul %137, %138, %cst_58 {dimension_numbers = #tpu.dot_dimension_numbers<[1], [0], [0], [1], [0, 0, 1, 1], [], []>} : vector<36x128xbf16>, vector<128x64xbf16>, vector<36x64xf32> -> vector<36x64xf32>
    %c0_59 = arith.constant 0 : index
    %c0_60 = arith.constant 0 : index
    %140 = vector.load %arg12[%c0_59, %c0_60] : memref<1x64xf32, #tpu.memory_space<vmem>>, vector<1x64xf32>
    %141 = vector.broadcast %140 : vector<1x64xf32> to vector<36x64xf32>
    %142 = arith.addf %139, %141 : vector<36x64xf32>
    %143 = arith.addf %126, %142 : vector<36x64xf32>
    %144 = arith.truncf %143 : vector<36x64xf32> to vector<36x64xbf16>
    %c0_61 = arith.constant 0 : index
    %c0_62 = arith.constant 0 : index
    %c0_63 = arith.constant 0 : index
    %145 = vector.load %arg13[%c0_61, %c0_62, %c0_63] : memref<1x36x64xbf16, #tpu.memory_space<vmem>>, vector<1x36x64xbf16>
    %146 = vector.shape_cast %145 : vector<1x36x64xbf16> to vector<36x64xbf16>
    %147 = vector.shape_cast %144 : vector<36x64xbf16> to vector<1x36x64xbf16>
    tpu.vector_store %arg13[%c0_61, %c0_62, %c0_63], %147 {strides = array<i32>} : memref<1x36x64xbf16, #tpu.memory_space<vmem>>, vector<1x36x64xbf16>,
    return
  }
  func.func @transform_0(%arg0: i32) -> (i32, i32, i32) {
    %c0_i32 = arith.constant 0 : i32
    %c0_i32_0 = arith.constant 0 : i32
    %c0_i32_1 = arith.constant 0 : i32
    return %arg0, %c0_i32, %c0_i32_0 : i32, i32, i32
  }
  func.func @transform_1(%arg0: i32) -> (i32, i32) {
    %c0_i32 = arith.constant 0 : i32
    %c0_i32_0 = arith.constant 0 : i32
    %c0_i32_1 = arith.constant 0 : i32
    return %c0_i32, %c0_i32_0 : i32, i32
  }
  func.func @transform_2(%arg0: i32) -> (i32, i32, i32) {
    %c0_i32 = arith.constant 0 : i32
    %c0_i32_0 = arith.constant 0 : i32
    %c0_i32_1 = arith.constant 0 : i32
    %c0_i32_2 = arith.constant 0 : i32
    return %c0_i32, %c0_i32_0, %c0_i32_1 : i32, i32, i32
  }
  func.func @transform_3(%arg0: i32) -> (i32, i32) {
    %c0_i32 = arith.constant 0 : i32
    %c0_i32_0 = arith.constant 0 : i32
    %c0_i32_1 = arith.constant 0 : i32
    return %c0_i32, %c0_i32_0 : i32, i32
  }
  func.func @transform_4(%arg0: i32) -> (i32, i32) {
    %c0_i32 = arith.constant 0 : i32
    %c0_i32_0 = arith.constant 0 : i32
    %c0_i32_1 = arith.constant 0 : i32
    return %c0_i32, %c0_i32_0 : i32, i32
  }
  func.func @transform_5(%arg0: i32) -> (i32, i32, i32) {
    %c0_i32 = arith.constant 0 : i32
    %c0_i32_0 = arith.constant 0 : i32
    %c0_i32_1 = arith.constant 0 : i32
    %c0_i32_2 = arith.constant 0 : i32
    return %c0_i32, %c0_i32_0, %c0_i32_1 : i32, i32, i32
  }
  func.func @transform_6(%arg0: i32) -> (i32, i32, i32) {
    %c0_i32 = arith.constant 0 : i32
    %c0_i32_0 = arith.constant 0 : i32
    %c0_i32_1 = arith.constant 0 : i32
    %c0_i32_2 = arith.constant 0 : i32
    return %c0_i32, %c0_i32_0, %c0_i32_1 : i32, i32, i32
  }
  func.func @transform_7(%arg0: i32) -> (i32, i32) {
    %c0_i32 = arith.constant 0 : i32
    %c0_i32_0 = arith.constant 0 : i32
    %c0_i32_1 = arith.constant 0 : i32
    return %c0_i32, %c0_i32_0 : i32, i32
  }
  func.func @transform_8(%arg0: i32) -> (i32, i32) {
    %c0_i32 = arith.constant 0 : i32
    %c0_i32_0 = arith.constant 0 : i32
    %c0_i32_1 = arith.constant 0 : i32
    return %c0_i32, %c0_i32_0 : i32, i32
  }
  func.func @transform_9(%arg0: i32) -> (i32, i32) {
    %c0_i32 = arith.constant 0 : i32
    %c0_i32_0 = arith.constant 0 : i32
    %c0_i32_1 = arith.constant 0 : i32
    return %c0_i32, %c0_i32_0 : i32, i32
  }
  func.func @transform_10(%arg0: i32) -> (i32, i32) {
    %c0_i32 = arith.constant 0 : i32
    %c0_i32_0 = arith.constant 0 : i32
    %c0_i32_1 = arith.constant 0 : i32
    return %c0_i32, %c0_i32_0 : i32, i32
  }
  func.func @transform_11(%arg0: i32) -> (i32, i32) {
    %c0_i32 = arith.constant 0 : i32
    %c0_i32_0 = arith.constant 0 : i32
    %c0_i32_1 = arith.constant 0 : i32
    return %c0_i32, %c0_i32_0 : i32, i32
  }
  func.func @transform_12(%arg0: i32) -> (i32, i32, i32) {
    %c0_i32 = arith.constant 0 : i32
    %c0_i32_0 = arith.constant 0 : i32
    %c0_i32_1 = arith.constant 0 : i32
    return %arg0, %c0_i32, %c0_i32_0 : i32, i32, i32
  }
}

</mosaic_0001>

<llo_original>
// kernel: _lambda_.11
$region0: #{_lambda_.11}
  #allocation0 [shape = 'u32[]', space=smem, size = 0x4, offset = 0x4, fixed_abs, tag = 'smem constant byte address 0x4 - core index']
  #allocation1 [shape = 'u32[72,128]{1,0:T(1,128)}', space=vmem, size = 0x9000, scoped, tag = 'internal scratch']
  %s0 = inlined_call_operand.vmem [shape: bf16[1152,27], index: 0, kind: input, shape index: {}]
  %s1 = inlined_call_operand.vmem [shape: bf16[27,3], index: 1, kind: input, shape index: {}]
  %s2 = inlined_call_operand.vmem [shape: f32[1,3], index: 2, kind: input, shape index: {}]
  %s3 = inlined_call_operand.vmem [shape: bf16[1152,3], index: 3, kind: output, shape index: {}]
  %s4 = sld [smem:[#allocation0]]
  $region45: #{_lambda_.11} parent=0
    _
  %s6 = ssub.s32 1, %s4
  %s7 = scalar_select 0, %s6, %s4
  loop: start=0, step=1, limit=4
  $region2: #{_lambda_.11} parent=0 // loop_pre_header
    _
  $region3: #{_lambda_.11} parent=0 // loop_header
    %s9 = sphi 0, %s13
    %p10 = scmp.ge.s32.totalorder %s9, 4
    %s19 = sphi 0, %s21
    %s22 = sphi 0, %s19
    %s23 = sphi 0, %s22
    %s39 = sphi 0, %s23
    %s43 = sphi 0, %s43
    %s45 = sphi 0, %s43
    %s46 = sphi 0, %s45
    %s60 = sphi 0, %s46
    %s64 = sphi 0, %s64
    %s66 = sphi 0, %s64
    %s67 = sphi 0, %s66
    %s81 = sphi 0, %s67
    %s87 = sphi 0, %s89
    %s90 = sphi 0, %s87
    %s91 = sphi 0, %s90
    %s107 = sphi 0, %s91
  $region4: #{_lambda_.11} parent=0 // loop_header_branch
    %12 = sbr.rel (%p10) target = $region8
  $region5: #{_lambda_.11} parent=0 // loop_body
    %s14 = ssub.s32 %s9, 1
    %s15 = ssub.s32 %s9, 2
    %s16 = sadd.s32 %s9, 1
    %s17 = ssub.s32 %s9, %s16
    %p18 = scmp.eq.s32.totalorder %s17, 0
    %s20 = sadd.s32 %s19, 1
    %s21 = scalar_select %p18, %s19, %s20
    %p24 = pneg %p18
    %p25 = scmp.eq.s32.totalorder %s9, 1
    %p26 = por %p24, %p25
    %p27 = scmp.ne.s32.totalorder %s19, %s22
    %p28 = scmp.eq.s32.totalorder %s9, 0
    %p29 = por %p27, %p28
    %p30 = scmp.ne.s32.totalorder %s19, %s22
    %p31 = scmp.eq.s32.totalorder %s14, 1
    %p32 = por %p30, %p31
    %p33 = scmp.ne.s32.totalorder %s22, %s23
    %p34 = scmp.eq.s32.totalorder %s14, 0
    %p35 = por %p33, %p34
    %p36 = scmp.ne.s32.totalorder %s22, %s23
    %p37 = scmp.eq.s32.totalorder %s15, 1
    %p38 = por %p36, %p37
    %p40 = scmp.ne.s32.totalorder %s23, %s39
    %p41 = scmp.eq.s32.totalorder %s15, 0
    %p42 = por %p40, %p41
    %s44 = sadd.s32 %s43, 1
    %p47 = scmp.eq.s32.totalorder %s9, 1
    %p48 = scmp.ne.s32.totalorder %s43, %s45
    %p49 = scmp.eq.s32.totalorder %s9, 0
    %p50 = por %p48, %p49
    %p51 = scmp.ne.s32.totalorder %s43, %s45
    %p52 = scmp.eq.s32.totalorder %s14, 1
    %p53 = por %p51, %p52
    %p54 = scmp.ne.s32.totalorder %s45, %s46
    %p55 = scmp.eq.s32.totalorder %s14, 0
    %p56 = por %p54, %p55
    %p57 = scmp.ne.s32.totalorder %s45, %s46
    %p58 = scmp.eq.s32.totalorder %s15, 1
    %p59 = por %p57, %p58
    %p61 = scmp.ne.s32.totalorder %s46, %s60
    %p62 = scmp.eq.s32.totalorder %s15, 0
    %p63 = por %p61, %p62
    %s65 = sadd.s32 %s64, 1
    %p68 = scmp.eq.s32.totalorder %s9, 1
    %p69 = scmp.ne.s32.totalorder %s64, %s66
    %p70 = scmp.eq.s32.totalorder %s9, 0
    %p71 = por %p69, %p70
    %p72 = scmp.ne.s32.totalorder %s64, %s66
    %p73 = scmp.eq.s32.totalorder %s14, 1
    %p74 = por %p72, %p73
    %p75 = scmp.ne.s32.totalorder %s66, %s67
    %p76 = scmp.eq.s32.totalorder %s14, 0
    %p77 = por %p75, %p76
    %p78 = scmp.ne.s32.totalorder %s66, %s67
    %p79 = scmp.eq.s32.totalorder %s15, 1
    %p80 = por %p78, %p79
    %p82 = scmp.ne.s32.totalorder %s67, %s81
    %p83 = scmp.eq.s32.totalorder %s15, 0
    %p84 = por %p82, %p83
    %s85 = ssub.s32 %s9, %s16
    %p86 = scmp.eq.s32.totalorder %s85, 0
    %s88 = sadd.s32 %s87, 1
    %s89 = scalar_select %p86, %s87, %s88
    %p92 = pneg %p86
    %p93 = scmp.eq.s32.totalorder %s9, 1
    %p94 = por %p92, %p93
    %p95 = scmp.ne.s32.totalorder %s87, %s90
    %p96 = scmp.eq.s32.totalorder %s9, 0
    %p97 = por %p95, %p96
    %p98 = scmp.ne.s32.totalorder %s87, %s90
    %p99 = scmp.eq.s32.totalorder %s14, 1
    %p100 = por %p98, %p99
    %p101 = scmp.ne.s32.totalorder %s90, %s91
    %p102 = scmp.eq.s32.totalorder %s14, 0
    %p103 = por %p101, %p102
    %p104 = scmp.ne.s32.totalorder %s90, %s91
    %p105 = scmp.eq.s32.totalorder %s15, 1
    %p106 = por %p104, %p105
    %p108 = scmp.ne.s32.totalorder %s91, %s107
    %p109 = scmp.eq.s32.totalorder %s15, 0
    %p110 = por %p108, %p109
    %p111 = scmp.le.s32.totalorder 1, %s9
    %p112 = scmp.lt.s32.totalorder %s9, 3
    %p113 = pnand %p111, %p112
    %p114 = pneg %p113
    // Predicated region
    $region9: #{_lambda_.11} parent=5 // pred_check
      _
    $region10: #{_lambda_.11} parent=5 // pred_check_branch
      %116 = sbr.rel (%p113) target = $region12
    $region11: #{_lambda_.11} parent=5 // pred_region
      %s117 = ssub.s32 %s9, 1
      // Predicated region
      $region13: #{_lambda_.11} parent=11 // pred_check
        %p118 = pneg %p56
      $region14: #{_lambda_.11} parent=11 // pred_check_branch
        %120 = sbr.rel (%p118) target = $region16
      $region15: #{_lambda_.11} parent=11 // pred_region
        _
      $region16: #{_lambda_.11} parent=11 // pred_fallthru
        _
      // Predicated region
      $region17: #{_lambda_.11} parent=11 // pred_check
        %p121 = pneg %p77
      $region18: #{_lambda_.11} parent=11 // pred_check_branch
        %123 = sbr.rel (%p121) target = $region20
      $region19: #{_lambda_.11} parent=11 // pred_region
        _
      $region20: #{_lambda_.11} parent=11 // pred_fallthru
        _
    $region12: #{_lambda_.11} parent=5 // pred_fallthru
      _
    %p124 = scmp.lt.s32.totalorder %s9, 2
    // Predicated region
    $region21: #{_lambda_.11} parent=5 // pred_check
      %p125 = pneg %p124
    $region22: #{_lambda_.11} parent=5 // pred_check_branch
      %127 = sbr.rel (%p125) target = $region24
    $region23: #{_lambda_.11} parent=5 // pred_region
      // Predicated region
      $region25: #{_lambda_.11} parent=23 // pred_check
        %p128 = pneg %p29
      $region26: #{_lambda_.11} parent=23 // pred_check_branch
        %130 = sbr.rel (%p128) target = $region28
      $region27: #{_lambda_.11} parent=23 // pred_region
        %s131 = smul.u32 72, %s9
        %p132 = scmp.lt.s32.totalorder %s131, 143
        %s133 = scalar_select %p132, %s131, 143
        %s134 = smul.addr %s133, 4
        %s135 = scalar_lea.vmem %s0, %s134
        %s136 = smul.u32 72, %s9
      $region28: #{_lambda_.11} parent=23 // pred_fallthru
        _
    $region24: #{_lambda_.11} parent=5 // pred_fallthru
      _
    %p137 = scmp.le.s32.totalorder 1, %s9
    %p138 = scmp.lt.s32.totalorder %s9, 3
    %p139 = pnand %p137, %p138
    %p140 = pneg %p139
    // Predicated region
    $region29: #{_lambda_.11} parent=5 // pred_check
      _
    $region30: #{_lambda_.11} parent=5 // pred_check_branch
      %142 = sbr.rel (%p139) target = $region32
    $region31: #{_lambda_.11} parent=5 // pred_region
      %s143 = ssub.s32 %s9, 1
      %s144 = smul.u32 72, %s14
      %p145 = scmp.lt.s32.totalorder %s144, 143
      %s146 = scalar_select %p145, %s144, 143
      %s147 = smul.addr %s146, 4
      %s148 = scalar_lea.vmem %s0, %s147
      %p149 = pneg %p35
      %p150 = pneg %p32
      %p151 = pneg %p56
      %p152 = pneg %p53
      %p153 = pneg %p77
      %p154 = pneg %p74
      %p155 = pneg %p103
      %p156 = pneg %p100
      %s157 = smul.u32 72, %s14
      %p158 = scmp.lt.s32.totalorder %s157, 143
      %s159 = scalar_select %p158, %s157, 143
      %s160 = smul.addr %s159, 4
      %s161 = scalar_lea.vmem %s3, %s160
      %s162 = smul.u32 72, %s14
      %p163 = scmp.lt.s32.totalorder %s162, 143
      %s164 = scalar_select %p163, %s162, 143
      %s165 = smul.addr %s164, 4
      %s166 = scalar_lea.vmem %s0, %s165
      %s167 = smul.u32 72, %s14
      %s168 = smul.u32 72, %s14
      %p169 = scmp.lt.s32.totalorder %s168, 143
      %s170 = scalar_select %p169, %s168, 143
      %s171 = smul.addr %s170, 4
      %s172 = scalar_lea.vmem %s3, %s171
      %s173 = smul.u32 72, %s14
      %v175 = vld [vmem:[%s166] sm:$0xf]
      %v176 = vld [vmem:[%s166 + $0x4] sm:$0xf]
      %v177 = vld [vmem:[%s166 + $0x8] sm:$0xf]
      %v178 = vld [vmem:[%s166 + $0xc] sm:$0xf]
      %v179 = vld [vmem:[%s166 + $0x10] sm:$0xf]
      %v180 = vld [vmem:[%s166 + $0x14] sm:$0xf]
      %v181 = vld [vmem:[%s166 + $0x18] sm:$0xf]
      %v182 = vld [vmem:[%s166 + $0x1c] sm:$0xf]
      %v183 = vld [vmem:[%s166 + $0x20] sm:$0xf]
      %v184 = vld [vmem:[%s166 + $0x24] sm:$0xf]
      %v185 = vld [vmem:[%s166 + $0x28] sm:$0xf]
      %v186 = vld [vmem:[%s166 + $0x2c] sm:$0xf]
      %v187 = vld [vmem:[%s166 + $0x30] sm:$0xf]
      %v188 = vld [vmem:[%s166 + $0x34] sm:$0xf]
      %v189 = vld [vmem:[%s166 + $0x38] sm:$0xf]
      %v190 = vld [vmem:[%s166 + $0x3c] sm:$0xf]
      %v191 = vld [vmem:[%s166 + $0x40] sm:$0xf]
      %v192 = vld [vmem:[%s166 + $0x44] sm:$0xf]
      %v193 = vld [vmem:[%s166 + $0x48] sm:$0xf]
      %v194 = vld [vmem:[%s166 + $0x4c] sm:$0xf]
      %v195 = vld [vmem:[%s166 + $0x50] sm:$0xf]
      %v196 = vld [vmem:[%s166 + $0x54] sm:$0xf]
      %v197 = vld [vmem:[%s166 + $0x58] sm:$0xf]
      %v198 = vld [vmem:[%s166 + $0x5c] sm:$0xf]
      %v199 = vld [vmem:[%s166 + $0x60] sm:$0xf]
      %v200 = vld [vmem:[%s166 + $0x64] sm:$0xf]
      %v201 = vld [vmem:[%s166 + $0x68] sm:$0xf]
      %v202 = vld [vmem:[%s166 + $0x6c] sm:$0xf]
      %v203 = vld [vmem:[%s166 + $0x70] sm:$0xf]
      %v204 = vld [vmem:[%s166 + $0x74] sm:$0xf]
      %v205 = vld [vmem:[%s166 + $0x78] sm:$0xf]
      %v206 = vld [vmem:[%s166 + $0x7c] sm:$0xf]
      %v207 = vld [vmem:[%s166 + $0x80] sm:$0xf]
      %v208 = vld [vmem:[%s166 + $0x84] sm:$0xf]
      %v209 = vld [vmem:[%s166 + $0x88] sm:$0xf]
      %v210 = vld [vmem:[%s166 + $0x8c] sm:$0xf]
      %v211 = vld [vmem:[%s166 + $0x90] sm:$0xf]
      %v212 = vld [vmem:[%s166 + $0x94] sm:$0xf]
      %v213 = vld [vmem:[%s166 + $0x98] sm:$0xf]
      %v214 = vld [vmem:[%s166 + $0x9c] sm:$0xf]
      %v215 = vld [vmem:[%s166 + $0xa0] sm:$0xf]
      %v216 = vld [vmem:[%s166 + $0xa4] sm:$0xf]
      %v217 = vld [vmem:[%s166 + $0xa8] sm:$0xf]
      %v218 = vld [vmem:[%s166 + $0xac] sm:$0xf]
      %v219 = vld [vmem:[%s166 + $0xb0] sm:$0xf]
      %v220 = vld [vmem:[%s166 + $0xb4] sm:$0xf]
      %v221 = vld [vmem:[%s166 + $0xb8] sm:$0xf]
      %v222 = vld [vmem:[%s166 + $0xbc] sm:$0xf]
      %v223 = vld [vmem:[%s166 + $0xc0] sm:$0xf]
      %v224 = vld [vmem:[%s166 + $0xc4] sm:$0xf]
      %v225 = vld [vmem:[%s166 + $0xc8] sm:$0xf]
      %v226 = vld [vmem:[%s166 + $0xcc] sm:$0xf]
      %v227 = vld [vmem:[%s166 + $0xd0] sm:$0xf]
      %v228 = vld [vmem:[%s166 + $0xd4] sm:$0xf]
      %v229 = vld [vmem:[%s166 + $0xd8] sm:$0xf]
      %v230 = vld [vmem:[%s166 + $0xdc] sm:$0xf]
      %v231 = vld [vmem:[%s166 + $0xe0] sm:$0xf]
      %v232 = vld [vmem:[%s166 + $0xe4] sm:$0xf]
      %v233 = vld [vmem:[%s166 + $0xe8] sm:$0xf]
      %v234 = vld [vmem:[%s166 + $0xec] sm:$0xf]
      %v235 = vld [vmem:[%s166 + $0xf0] sm:$0xf]
      %v236 = vld [vmem:[%s166 + $0xf4] sm:$0xf]
      %v237 = vld [vmem:[%s166 + $0xf8] sm:$0xf]
      %v238 = vld [vmem:[%s166 + $0xfc] sm:$0xf]
      %v239 = vld [vmem:[%s166 + $0x100] sm:$0xf]
      %v240 = vld [vmem:[%s166 + $0x104] sm:$0xf]
      %v241 = vld [vmem:[%s166 + $0x108] sm:$0xf]
      %v242 = vld [vmem:[%s166 + $0x10c] sm:$0xf]
      %v243 = vld [vmem:[%s166 + $0x110] sm:$0xf]
      %v244 = vld [vmem:[%s166 + $0x114] sm:$0xf]
      %v245 = vld [vmem:[%s166 + $0x118] sm:$0xf]
      %v246 = vld [vmem:[%s166 + $0x11c] sm:$0xf]
      %v247 = vld [vmem:[%s1] sm:$0xf]
      %v248 = vld [vmem:[%s1 + $0x4] sm:$0xf]
      %v249 = vld [vmem:[%s1 + $0x8] sm:$0xf]
      %v250 = vld [vmem:[%s1 + $0xc] sm:$0x3]
      %v251 = vld [vmem:[%s2] sm:$0x1]
      %v253 = vperm.slane %v251, 0
      %v327 = vunpack.c.l.b16 %v175
      %v328 = vunpack.c.l.b16 %v176
      %v329 = vunpack.c.l.b16 %v177
      %v330 = vunpack.c.l.b16 %v178
      %v331 = vunpack.c.l.b16 %v179
      %v332 = vunpack.c.l.b16 %v180
      %v333 = vunpack.c.l.b16 %v181
      %v334 = vunpack.c.l.b16 %v182
      %v335 = vunpack.c.l.b16 %v183
      %v336 = vunpack.c.l.b16 %v184
      %v337 = vunpack.c.l.b16 %v185
      %v338 = vunpack.c.l.b16 %v186
      %v339 = vunpack.c.l.b16 %v187
      %v340 = vunpack.c.l.b16 %v188
      %v341 = vunpack.c.l.b16 %v189
      %v342 = vunpack.c.l.b16 %v190
      %v343 = vunpack.c.l.b16 %v191
      %v344 = vunpack.c.l.b16 %v192
      %v345 = vunpack.c.l.b16 %v193
      %v346 = vunpack.c.l.b16 %v194
      %v347 = vunpack.c.l.b16 %v195
      %v348 = vunpack.c.l.b16 %v196
      %v349 = vunpack.c.l.b16 %v197
      %v350 = vunpack.c.l.b16 %v198
      %v351 = vunpack.c.l.b16 %v199
      %v352 = vunpack.c.l.b16 %v200
      %v353 = vunpack.c.l.b16 %v201
      %v354 = vunpack.c.l.b16 %v202
      %v355 = vunpack.c.l.b16 %v203
      %v356 = vunpack.c.l.b16 %v204
      %v357 = vunpack.c.l.b16 %v205
      %v358 = vunpack.c.l.b16 %v206
      %v359 = vunpack.c.l.b16 %v207
      %v360 = vunpack.c.l.b16 %v208
      %v361 = vunpack.c.l.b16 %v209
      %v362 = vunpack.c.l.b16 %v210
      %v363 = vunpack.c.l.b16 %v211
      %v364 = vunpack.c.l.b16 %v212
      %v365 = vunpack.c.l.b16 %v213
      %v366 = vunpack.c.l.b16 %v214
      %v367 = vunpack.c.l.b16 %v215
      %v368 = vunpack.c.l.b16 %v216
      %v369 = vunpack.c.l.b16 %v217
      %v370 = vunpack.c.l.b16 %v218
      %v371 = vunpack.c.l.b16 %v219
      %v372 = vunpack.c.l.b16 %v220
      %v373 = vunpack.c.l.b16 %v221
      %v374 = vunpack.c.l.b16 %v222
      %v375 = vunpack.c.l.b16 %v223
      %v376 = vunpack.c.l.b16 %v224
      %v377 = vunpack.c.l.b16 %v225
      %v378 = vunpack.c.l.b16 %v226
      %v379 = vunpack.c.l.b16 %v227
      %v380 = vunpack.c.l.b16 %v228
      %v381 = vunpack.c.l.b16 %v229
      %v382 = vunpack.c.l.b16 %v230
      %v383 = vunpack.c.l.b16 %v231
      %v384 = vunpack.c.l.b16 %v232
      %v385 = vunpack.c.l.b16 %v233
      %v386 = vunpack.c.l.b16 %v234
      %v387 = vunpack.c.l.b16 %v235
      %v388 = vunpack.c.l.b16 %v236
      %v389 = vunpack.c.l.b16 %v237
      %v390 = vunpack.c.l.b16 %v238
      %v391 = vunpack.c.l.b16 %v239
      %v392 = vunpack.c.l.b16 %v240
      %v393 = vunpack.c.l.b16 %v241
      %v394 = vunpack.c.l.b16 %v242
      %v395 = vunpack.c.l.b16 %v243
      %v396 = vunpack.c.l.b16 %v244
      %v397 = vunpack.c.l.b16 %v245
      %v398 = vunpack.c.l.b16 %v246
      %v399 = vpack.c.b16 %v328, %v327
      %v400 = vpack.c.b16 %v330, %v329
      %v401 = vpack.c.b16 %v332, %v331
      %v402 = vpack.c.b16 %v334, %v333
      %v403 = vpack.c.b16 %v336, %v335
      %v404 = vpack.c.b16 %v338, %v337
      %v405 = vpack.c.b16 %v340, %v339
      %v406 = vpack.c.b16 %v342, %v341
      %v407 = vpack.c.b16 %v344, %v343
      %v408 = vpack.c.b16 %v346, %v345
      %v409 = vpack.c.b16 %v348, %v347
      %v410 = vpack.c.b16 %v350, %v349
      %v411 = vpack.c.b16 %v352, %v351
      %v412 = vpack.c.b16 %v354, %v353
      %v413 = vpack.c.b16 %v356, %v355
      %v414 = vpack.c.b16 %v358, %v357
      %v415 = vpack.c.b16 %v360, %v359
      %v416 = vpack.c.b16 %v362, %v361
      %v417 = vpack.c.b16 %v364, %v363
      %v418 = vpack.c.b16 %v366, %v365
      %v419 = vpack.c.b16 %v368, %v367
      %v420 = vpack.c.b16 %v370, %v369
      %v421 = vpack.c.b16 %v372, %v371
      %v422 = vpack.c.b16 %v374, %v373
      %v423 = vpack.c.b16 %v376, %v375
      %v424 = vpack.c.b16 %v378, %v377
      %v425 = vpack.c.b16 %v380, %v379
      %v426 = vpack.c.b16 %v382, %v381
      %v427 = vpack.c.b16 %v384, %v383
      %v428 = vpack.c.b16 %v386, %v385
      %v429 = vpack.c.b16 %v388, %v387
      %v430 = vpack.c.b16 %v390, %v389
      %v431 = vpack.c.b16 %v392, %v391
      %v432 = vpack.c.b16 %v394, %v393
      %v433 = vpack.c.b16 %v396, %v395
      %v434 = vpack.c.b16 %v398, %v397
      %v439 = vunpack.c.l.b16 %v247
      %v440 = vunpack.c.l.b16 %v248
      %v441 = vunpack.c.l.b16 %v249
      %v442 = vunpack.c.l.b16 %v250
      %v443 = vpack.c.b16 %v440, %v439
      %v444 = vpack.c.b16 %v442, %v441
      %vm446 = vcmask 220160
      %v448 = vsel %vm446, %v399, 0
      %v451 = vsel %vm446, %v400, 0
      %v454 = vsel %vm446, %v401, 0
      %v457 = vsel %vm446, %v402, 0
      %v460 = vsel %vm446, %v403, 0
      %v463 = vsel %vm446, %v404, 0
      %v466 = vsel %vm446, %v405, 0
      %v469 = vsel %vm446, %v406, 0
      %v472 = vsel %vm446, %v407, 0
      %v475 = vsel %vm446, %v408, 0
      %v478 = vsel %vm446, %v409, 0
      %v481 = vsel %vm446, %v410, 0
      %v484 = vsel %vm446, %v411, 0
      %v487 = vsel %vm446, %v412, 0
      %v490 = vsel %vm446, %v413, 0
      %v493 = vsel %vm446, %v414, 0
      %v496 = vsel %vm446, %v415, 0
      %v499 = vsel %vm446, %v416, 0
      %v502 = vsel %vm446, %v417, 0
      %v505 = vsel %vm446, %v418, 0
      %v508 = vsel %vm446, %v419, 0
      %v511 = vsel %vm446, %v420, 0
      %v514 = vsel %vm446, %v421, 0
      %v517 = vsel %vm446, %v422, 0
      %v520 = vsel %vm446, %v423, 0
      %v523 = vsel %vm446, %v424, 0
      %v526 = vsel %vm446, %v425, 0
      %v529 = vsel %vm446, %v426, 0
      %v532 = vsel %vm446, %v427, 0
      %v535 = vsel %vm446, %v428, 0
      %v538 = vsel %vm446, %v429, 0
      %v541 = vsel %vm446, %v430, 0
      %v544 = vsel %vm446, %v431, 0
      %v547 = vsel %vm446, %v432, 0
      %v550 = vsel %vm446, %v433, 0
      %v553 = vsel %vm446, %v434, 0
      %vm555 = vcmask 1044480
      %vm556 = vcmask 1045504
      %v557 = vsel %vm555, 4294967295, 65535
      %v558 = vsel %vm556, %v557, 0
      %v560 = vand.u32 %v444, %v558
      %562 = vmatpush.bf16.msra.mxu0 0
      %563 = vmatpush.bf16.msra.mxu0 0
      %564 = vmatpush.bf16.msra.mxu0 0
      %565 = vmatpush.bf16.msra.mxu0 0
      %566 = vmatpush.bf16.msra.mxu0 0
      %567 = vmatpush.bf16.msra.mxu0 0
      %568 = vmatpush.bf16.msra.mxu0 %v560
      %569 = vmatpush.bf16.msra.mxu0 %v443
      %570 = vmatmul.bf16.gmra.mxu0 %v448
      %v571 = vpop.f32.mrf.mxu0
      %v572 = vadd.f32 %v253, %v571
      %v573 = vpop.f32.mrf.mxu0
      %v574 = vadd.f32 %v253, %v573
      %575 = vmatmul.bf16.gmra.mxu0 %v451
      %v576 = vpop.f32.mrf.mxu0
      %v577 = vadd.f32 %v253, %v576
      %v578 = vpop.f32.mrf.mxu0
      %v579 = vadd.f32 %v253, %v578
      %580 = vmatmul.bf16.gmra.mxu0 %v454
      %v581 = vpop.f32.mrf.mxu0
      %v582 = vadd.f32 %v253, %v581
      %v583 = vpop.f32.mrf.mxu0
      %v584 = vadd.f32 %v253, %v583
      %585 = vmatmul.bf16.gmra.mxu0 %v457
      %v586 = vpop.f32.mrf.mxu0
      %v587 = vadd.f32 %v253, %v586
      %v588 = vpop.f32.mrf.mxu0
      %v589 = vadd.f32 %v253, %v588
      %590 = vmatmul.bf16.gmra.mxu0 %v460
      %v591 = vpop.f32.mrf.mxu0
      %v592 = vadd.f32 %v253, %v591
      %v593 = vpop.f32.mrf.mxu0
      %v594 = vadd.f32 %v253, %v593
      %595 = vmatmul.bf16.gmra.mxu0 %v463
      %v596 = vpop.f32.mrf.mxu0
      %v597 = vadd.f32 %v253, %v596
      %v598 = vpop.f32.mrf.mxu0
      %v599 = vadd.f32 %v253, %v598
      %600 = vmatmul.bf16.gmra.mxu0 %v466
      %v601 = vpop.f32.mrf.mxu0
      %v602 = vadd.f32 %v253, %v601
      %v603 = vpop.f32.mrf.mxu0
      %v604 = vadd.f32 %v253, %v603
      %605 = vmatmul.bf16.gmra.mxu0 %v469
      %v606 = vpop.f32.mrf.mxu0
      %v607 = vadd.f32 %v253, %v606
      %v608 = vpop.f32.mrf.mxu0
      %v609 = vadd.f32 %v253, %v608
      %610 = vmatmul.bf16.gmra.mxu0 %v472
      %v611 = vpop.f32.mrf.mxu0
      %v612 = vadd.f32 %v253, %v611
      %v613 = vpop.f32.mrf.mxu0
      %v614 = vadd.f32 %v253, %v613
      %615 = vmatmul.bf16.gmra.mxu0 %v475
      %v616 = vpop.f32.mrf.mxu0
      %v617 = vadd.f32 %v253, %v616
      %v618 = vpop.f32.mrf.mxu0
      %v619 = vadd.f32 %v253, %v618
      %620 = vmatmul.bf16.gmra.mxu0 %v478
      %v621 = vpop.f32.mrf.mxu0
      %v622 = vadd.f32 %v253, %v621
      %v623 = vpop.f32.mrf.mxu0
      %v624 = vadd.f32 %v253, %v623
      %625 = vmatmul.bf16.gmra.mxu0 %v481
      %v626 = vpop.f32.mrf.mxu0
      %v627 = vadd.f32 %v253, %v626
      %v628 = vpop.f32.mrf.mxu0
      %v629 = vadd.f32 %v253, %v628
      %630 = vmatmul.bf16.gmra.mxu0 %v484
      %v631 = vpop.f32.mrf.mxu0
      %v632 = vadd.f32 %v253, %v631
      %v633 = vpop.f32.mrf.mxu0
      %v634 = vadd.f32 %v253, %v633
      %635 = vmatmul.bf16.gmra.mxu0 %v487
      %v636 = vpop.f32.mrf.mxu0
      %v637 = vadd.f32 %v253, %v636
      %v638 = vpop.f32.mrf.mxu0
      %v639 = vadd.f32 %v253, %v638
      %640 = vmatmul.bf16.gmra.mxu0 %v490
      %v641 = vpop.f32.mrf.mxu0
      %v642 = vadd.f32 %v253, %v641
      %v643 = vpop.f32.mrf.mxu0
      %v644 = vadd.f32 %v253, %v643
      %645 = vmatmul.bf16.gmra.mxu0 %v493
      %v646 = vpop.f32.mrf.mxu0
      %v647 = vadd.f32 %v253, %v646
      %v648 = vpop.f32.mrf.mxu0
      %v649 = vadd.f32 %v253, %v648
      %650 = vmatmul.bf16.gmra.mxu0 %v496
      %v651 = vpop.f32.mrf.mxu0
      %v652 = vadd.f32 %v253, %v651
      %v653 = vpop.f32.mrf.mxu0
      %v654 = vadd.f32 %v253, %v653
      %655 = vmatmul.bf16.gmra.mxu0 %v499
      %v656 = vpop.f32.mrf.mxu0
      %v657 = vadd.f32 %v253, %v656
      %v658 = vpop.f32.mrf.mxu0
      %v659 = vadd.f32 %v253, %v658
      %660 = vmatmul.bf16.gmra.mxu0 %v502
      %v661 = vpop.f32.mrf.mxu0
      %v662 = vadd.f32 %v253, %v661
      %v663 = vpop.f32.mrf.mxu0
      %v664 = vadd.f32 %v253, %v663
      %665 = vmatmul.bf16.gmra.mxu0 %v505
      %v666 = vpop.f32.mrf.mxu0
      %v667 = vadd.f32 %v253, %v666
      %v668 = vpop.f32.mrf.mxu0
      %v669 = vadd.f32 %v253, %v668
      %670 = vmatmul.bf16.gmra.mxu0 %v508
      %v671 = vpop.f32.mrf.mxu0
      %v672 = vadd.f32 %v253, %v671
      %v673 = vpop.f32.mrf.mxu0
      %v674 = vadd.f32 %v253, %v673
      %675 = vmatmul.bf16.gmra.mxu0 %v511
      %v676 = vpop.f32.mrf.mxu0
      %v677 = vadd.f32 %v253, %v676
      %v678 = vpop.f32.mrf.mxu0
      %v679 = vadd.f32 %v253, %v678
      %680 = vmatmul.bf16.gmra.mxu0 %v514
      %v681 = vpop.f32.mrf.mxu0
      %v682 = vadd.f32 %v253, %v681
      %v683 = vpop.f32.mrf.mxu0
      %v684 = vadd.f32 %v253, %v683
      %685 = vmatmul.bf16.gmra.mxu0 %v517
      %v686 = vpop.f32.mrf.mxu0
      %v687 = vadd.f32 %v253, %v686
      %v688 = vpop.f32.mrf.mxu0
      %v689 = vadd.f32 %v253, %v688
      %690 = vmatmul.bf16.gmra.mxu0 %v520
      %v691 = vpop.f32.mrf.mxu0
      %v692 = vadd.f32 %v253, %v691
      %v693 = vpop.f32.mrf.mxu0
      %v694 = vadd.f32 %v253, %v693
      %695 = vmatmul.bf16.gmra.mxu0 %v523
      %v696 = vpop.f32.mrf.mxu0
      %v697 = vadd.f32 %v253, %v696
      %v698 = vpop.f32.mrf.mxu0
      %v699 = vadd.f32 %v253, %v698
      %700 = vmatmul.bf16.gmra.mxu0 %v526
      %v701 = vpop.f32.mrf.mxu0
      %v702 = vadd.f32 %v253, %v701
      %v703 = vpop.f32.mrf.mxu0
      %v704 = vadd.f32 %v253, %v703
      %705 = vmatmul.bf16.gmra.mxu0 %v529
      %v706 = vpop.f32.mrf.mxu0
      %v707 = vadd.f32 %v253, %v706
      %v708 = vpop.f32.mrf.mxu0
      %v709 = vadd.f32 %v253, %v708
      %710 = vmatmul.bf16.gmra.mxu0 %v532
      %v711 = vpop.f32.mrf.mxu0
      %v712 = vadd.f32 %v253, %v711
      %v713 = vpop.f32.mrf.mxu0
      %v714 = vadd.f32 %v253, %v713
      %715 = vmatmul.bf16.gmra.mxu0 %v535
      %v716 = vpop.f32.mrf.mxu0
      %v717 = vadd.f32 %v253, %v716
      %v718 = vpop.f32.mrf.mxu0
      %v719 = vadd.f32 %v253, %v718
      %720 = vmatmul.bf16.gmra.mxu0 %v538
      %v721 = vpop.f32.mrf.mxu0
      %v722 = vadd.f32 %v253, %v721
      %v723 = vpop.f32.mrf.mxu0
      %v724 = vadd.f32 %v253, %v723
      %725 = vmatmul.bf16.gmra.mxu0 %v541
      %v726 = vpop.f32.mrf.mxu0
      %v727 = vadd.f32 %v253, %v726
      %v728 = vpop.f32.mrf.mxu0
      %v729 = vadd.f32 %v253, %v728
      %730 = vmatmul.bf16.gmra.mxu0 %v544
      %v731 = vpop.f32.mrf.mxu0
      %v732 = vadd.f32 %v253, %v731
      %v733 = vpop.f32.mrf.mxu0
      %v734 = vadd.f32 %v253, %v733
      %735 = vmatmul.bf16.gmra.mxu0 %v547
      %v736 = vpop.f32.mrf.mxu0
      %v737 = vadd.f32 %v253, %v736
      %v738 = vpop.f32.mrf.mxu0
      %v739 = vadd.f32 %v253, %v738
      %740 = vmatmul.bf16.gmra.mxu0 %v550
      %v741 = vpop.f32.mrf.mxu0
      %v742 = vadd.f32 %v253, %v741
      %v743 = vpop.f32.mrf.mxu0
      %v744 = vadd.f32 %v253, %v743
      %745 = vmatmul.bf16.gmra.mxu0 %v553
      %v746 = vpop.f32.mrf.mxu0
      %v747 = vadd.f32 %v253, %v746
      %v748 = vpop.f32.mrf.mxu0
      %v749 = vadd.f32 %v253, %v748
      %750 = vdwg.mxu0
      %v751 = vmax.f32 %v572, 0.0
      %v752 = vmax.f32 %v574, 0.0
      %v753 = vmax.f32 %v577, 0.0
      %v754 = vmax.f32 %v579, 0.0
      %v755 = vmax.f32 %v582, 0.0
      %v756 = vmax.f32 %v584, 0.0
      %v757 = vmax.f32 %v587, 0.0
      %v758 = vmax.f32 %v589, 0.0
      %v759 = vmax.f32 %v592, 0.0
      %v760 = vmax.f32 %v594, 0.0
      %v761 = vmax.f32 %v597, 0.0
      %v762 = vmax.f32 %v599, 0.0
      %v763 = vmax.f32 %v602, 0.0
      %v764 = vmax.f32 %v604, 0.0
      %v765 = vmax.f32 %v607, 0.0
      %v766 = vmax.f32 %v609, 0.0
      %v767 = vmax.f32 %v612, 0.0
      %v768 = vmax.f32 %v614, 0.0
      %v769 = vmax.f32 %v617, 0.0
      %v770 = vmax.f32 %v619, 0.0
      %v771 = vmax.f32 %v622, 0.0
      %v772 = vmax.f32 %v624, 0.0
      %v773 = vmax.f32 %v627, 0.0
      %v774 = vmax.f32 %v629, 0.0
      %v775 = vmax.f32 %v632, 0.0
      %v776 = vmax.f32 %v634, 0.0
      %v777 = vmax.f32 %v637, 0.0
      %v778 = vmax.f32 %v639, 0.0
      %v779 = vmax.f32 %v642, 0.0
      %v780 = vmax.f32 %v644, 0.0
      %v781 = vmax.f32 %v647, 0.0
      %v782 = vmax.f32 %v649, 0.0
      %v783 = vmax.f32 %v652, 0.0
      %v784 = vmax.f32 %v654, 0.0
      %v785 = vmax.f32 %v657, 0.0
      %v786 = vmax.f32 %v659, 0.0
      %v787 = vmax.f32 %v662, 0.0
      %v788 = vmax.f32 %v664, 0.0
      %v789 = vmax.f32 %v667, 0.0
      %v790 = vmax.f32 %v669, 0.0
      %v791 = vmax.f32 %v672, 0.0
      %v792 = vmax.f32 %v674, 0.0
      %v793 = vmax.f32 %v677, 0.0
      %v794 = vmax.f32 %v679, 0.0
      %v795 = vmax.f32 %v682, 0.0
      %v796 = vmax.f32 %v684, 0.0
      %v797 = vmax.f32 %v687, 0.0
      %v798 = vmax.f32 %v689, 0.0
      %v799 = vmax.f32 %v692, 0.0
      %v800 = vmax.f32 %v694, 0.0
      %v801 = vmax.f32 %v697, 0.0
      %v802 = vmax.f32 %v699, 0.0
      %v803 = vmax.f32 %v702, 0.0
      %v804 = vmax.f32 %v704, 0.0
      %v805 = vmax.f32 %v707, 0.0
      %v806 = vmax.f32 %v709, 0.0
      %v807 = vmax.f32 %v712, 0.0
      %v808 = vmax.f32 %v714, 0.0
      %v809 = vmax.f32 %v717, 0.0
      %v810 = vmax.f32 %v719, 0.0
      %v811 = vmax.f32 %v722, 0.0
      %v812 = vmax.f32 %v724, 0.0
      %v813 = vmax.f32 %v727, 0.0
      %v814 = vmax.f32 %v729, 0.0
      %v815 = vmax.f32 %v732, 0.0
      %v816 = vmax.f32 %v734, 0.0
      %v817 = vmax.f32 %v737, 0.0
      %v818 = vmax.f32 %v739, 0.0
      %v819 = vmax.f32 %v742, 0.0
      %v820 = vmax.f32 %v744, 0.0
      %v821 = vmax.f32 %v747, 0.0
      %v822 = vmax.f32 %v749, 0.0
      %v823 = vmin.f32 %v751, 6.0
      %v824 = vmin.f32 %v752, 6.0
      %v825 = vmin.f32 %v753, 6.0
      %v826 = vmin.f32 %v754, 6.0
      %v827 = vmin.f32 %v755, 6.0
      %v828 = vmin.f32 %v756, 6.0
      %v829 = vmin.f32 %v757, 6.0
      %v830 = vmin.f32 %v758, 6.0
      %v831 = vmin.f32 %v759, 6.0
      %v832 = vmin.f32 %v760, 6.0
      %v833 = vmin.f32 %v761, 6.0
      %v834 = vmin.f32 %v762, 6.0
      %v835 = vmin.f32 %v763, 6.0
      %v836 = vmin.f32 %v764, 6.0
      %v837 = vmin.f32 %v765, 6.0
      %v838 = vmin.f32 %v766, 6.0
      %v839 = vmin.f32 %v767, 6.0
      %v840 = vmin.f32 %v768, 6.0
      %v841 = vmin.f32 %v769, 6.0
      %v842 = vmin.f32 %v770, 6.0
      %v843 = vmin.f32 %v771, 6.0
      %v844 = vmin.f32 %v772, 6.0
      %v845 = vmin.f32 %v773, 6.0
      %v846 = vmin.f32 %v774, 6.0
      %v847 = vmin.f32 %v775, 6.0
      %v848 = vmin.f32 %v776, 6.0
      %v849 = vmin.f32 %v777, 6.0
      %v850 = vmin.f32 %v778, 6.0
      %v851 = vmin.f32 %v779, 6.0
      %v852 = vmin.f32 %v780, 6.0
      %v853 = vmin.f32 %v781, 6.0
      %v854 = vmin.f32 %v782, 6.0
      %v855 = vmin.f32 %v783, 6.0
      %v856 = vmin.f32 %v784, 6.0
      %v857 = vmin.f32 %v785, 6.0
      %v858 = vmin.f32 %v786, 6.0
      %v859 = vmin.f32 %v787, 6.0
      %v860 = vmin.f32 %v788, 6.0
      %v861 = vmin.f32 %v789, 6.0
      %v862 = vmin.f32 %v790, 6.0
      %v863 = vmin.f32 %v791, 6.0
      %v864 = vmin.f32 %v792, 6.0
      %v865 = vmin.f32 %v793, 6.0
      %v866 = vmin.f32 %v794, 6.0
      %v867 = vmin.f32 %v795, 6.0
      %v868 = vmin.f32 %v796, 6.0
      %v869 = vmin.f32 %v797, 6.0
      %v870 = vmin.f32 %v798, 6.0
      %v871 = vmin.f32 %v799, 6.0
      %v872 = vmin.f32 %v800, 6.0
      %v873 = vmin.f32 %v801, 6.0
      %v874 = vmin.f32 %v802, 6.0
      %v875 = vmin.f32 %v803, 6.0
      %v876 = vmin.f32 %v804, 6.0
      %v877 = vmin.f32 %v805, 6.0
      %v878 = vmin.f32 %v806, 6.0
      %v879 = vmin.f32 %v807, 6.0
      %v880 = vmin.f32 %v808, 6.0
      %v881 = vmin.f32 %v809, 6.0
      %v882 = vmin.f32 %v810, 6.0
      %v883 = vmin.f32 %v811, 6.0
      %v884 = vmin.f32 %v812, 6.0
      %v885 = vmin.f32 %v813, 6.0
      %v886 = vmin.f32 %v814, 6.0
      %v887 = vmin.f32 %v815, 6.0
      %v888 = vmin.f32 %v816, 6.0
      %v889 = vmin.f32 %v817, 6.0
      %v890 = vmin.f32 %v818, 6.0
      %v891 = vmin.f32 %v819, 6.0
      %v892 = vmin.f32 %v820, 6.0
      %v893 = vmin.f32 %v821, 6.0
      %v894 = vmin.f32 %v822, 6.0
      %v895 = vpack.c.bf16 %v823, %v823
      %v896 = vpack.c.bf16 %v824, %v824
      %v897 = vpack.c.bf16 %v825, %v825
      %v898 = vpack.c.bf16 %v826, %v826
      %v899 = vpack.c.bf16 %v827, %v827
      %v900 = vpack.c.bf16 %v828, %v828
      %v901 = vpack.c.bf16 %v829, %v829
      %v902 = vpack.c.bf16 %v830, %v830
      %v903 = vpack.c.bf16 %v831, %v831
      %v904 = vpack.c.bf16 %v832, %v832
      %v905 = vpack.c.bf16 %v833, %v833
      %v906 = vpack.c.bf16 %v834, %v834
      %v907 = vpack.c.bf16 %v835, %v835
      %v908 = vpack.c.bf16 %v836, %v836
      %v909 = vpack.c.bf16 %v837, %v837
      %v910 = vpack.c.bf16 %v838, %v838
      %v911 = vpack.c.bf16 %v839, %v839
      %v912 = vpack.c.bf16 %v840, %v840
      %v913 = vpack.c.bf16 %v841, %v841
      %v914 = vpack.c.bf16 %v842, %v842
      %v915 = vpack.c.bf16 %v843, %v843
      %v916 = vpack.c.bf16 %v844, %v844
      %v917 = vpack.c.bf16 %v845, %v845
      %v918 = vpack.c.bf16 %v846, %v846
      %v919 = vpack.c.bf16 %v847, %v847
      %v920 = vpack.c.bf16 %v848, %v848
      %v921 = vpack.c.bf16 %v849, %v849
      %v922 = vpack.c.bf16 %v850, %v850
      %v923 = vpack.c.bf16 %v851, %v851
      %v924 = vpack.c.bf16 %v852, %v852
      %v925 = vpack.c.bf16 %v853, %v853
      %v926 = vpack.c.bf16 %v854, %v854
      %v927 = vpack.c.bf16 %v855, %v855
      %v928 = vpack.c.bf16 %v856, %v856
      %v929 = vpack.c.bf16 %v857, %v857
      %v930 = vpack.c.bf16 %v858, %v858
      %v931 = vpack.c.bf16 %v859, %v859
      %v932 = vpack.c.bf16 %v860, %v860
      %v933 = vpack.c.bf16 %v861, %v861
      %v934 = vpack.c.bf16 %v862, %v862
      %v935 = vpack.c.bf16 %v863, %v863
      %v936 = vpack.c.bf16 %v864, %v864
      %v937 = vpack.c.bf16 %v865, %v865
      %v938 = vpack.c.bf16 %v866, %v866
      %v939 = vpack.c.bf16 %v867, %v867
      %v940 = vpack.c.bf16 %v868, %v868
      %v941 = vpack.c.bf16 %v869, %v869
      %v942 = vpack.c.bf16 %v870, %v870
      %v943 = vpack.c.bf16 %v871, %v871
      %v944 = vpack.c.bf16 %v872, %v872
      %v945 = vpack.c.bf16 %v873, %v873
      %v946 = vpack.c.bf16 %v874, %v874
      %v947 = vpack.c.bf16 %v875, %v875
      %v948 = vpack.c.bf16 %v876, %v876
      %v949 = vpack.c.bf16 %v877, %v877
      %v950 = vpack.c.bf16 %v878, %v878
      %v951 = vpack.c.bf16 %v879, %v879
      %v952 = vpack.c.bf16 %v880, %v880
      %v953 = vpack.c.bf16 %v881, %v881
      %v954 = vpack.c.bf16 %v882, %v882
      %v955 = vpack.c.bf16 %v883, %v883
      %v956 = vpack.c.bf16 %v884, %v884
      %v957 = vpack.c.bf16 %v885, %v885
      %v958 = vpack.c.bf16 %v886, %v886
      %v959 = vpack.c.bf16 %v887, %v887
      %v960 = vpack.c.bf16 %v888, %v888
      %v961 = vpack.c.bf16 %v889, %v889
      %v962 = vpack.c.bf16 %v890, %v890
      %v963 = vpack.c.bf16 %v891, %v891
      %v964 = vpack.c.bf16 %v892, %v892
      %v965 = vpack.c.bf16 %v893, %v893
      %v966 = vpack.c.bf16 %v894, %v894
      %vm967 = vcmask 19456
      %968 = vst.msk [vmem:[%s172] sm:$0xf] %vm967, %v895
      %969 = vst.msk [vmem:[%s172 + $0x4] sm:$0xf] %vm967, %v896
      %970 = vst.msk [vmem:[%s172 + $0x8] sm:$0xf] %vm967, %v897
      %971 = vst.msk [vmem:[%s172 + $0xc] sm:$0xf] %vm967, %v898
      %972 = vst.msk [vmem:[%s172 + $0x10] sm:$0xf] %vm967, %v899
      %973 = vst.msk [vmem:[%s172 + $0x14] sm:$0xf] %vm967, %v900
      %974 = vst.msk [vmem:[%s172 + $0x18] sm:$0xf] %vm967, %v901
      %975 = vst.msk [vmem:[%s172 + $0x1c] sm:$0xf] %vm967, %v902
      %976 = vst.msk [vmem:[%s172 + $0x20] sm:$0xf] %vm967, %v903
      %977 = vst.msk [vmem:[%s172 + $0x24] sm:$0xf] %vm967, %v904
      %978 = vst.msk [vmem:[%s172 + $0x28] sm:$0xf] %vm967, %v905
      %979 = vst.msk [vmem:[%s172 + $0x2c] sm:$0xf] %vm967, %v906
      %980 = vst.msk [vmem:[%s172 + $0x30] sm:$0xf] %vm967, %v907
      %981 = vst.msk [vmem:[%s172 + $0x34] sm:$0xf] %vm967, %v908
      %982 = vst.msk [vmem:[%s172 + $0x38] sm:$0xf] %vm967, %v909
      %983 = vst.msk [vmem:[%s172 + $0x3c] sm:$0xf] %vm967, %v910
      %984 = vst.msk [vmem:[%s172 + $0x40] sm:$0xf] %vm967, %v911
      %985 = vst.msk [vmem:[%s172 + $0x44] sm:$0xf] %vm967, %v912
      %986 = vst.msk [vmem:[%s172 + $0x48] sm:$0xf] %vm967, %v913
      %987 = vst.msk [vmem:[%s172 + $0x4c] sm:$0xf] %vm967, %v914
      %988 = vst.msk [vmem:[%s172 + $0x50] sm:$0xf] %vm967, %v915
      %989 = vst.msk [vmem:[%s172 + $0x54] sm:$0xf] %vm967, %v916
      %990 = vst.msk [vmem:[%s172 + $0x58] sm:$0xf] %vm967, %v917
      %991 = vst.msk [vmem:[%s172 + $0x5c] sm:$0xf] %vm967, %v918
      %992 = vst.msk [vmem:[%s172 + $0x60] sm:$0xf] %vm967, %v919
      %993 = vst.msk [vmem:[%s172 + $0x64] sm:$0xf] %vm967, %v920
      %994 = vst.msk [vmem:[%s172 + $0x68] sm:$0xf] %vm967, %v921
      %995 = vst.msk [vmem:[%s172 + $0x6c] sm:$0xf] %vm967, %v922
      %996 = vst.msk [vmem:[%s172 + $0x70] sm:$0xf] %vm967, %v923
      %997 = vst.msk [vmem:[%s172 + $0x74] sm:$0xf] %vm967, %v924
      %998 = vst.msk [vmem:[%s172 + $0x78] sm:$0xf] %vm967, %v925
      %999 = vst.msk [vmem:[%s172 + $0x7c] sm:$0xf] %vm967, %v926
      %1000 = vst.msk [vmem:[%s172 + $0x80] sm:$0xf] %vm967, %v927
      %1001 = vst.msk [vmem:[%s172 + $0x84] sm:$0xf] %vm967, %v928
      %1002 = vst.msk [vmem:[%s172 + $0x88] sm:$0xf] %vm967, %v929
      %1003 = vst.msk [vmem:[%s172 + $0x8c] sm:$0xf] %vm967, %v930
      %1004 = vst.msk [vmem:[%s172 + $0x90] sm:$0xf] %vm967, %v931
      %1005 = vst.msk [vmem:[%s172 + $0x94] sm:$0xf] %vm967, %v932
      %1006 = vst.msk [vmem:[%s172 + $0x98] sm:$0xf] %vm967, %v933
      %1007 = vst.msk [vmem:[%s172 + $0x9c] sm:$0xf] %vm967, %v934
      %1008 = vst.msk [vmem:[%s172 + $0xa0] sm:$0xf] %vm967, %v935
      %1009 = vst.msk [vmem:[%s172 + $0xa4] sm:$0xf] %vm967, %v936
      %1010 = vst.msk [vmem:[%s172 + $0xa8] sm:$0xf] %vm967, %v937
      %1011 = vst.msk [vmem:[%s172 + $0xac] sm:$0xf] %vm967, %v938
      %1012 = vst.msk [vmem:[%s172 + $0xb0] sm:$0xf] %vm967, %v939
      %1013 = vst.msk [vmem:[%s172 + $0xb4] sm:$0xf] %vm967, %v940
      %1014 = vst.msk [vmem:[%s172 + $0xb8] sm:$0xf] %vm967, %v941
      %1015 = vst.msk [vmem:[%s172 + $0xbc] sm:$0xf] %vm967, %v942
      %1016 = vst.msk [vmem:[%s172 + $0xc0] sm:$0xf] %vm967, %v943
      %1017 = vst.msk [vmem:[%s172 + $0xc4] sm:$0xf] %vm967, %v944
      %1018 = vst.msk [vmem:[%s172 + $0xc8] sm:$0xf] %vm967, %v945
      %1019 = vst.msk [vmem:[%s172 + $0xcc] sm:$0xf] %vm967, %v946
      %1020 = vst.msk [vmem:[%s172 + $0xd0] sm:$0xf] %vm967, %v947
      %1021 = vst.msk [vmem:[%s172 + $0xd4] sm:$0xf] %vm967, %v948
      %1022 = vst.msk [vmem:[%s172 + $0xd8] sm:$0xf] %vm967, %v949
      %1023 = vst.msk [vmem:[%s172 + $0xdc] sm:$0xf] %vm967, %v950
      %1024 = vst.msk [vmem:[%s172 + $0xe0] sm:$0xf] %vm967, %v951
      %1025 = vst.msk [vmem:[%s172 + $0xe4] sm:$0xf] %vm967, %v952
      %1026 = vst.msk [vmem:[%s172 + $0xe8] sm:$0xf] %vm967, %v953
      %1027 = vst.msk [vmem:[%s172 + $0xec] sm:$0xf] %vm967, %v954
      %1028 = vst.msk [vmem:[%s172 + $0xf0] sm:$0xf] %vm967, %v955
      %1029 = vst.msk [vmem:[%s172 + $0xf4] sm:$0xf] %vm967, %v956
      %1030 = vst.msk [vmem:[%s172 + $0xf8] sm:$0xf] %vm967, %v957
      %1031 = vst.msk [vmem:[%s172 + $0xfc] sm:$0xf] %vm967, %v958
      %1032 = vst.msk [vmem:[%s172 + $0x100] sm:$0xf] %vm967, %v959
      %1033 = vst.msk [vmem:[%s172 + $0x104] sm:$0xf] %vm967, %v960
      %1034 = vst.msk [vmem:[%s172 + $0x108] sm:$0xf] %vm967, %v961
      %1035 = vst.msk [vmem:[%s172 + $0x10c] sm:$0xf] %vm967, %v962
      %1036 = vst.msk [vmem:[%s172 + $0x110] sm:$0xf] %vm967, %v963
      %1037 = vst.msk [vmem:[%s172 + $0x114] sm:$0xf] %vm967, %v964
      %1038 = vst.msk [vmem:[%s172 + $0x118] sm:$0xf] %vm967, %v965
      %1039 = vst.msk [vmem:[%s172 + $0x11c] sm:$0xf] %vm967, %v966
      %s1040 = smul.u32 72, %s14
      %p1041 = scmp.lt.s32.totalorder %s1040, 143
      %s1042 = scalar_select %p1041, %s1040, 143
      %s1043 = smul.addr %s1042, 4
      %s1044 = scalar_lea.vmem %s3, %s1043
      // Predicated region
      $region33: #{_lambda_.11} parent=31 // pred_check
        %p1045 = pneg %p100
      $region34: #{_lambda_.11} parent=31 // pred_check_branch
        %1047 = sbr.rel (%p1045) target = $region36
      $region35: #{_lambda_.11} parent=31 // pred_region
        %s1048 = smul.u32 72, %s14
      $region36: #{_lambda_.11} parent=31 // pred_fallthru
        _
    $region32: #{_lambda_.11} parent=5 // pred_fallthru
      _
    %p1049 = scmp.le.s32.totalorder 2, %s9
    // Predicated region
    $region37: #{_lambda_.11} parent=5 // pred_check
      %p1050 = pneg %p1049
    $region38: #{_lambda_.11} parent=5 // pred_check_branch
      %1052 = sbr.rel (%p1050) target = $region40
    $region39: #{_lambda_.11} parent=5 // pred_region
      %s1053 = ssub.s32 %s9, 2
      // Predicated region
      $region41: #{_lambda_.11} parent=39 // pred_check
        %p1054 = pneg %p106
      $region42: #{_lambda_.11} parent=39 // pred_check_branch
        %1056 = sbr.rel (%p1054) target = $region44
      $region43: #{_lambda_.11} parent=39 // pred_region
        %s1057 = smul.u32 72, %s15
        %p1058 = scmp.lt.s32.totalorder %s1057, 143
        %s1059 = scalar_select %p1058, %s1057, 143
        %s1060 = smul.addr %s1059, 4
        %s1061 = scalar_lea.vmem %s3, %s1060
      $region44: #{_lambda_.11} parent=39 // pred_fallthru
        _
    $region40: #{_lambda_.11} parent=5 // pred_fallthru
      _
  $region6: #{_lambda_.11} parent=0 // loop_footer
    %s13 = sadd.s32 1, %s9
  $region7: #{_lambda_.11} parent=0 // loop_footer_branch
    %8 = sbr.rel target = $region3
  $region8: #{_lambda_.11} parent=0 // loop_exit
    _

// kernel: _lambda_.12
$region0: #{_lambda_.12}
  #allocation0 [shape = 'u32[]', space=smem, size = 0x4, offset = 0x4, fixed_abs, tag = 'smem constant byte address 0x4 - core index']
  #allocation1 [shape = 'u32[72,128]{1,0:T(1,128)}', space=vmem, size = 0x9000, scoped, tag = 'internal scratch']
  %s0 = inlined_call_operand.vmem [shape: bf16[288,27], index: 0, kind: input, shape index: {}]
  %s1 = inlined_call_operand.vmem [shape: bf16[27,32], index: 1, kind: input, shape index: {}]
  %s2 = inlined_call_operand.vmem [shape: f32[1,32], index: 2, kind: input, shape index: {}]
  %s3 = inlined_call_operand.vmem [shape: bf16[32,32], index: 3, kind: input, shape index: {}]
  %s4 = inlined_call_operand.vmem [shape: f32[1,32], index: 4, kind: input, shape index: {}]
  %s5 = inlined_call_operand.vmem [shape: bf16[288,32], index: 5, kind: output, shape index: {}]
  %s6 = sld [smem:[#allocation0]]
  $region53: #{_lambda_.12} parent=0
    _
  %s8 = ssub.s32 1, %s6
  %s9 = scalar_select 0, %s8, %s6
  loop: start=0, step=1, limit=4
  $region2: #{_lambda_.12} parent=0 // loop_pre_header
    _
  $region3: #{_lambda_.12} parent=0 // loop_header
    %s11 = sphi 0, %s15
    %p12 = scmp.ge.s32.totalorder %s11, 4
    %s21 = sphi 0, %s23
    %s24 = sphi 0, %s21
    %s25 = sphi 0, %s24
    %s41 = sphi 0, %s25
    %s45 = sphi 0, %s45
    %s47 = sphi 0, %s45
    %s48 = sphi 0, %s47
    %s62 = sphi 0, %s48
    %s66 = sphi 0, %s66
    %s68 = sphi 0, %s66
    %s69 = sphi 0, %s68
    %s83 = sphi 0, %s69
    %s87 = sphi 0, %s87
    %s89 = sphi 0, %s87
    %s90 = sphi 0, %s89
    %s104 = sphi 0, %s90
    %s108 = sphi 0, %s108
    %s110 = sphi 0, %s108
    %s111 = sphi 0, %s110
    %s125 = sphi 0, %s111
    %s131 = sphi 0, %s133
    %s134 = sphi 0, %s131
    %s135 = sphi 0, %s134
    %s151 = sphi 0, %s135
  $region4: #{_lambda_.12} parent=0 // loop_header_branch
    %14 = sbr.rel (%p12) target = $region8
  $region5: #{_lambda_.12} parent=0 // loop_body
    %s16 = ssub.s32 %s11, 1
    %s17 = ssub.s32 %s11, 2
    %s18 = sadd.s32 %s11, 1
    %s19 = ssub.s32 %s11, %s18
    %p20 = scmp.eq.s32.totalorder %s19, 0
    %s22 = sadd.s32 %s21, 1
    %s23 = scalar_select %p20, %s21, %s22
    %p26 = pneg %p20
    %p27 = scmp.eq.s32.totalorder %s11, 1
    %p28 = por %p26, %p27
    %p29 = scmp.ne.s32.totalorder %s21, %s24
    %p30 = scmp.eq.s32.totalorder %s11, 0
    %p31 = por %p29, %p30
    %p32 = scmp.ne.s32.totalorder %s21, %s24
    %p33 = scmp.eq.s32.totalorder %s16, 1
    %p34 = por %p32, %p33
    %p35 = scmp.ne.s32.totalorder %s24, %s25
    %p36 = scmp.eq.s32.totalorder %s16, 0
    %p37 = por %p35, %p36
    %p38 = scmp.ne.s32.totalorder %s24, %s25
    %p39 = scmp.eq.s32.totalorder %s17, 1
    %p40 = por %p38, %p39
    %p42 = scmp.ne.s32.totalorder %s25, %s41
    %p43 = scmp.eq.s32.totalorder %s17, 0
    %p44 = por %p42, %p43
    %s46 = sadd.s32 %s45, 1
    %p49 = scmp.eq.s32.totalorder %s11, 1
    %p50 = scmp.ne.s32.totalorder %s45, %s47
    %p51 = scmp.eq.s32.totalorder %s11, 0
    %p52 = por %p50, %p51
    %p53 = scmp.ne.s32.totalorder %s45, %s47
    %p54 = scmp.eq.s32.totalorder %s16, 1
    %p55 = por %p53, %p54
    %p56 = scmp.ne.s32.totalorder %s47, %s48
    %p57 = scmp.eq.s32.totalorder %s16, 0
    %p58 = por %p56, %p57
    %p59 = scmp.ne.s32.totalorder %s47, %s48
    %p60 = scmp.eq.s32.totalorder %s17, 1
    %p61 = por %p59, %p60
    %p63 = scmp.ne.s32.totalorder %s48, %s62
    %p64 = scmp.eq.s32.totalorder %s17, 0
    %p65 = por %p63, %p64
    %s67 = sadd.s32 %s66, 1
    %p70 = scmp.eq.s32.totalorder %s11, 1
    %p71 = scmp.ne.s32.totalorder %s66, %s68
    %p72 = scmp.eq.s32.totalorder %s11, 0
    %p73 = por %p71, %p72
    %p74 = scmp.ne.s32.totalorder %s66, %s68
    %p75 = scmp.eq.s32.totalorder %s16, 1
    %p76 = por %p74, %p75
    %p77 = scmp.ne.s32.totalorder %s68, %s69
    %p78 = scmp.eq.s32.totalorder %s16, 0
    %p79 = por %p77, %p78
    %p80 = scmp.ne.s32.totalorder %s68, %s69
    %p81 = scmp.eq.s32.totalorder %s17, 1
    %p82 = por %p80, %p81
    %p84 = scmp.ne.s32.totalorder %s69, %s83
    %p85 = scmp.eq.s32.totalorder %s17, 0
    %p86 = por %p84, %p85
    %s88 = sadd.s32 %s87, 1
    %p91 = scmp.eq.s32.totalorder %s11, 1
    %p92 = scmp.ne.s32.totalorder %s87, %s89
    %p93 = scmp.eq.s32.totalorder %s11, 0
    %p94 = por %p92, %p93
    %p95 = scmp.ne.s32.totalorder %s87, %s89
    %p96 = scmp.eq.s32.totalorder %s16, 1
    %p97 = por %p95, %p96
    %p98 = scmp.ne.s32.totalorder %s89, %s90
    %p99 = scmp.eq.s32.totalorder %s16, 0
    %p100 = por %p98, %p99
    %p101 = scmp.ne.s32.totalorder %s89, %s90
    %p102 = scmp.eq.s32.totalorder %s17, 1
    %p103 = por %p101, %p102
    %p105 = scmp.ne.s32.totalorder %s90, %s104
    %p106 = scmp.eq.s32.totalorder %s17, 0
    %p107 = por %p105, %p106
    %s109 = sadd.s32 %s108, 1
    %p112 = scmp.eq.s32.totalorder %s11, 1
    %p113 = scmp.ne.s32.totalorder %s108, %s110
    %p114 = scmp.eq.s32.totalorder %s11, 0
    %p115 = por %p113, %p114
    %p116 = scmp.ne.s32.totalorder %s108, %s110
    %p117 = scmp.eq.s32.totalorder %s16, 1
    %p118 = por %p116, %p117
    %p119 = scmp.ne.s32.totalorder %s110, %s111
    %p120 = scmp.eq.s32.totalorder %s16, 0
    %p121 = por %p119, %p120
    %p122 = scmp.ne.s32.totalorder %s110, %s111
    %p123 = scmp.eq.s32.totalorder %s17, 1
    %p124 = por %p122, %p123
    %p126 = scmp.ne.s32.totalorder %s111, %s125
    %p127 = scmp.eq.s32.totalorder %s17, 0
    %p128 = por %p126, %p127
    %s129 = ssub.s32 %s11, %s18
    %p130 = scmp.eq.s32.totalorder %s129, 0
    %s132 = sadd.s32 %s131, 1
    %s133 = scalar_select %p130, %s131, %s132
    %p136 = pneg %p130
    %p137 = scmp.eq.s32.totalorder %s11, 1
    %p138 = por %p136, %p137
    %p139 = scmp.ne.s32.totalorder %s131, %s134
    %p140 = scmp.eq.s32.totalorder %s11, 0
    %p141 = por %p139, %p140
    %p142 = scmp.ne.s32.totalorder %s131, %s134
    %p143 = scmp.eq.s32.totalorder %s16, 1
    %p144 = por %p142, %p143
    %p145 = scmp.ne.s32.totalorder %s134, %s135
    %p146 = scmp.eq.s32.totalorder %s16, 0
    %p147 = por %p145, %p146
    %p148 = scmp.ne.s32.totalorder %s134, %s135
    %p149 = scmp.eq.s32.totalorder %s17, 1
    %p150 = por %p148, %p149
    %p152 = scmp.ne.s32.totalorder %s135, %s151
    %p153 = scmp.eq.s32.totalorder %s17, 0
    %p154 = por %p152, %p153
    %p155 = scmp.le.s32.totalorder 1, %s11
    %p156 = scmp.lt.s32.totalorder %s11, 3
    %p157 = pnand %p155, %p156
    %p158 = pneg %p157
    // Predicated region
    $region9: #{_lambda_.12} parent=5 // pred_check
      _
    $region10: #{_lambda_.12} parent=5 // pred_check_branch
      %160 = sbr.rel (%p157) target = $region12
    $region11: #{_lambda_.12} parent=5 // pred_region
      %s161 = ssub.s32 %s11, 1
      // Predicated region
      $region13: #{_lambda_.12} parent=11 // pred_check
        %p162 = pneg %p58
      $region14: #{_lambda_.12} parent=11 // pred_check_branch
        %164 = sbr.rel (%p162) target = $region16
      $region15: #{_lambda_.12} parent=11 // pred_region
        _
      $region16: #{_lambda_.12} parent=11 // pred_fallthru
        _
      // Predicated region
      $region17: #{_lambda_.12} parent=11 // pred_check
        %p165 = pneg %p79
      $region18: #{_lambda_.12} parent=11 // pred_check_branch
        %167 = sbr.rel (%p165) target = $region20
      $region19: #{_lambda_.12} parent=11 // pred_region
        _
      $region20: #{_lambda_.12} parent=11 // pred_fallthru
        _
      // Predicated region
      $region21: #{_lambda_.12} parent=11 // pred_check
        %p168 = pneg %p100
      $region22: #{_lambda_.12} parent=11 // pred_check_branch
        %170 = sbr.rel (%p168) target = $region24
      $region23: #{_lambda_.12} parent=11 // pred_region
        _
      $region24: #{_lambda_.12} parent=11 // pred_fallthru
        _
      // Predicated region
      $region25: #{_lambda_.12} parent=11 // pred_check
        %p171 = pneg %p121
      $region26: #{_lambda_.12} parent=11 // pred_check_branch
        %173 = sbr.rel (%p171) target = $region28
      $region27: #{_lambda_.12} parent=11 // pred_region
        _
      $region28: #{_lambda_.12} parent=11 // pred_fallthru
        _
    $region12: #{_lambda_.12} parent=5 // pred_fallthru
      _
    %p174 = scmp.lt.s32.totalorder %s11, 2
    // Predicated region
    $region29: #{_lambda_.12} parent=5 // pred_check
      %p175 = pneg %p174
    $region30: #{_lambda_.12} parent=5 // pred_check_branch
      %177 = sbr.rel (%p175) target = $region32
    $region31: #{_lambda_.12} parent=5 // pred_region
      // Predicated region
      $region33: #{_lambda_.12} parent=31 // pred_check
        %p178 = pneg %p31
      $region34: #{_lambda_.12} parent=31 // pred_check_branch
        %180 = sbr.rel (%p178) target = $region36
      $region35: #{_lambda_.12} parent=31 // pred_region
        %s181 = smul.u32 18, %s11
        %p182 = scmp.lt.s32.totalorder %s181, 35
        %s183 = scalar_select %p182, %s181, 35
        %s184 = smul.addr %s183, 4
        %s185 = scalar_lea.vmem %s0, %s184
        %s186 = smul.u32 18, %s11
      $region36: #{_lambda_.12} parent=31 // pred_fallthru
        _
    $region32: #{_lambda_.12} parent=5 // pred_fallthru
      _
    %p187 = scmp.le.s32.totalorder 1, %s11
    %p188 = scmp.lt.s32.totalorder %s11, 3
    %p189 = pnand %p187, %p188
    %p190 = pneg %p189
    // Predicated region
    $region37: #{_lambda_.12} parent=5 // pred_check
      _
    $region38: #{_lambda_.12} parent=5 // pred_check_branch
      %192 = sbr.rel (%p189) target = $region40
    $region39: #{_lambda_.12} parent=5 // pred_region
      %s193 = ssub.s32 %s11, 1
      %s194 = smul.u32 18, %s16
      %p195 = scmp.lt.s32.totalorder %s194, 35
      %s196 = scalar_select %p195, %s194, 35
      %s197 = smul.addr %s196, 4
      %s198 = scalar_lea.vmem %s0, %s197
      %p199 = pneg %p37
      %p200 = pneg %p34
      %p201 = pneg %p58
      %p202 = pneg %p55
      %p203 = pneg %p79
      %p204 = pneg %p76
      %p205 = pneg %p100
      %p206 = pneg %p97
      %p207 = pneg %p121
      %p208 = pneg %p118
      %p209 = pneg %p147
      %p210 = pneg %p144
      %s211 = smul.u32 18, %s16
      %p212 = scmp.lt.s32.totalorder %s211, 35
      %s213 = scalar_select %p212, %s211, 35
      %s214 = smul.addr %s213, 4
      %s215 = scalar_lea.vmem %s5, %s214
      %s216 = smul.u32 18, %s16
      %p217 = scmp.lt.s32.totalorder %s216, 35
      %s218 = scalar_select %p217, %s216, 35
      %s219 = smul.addr %s218, 4
      %s220 = scalar_lea.vmem %s0, %s219
      %s221 = smul.u32 18, %s16
      %s222 = smul.u32 18, %s16
      %p223 = scmp.lt.s32.totalorder %s222, 35
      %s224 = scalar_select %p223, %s222, 35
      %s225 = smul.addr %s224, 4
      %s226 = scalar_lea.vmem %s5, %s225
      %s227 = smul.u32 18, %s16
      %v229 = vld [vmem:[%s220] sm:$0xf]
      %v230 = vld [vmem:[%s220 + $0x4] sm:$0xf]
      %v231 = vld [vmem:[%s220 + $0x8] sm:$0xf]
      %v232 = vld [vmem:[%s220 + $0xc] sm:$0xf]
      %v233 = vld [vmem:[%s220 + $0x10] sm:$0xf]
      %v234 = vld [vmem:[%s220 + $0x14] sm:$0xf]
      %v235 = vld [vmem:[%s220 + $0x18] sm:$0xf]
      %v236 = vld [vmem:[%s220 + $0x1c] sm:$0xf]
      %v237 = vld [vmem:[%s220 + $0x20] sm:$0xf]
      %v238 = vld [vmem:[%s220 + $0x24] sm:$0xf]
      %v239 = vld [vmem:[%s220 + $0x28] sm:$0xf]
      %v240 = vld [vmem:[%s220 + $0x2c] sm:$0xf]
      %v241 = vld [vmem:[%s220 + $0x30] sm:$0xf]
      %v242 = vld [vmem:[%s220 + $0x34] sm:$0xf]
      %v243 = vld [vmem:[%s220 + $0x38] sm:$0xf]
      %v244 = vld [vmem:[%s220 + $0x3c] sm:$0xf]
      %v245 = vld [vmem:[%s220 + $0x40] sm:$0xf]
      %v246 = vld [vmem:[%s220 + $0x44] sm:$0xf]
      %v247 = vld [vmem:[%s1] sm:$0xf]
      %v248 = vld [vmem:[%s1 + $0x4] sm:$0xf]
      %v249 = vld [vmem:[%s1 + $0x8] sm:$0xf]
      %v250 = vld [vmem:[%s1 + $0xc] sm:$0x3]
      %v251 = vld [vmem:[%s2] sm:$0x1]
      %v253 = vperm.slane %v251, 0
      %v273 = vunpack.c.l.b16 %v229
      %v274 = vunpack.c.l.b16 %v230
      %v275 = vunpack.c.l.b16 %v231
      %v276 = vunpack.c.l.b16 %v232
      %v277 = vunpack.c.l.b16 %v233
      %v278 = vunpack.c.l.b16 %v234
      %v279 = vunpack.c.l.b16 %v235
      %v280 = vunpack.c.l.b16 %v236
      %v281 = vunpack.c.l.b16 %v237
      %v282 = vunpack.c.l.b16 %v238
      %v283 = vunpack.c.l.b16 %v239
      %v284 = vunpack.c.l.b16 %v240
      %v285 = vunpack.c.l.b16 %v241
      %v286 = vunpack.c.l.b16 %v242
      %v287 = vunpack.c.l.b16 %v243
      %v288 = vunpack.c.l.b16 %v244
      %v289 = vunpack.c.l.b16 %v245
      %v290 = vunpack.c.l.b16 %v246
      %v291 = vpack.c.b16 %v274, %v273
      %v292 = vpack.c.b16 %v276, %v275
      %v293 = vpack.c.b16 %v278, %v277
      %v294 = vpack.c.b16 %v280, %v279
      %v295 = vpack.c.b16 %v282, %v281
      %v296 = vpack.c.b16 %v284, %v283
      %v297 = vpack.c.b16 %v286, %v285
      %v298 = vpack.c.b16 %v288, %v287
      %v299 = vpack.c.b16 %v290, %v289
      %v304 = vunpack.c.l.b16 %v247
      %v305 = vunpack.c.l.b16 %v248
      %v306 = vunpack.c.l.b16 %v249
      %v307 = vunpack.c.l.b16 %v250
      %v308 = vpack.c.b16 %v305, %v304
      %v309 = vpack.c.b16 %v307, %v306
      %vm311 = vcmask 220160
      %v313 = vsel %vm311, %v291, 0
      %v316 = vsel %vm311, %v292, 0
      %v319 = vsel %vm311, %v293, 0
      %v322 = vsel %vm311, %v294, 0
      %v325 = vsel %vm311, %v295, 0
      %v328 = vsel %vm311, %v296, 0
      %v331 = vsel %vm311, %v297, 0
      %v334 = vsel %vm311, %v298, 0
      %v337 = vsel %vm311, %v299, 0
      %vm339 = vcmask 1044480
      %vm340 = vcmask 1045504
      %v341 = vsel %vm339, 4294967295, 65535
      %v342 = vsel %vm340, %v341, 0
      %v344 = vand.u32 %v309, %v342
      %346 = vmatpush.bf16.msra.mxu0 0
      %347 = vmatpush.bf16.msra.mxu0 0
      %348 = vmatpush.bf16.msra.mxu0 0
      %349 = vmatpush.bf16.msra.mxu0 0
      %350 = vmatpush.bf16.msra.mxu0 0
      %351 = vmatpush.bf16.msra.mxu0 0
      %352 = vmatpush.bf16.msra.mxu0 %v344
      %353 = vmatpush.bf16.msra.mxu0 %v308
      %354 = vmatmul.bf16.gmra.mxu0 %v313
      %v355 = vpop.f32.mrf.mxu0
      %v356 = vadd.f32 %v253, %v355
      %v357 = vpop.f32.mrf.mxu0
      %v358 = vadd.f32 %v253, %v357
      %359 = vmatmul.bf16.gmra.mxu0 %v316
      %v360 = vpop.f32.mrf.mxu0
      %v361 = vadd.f32 %v253, %v360
      %v362 = vpop.f32.mrf.mxu0
      %v363 = vadd.f32 %v253, %v362
      %364 = vmatmul.bf16.gmra.mxu0 %v319
      %v365 = vpop.f32.mrf.mxu0
      %v366 = vadd.f32 %v253, %v365
      %v367 = vpop.f32.mrf.mxu0
      %v368 = vadd.f32 %v253, %v367
      %369 = vmatmul.bf16.gmra.mxu0 %v322
      %v370 = vpop.f32.mrf.mxu0
      %v371 = vadd.f32 %v253, %v370
      %v372 = vpop.f32.mrf.mxu0
      %v373 = vadd.f32 %v253, %v372
      %374 = vmatmul.bf16.gmra.mxu0 %v325
      %v375 = vpop.f32.mrf.mxu0
      %v376 = vadd.f32 %v253, %v375
      %v377 = vpop.f32.mrf.mxu0
      %v378 = vadd.f32 %v253, %v377
      %379 = vmatmul.bf16.gmra.mxu0 %v328
      %v380 = vpop.f32.mrf.mxu0
      %v381 = vadd.f32 %v253, %v380
      %v382 = vpop.f32.mrf.mxu0
      %v383 = vadd.f32 %v253, %v382
      %384 = vmatmul.bf16.gmra.mxu0 %v331
      %v385 = vpop.f32.mrf.mxu0
      %v386 = vadd.f32 %v253, %v385
      %v387 = vpop.f32.mrf.mxu0
      %v388 = vadd.f32 %v253, %v387
      %389 = vmatmul.bf16.gmra.mxu0 %v334
      %v390 = vpop.f32.mrf.mxu0
      %v391 = vadd.f32 %v253, %v390
      %v392 = vpop.f32.mrf.mxu0
      %v393 = vadd.f32 %v253, %v392
      %394 = vmatmul.bf16.gmra.mxu0 %v337
      %v395 = vpop.f32.mrf.mxu0
      %v396 = vadd.f32 %v253, %v395
      %v397 = vpop.f32.mrf.mxu0
      %v398 = vadd.f32 %v253, %v397
      %399 = vdwg.mxu0
      %v400 = vmax.f32 %v356, 0.0
      %v401 = vmax.f32 %v358, 0.0
      %v402 = vmax.f32 %v361, 0.0
      %v403 = vmax.f32 %v363, 0.0
      %v404 = vmax.f32 %v366, 0.0
      %v405 = vmax.f32 %v368, 0.0
      %v406 = vmax.f32 %v371, 0.0
      %v407 = vmax.f32 %v373, 0.0
      %v408 = vmax.f32 %v376, 0.0
      %v409 = vmax.f32 %v378, 0.0
      %v410 = vmax.f32 %v381, 0.0
      %v411 = vmax.f32 %v383, 0.0
      %v412 = vmax.f32 %v386, 0.0
      %v413 = vmax.f32 %v388, 0.0
      %v414 = vmax.f32 %v391, 0.0
      %v415 = vmax.f32 %v393, 0.0
      %v416 = vmax.f32 %v396, 0.0
      %v417 = vmax.f32 %v398, 0.0
      %v418 = vmin.f32 %v400, 6.0
      %v419 = vmin.f32 %v401, 6.0
      %v420 = vmin.f32 %v402, 6.0
      %v421 = vmin.f32 %v403, 6.0
      %v422 = vmin.f32 %v404, 6.0
      %v423 = vmin.f32 %v405, 6.0
      %v424 = vmin.f32 %v406, 6.0
      %v425 = vmin.f32 %v407, 6.0
      %v426 = vmin.f32 %v408, 6.0
      %v427 = vmin.f32 %v409, 6.0
      %v428 = vmin.f32 %v410, 6.0
      %v429 = vmin.f32 %v411, 6.0
      %v430 = vmin.f32 %v412, 6.0
      %v431 = vmin.f32 %v413, 6.0
      %v432 = vmin.f32 %v414, 6.0
      %v433 = vmin.f32 %v415, 6.0
      %v434 = vmin.f32 %v416, 6.0
      %v435 = vmin.f32 %v417, 6.0
      %v436 = vpack.c.bf16 %v419, %v418
      %v437 = vpack.c.bf16 %v421, %v420
      %v438 = vpack.c.bf16 %v423, %v422
      %v439 = vpack.c.bf16 %v425, %v424
      %v440 = vpack.c.bf16 %v427, %v426
      %v441 = vpack.c.bf16 %v429, %v428
      %v442 = vpack.c.bf16 %v431, %v430
      %v443 = vpack.c.bf16 %v433, %v432
      %v444 = vpack.c.bf16 %v435, %v434
      %v445 = vld [vmem:[%s3] sm:$0xf]
      %v446 = vld [vmem:[%s3 + $0x4] sm:$0xf]
      %v447 = vld [vmem:[%s3 + $0x8] sm:$0xf]
      %v448 = vld [vmem:[%s3 + $0xc] sm:$0xf]
      %v449 = vld [vmem:[%s4] sm:$0x1]
      %v451 = vperm.slane %v449, 0
      %v457 = vunpack.c.l.b16 %v445
      %v458 = vunpack.c.l.b16 %v446
      %v459 = vunpack.c.l.b16 %v447
      %v460 = vunpack.c.l.b16 %v448
      %v461 = vpack.c.b16 %v458, %v457
      %v462 = vpack.c.b16 %v460, %v459
      %vm465 = vcmask 261120
      %v467 = vsel %vm465, %v436, 0
      %v470 = vsel %vm465, %v437, 0
      %v473 = vsel %vm465, %v438, 0
      %v476 = vsel %vm465, %v439, 0
      %v479 = vsel %vm465, %v440, 0
      %v482 = vsel %vm465, %v441, 0
      %v485 = vsel %vm465, %v442, 0
      %v488 = vsel %vm465, %v443, 0
      %v491 = vsel %vm465, %v444, 0
      %493 = vmatpush.bf16.msra.mxu0 0
      %494 = vmatpush.bf16.msra.mxu0 0
      %495 = vmatpush.bf16.msra.mxu0 0
      %496 = vmatpush.bf16.msra.mxu0 0
      %497 = vmatpush.bf16.msra.mxu0 0
      %498 = vmatpush.bf16.msra.mxu0 0
      %499 = vmatpush.bf16.msra.mxu0 %v462
      %500 = vmatpush.bf16.msra.mxu0 %v461
      %501 = vmatmul.bf16.gmra.mxu0 %v467
      %v502 = vpop.f32.mrf.mxu0
      %v503 = vadd.f32 %v451, %v502
      %v504 = vpop.f32.mrf.mxu0
      %v505 = vadd.f32 %v451, %v504
      %506 = vmatmul.bf16.gmra.mxu0 %v470
      %v507 = vpop.f32.mrf.mxu0
      %v508 = vadd.f32 %v451, %v507
      %v509 = vpop.f32.mrf.mxu0
      %v510 = vadd.f32 %v451, %v509
      %511 = vmatmul.bf16.gmra.mxu0 %v473
      %v512 = vpop.f32.mrf.mxu0
      %v513 = vadd.f32 %v451, %v512
      %v514 = vpop.f32.mrf.mxu0
      %v515 = vadd.f32 %v451, %v514
      %516 = vmatmul.bf16.gmra.mxu0 %v476
      %v517 = vpop.f32.mrf.mxu0
      %v518 = vadd.f32 %v451, %v517
      %v519 = vpop.f32.mrf.mxu0
      %v520 = vadd.f32 %v451, %v519
      %521 = vmatmul.bf16.gmra.mxu0 %v479
      %v522 = vpop.f32.mrf.mxu0
      %v523 = vadd.f32 %v451, %v522
      %v524 = vpop.f32.mrf.mxu0
      %v525 = vadd.f32 %v451, %v524
      %526 = vmatmul.bf16.gmra.mxu0 %v482
      %v527 = vpop.f32.mrf.mxu0
      %v528 = vadd.f32 %v451, %v527
      %v529 = vpop.f32.mrf.mxu0
      %v530 = vadd.f32 %v451, %v529
      %531 = vmatmul.bf16.gmra.mxu0 %v485
      %v532 = vpop.f32.mrf.mxu0
      %v533 = vadd.f32 %v451, %v532
      %v534 = vpop.f32.mrf.mxu0
      %v535 = vadd.f32 %v451, %v534
      %536 = vmatmul.bf16.gmra.mxu0 %v488
      %v537 = vpop.f32.mrf.mxu0
      %v538 = vadd.f32 %v451, %v537
      %v539 = vpop.f32.mrf.mxu0
      %v540 = vadd.f32 %v451, %v539
      %541 = vmatmul.bf16.gmra.mxu0 %v491
      %v542 = vpop.f32.mrf.mxu0
      %v543 = vadd.f32 %v451, %v542
      %v544 = vpop.f32.mrf.mxu0
      %v545 = vadd.f32 %v451, %v544
      %546 = vdwg.mxu0
      %v547 = vpack.c.bf16 %v503, %v503
      %v548 = vpack.c.bf16 %v505, %v505
      %v549 = vpack.c.bf16 %v508, %v508
      %v550 = vpack.c.bf16 %v510, %v510
      %v551 = vpack.c.bf16 %v513, %v513
      %v552 = vpack.c.bf16 %v515, %v515
      %v553 = vpack.c.bf16 %v518, %v518
      %v554 = vpack.c.bf16 %v520, %v520
      %v555 = vpack.c.bf16 %v523, %v523
      %v556 = vpack.c.bf16 %v525, %v525
      %v557 = vpack.c.bf16 %v528, %v528
      %v558 = vpack.c.bf16 %v530, %v530
      %v559 = vpack.c.bf16 %v533, %v533
      %v560 = vpack.c.bf16 %v535, %v535
      %v561 = vpack.c.bf16 %v538, %v538
      %v562 = vpack.c.bf16 %v540, %v540
      %v563 = vpack.c.bf16 %v543, %v543
      %v564 = vpack.c.bf16 %v545, %v545
      %vm565 = vcmask 257024
      %566 = vst.msk [vmem:[%s226] sm:$0xf] %vm565, %v547
      %567 = vst.msk [vmem:[%s226 + $0x4] sm:$0xf] %vm565, %v548
      %568 = vst.msk [vmem:[%s226 + $0x8] sm:$0xf] %vm565, %v549
      %569 = vst.msk [vmem:[%s226 + $0xc] sm:$0xf] %vm565, %v550
      %570 = vst.msk [vmem:[%s226 + $0x10] sm:$0xf] %vm565, %v551
      %571 = vst.msk [vmem:[%s226 + $0x14] sm:$0xf] %vm565, %v552
      %572 = vst.msk [vmem:[%s226 + $0x18] sm:$0xf] %vm565, %v553
      %573 = vst.msk [vmem:[%s226 + $0x1c] sm:$0xf] %vm565, %v554
      %574 = vst.msk [vmem:[%s226 + $0x20] sm:$0xf] %vm565, %v555
      %575 = vst.msk [vmem:[%s226 + $0x24] sm:$0xf] %vm565, %v556
      %576 = vst.msk [vmem:[%s226 + $0x28] sm:$0xf] %vm565, %v557
      %577 = vst.msk [vmem:[%s226 + $0x2c] sm:$0xf] %vm565, %v558
      %578 = vst.msk [vmem:[%s226 + $0x30] sm:$0xf] %vm565, %v559
      %579 = vst.msk [vmem:[%s226 + $0x34] sm:$0xf] %vm565, %v560
      %580 = vst.msk [vmem:[%s226 + $0x38] sm:$0xf] %vm565, %v561
      %581 = vst.msk [vmem:[%s226 + $0x3c] sm:$0xf] %vm565, %v562
      %582 = vst.msk [vmem:[%s226 + $0x40] sm:$0xf] %vm565, %v563
      %583 = vst.msk [vmem:[%s226 + $0x44] sm:$0xf] %vm565, %v564
      %s584 = smul.u32 18, %s16
      %p585 = scmp.lt.s32.totalorder %s584, 35
      %s586 = scalar_select %p585, %s584, 35
      %s587 = smul.addr %s586, 4
      %s588 = scalar_lea.vmem %s5, %s587
      // Predicated region
      $region41: #{_lambda_.12} parent=39 // pred_check
        %p589 = pneg %p144
      $region42: #{_lambda_.12} parent=39 // pred_check_branch
        %591 = sbr.rel (%p589) target = $region44
      $region43: #{_lambda_.12} parent=39 // pred_region
        %s592 = smul.u32 18, %s16
      $region44: #{_lambda_.12} parent=39 // pred_fallthru
        _
    $region40: #{_lambda_.12} parent=5 // pred_fallthru
      _
    %p593 = scmp.le.s32.totalorder 2, %s11
    // Predicated region
    $region45: #{_lambda_.12} parent=5 // pred_check
      %p594 = pneg %p593
    $region46: #{_lambda_.12} parent=5 // pred_check_branch
      %596 = sbr.rel (%p594) target = $region48
    $region47: #{_lambda_.12} parent=5 // pred_region
      %s597 = ssub.s32 %s11, 2
      // Predicated region
      $region49: #{_lambda_.12} parent=47 // pred_check
        %p598 = pneg %p150
      $region50: #{_lambda_.12} parent=47 // pred_check_branch
        %600 = sbr.rel (%p598) target = $region52
      $region51: #{_lambda_.12} parent=47 // pred_region
        %s601 = smul.u32 18, %s17
        %p602 = scmp.lt.s32.totalorder %s601, 35
        %s603 = scalar_select %p602, %s601, 35
        %s604 = smul.addr %s603, 4
        %s605 = scalar_lea.vmem %s5, %s604
      $region52: #{_lambda_.12} parent=47 // pred_fallthru
        _
    $region48: #{_lambda_.12} parent=5 // pred_fallthru
      _
  $region6: #{_lambda_.12} parent=0 // loop_footer
    %s15 = sadd.s32 1, %s11
  $region7: #{_lambda_.12} parent=0 // loop_footer_branch
    %10 = sbr.rel target = $region3
  $region8: #{_lambda_.12} parent=0 // loop_exit
    _

// kernel: _lambda_.13
$region0: #{_lambda_.13}
  #allocation0 [shape = 'u32[]', space=smem, size = 0x4, offset = 0x4, fixed_abs, tag = 'smem constant byte address 0x4 - core index']
  #allocation1 [shape = 'u32[72,128]{1,0:T(1,128)}', space=vmem, size = 0x9000, scoped, tag = 'internal scratch']
  %s0 = inlined_call_operand.vmem [shape: bf16[2,144,32], index: 0, kind: input, shape index: {}]
  %s1 = inlined_call_operand.vmem [shape: bf16[32,96], index: 1, kind: input, shape index: {}]
  %s2 = inlined_call_operand.vmem [shape: f32[1,144,144], index: 2, kind: input, shape index: {}]
  %s3 = inlined_call_operand.vmem [shape: bf16[32,32], index: 3, kind: input, shape index: {}]
  %s4 = inlined_call_operand.vmem [shape: f32[1,32], index: 4, kind: input, shape index: {}]
  %s5 = inlined_call_operand.vmem [shape: bf16[2,144,144], index: 5, kind: input, shape index: {}]
  %s6 = inlined_call_operand.vmem [shape: bf16[2,144,144], index: 6, kind: input, shape index: {}]
  %s7 = inlined_call_operand.vmem [shape: f32[9,32], index: 7, kind: input, shape index: {}]
  %s8 = inlined_call_operand.vmem [shape: bf16[32,64], index: 8, kind: input, shape index: {}]
  %s9 = inlined_call_operand.vmem [shape: f32[1,64], index: 9, kind: input, shape index: {}]
  %s10 = inlined_call_operand.vmem [shape: bf16[64,32], index: 10, kind: input, shape index: {}]
  %s11 = inlined_call_operand.vmem [shape: f32[1,32], index: 11, kind: input, shape index: {}]
  %s12 = inlined_call_operand.vmem [shape: bf16[2,144,32], index: 12, kind: output, shape index: {}]
  %s13 = sld [smem:[#allocation0]]
  $region81: #{_lambda_.13} parent=0
    _
  %s15 = ssub.s32 1, %s13
  %s16 = scalar_select 0, %s15, %s13
  loop: start=0, step=1, limit=4
  $region2: #{_lambda_.13} parent=0 // loop_pre_header
    _
  $region3: #{_lambda_.13} parent=0 // loop_header
    %s18 = sphi 0, %s22
    %p19 = scmp.ge.s32.totalorder %s18, 4
    %s28 = sphi 0, %s30
    %s31 = sphi 0, %s28
    %s32 = sphi 0, %s31
    %s48 = sphi 0, %s32
    %s52 = sphi 0, %s52
    %s54 = sphi 0, %s52
    %s55 = sphi 0, %s54
    %s69 = sphi 0, %s55
    %s73 = sphi 0, %s73
    %s75 = sphi 0, %s73
    %s76 = sphi 0, %s75
    %s90 = sphi 0, %s76
    %s94 = sphi 0, %s94
    %s96 = sphi 0, %s94
    %s97 = sphi 0, %s96
    %s111 = sphi 0, %s97
    %s115 = sphi 0, %s115
    %s117 = sphi 0, %s115
    %s118 = sphi 0, %s117
    %s132 = sphi 0, %s118
    %s136 = sphi 0, %s136
    %s138 = sphi 0, %s136
    %s139 = sphi 0, %s138
    %s153 = sphi 0, %s139
    %s157 = sphi 0, %s157
    %s159 = sphi 0, %s157
    %s160 = sphi 0, %s159
    %s174 = sphi 0, %s160
    %s178 = sphi 0, %s178
    %s180 = sphi 0, %s178
    %s181 = sphi 0, %s180
    %s195 = sphi 0, %s181
    %s199 = sphi 0, %s199
    %s201 = sphi 0, %s199
    %s202 = sphi 0, %s201
    %s216 = sphi 0, %s202
    %s220 = sphi 0, %s220
    %s222 = sphi 0, %s220
    %s223 = sphi 0, %s222
    %s237 = sphi 0, %s223
    %s241 = sphi 0, %s241
    %s243 = sphi 0, %s241
    %s244 = sphi 0, %s243
    %s258 = sphi 0, %s244
    %s262 = sphi 0, %s262
    %s264 = sphi 0, %s262
    %s265 = sphi 0, %s264
    %s279 = sphi 0, %s265
    %s285 = sphi 0, %s287
    %s288 = sphi 0, %s285
    %s289 = sphi 0, %s288
    %s305 = sphi 0, %s289
  $region4: #{_lambda_.13} parent=0 // loop_header_branch
    %21 = sbr.rel (%p19) target = $region8
  $region5: #{_lambda_.13} parent=0 // loop_body
    %s23 = ssub.s32 %s18, 1
    %s24 = ssub.s32 %s18, 2
    %s25 = sadd.s32 %s18, 1
    %s26 = ssub.s32 %s18, %s25
    %p27 = scmp.eq.s32.totalorder %s26, 0
    %s29 = sadd.s32 %s28, 1
    %s30 = scalar_select %p27, %s28, %s29
    %p33 = pneg %p27
    %p34 = scmp.eq.s32.totalorder %s18, 1
    %p35 = por %p33, %p34
    %p36 = scmp.ne.s32.totalorder %s28, %s31
    %p37 = scmp.eq.s32.totalorder %s18, 0
    %p38 = por %p36, %p37
    %p39 = scmp.ne.s32.totalorder %s28, %s31
    %p40 = scmp.eq.s32.totalorder %s23, 1
    %p41 = por %p39, %p40
    %p42 = scmp.ne.s32.totalorder %s31, %s32
    %p43 = scmp.eq.s32.totalorder %s23, 0
    %p44 = por %p42, %p43
    %p45 = scmp.ne.s32.totalorder %s31, %s32
    %p46 = scmp.eq.s32.totalorder %s24, 1
    %p47 = por %p45, %p46
    %p49 = scmp.ne.s32.totalorder %s32, %s48
    %p50 = scmp.eq.s32.totalorder %s24, 0
    %p51 = por %p49, %p50
    %s53 = sadd.s32 %s52, 1
    %p56 = scmp.eq.s32.totalorder %s18, 1
    %p57 = scmp.ne.s32.totalorder %s52, %s54
    %p58 = scmp.eq.s32.totalorder %s18, 0
    %p59 = por %p57, %p58
    %p60 = scmp.ne.s32.totalorder %s52, %s54
    %p61 = scmp.eq.s32.totalorder %s23, 1
    %p62 = por %p60, %p61
    %p63 = scmp.ne.s32.totalorder %s54, %s55
    %p64 = scmp.eq.s32.totalorder %s23, 0
    %p65 = por %p63, %p64
    %p66 = scmp.ne.s32.totalorder %s54, %s55
    %p67 = scmp.eq.s32.totalorder %s24, 1
    %p68 = por %p66, %p67
    %p70 = scmp.ne.s32.totalorder %s55, %s69
    %p71 = scmp.eq.s32.totalorder %s24, 0
    %p72 = por %p70, %p71
    %s74 = sadd.s32 %s73, 1
    %p77 = scmp.eq.s32.totalorder %s18, 1
    %p78 = scmp.ne.s32.totalorder %s73, %s75
    %p79 = scmp.eq.s32.totalorder %s18, 0
    %p80 = por %p78, %p79
    %p81 = scmp.ne.s32.totalorder %s73, %s75
    %p82 = scmp.eq.s32.totalorder %s23, 1
    %p83 = por %p81, %p82
    %p84 = scmp.ne.s32.totalorder %s75, %s76
    %p85 = scmp.eq.s32.totalorder %s23, 0
    %p86 = por %p84, %p85
    %p87 = scmp.ne.s32.totalorder %s75, %s76
    %p88 = scmp.eq.s32.totalorder %s24, 1
    %p89 = por %p87, %p88
    %p91 = scmp.ne.s32.totalorder %s76, %s90
    %p92 = scmp.eq.s32.totalorder %s24, 0
    %p93 = por %p91, %p92
    %s95 = sadd.s32 %s94, 1
    %p98 = scmp.eq.s32.totalorder %s18, 1
    %p99 = scmp.ne.s32.totalorder %s94, %s96
    %p100 = scmp.eq.s32.totalorder %s18, 0
    %p101 = por %p99, %p100
    %p102 = scmp.ne.s32.totalorder %s94, %s96
    %p103 = scmp.eq.s32.totalorder %s23, 1
    %p104 = por %p102, %p103
    %p105 = scmp.ne.s32.totalorder %s96, %s97
    %p106 = scmp.eq.s32.totalorder %s23, 0
    %p107 = por %p105, %p106
    %p108 = scmp.ne.s32.totalorder %s96, %s97
    %p109 = scmp.eq.s32.totalorder %s24, 1
    %p110 = por %p108, %p109
    %p112 = scmp.ne.s32.totalorder %s97, %s111
    %p113 = scmp.eq.s32.totalorder %s24, 0
    %p114 = por %p112, %p113
    %s116 = sadd.s32 %s115, 1
    %p119 = scmp.eq.s32.totalorder %s18, 1
    %p120 = scmp.ne.s32.totalorder %s115, %s117
    %p121 = scmp.eq.s32.totalorder %s18, 0
    %p122 = por %p120, %p121
    %p123 = scmp.ne.s32.totalorder %s115, %s117
    %p124 = scmp.eq.s32.totalorder %s23, 1
    %p125 = por %p123, %p124
    %p126 = scmp.ne.s32.totalorder %s117, %s118
    %p127 = scmp.eq.s32.totalorder %s23, 0
    %p128 = por %p126, %p127
    %p129 = scmp.ne.s32.totalorder %s117, %s118
    %p130 = scmp.eq.s32.totalorder %s24, 1
    %p131 = por %p129, %p130
    %p133 = scmp.ne.s32.totalorder %s118, %s132
    %p134 = scmp.eq.s32.totalorder %s24, 0
    %p135 = por %p133, %p134
    %s137 = sadd.s32 %s136, 1
    %p140 = scmp.eq.s32.totalorder %s18, 1
    %p141 = scmp.ne.s32.totalorder %s136, %s138
    %p142 = scmp.eq.s32.totalorder %s18, 0
    %p143 = por %p141, %p142
    %p144 = scmp.ne.s32.totalorder %s136, %s138
    %p145 = scmp.eq.s32.totalorder %s23, 1
    %p146 = por %p144, %p145
    %p147 = scmp.ne.s32.totalorder %s138, %s139
    %p148 = scmp.eq.s32.totalorder %s23, 0
    %p149 = por %p147, %p148
    %p150 = scmp.ne.s32.totalorder %s138, %s139
    %p151 = scmp.eq.s32.totalorder %s24, 1
    %p152 = por %p150, %p151
    %p154 = scmp.ne.s32.totalorder %s139, %s153
    %p155 = scmp.eq.s32.totalorder %s24, 0
    %p156 = por %p154, %p155
    %s158 = sadd.s32 %s157, 1
    %p161 = scmp.eq.s32.totalorder %s18, 1
    %p162 = scmp.ne.s32.totalorder %s157, %s159
    %p163 = scmp.eq.s32.totalorder %s18, 0
    %p164 = por %p162, %p163
    %p165 = scmp.ne.s32.totalorder %s157, %s159
    %p166 = scmp.eq.s32.totalorder %s23, 1
    %p167 = por %p165, %p166
    %p168 = scmp.ne.s32.totalorder %s159, %s160
    %p169 = scmp.eq.s32.totalorder %s23, 0
    %p170 = por %p168, %p169
    %p171 = scmp.ne.s32.totalorder %s159, %s160
    %p172 = scmp.eq.s32.totalorder %s24, 1
    %p173 = por %p171, %p172
    %p175 = scmp.ne.s32.totalorder %s160, %s174
    %p176 = scmp.eq.s32.totalorder %s24, 0
    %p177 = por %p175, %p176
    %s179 = sadd.s32 %s178, 1
    %p182 = scmp.eq.s32.totalorder %s18, 1
    %p183 = scmp.ne.s32.totalorder %s178, %s180
    %p184 = scmp.eq.s32.totalorder %s18, 0
    %p185 = por %p183, %p184
    %p186 = scmp.ne.s32.totalorder %s178, %s180
    %p187 = scmp.eq.s32.totalorder %s23, 1
    %p188 = por %p186, %p187
    %p189 = scmp.ne.s32.totalorder %s180, %s181
    %p190 = scmp.eq.s32.totalorder %s23, 0
    %p191 = por %p189, %p190
    %p192 = scmp.ne.s32.totalorder %s180, %s181
    %p193 = scmp.eq.s32.totalorder %s24, 1
    %p194 = por %p192, %p193
    %p196 = scmp.ne.s32.totalorder %s181, %s195
    %p197 = scmp.eq.s32.totalorder %s24, 0
    %p198 = por %p196, %p197
    %s200 = sadd.s32 %s199, 1
    %p203 = scmp.eq.s32.totalorder %s18, 1
    %p204 = scmp.ne.s32.totalorder %s199, %s201
    %p205 = scmp.eq.s32.totalorder %s18, 0
    %p206 = por %p204, %p205
    %p207 = scmp.ne.s32.totalorder %s199, %s201
    %p208 = scmp.eq.s32.totalorder %s23, 1
    %p209 = por %p207, %p208
    %p210 = scmp.ne.s32.totalorder %s201, %s202
    %p211 = scmp.eq.s32.totalorder %s23, 0
    %p212 = por %p210, %p211
    %p213 = scmp.ne.s32.totalorder %s201, %s202
    %p214 = scmp.eq.s32.totalorder %s24, 1
    %p215 = por %p213, %p214
    %p217 = scmp.ne.s32.totalorder %s202, %s216
    %p218 = scmp.eq.s32.totalorder %s24, 0
    %p219 = por %p217, %p218
    %s221 = sadd.s32 %s220, 1
    %p224 = scmp.eq.s32.totalorder %s18, 1
    %p225 = scmp.ne.s32.totalorder %s220, %s222
    %p226 = scmp.eq.s32.totalorder %s18, 0
    %p227 = por %p225, %p226
    %p228 = scmp.ne.s32.totalorder %s220, %s222
    %p229 = scmp.eq.s32.totalorder %s23, 1
    %p230 = por %p228, %p229
    %p231 = scmp.ne.s32.totalorder %s222, %s223
    %p232 = scmp.eq.s32.totalorder %s23, 0
    %p233 = por %p231, %p232
    %p234 = scmp.ne.s32.totalorder %s222, %s223
    %p235 = scmp.eq.s32.totalorder %s24, 1
    %p236 = por %p234, %p235
    %p238 = scmp.ne.s32.totalorder %s223, %s237
    %p239 = scmp.eq.s32.totalorder %s24, 0
    %p240 = por %p238, %p239
    %s242 = sadd.s32 %s241, 1
    %p245 = scmp.eq.s32.totalorder %s18, 1
    %p246 = scmp.ne.s32.totalorder %s241, %s243
    %p247 = scmp.eq.s32.totalorder %s18, 0
    %p248 = por %p246, %p247
    %p249 = scmp.ne.s32.totalorder %s241, %s243
    %p250 = scmp.eq.s32.totalorder %s23, 1
    %p251 = por %p249, %p250
    %p252 = scmp.ne.s32.totalorder %s243, %s244
    %p253 = scmp.eq.s32.totalorder %s23, 0
    %p254 = por %p252, %p253
    %p255 = scmp.ne.s32.totalorder %s243, %s244
    %p256 = scmp.eq.s32.totalorder %s24, 1
    %p257 = por %p255, %p256
    %p259 = scmp.ne.s32.totalorder %s244, %s258
    %p260 = scmp.eq.s32.totalorder %s24, 0
    %p261 = por %p259, %p260
    %s263 = sadd.s32 %s262, 1
    %p266 = scmp.eq.s32.totalorder %s18, 1
    %p267 = scmp.ne.s32.totalorder %s262, %s264
    %p268 = scmp.eq.s32.totalorder %s18, 0
    %p269 = por %p267, %p268
    %p270 = scmp.ne.s32.totalorder %s262, %s264
    %p271 = scmp.eq.s32.totalorder %s23, 1
    %p272 = por %p270, %p271
    %p273 = scmp.ne.s32.totalorder %s264, %s265
    %p274 = scmp.eq.s32.totalorder %s23, 0
    %p275 = por %p273, %p274
    %p276 = scmp.ne.s32.totalorder %s264, %s265
    %p277 = scmp.eq.s32.totalorder %s24, 1
    %p278 = por %p276, %p277
    %p280 = scmp.ne.s32.totalorder %s265, %s279
    %p281 = scmp.eq.s32.totalorder %s24, 0
    %p282 = por %p280, %p281
    %s283 = ssub.s32 %s18, %s25
    %p284 = scmp.eq.s32.totalorder %s283, 0
    %s286 = sadd.s32 %s285, 1
    %s287 = scalar_select %p284, %s285, %s286
    %p290 = pneg %p284
    %p291 = scmp.eq.s32.totalorder %s18, 1
    %p292 = por %p290, %p291
    %p293 = scmp.ne.s32.totalorder %s285, %s288
    %p294 = scmp.eq.s32.totalorder %s18, 0
    %p295 = por %p293, %p294
    %p296 = scmp.ne.s32.totalorder %s285, %s288
    %p297 = scmp.eq.s32.totalorder %s23, 1
    %p298 = por %p296, %p297
    %p299 = scmp.ne.s32.totalorder %s288, %s289
    %p300 = scmp.eq.s32.totalorder %s23, 0
    %p301 = por %p299, %p300
    %p302 = scmp.ne.s32.totalorder %s288, %s289
    %p303 = scmp.eq.s32.totalorder %s24, 1
    %p304 = por %p302, %p303
    %p306 = scmp.ne.s32.totalorder %s289, %s305
    %p307 = scmp.eq.s32.totalorder %s24, 0
    %p308 = por %p306, %p307
    %p309 = scmp.le.s32.totalorder 1, %s18
    %p310 = scmp.lt.s32.totalorder %s18, 3
    %p311 = pnand %p309, %p310
    %p312 = pneg %p311
    // Predicated region
    $region9: #{_lambda_.13} parent=5 // pred_check
      _
    $region10: #{_lambda_.13} parent=5 // pred_check_branch
      %314 = sbr.rel (%p311) target = $region12
    $region11: #{_lambda_.13} parent=5 // pred_region
      %s315 = ssub.s32 %s18, 1
      // Predicated region
      $region13: #{_lambda_.13} parent=11 // pred_check
        %p316 = pneg %p65
      $region14: #{_lambda_.13} parent=11 // pred_check_branch
        %318 = sbr.rel (%p316) target = $region16
      $region15: #{_lambda_.13} parent=11 // pred_region
        _
      $region16: #{_lambda_.13} parent=11 // pred_fallthru
        _
      // Predicated region
      $region17: #{_lambda_.13} parent=11 // pred_check
        %p319 = pneg %p86
      $region18: #{_lambda_.13} parent=11 // pred_check_branch
        %321 = sbr.rel (%p319) target = $region20
      $region19: #{_lambda_.13} parent=11 // pred_region
        _
      $region20: #{_lambda_.13} parent=11 // pred_fallthru
        _
      // Predicated region
      $region21: #{_lambda_.13} parent=11 // pred_check
        %p322 = pneg %p107
      $region22: #{_lambda_.13} parent=11 // pred_check_branch
        %324 = sbr.rel (%p322) target = $region24
      $region23: #{_lambda_.13} parent=11 // pred_region
        _
      $region24: #{_lambda_.13} parent=11 // pred_fallthru
        _
      // Predicated region
      $region25: #{_lambda_.13} parent=11 // pred_check
        %p325 = pneg %p128
      $region26: #{_lambda_.13} parent=11 // pred_check_branch
        %327 = sbr.rel (%p325) target = $region28
      $region27: #{_lambda_.13} parent=11 // pred_region
        _
      $region28: #{_lambda_.13} parent=11 // pred_fallthru
        _
      // Predicated region
      $region29: #{_lambda_.13} parent=11 // pred_check
        %p328 = pneg %p149
      $region30: #{_lambda_.13} parent=11 // pred_check_branch
        %330 = sbr.rel (%p328) target = $region32
      $region31: #{_lambda_.13} parent=11 // pred_region
        _
      $region32: #{_lambda_.13} parent=11 // pred_fallthru
        _
      // Predicated region
      $region33: #{_lambda_.13} parent=11 // pred_check
        %p331 = pneg %p170
      $region34: #{_lambda_.13} parent=11 // pred_check_branch
        %333 = sbr.rel (%p331) target = $region36
      $region35: #{_lambda_.13} parent=11 // pred_region
        _
      $region36: #{_lambda_.13} parent=11 // pred_fallthru
        _
      // Predicated region
      $region37: #{_lambda_.13} parent=11 // pred_check
        %p334 = pneg %p191
      $region38: #{_lambda_.13} parent=11 // pred_check_branch
        %336 = sbr.rel (%p334) target = $region40
      $region39: #{_lambda_.13} parent=11 // pred_region
        _
      $region40: #{_lambda_.13} parent=11 // pred_fallthru
        _
      // Predicated region
      $region41: #{_lambda_.13} parent=11 // pred_check
        %p337 = pneg %p212
      $region42: #{_lambda_.13} parent=11 // pred_check_branch
        %339 = sbr.rel (%p337) target = $region44
      $region43: #{_lambda_.13} parent=11 // pred_region
        _
      $region44: #{_lambda_.13} parent=11 // pred_fallthru
        _
      // Predicated region
      $region45: #{_lambda_.13} parent=11 // pred_check
        %p340 = pneg %p233
      $region46: #{_lambda_.13} parent=11 // pred_check_branch
        %342 = sbr.rel (%p340) target = $region48
      $region47: #{_lambda_.13} parent=11 // pred_region
        _
      $region48: #{_lambda_.13} parent=11 // pred_fallthru
        _
      // Predicated region
      $region49: #{_lambda_.13} parent=11 // pred_check
        %p343 = pneg %p254
      $region50: #{_lambda_.13} parent=11 // pred_check_branch
        %345 = sbr.rel (%p343) target = $region52
      $region51: #{_lambda_.13} parent=11 // pred_region
        _
      $region52: #{_lambda_.13} parent=11 // pred_fallthru
        _
      // Predicated region
      $region53: #{_lambda_.13} parent=11 // pred_check
        %p346 = pneg %p275
      $region54: #{_lambda_.13} parent=11 // pred_check_branch
        %348 = sbr.rel (%p346) target = $region56
      $region55: #{_lambda_.13} parent=11 // pred_region
        _
      $region56: #{_lambda_.13} parent=11 // pred_fallthru
        _
    $region12: #{_lambda_.13} parent=5 // pred_fallthru
      _
    %p349 = scmp.lt.s32.totalorder %s18, 2
    // Predicated region
    $region57: #{_lambda_.13} parent=5 // pred_check
      %p350 = pneg %p349
    $region58: #{_lambda_.13} parent=5 // pred_check_branch
      %352 = sbr.rel (%p350) target = $region60
    $region59: #{_lambda_.13} parent=5 // pred_region
      // Predicated region
      $region61: #{_lambda_.13} parent=59 // pred_check
        %p353 = pneg %p38
      $region62: #{_lambda_.13} parent=59 // pred_check_branch
        %355 = sbr.rel (%p353) target = $region64
      $region63: #{_lambda_.13} parent=59 // pred_region
        %p356 = scmp.lt.s32.totalorder %s18, 1
        %s357 = scalar_select %p356, %s18, 1
        %s358 = smul.addr %s357, 18
        %s359 = smul.addr %s358, 4
        %s360 = scalar_lea.vmem %s0, %s359
      $region64: #{_lambda_.13} parent=59 // pred_fallthru
        _
    $region60: #{_lambda_.13} parent=5 // pred_fallthru
      _
    %p361 = scmp.le.s32.totalorder 1, %s18
    %p362 = scmp.lt.s32.totalorder %s18, 3
    %p363 = pnand %p361, %p362
    %p364 = pneg %p363
    // Predicated region
    $region65: #{_lambda_.13} parent=5 // pred_check
      _
    $region66: #{_lambda_.13} parent=5 // pred_check_branch
      %366 = sbr.rel (%p363) target = $region68
    $region67: #{_lambda_.13} parent=5 // pred_region
      %s367 = ssub.s32 %s18, 1
      %p368 = scmp.lt.s32.totalorder %s23, 1
      %s369 = scalar_select %p368, %s23, 1
      %s370 = smul.addr %s369, 18
      %s371 = smul.addr %s370, 4
      %s372 = scalar_lea.vmem %s0, %s371
      %p373 = pneg %p44
      %p374 = pneg %p41
      %p375 = pneg %p65
      %p376 = pneg %p62
      %p377 = pneg %p86
      %p378 = pneg %p83
      %p379 = pneg %p107
      %p380 = pneg %p104
      %p381 = pneg %p128
      %p382 = pneg %p125
      %p383 = pneg %p149
      %p384 = pneg %p146
      %p385 = pneg %p170
      %p386 = pneg %p167
      %p387 = pneg %p191
      %p388 = pneg %p188
      %p389 = pneg %p212
      %p390 = pneg %p209
      %p391 = pneg %p233
      %p392 = pneg %p230
      %p393 = pneg %p254
      %p394 = pneg %p251
      %p395 = pneg %p275
      %p396 = pneg %p272
      %p397 = pneg %p301
      %p398 = pneg %p298
      %p399 = scmp.lt.s32.totalorder %s23, 1
      %s400 = scalar_select %p399, %s23, 1
      %s401 = smul.addr %s400, 18
      %s402 = smul.addr %s401, 4
      %s403 = scalar_lea.vmem %s12, %s402
      %p404 = scmp.lt.s32.totalorder %s23, 1
      %s405 = scalar_select %p404, %s23, 1
      %s406 = smul.addr %s405, 18
      %s407 = smul.addr %s406, 4
      %s408 = scalar_lea.vmem %s0, %s407
      %p409 = scmp.lt.s32.totalorder %s23, 1
      %s410 = scalar_select %p409, %s23, 1
      %s411 = smul.addr %s410, 18
      %s412 = smul.addr %s411, 4
      %s413 = scalar_lea.vmem %s12, %s412
      %v415 = vld [vmem:[%s408] sm:$0xf]
      %v416 = vld [vmem:[%s408 + $0x4] sm:$0xf]
      %v417 = vld [vmem:[%s408 + $0x8] sm:$0xf]
      %v418 = vld [vmem:[%s408 + $0xc] sm:$0xf]
      %v419 = vld [vmem:[%s408 + $0x10] sm:$0xf]
      %v420 = vld [vmem:[%s408 + $0x14] sm:$0xf]
      %v421 = vld [vmem:[%s408 + $0x18] sm:$0xf]
      %v422 = vld [vmem:[%s408 + $0x1c] sm:$0xf]
      %v423 = vld [vmem:[%s408 + $0x20] sm:$0xf]
      %v424 = vld [vmem:[%s408 + $0x24] sm:$0xf]
      %v425 = vld [vmem:[%s408 + $0x28] sm:$0xf]
      %v426 = vld [vmem:[%s408 + $0x2c] sm:$0xf]
      %v427 = vld [vmem:[%s408 + $0x30] sm:$0xf]
      %v428 = vld [vmem:[%s408 + $0x34] sm:$0xf]
      %v429 = vld [vmem:[%s408 + $0x38] sm:$0xf]
      %v430 = vld [vmem:[%s408 + $0x3c] sm:$0xf]
      %v431 = vld [vmem:[%s408 + $0x40] sm:$0xf]
      %v432 = vld [vmem:[%s408 + $0x44] sm:$0xf]
      %v433 = vunpack.c.l.bf16 %v415
      %v434 = vunpack.c.l.bf16 %v416
      %v435 = vunpack.c.l.bf16 %v417
      %v436 = vunpack.c.l.bf16 %v418
      %v437 = vunpack.c.l.bf16 %v419
      %v438 = vunpack.c.l.bf16 %v420
      %v439 = vunpack.c.l.bf16 %v421
      %v440 = vunpack.c.l.bf16 %v422
      %v441 = vunpack.c.l.bf16 %v423
      %v442 = vunpack.c.l.bf16 %v424
      %v443 = vunpack.c.l.bf16 %v425
      %v444 = vunpack.c.l.bf16 %v426
      %v445 = vunpack.c.l.bf16 %v427
      %v446 = vunpack.c.l.bf16 %v428
      %v447 = vunpack.c.l.bf16 %v429
      %v448 = vunpack.c.l.bf16 %v430
      %v449 = vunpack.c.l.bf16 %v431
      %v450 = vunpack.c.l.bf16 %v432
      %v451 = vld [vmem:[%s1] sm:$0xf]
      %v452 = vld [vmem:[%s1 + $0x4] sm:$0xf]
      %v453 = vld [vmem:[%s1 + $0x8] sm:$0xf]
      %v454 = vld [vmem:[%s1 + $0xc] sm:$0xf]
      %v473 = vunpack.c.l.b16 %v415
      %v474 = vunpack.c.l.b16 %v416
      %v475 = vunpack.c.l.b16 %v417
      %v476 = vunpack.c.l.b16 %v418
      %v477 = vunpack.c.l.b16 %v419
      %v478 = vunpack.c.l.b16 %v420
      %v479 = vunpack.c.l.b16 %v421
      %v480 = vunpack.c.l.b16 %v422
      %v481 = vunpack.c.l.b16 %v423
      %v482 = vunpack.c.l.b16 %v424
      %v483 = vunpack.c.l.b16 %v425
      %v484 = vunpack.c.l.b16 %v426
      %v485 = vunpack.c.l.b16 %v427
      %v486 = vunpack.c.l.b16 %v428
      %v487 = vunpack.c.l.b16 %v429
      %v488 = vunpack.c.l.b16 %v430
      %v489 = vunpack.c.l.b16 %v431
      %v490 = vunpack.c.l.b16 %v432
      %v491 = vpack.c.b16 %v474, %v473
      %v492 = vpack.c.b16 %v476, %v475
      %v493 = vpack.c.b16 %v478, %v477
      %v494 = vpack.c.b16 %v480, %v479
      %v495 = vpack.c.b16 %v482, %v481
      %v496 = vpack.c.b16 %v484, %v483
      %v497 = vpack.c.b16 %v486, %v485
      %v498 = vpack.c.b16 %v488, %v487
      %v499 = vpack.c.b16 %v490, %v489
      %v504 = vunpack.c.l.b16 %v451
      %v505 = vunpack.c.l.b16 %v452
      %v506 = vunpack.c.l.b16 %v453
      %v507 = vunpack.c.l.b16 %v454
      %v508 = vpack.c.b16 %v505, %v504
      %v509 = vpack.c.b16 %v507, %v506
      %vm512 = vcmask 261120
      %v514 = vsel %vm512, %v491, 0
      %v517 = vsel %vm512, %v492, 0
      %v520 = vsel %vm512, %v493, 0
      %v523 = vsel %vm512, %v494, 0
      %v526 = vsel %vm512, %v495, 0
      %v529 = vsel %vm512, %v496, 0
      %v532 = vsel %vm512, %v497, 0
      %v535 = vsel %vm512, %v498, 0
      %v538 = vsel %vm512, %v499, 0
      %540 = vmatpush.bf16.msra.mxu0 0
      %541 = vmatpush.bf16.msra.mxu0 0
      %542 = vmatpush.bf16.msra.mxu0 0
      %543 = vmatpush.bf16.msra.mxu0 0
      %544 = vmatpush.bf16.msra.mxu0 0
      %545 = vmatpush.bf16.msra.mxu0 0
      %546 = vmatpush.bf16.msra.mxu0 %v509
      %547 = vmatpush.bf16.msra.mxu0 %v508
      %548 = vmatmul.bf16.gmra.mxu0 %v514
      %v549 = vpop.f32.mrf.mxu0
      %v550 = vadd.f32 0.0, %v549
      %v551 = vpop.f32.mrf.mxu0
      %v552 = vadd.f32 0.0, %v551
      %553 = vmatmul.bf16.gmra.mxu0 %v517
      %v554 = vpop.f32.mrf.mxu0
      %v555 = vadd.f32 0.0, %v554
      %v556 = vpop.f32.mrf.mxu0
      %v557 = vadd.f32 0.0, %v556
      %558 = vmatmul.bf16.gmra.mxu0 %v520
      %v559 = vpop.f32.mrf.mxu0
      %v560 = vadd.f32 0.0, %v559
      %v561 = vpop.f32.mrf.mxu0
      %v562 = vadd.f32 0.0, %v561
      %563 = vmatmul.bf16.gmra.mxu0 %v523
      %v564 = vpop.f32.mrf.mxu0
      %v565 = vadd.f32 0.0, %v564
      %v566 = vpop.f32.mrf.mxu0
      %v567 = vadd.f32 0.0, %v566
      %568 = vmatmul.bf16.gmra.mxu0 %v526
      %v569 = vpop.f32.mrf.mxu0
      %v570 = vadd.f32 0.0, %v569
      %v571 = vpop.f32.mrf.mxu0
      %v572 = vadd.f32 0.0, %v571
      %573 = vmatmul.bf16.gmra.mxu0 %v529
      %v574 = vpop.f32.mrf.mxu0
      %v575 = vadd.f32 0.0, %v574
      %v576 = vpop.f32.mrf.mxu0
      %v577 = vadd.f32 0.0, %v576
      %578 = vmatmul.bf16.gmra.mxu0 %v532
      %v579 = vpop.f32.mrf.mxu0
      %v580 = vadd.f32 0.0, %v579
      %v581 = vpop.f32.mrf.mxu0
      %v582 = vadd.f32 0.0, %v581
      %583 = vmatmul.bf16.gmra.mxu0 %v535
      %v584 = vpop.f32.mrf.mxu0
      %v585 = vadd.f32 0.0, %v584
      %v586 = vpop.f32.mrf.mxu0
      %v587 = vadd.f32 0.0, %v586
      %588 = vmatmul.bf16.gmra.mxu0 %v538
      %v589 = vpop.f32.mrf.mxu0
      %v590 = vadd.f32 0.0, %v589
      %v591 = vpop.f32.mrf.mxu0
      %v592 = vadd.f32 0.0, %v591
      %593 = vdwg.mxu0
      %v594 = vpack.c.bf16 %v552, %v550
      %v595 = vpack.c.bf16 %v557, %v555
      %v596 = vpack.c.bf16 %v562, %v560
      %v597 = vpack.c.bf16 %v567, %v565
      %v598 = vpack.c.bf16 %v572, %v570
      %v599 = vpack.c.bf16 %v577, %v575
      %v600 = vpack.c.bf16 %v582, %v580
      %v601 = vpack.c.bf16 %v587, %v585
      %v602 = vpack.c.bf16 %v592, %v590
      %612 = vrot.lane.b32.xlu0 %v594, 96
      %v613 = vpop.permute.xlu0 %612
      %614 = vrot.lane.b32.xlu0 %v595, 96
      %v615 = vpop.permute.xlu0 %614
      %616 = vrot.lane.b32.xlu0 %v596, 96
      %v617 = vpop.permute.xlu0 %616
      %618 = vrot.lane.b32.xlu0 %v597, 96
      %v619 = vpop.permute.xlu0 %618
      %620 = vrot.lane.b32.xlu0 %v598, 96
      %v621 = vpop.permute.xlu0 %620
      %622 = vrot.lane.b32.xlu0 %v599, 96
      %v623 = vpop.permute.xlu0 %622
      %624 = vrot.lane.b32.xlu0 %v600, 96
      %v625 = vpop.permute.xlu0 %624
      %626 = vrot.lane.b32.xlu0 %v601, 96
      %v627 = vpop.permute.xlu0 %626
      %628 = vrot.lane.b32.xlu0 %v602, 96
      %v629 = vpop.permute.xlu0 %628
      %v631 = vsel %vm512, %v594, 0
      %v634 = vsel %vm512, %v595, 0
      %v637 = vsel %vm512, %v596, 0
      %v640 = vsel %vm512, %v597, 0
      %v643 = vsel %vm512, %v598, 0
      %v646 = vsel %vm512, %v599, 0
      %v649 = vsel %vm512, %v600, 0
      %v652 = vsel %vm512, %v601, 0
      %v655 = vsel %vm512, %v602, 0
      %v658 = vsel %vm512, %v613, 0
      %v661 = vsel %vm512, %v615, 0
      %v664 = vsel %vm512, %v617, 0
      %v667 = vsel %vm512, %v619, 0
      %v670 = vsel %vm512, %v621, 0
      %v673 = vsel %vm512, %v623, 0
      %v676 = vsel %vm512, %v625, 0
      %v679 = vsel %vm512, %v627, 0
      %v682 = vsel %vm512, %v629, 0
      %684 = vmatpush.bf16.xpose.msra.mxu0 %v679
      %685 = vmatpush.bf16.xpose.msra.mxu0 %v676
      %686 = vmatpush.bf16.xpose.msra.mxu0 %v673
      %687 = vmatpush.bf16.xpose.msra.mxu0 %v670
      %688 = vmatpush.bf16.xpose.msra.mxu0 %v667
      %689 = vmatpush.bf16.xpose.msra.mxu0 %v664
      %690 = vmatpush.bf16.xpose.msra.mxu0 %v661
      %691 = vmatpush.bf16.xpose.msra.mxu0 %v658
      %692 = vmatmul.bf16.gmra.mxu0 %v631
      %v693 = vpop.f32.mrf.mxu0
      %v694 = vadd.f32 0.0, %v693
      %v695 = vpop.f32.mrf.mxu0
      %v696 = vadd.f32 0.0, %v695
      %697 = vmatmul.bf16.gmra.mxu0 %v634
      %v698 = vpop.f32.mrf.mxu0
      %v699 = vadd.f32 0.0, %v698
      %v700 = vpop.f32.mrf.mxu0
      %v701 = vadd.f32 0.0, %v700
      %702 = vmatmul.bf16.gmra.mxu0 %v637
      %v703 = vpop.f32.mrf.mxu0
      %v704 = vadd.f32 0.0, %v703
      %v705 = vpop.f32.mrf.mxu0
      %v706 = vadd.f32 0.0, %v705
      %707 = vmatmul.bf16.gmra.mxu0 %v640
      %v708 = vpop.f32.mrf.mxu0
      %v709 = vadd.f32 0.0, %v708
      %v710 = vpop.f32.mrf.mxu0
      %v711 = vadd.f32 0.0, %v710
      %712 = vmatmul.bf16.gmra.mxu0 %v643
      %v713 = vpop.f32.mrf.mxu0
      %v714 = vadd.f32 0.0, %v713
      %v715 = vpop.f32.mrf.mxu0
      %v716 = vadd.f32 0.0, %v715
      %717 = vmatmul.bf16.gmra.mxu0 %v646
      %v718 = vpop.f32.mrf.mxu0
      %v719 = vadd.f32 0.0, %v718
      %v720 = vpop.f32.mrf.mxu0
      %v721 = vadd.f32 0.0, %v720
      %722 = vmatmul.bf16.gmra.mxu0 %v649
      %v723 = vpop.f32.mrf.mxu0
      %v724 = vadd.f32 0.0, %v723
      %v725 = vpop.f32.mrf.mxu0
      %v726 = vadd.f32 0.0, %v725
      %727 = vmatmul.bf16.gmra.mxu0 %v652
      %v728 = vpop.f32.mrf.mxu0
      %v729 = vadd.f32 0.0, %v728
      %v730 = vpop.f32.mrf.mxu0
      %v731 = vadd.f32 0.0, %v730
      %732 = vmatmul.bf16.gmra.mxu0 %v655
      %v733 = vpop.f32.mrf.mxu0
      %v734 = vadd.f32 0.0, %v733
      %v735 = vpop.f32.mrf.mxu0
      %v736 = vadd.f32 0.0, %v735
      %737 = vdwg.mxu0
      %738 = vmatpush.bf16.xpose.msra.mxu0 0
      %739 = vmatpush.bf16.xpose.msra.mxu0 0
      %740 = vmatpush.bf16.xpose.msra.mxu0 0
      %741 = vmatpush.bf16.xpose.msra.mxu0 0
      %742 = vmatpush.bf16.xpose.msra.mxu0 0
      %743 = vmatpush.bf16.xpose.msra.mxu0 0
      %744 = vmatpush.bf16.xpose.msra.mxu0 0
      %745 = vmatpush.bf16.xpose.msra.mxu0 %v682
      %746 = vmatmul.bf16.gmra.mxu0 %v631
      %v747 = vpop.f32.mrf.mxu0
      %v748 = vadd.f32 0.0, %v747
      %v749 = vpop.f32.mrf.mxu0
      %v750 = vadd.f32 0.0, %v749
      %751 = vmatmul.bf16.gmra.mxu0 %v634
      %v752 = vpop.f32.mrf.mxu0
      %v753 = vadd.f32 0.0, %v752
      %v754 = vpop.f32.mrf.mxu0
      %v755 = vadd.f32 0.0, %v754
      %756 = vmatmul.bf16.gmra.mxu0 %v637
      %v757 = vpop.f32.mrf.mxu0
      %v758 = vadd.f32 0.0, %v757
      %v759 = vpop.f32.mrf.mxu0
      %v760 = vadd.f32 0.0, %v759
      %761 = vmatmul.bf16.gmra.mxu0 %v640
      %v762 = vpop.f32.mrf.mxu0
      %v763 = vadd.f32 0.0, %v762
      %v764 = vpop.f32.mrf.mxu0
      %v765 = vadd.f32 0.0, %v764
      %766 = vmatmul.bf16.gmra.mxu0 %v643
      %v767 = vpop.f32.mrf.mxu0
      %v768 = vadd.f32 0.0, %v767
      %v769 = vpop.f32.mrf.mxu0
      %v770 = vadd.f32 0.0, %v769
      %771 = vmatmul.bf16.gmra.mxu0 %v646
      %v772 = vpop.f32.mrf.mxu0
      %v773 = vadd.f32 0.0, %v772
      %v774 = vpop.f32.mrf.mxu0
      %v775 = vadd.f32 0.0, %v774
      %776 = vmatmul.bf16.gmra.mxu0 %v649
      %v777 = vpop.f32.mrf.mxu0
      %v778 = vadd.f32 0.0, %v777
      %v779 = vpop.f32.mrf.mxu0
      %v780 = vadd.f32 0.0, %v779
      %781 = vmatmul.bf16.gmra.mxu0 %v652
      %v782 = vpop.f32.mrf.mxu0
      %v783 = vadd.f32 0.0, %v782
      %v784 = vpop.f32.mrf.mxu0
      %v785 = vadd.f32 0.0, %v784
      %786 = vmatmul.bf16.gmra.mxu0 %v655
      %v787 = vpop.f32.mrf.mxu0
      %v788 = vadd.f32 0.0, %v787
      %v789 = vpop.f32.mrf.mxu0
      %v790 = vadd.f32 0.0, %v789
      %791 = vdwg.mxu0
      %v792 = vmul.f32 %v694, 0.17677669
      %v793 = vmul.f32 %v748, 0.17677669
      %v794 = vmul.f32 %v696, 0.17677669
      %v795 = vmul.f32 %v750, 0.17677669
      %v796 = vmul.f32 %v699, 0.17677669
      %v797 = vmul.f32 %v753, 0.17677669
      %v798 = vmul.f32 %v701, 0.17677669
      %v799 = vmul.f32 %v755, 0.17677669
      %v800 = vmul.f32 %v704, 0.17677669
      %v801 = vmul.f32 %v758, 0.17677669
      %v802 = vmul.f32 %v706, 0.17677669
      %v803 = vmul.f32 %v760, 0.17677669
      %v804 = vmul.f32 %v709, 0.17677669
      %v805 = vmul.f32 %v763, 0.17677669
      %v806 = vmul.f32 %v711, 0.17677669
      %v807 = vmul.f32 %v765, 0.17677669
      %v808 = vmul.f32 %v714, 0.17677669
      %v809 = vmul.f32 %v768, 0.17677669
      %v810 = vmul.f32 %v716, 0.17677669
      %v811 = vmul.f32 %v770, 0.17677669
      %v812 = vmul.f32 %v719, 0.17677669
      %v813 = vmul.f32 %v773, 0.17677669
      %v814 = vmul.f32 %v721, 0.17677669
      %v815 = vmul.f32 %v775, 0.17677669
      %v816 = vmul.f32 %v724, 0.17677669
      %v817 = vmul.f32 %v778, 0.17677669
      %v818 = vmul.f32 %v726, 0.17677669
      %v819 = vmul.f32 %v780, 0.17677669
      %v820 = vmul.f32 %v729, 0.17677669
      %v821 = vmul.f32 %v783, 0.17677669
      %v822 = vmul.f32 %v731, 0.17677669
      %v823 = vmul.f32 %v785, 0.17677669
      %v824 = vmul.f32 %v734, 0.17677669
      %v825 = vmul.f32 %v788, 0.17677669
      %v826 = vmul.f32 %v736, 0.17677669
      %v827 = vmul.f32 %v790, 0.17677669
      %v828 = vld [vmem:[%s2] sm:$0xff]
      %v829 = vld [vmem:[%s2 + $0x8] sm:$0xff]
      %v830 = vld [vmem:[%s2 + $0x10] sm:$0xff]
      %v831 = vld [vmem:[%s2 + $0x18] sm:$0xff]
      %v832 = vld [vmem:[%s2 + $0x20] sm:$0xff]
      %v833 = vld [vmem:[%s2 + $0x28] sm:$0xff]
      %v834 = vld [vmem:[%s2 + $0x30] sm:$0xff]
      %v835 = vld [vmem:[%s2 + $0x38] sm:$0xff]
      %v836 = vld [vmem:[%s2 + $0x40] sm:$0xff]
      %v837 = vld [vmem:[%s2 + $0x48] sm:$0xff]
      %v838 = vld [vmem:[%s2 + $0x50] sm:$0xff]
      %v839 = vld [vmem:[%s2 + $0x58] sm:$0xff]
      %v840 = vld [vmem:[%s2 + $0x60] sm:$0xff]
      %v841 = vld [vmem:[%s2 + $0x68] sm:$0xff]
      %v842 = vld [vmem:[%s2 + $0x70] sm:$0xff]
      %v843 = vld [vmem:[%s2 + $0x78] sm:$0xff]
      %v844 = vld [vmem:[%s2 + $0x80] sm:$0xff]
      %v845 = vld [vmem:[%s2 + $0x88] sm:$0xff]
      %v846 = vld [vmem:[%s2 + $0x90] sm:$0xff]
      %v847 = vld [vmem:[%s2 + $0x98] sm:$0xff]
      %v848 = vld [vmem:[%s2 + $0xa0] sm:$0xff]
      %v849 = vld [vmem:[%s2 + $0xa8] sm:$0xff]
      %v850 = vld [vmem:[%s2 + $0xb0] sm:$0xff]
      %v851 = vld [vmem:[%s2 + $0xb8] sm:$0xff]
      %v852 = vld [vmem:[%s2 + $0xc0] sm:$0xff]
      %v853 = vld [vmem:[%s2 + $0xc8] sm:$0xff]
      %v854 = vld [vmem:[%s2 + $0xd0] sm:$0xff]
      %v855 = vld [vmem:[%s2 + $0xd8] sm:$0xff]
      %v856 = vld [vmem:[%s2 + $0xe0] sm:$0xff]
      %v857 = vld [vmem:[%s2 + $0xe8] sm:$0xff]
      %v858 = vld [vmem:[%s2 + $0xf0] sm:$0xff]
      %v859 = vld [vmem:[%s2 + $0xf8] sm:$0xff]
      %v860 = vld [vmem:[%s2 + $0x100] sm:$0xff]
      %v861 = vld [vmem:[%s2 + $0x108] sm:$0xff]
      %v862 = vld [vmem:[%s2 + $0x110] sm:$0xff]
      %v863 = vld [vmem:[%s2 + $0x118] sm:$0xff]
      %v864 = vadd.f32 %v792, %v828
      %v865 = vadd.f32 %v793, %v829
      %v866 = vadd.f32 %v794, %v830
      %v867 = vadd.f32 %v795, %v831
      %v868 = vadd.f32 %v796, %v832
      %v869 = vadd.f32 %v797, %v833
      %v870 = vadd.f32 %v798, %v834
      %v871 = vadd.f32 %v799, %v835
      %v872 = vadd.f32 %v800, %v836
      %v873 = vadd.f32 %v801, %v837
      %v874 = vadd.f32 %v802, %v838
      %v875 = vadd.f32 %v803, %v839
      %v876 = vadd.f32 %v804, %v840
      %v877 = vadd.f32 %v805, %v841
      %v878 = vadd.f32 %v806, %v842
      %v879 = vadd.f32 %v807, %v843
      %v880 = vadd.f32 %v808, %v844
      %v881 = vadd.f32 %v809, %v845
      %v882 = vadd.f32 %v810, %v846
      %v883 = vadd.f32 %v811, %v847
      %v884 = vadd.f32 %v812, %v848
      %v885 = vadd.f32 %v813, %v849
      %v886 = vadd.f32 %v814, %v850
      %v887 = vadd.f32 %v815, %v851
      %v888 = vadd.f32 %v816, %v852
      %v889 = vadd.f32 %v817, %v853
      %v890 = vadd.f32 %v818, %v854
      %v891 = vadd.f32 %v819, %v855
      %v892 = vadd.f32 %v820, %v856
      %v893 = vadd.f32 %v821, %v857
      %v894 = vadd.f32 %v822, %v858
      %v895 = vadd.f32 %v823, %v859
      %v896 = vadd.f32 %v824, %v860
      %v897 = vadd.f32 %v825, %v861
      %v898 = vadd.f32 %v826, %v862
      %v899 = vadd.f32 %v827, %v863
      %vm900 = vcmask 130048
      %v901 = vsel %vm900, %v865, -inf
      %v902 = vmax.f32 %v864, %v901
      %903 = vmax.xlane.f32.xlu0 %v902
      %v904 = vpop.xlane.xlu0 %903
      %v905 = vsel %vm900, %v867, -inf
      %v906 = vmax.f32 %v866, %v905
      %907 = vmax.xlane.f32.xlu0 %v906
      %v908 = vpop.xlane.xlu0 %907
      %v909 = vsel %vm900, %v869, -inf
      %v910 = vmax.f32 %v868, %v909
      %911 = vmax.xlane.f32.xlu0 %v910
      %v912 = vpop.xlane.xlu0 %911
      %v913 = vsel %vm900, %v871, -inf
      %v914 = vmax.f32 %v870, %v913
      %915 = vmax.xlane.f32.xlu0 %v914
      %v916 = vpop.xlane.xlu0 %915
      %v917 = vsel %vm900, %v873, -inf
      %v918 = vmax.f32 %v872, %v917
      %919 = vmax.xlane.f32.xlu0 %v918
      %v920 = vpop.xlane.xlu0 %919
      %v921 = vsel %vm900, %v875, -inf
      %v922 = vmax.f32 %v874, %v921
      %923 = vmax.xlane.f32.xlu0 %v922
      %v924 = vpop.xlane.xlu0 %923
      %v925 = vsel %vm900, %v877, -inf
      %v926 = vmax.f32 %v876, %v925
      %927 = vmax.xlane.f32.xlu0 %v926
      %v928 = vpop.xlane.xlu0 %927
      %v929 = vsel %vm900, %v879, -inf
      %v930 = vmax.f32 %v878, %v929
      %931 = vmax.xlane.f32.xlu0 %v930
      %v932 = vpop.xlane.xlu0 %931
      %v933 = vsel %vm900, %v881, -inf
      %v934 = vmax.f32 %v880, %v933
      %935 = vmax.xlane.f32.xlu0 %v934
      %v936 = vpop.xlane.xlu0 %935
      %v937 = vsel %vm900, %v883, -inf
      %v938 = vmax.f32 %v882, %v937
      %939 = vmax.xlane.f32.xlu0 %v938
      %v940 = vpop.xlane.xlu0 %939
      %v941 = vsel %vm900, %v885, -inf
      %v942 = vmax.f32 %v884, %v941
      %943 = vmax.xlane.f32.xlu0 %v942
      %v944 = vpop.xlane.xlu0 %943
      %v945 = vsel %vm900, %v887, -inf
      %v946 = vmax.f32 %v886, %v945
      %947 = vmax.xlane.f32.xlu0 %v946
      %v948 = vpop.xlane.xlu0 %947
      %v949 = vsel %vm900, %v889, -inf
      %v950 = vmax.f32 %v888, %v949
      %951 = vmax.xlane.f32.xlu0 %v950
      %v952 = vpop.xlane.xlu0 %951
      %v953 = vsel %vm900, %v891, -inf
      %v954 = vmax.f32 %v890, %v953
      %955 = vmax.xlane.f32.xlu0 %v954
      %v956 = vpop.xlane.xlu0 %955
      %v957 = vsel %vm900, %v893, -inf
      %v958 = vmax.f32 %v892, %v957
      %959 = vmax.xlane.f32.xlu0 %v958
      %v960 = vpop.xlane.xlu0 %959
      %v961 = vsel %vm900, %v895, -inf
      %v962 = vmax.f32 %v894, %v961
      %963 = vmax.xlane.f32.xlu0 %v962
      %v964 = vpop.xlane.xlu0 %963
      %v965 = vsel %vm900, %v897, -inf
      %v966 = vmax.f32 %v896, %v965
      %967 = vmax.xlane.f32.xlu0 %v966
      %v968 = vpop.xlane.xlu0 %967
      %v969 = vsel %vm900, %v899, -inf
      %v970 = vmax.f32 %v898, %v969
      %971 = vmax.xlane.f32.xlu0 %v970
      %v972 = vpop.xlane.xlu0 %971
      %v973 = vsub.f32 %v864, %v904
      %v974 = vsub.f32 %v865, %v904
      %v975 = vsub.f32 %v866, %v908
      %v976 = vsub.f32 %v867, %v908
      %v977 = vsub.f32 %v868, %v912
      %v978 = vsub.f32 %v869, %v912
      %v979 = vsub.f32 %v870, %v916
      %v980 = vsub.f32 %v871, %v916
      %v981 = vsub.f32 %v872, %v920
      %v982 = vsub.f32 %v873, %v920
      %v983 = vsub.f32 %v874, %v924
      %v984 = vsub.f32 %v875, %v924
      %v985 = vsub.f32 %v876, %v928
      %v986 = vsub.f32 %v877, %v928
      %v987 = vsub.f32 %v878, %v932
      %v988 = vsub.f32 %v879, %v932
      %v989 = vsub.f32 %v880, %v936
      %v990 = vsub.f32 %v881, %v936
      %v991 = vsub.f32 %v882, %v940
      %v992 = vsub.f32 %v883, %v940
      %v993 = vsub.f32 %v884, %v944
      %v994 = vsub.f32 %v885, %v944
      %v995 = vsub.f32 %v886, %v948
      %v996 = vsub.f32 %v887, %v948
      %v997 = vsub.f32 %v888, %v952
      %v998 = vsub.f32 %v889, %v952
      %v999 = vsub.f32 %v890, %v956
      %v1000 = vsub.f32 %v891, %v956
      %v1001 = vsub.f32 %v892, %v960
      %v1002 = vsub.f32 %v893, %v960
      %v1003 = vsub.f32 %v894, %v964
      %v1004 = vsub.f32 %v895, %v964
      %v1005 = vsub.f32 %v896, %v968
      %v1006 = vsub.f32 %v897, %v968
      %v1007 = vsub.f32 %v898, %v972
      %v1008 = vsub.f32 %v899, %v972
      %v1009 = vmul.f32 %v973, 1.442695
      %v1010 = vpow.pop %v1009
      %v1011 = vmul.f32 %v974, 1.442695
      %v1012 = vpow.pop %v1011
      %v1013 = vmul.f32 %v975, 1.442695
      %v1014 = vpow.pop %v1013
      %v1015 = vmul.f32 %v976, 1.442695
      %v1016 = vpow.pop %v1015
      %v1017 = vmul.f32 %v977, 1.442695
      %v1018 = vpow.pop %v1017
      %v1019 = vmul.f32 %v978, 1.442695
      %v1020 = vpow.pop %v1019
      %v1021 = vmul.f32 %v979, 1.442695
      %v1022 = vpow.pop %v1021
      %v1023 = vmul.f32 %v980, 1.442695
      %v1024 = vpow.pop %v1023
      %v1025 = vmul.f32 %v981, 1.442695
      %v1026 = vpow.pop %v1025
      %v1027 = vmul.f32 %v982, 1.442695
      %v1028 = vpow.pop %v1027
      %v1029 = vmul.f32 %v983, 1.442695
      %v1030 = vpow.pop %v1029
      %v1031 = vmul.f32 %v984, 1.442695
      %v1032 = vpow.pop %v1031
      %v1033 = vmul.f32 %v985, 1.442695
      %v1034 = vpow.pop %v1033
      %v1035 = vmul.f32 %v986, 1.442695
      %v1036 = vpow.pop %v1035
      %v1037 = vmul.f32 %v987, 1.442695
      %v1038 = vpow.pop %v1037
      %v1039 = vmul.f32 %v988, 1.442695
      %v1040 = vpow.pop %v1039
      %v1041 = vmul.f32 %v989, 1.442695
      %v1042 = vpow.pop %v1041
      %v1043 = vmul.f32 %v990, 1.442695
      %v1044 = vpow.pop %v1043
      %v1045 = vmul.f32 %v991, 1.442695
      %v1046 = vpow.pop %v1045
      %v1047 = vmul.f32 %v992, 1.442695
      %v1048 = vpow.pop %v1047
      %v1049 = vmul.f32 %v993, 1.442695
      %v1050 = vpow.pop %v1049
      %v1051 = vmul.f32 %v994, 1.442695
      %v1052 = vpow.pop %v1051
      %v1053 = vmul.f32 %v995, 1.442695
      %v1054 = vpow.pop %v1053
      %v1055 = vmul.f32 %v996, 1.442695
      %v1056 = vpow.pop %v1055
      %v1057 = vmul.f32 %v997, 1.442695
      %v1058 = vpow.pop %v1057
      %v1059 = vmul.f32 %v998, 1.442695
      %v1060 = vpow.pop %v1059
      %v1061 = vmul.f32 %v999, 1.442695
      %v1062 = vpow.pop %v1061
      %v1063 = vmul.f32 %v1000, 1.442695
      %v1064 = vpow.pop %v1063
      %v1065 = vmul.f32 %v1001, 1.442695
      %v1066 = vpow.pop %v1065
      %v1067 = vmul.f32 %v1002, 1.442695
      %v1068 = vpow.pop %v1067
      %v1069 = vmul.f32 %v1003, 1.442695
      %v1070 = vpow.pop %v1069
      %v1071 = vmul.f32 %v1004, 1.442695
      %v1072 = vpow.pop %v1071
      %v1073 = vmul.f32 %v1005, 1.442695
      %v1074 = vpow.pop %v1073
      %v1075 = vmul.f32 %v1006, 1.442695
      %v1076 = vpow.pop %v1075
      %v1077 = vmul.f32 %v1007, 1.442695
      %v1078 = vpow.pop %v1077
      %v1079 = vmul.f32 %v1008, 1.442695
      %v1080 = vpow.pop %v1079
      %v1081 = vsel %vm900, %v1012, 0.0
      %v1082 = vadd.f32 %v1010, %v1081
      %1083 = vadd.xlane.f32.xlu0 %v1082
      %v1084 = vpop.xlane.xlu0 %1083
      %v1085 = vsel %vm900, %v1016, 0.0
      %v1086 = vadd.f32 %v1014, %v1085
      %1087 = vadd.xlane.f32.xlu0 %v1086
      %v1088 = vpop.xlane.xlu0 %1087
      %v1089 = vsel %vm900, %v1020, 0.0
      %v1090 = vadd.f32 %v1018, %v1089
      %1091 = vadd.xlane.f32.xlu0 %v1090
      %v1092 = vpop.xlane.xlu0 %1091
      %v1093 = vsel %vm900, %v1024, 0.0
      %v1094 = vadd.f32 %v1022, %v1093
      %1095 = vadd.xlane.f32.xlu0 %v1094
      %v1096 = vpop.xlane.xlu0 %1095
      %v1097 = vsel %vm900, %v1028, 0.0
      %v1098 = vadd.f32 %v1026, %v1097
      %1099 = vadd.xlane.f32.xlu0 %v1098
      %v1100 = vpop.xlane.xlu0 %1099
      %v1101 = vsel %vm900, %v1032, 0.0
      %v1102 = vadd.f32 %v1030, %v1101
      %1103 = vadd.xlane.f32.xlu0 %v1102
      %v1104 = vpop.xlane.xlu0 %1103
      %v1105 = vsel %vm900, %v1036, 0.0
      %v1106 = vadd.f32 %v1034, %v1105
      %1107 = vadd.xlane.f32.xlu0 %v1106
      %v1108 = vpop.xlane.xlu0 %1107
      %v1109 = vsel %vm900, %v1040, 0.0
      %v1110 = vadd.f32 %v1038, %v1109
      %1111 = vadd.xlane.f32.xlu0 %v1110
      %v1112 = vpop.xlane.xlu0 %1111
      %v1113 = vsel %vm900, %v1044, 0.0
      %v1114 = vadd.f32 %v1042, %v1113
      %1115 = vadd.xlane.f32.xlu0 %v1114
      %v1116 = vpop.xlane.xlu0 %1115
      %v1117 = vsel %vm900, %v1048, 0.0
      %v1118 = vadd.f32 %v1046, %v1117
      %1119 = vadd.xlane.f32.xlu0 %v1118
      %v1120 = vpop.xlane.xlu0 %1119
      %v1121 = vsel %vm900, %v1052, 0.0
      %v1122 = vadd.f32 %v1050, %v1121
      %1123 = vadd.xlane.f32.xlu0 %v1122
      %v1124 = vpop.xlane.xlu0 %1123
      %v1125 = vsel %vm900, %v1056, 0.0
      %v1126 = vadd.f32 %v1054, %v1125
      %1127 = vadd.xlane.f32.xlu0 %v1126
      %v1128 = vpop.xlane.xlu0 %1127
      %v1129 = vsel %vm900, %v1060, 0.0
      %v1130 = vadd.f32 %v1058, %v1129
      %1131 = vadd.xlane.f32.xlu0 %v1130
      %v1132 = vpop.xlane.xlu0 %1131
      %v1133 = vsel %vm900, %v1064, 0.0
      %v1134 = vadd.f32 %v1062, %v1133
      %1135 = vadd.xlane.f32.xlu0 %v1134
      %v1136 = vpop.xlane.xlu0 %1135
      %v1137 = vsel %vm900, %v1068, 0.0
      %v1138 = vadd.f32 %v1066, %v1137
      %1139 = vadd.xlane.f32.xlu0 %v1138
      %v1140 = vpop.xlane.xlu0 %1139
      %v1141 = vsel %vm900, %v1072, 0.0
      %v1142 = vadd.f32 %v1070, %v1141
      %1143 = vadd.xlane.f32.xlu0 %v1142
      %v1144 = vpop.xlane.xlu0 %1143
      %v1145 = vsel %vm900, %v1076, 0.0
      %v1146 = vadd.f32 %v1074, %v1145
      %1147 = vadd.xlane.f32.xlu0 %v1146
      %v1148 = vpop.xlane.xlu0 %1147
      %v1149 = vsel %vm900, %v1080, 0.0
      %v1150 = vadd.f32 %v1078, %v1149
      %1151 = vadd.xlane.f32.xlu0 %v1150
      %v1152 = vpop.xlane.xlu0 %1151
      %v1153 = vrcp.pop %v1084
      %v1154 = vrcp.pop %v1088
      %v1155 = vrcp.pop %v1092
      %v1156 = vrcp.pop %v1096
      %v1157 = vrcp.pop %v1100
      %v1158 = vrcp.pop %v1104
      %v1159 = vrcp.pop %v1108
      %v1160 = vrcp.pop %v1112
      %v1161 = vrcp.pop %v1116
      %v1162 = vrcp.pop %v1120
      %v1163 = vrcp.pop %v1124
      %v1164 = vrcp.pop %v1128
      %v1165 = vrcp.pop %v1132
      %v1166 = vrcp.pop %v1136
      %v1167 = vrcp.pop %v1140
      %v1168 = vrcp.pop %v1144
      %v1169 = vrcp.pop %v1148
      %v1170 = vrcp.pop %v1152
      %v1171 = vmul.f32 %v1010, %v1153
      %v1172 = vmul.f32 %v1012, %v1153
      %v1173 = vmul.f32 %v1014, %v1154
      %v1174 = vmul.f32 %v1016, %v1154
      %v1175 = vmul.f32 %v1018, %v1155
      %v1176 = vmul.f32 %v1020, %v1155
      %v1177 = vmul.f32 %v1022, %v1156
      %v1178 = vmul.f32 %v1024, %v1156
      %v1179 = vmul.f32 %v1026, %v1157
      %v1180 = vmul.f32 %v1028, %v1157
      %v1181 = vmul.f32 %v1030, %v1158
      %v1182 = vmul.f32 %v1032, %v1158
      %v1183 = vmul.f32 %v1034, %v1159
      %v1184 = vmul.f32 %v1036, %v1159
      %v1185 = vmul.f32 %v1038, %v1160
      %v1186 = vmul.f32 %v1040, %v1160
      %v1187 = vmul.f32 %v1042, %v1161
      %v1188 = vmul.f32 %v1044, %v1161
      %v1189 = vmul.f32 %v1046, %v1162
      %v1190 = vmul.f32 %v1048, %v1162
      %v1191 = vmul.f32 %v1050, %v1163
      %v1192 = vmul.f32 %v1052, %v1163
      %v1193 = vmul.f32 %v1054, %v1164
      %v1194 = vmul.f32 %v1056, %v1164
      %v1195 = vmul.f32 %v1058, %v1165
      %v1196 = vmul.f32 %v1060, %v1165
      %v1197 = vmul.f32 %v1062, %v1166
      %v1198 = vmul.f32 %v1064, %v1166
      %v1199 = vmul.f32 %v1066, %v1167
      %v1200 = vmul.f32 %v1068, %v1167
      %v1201 = vmul.f32 %v1070, %v1168
      %v1202 = vmul.f32 %v1072, %v1168
      %v1203 = vmul.f32 %v1074, %v1169
      %v1204 = vmul.f32 %v1076, %v1169
      %v1205 = vmul.f32 %v1078, %v1170
      %v1206 = vmul.f32 %v1080, %v1170
      %v1207 = vpack.c.bf16 %v1173, %v1171
      %v1208 = vpack.c.bf16 %v1174, %v1172
      %v1209 = vpack.c.bf16 %v1177, %v1175
      %v1210 = vpack.c.bf16 %v1178, %v1176
      %v1211 = vpack.c.bf16 %v1181, %v1179
      %v1212 = vpack.c.bf16 %v1182, %v1180
      %v1213 = vpack.c.bf16 %v1185, %v1183
      %v1214 = vpack.c.bf16 %v1186, %v1184
      %v1215 = vpack.c.bf16 %v1189, %v1187
      %v1216 = vpack.c.bf16 %v1190, %v1188
      %v1217 = vpack.c.bf16 %v1193, %v1191
      %v1218 = vpack.c.bf16 %v1194, %v1192
      %v1219 = vpack.c.bf16 %v1197, %v1195
      %v1220 = vpack.c.bf16 %v1198, %v1196
      %v1221 = vpack.c.bf16 %v1201, %v1199
      %v1222 = vpack.c.bf16 %v1202, %v1200
      %v1223 = vpack.c.bf16 %v1205, %v1203
      %v1224 = vpack.c.bf16 %v1206, %v1204
      %1225 = vrot.lane.b32.xlu0 %v594, 64
      %v1226 = vpop.permute.xlu0 %1225
      %1227 = vrot.lane.b32.xlu0 %v595, 64
      %v1228 = vpop.permute.xlu0 %1227
      %1229 = vrot.lane.b32.xlu0 %v596, 64
      %v1230 = vpop.permute.xlu0 %1229
      %1231 = vrot.lane.b32.xlu0 %v597, 64
      %v1232 = vpop.permute.xlu0 %1231
      %1233 = vrot.lane.b32.xlu0 %v598, 64
      %v1234 = vpop.permute.xlu0 %1233
      %1235 = vrot.lane.b32.xlu0 %v599, 64
      %v1236 = vpop.permute.xlu0 %1235
      %1237 = vrot.lane.b32.xlu0 %v600, 64
      %v1238 = vpop.permute.xlu0 %1237
      %1239 = vrot.lane.b32.xlu0 %v601, 64
      %v1240 = vpop.permute.xlu0 %1239
      %1241 = vrot.lane.b32.xlu0 %v602, 64
      %v1242 = vpop.permute.xlu0 %1241
      %v1253 = vsel %vm900, %v1208, 0
      %v1256 = vsel %vm900, %v1210, 0
      %v1259 = vsel %vm900, %v1212, 0
      %v1262 = vsel %vm900, %v1214, 0
      %v1265 = vsel %vm900, %v1216, 0
      %v1268 = vsel %vm900, %v1218, 0
      %v1271 = vsel %vm900, %v1220, 0
      %v1274 = vsel %vm900, %v1222, 0
      %v1277 = vsel %vm900, %v1224, 0
      %1279 = vmatpush.bf16.msra.mxu0 %v1240
      %1280 = vmatpush.bf16.msra.mxu0 %v1238
      %1281 = vmatpush.bf16.msra.mxu0 %v1236
      %1282 = vmatpush.bf16.msra.mxu0 %v1234
      %1283 = vmatpush.bf16.msra.mxu0 %v1232
      %1284 = vmatpush.bf16.msra.mxu0 %v1230
      %1285 = vmatpush.bf16.msra.mxu0 %v1228
      %1286 = vmatpush.bf16.msra.mxu0 %v1226
      %1287 = vmatmul.bf16.gmra.mxu0 %v1207
      %v1288 = vpop.f32.mrf.mxu0
      %v1289 = vadd.f32 0.0, %v1288
      %v1290 = vpop.f32.mrf.mxu0
      %v1291 = vadd.f32 0.0, %v1290
      %1292 = vmatmul.bf16.gmra.mxu0 %v1209
      %v1293 = vpop.f32.mrf.mxu0
      %v1294 = vadd.f32 0.0, %v1293
      %v1295 = vpop.f32.mrf.mxu0
      %v1296 = vadd.f32 0.0, %v1295
      %1297 = vmatmul.bf16.gmra.mxu0 %v1211
      %v1298 = vpop.f32.mrf.mxu0
      %v1299 = vadd.f32 0.0, %v1298
      %v1300 = vpop.f32.mrf.mxu0
      %v1301 = vadd.f32 0.0, %v1300
      %1302 = vmatmul.bf16.gmra.mxu0 %v1213
      %v1303 = vpop.f32.mrf.mxu0
      %v1304 = vadd.f32 0.0, %v1303
      %v1305 = vpop.f32.mrf.mxu0
      %v1306 = vadd.f32 0.0, %v1305
      %1307 = vmatmul.bf16.gmra.mxu0 %v1215
      %v1308 = vpop.f32.mrf.mxu0
      %v1309 = vadd.f32 0.0, %v1308
      %v1310 = vpop.f32.mrf.mxu0
      %v1311 = vadd.f32 0.0, %v1310
      %1312 = vmatmul.bf16.gmra.mxu0 %v1217
      %v1313 = vpop.f32.mrf.mxu0
      %v1314 = vadd.f32 0.0, %v1313
      %v1315 = vpop.f32.mrf.mxu0
      %v1316 = vadd.f32 0.0, %v1315
      %1317 = vmatmul.bf16.gmra.mxu0 %v1219
      %v1318 = vpop.f32.mrf.mxu0
      %v1319 = vadd.f32 0.0, %v1318
      %v1320 = vpop.f32.mrf.mxu0
      %v1321 = vadd.f32 0.0, %v1320
      %1322 = vmatmul.bf16.gmra.mxu0 %v1221
      %v1323 = vpop.f32.mrf.mxu0
      %v1324 = vadd.f32 0.0, %v1323
      %v1325 = vpop.f32.mrf.mxu0
      %v1326 = vadd.f32 0.0, %v1325
      %1327 = vmatmul.bf16.gmra.mxu0 %v1223
      %v1328 = vpop.f32.mrf.mxu0
      %v1329 = vadd.f32 0.0, %v1328
      %v1330 = vpop.f32.mrf.mxu0
      %v1331 = vadd.f32 0.0, %v1330
      %1332 = vdwg.mxu0
      %1333 = vmatpush.bf16.msra.mxu0 0
      %1334 = vmatpush.bf16.msra.mxu0 0
      %1335 = vmatpush.bf16.msra.mxu0 0
      %1336 = vmatpush.bf16.msra.mxu0 0
      %1337 = vmatpush.bf16.msra.mxu0 0
      %1338 = vmatpush.bf16.msra.mxu0 0
      %1339 = vmatpush.bf16.msra.mxu0 0
      %1340 = vmatpush.bf16.msra.mxu0 %v1242
      %1341 = vmatmul.bf16.gmra.mxu0 %v1253
      %v1342 = vpop.f32.mrf.mxu0
      %v1343 = vadd.f32 %v1289, %v1342
      %v1344 = vpop.f32.mrf.mxu0
      %v1345 = vadd.f32 %v1291, %v1344
      %1346 = vmatmul.bf16.gmra.mxu0 %v1256
      %v1347 = vpop.f32.mrf.mxu0
      %v1348 = vadd.f32 %v1294, %v1347
      %v1349 = vpop.f32.mrf.mxu0
      %v1350 = vadd.f32 %v1296, %v1349
      %1351 = vmatmul.bf16.gmra.mxu0 %v1259
      %v1352 = vpop.f32.mrf.mxu0
      %v1353 = vadd.f32 %v1299, %v1352
      %v1354 = vpop.f32.mrf.mxu0
      %v1355 = vadd.f32 %v1301, %v1354
      %1356 = vmatmul.bf16.gmra.mxu0 %v1262
      %v1357 = vpop.f32.mrf.mxu0
      %v1358 = vadd.f32 %v1304, %v1357
      %v1359 = vpop.f32.mrf.mxu0
      %v1360 = vadd.f32 %v1306, %v1359
      %1361 = vmatmul.bf16.gmra.mxu0 %v1265
      %v1362 = vpop.f32.mrf.mxu0
      %v1363 = vadd.f32 %v1309, %v1362
      %v1364 = vpop.f32.mrf.mxu0
      %v1365 = vadd.f32 %v1311, %v1364
      %1366 = vmatmul.bf16.gmra.mxu0 %v1268
      %v1367 = vpop.f32.mrf.mxu0
      %v1368 = vadd.f32 %v1314, %v1367
      %v1369 = vpop.f32.mrf.mxu0
      %v1370 = vadd.f32 %v1316, %v1369
      %1371 = vmatmul.bf16.gmra.mxu0 %v1271
      %v1372 = vpop.f32.mrf.mxu0
      %v1373 = vadd.f32 %v1319, %v1372
      %v1374 = vpop.f32.mrf.mxu0
      %v1375 = vadd.f32 %v1321, %v1374
      %1376 = vmatmul.bf16.gmra.mxu0 %v1274
      %v1377 = vpop.f32.mrf.mxu0
      %v1378 = vadd.f32 %v1324, %v1377
      %v1379 = vpop.f32.mrf.mxu0
      %v1380 = vadd.f32 %v1326, %v1379
      %1381 = vmatmul.bf16.gmra.mxu0 %v1277
      %v1382 = vpop.f32.mrf.mxu0
      %v1383 = vadd.f32 %v1329, %v1382
      %v1384 = vpop.f32.mrf.mxu0
      %v1385 = vadd.f32 %v1331, %v1384
      %1386 = vdwg.mxu0
      %v1387 = vpack.c.bf16 %v1345, %v1343
      %v1388 = vpack.c.bf16 %v1350, %v1348
      %v1389 = vpack.c.bf16 %v1355, %v1353
      %v1390 = vpack.c.bf16 %v1360, %v1358
      %v1391 = vpack.c.bf16 %v1365, %v1363
      %v1392 = vpack.c.bf16 %v1370, %v1368
      %v1393 = vpack.c.bf16 %v1375, %v1373
      %v1394 = vpack.c.bf16 %v1380, %v1378
      %v1395 = vpack.c.bf16 %v1385, %v1383
      %v1396 = vld [vmem:[%s3] sm:$0xf]
      %v1397 = vld [vmem:[%s3 + $0x4] sm:$0xf]
      %v1398 = vld [vmem:[%s3 + $0x8] sm:$0xf]
      %v1399 = vld [vmem:[%s3 + $0xc] sm:$0xf]
      %v1404 = vunpack.c.l.b16 %v1396
      %v1405 = vunpack.c.l.b16 %v1397
      %v1406 = vunpack.c.l.b16 %v1398
      %v1407 = vunpack.c.l.b16 %v1399
      %v1408 = vpack.c.b16 %v1405, %v1404
      %v1409 = vpack.c.b16 %v1407, %v1406
      %v1413 = vsel %vm512, %v1387, 0
      %v1416 = vsel %vm512, %v1388, 0
      %v1419 = vsel %vm512, %v1389, 0
      %v1422 = vsel %vm512, %v1390, 0
      %v1425 = vsel %vm512, %v1391, 0
      %v1428 = vsel %vm512, %v1392, 0
      %v1431 = vsel %vm512, %v1393, 0
      %v1434 = vsel %vm512, %v1394, 0
      %v1437 = vsel %vm512, %v1395, 0
      %1439 = vmatpush.bf16.msra.mxu0 0
      %1440 = vmatpush.bf16.msra.mxu0 0
      %1441 = vmatpush.bf16.msra.mxu0 0
      %1442 = vmatpush.bf16.msra.mxu0 0
      %1443 = vmatpush.bf16.msra.mxu0 0
      %1444 = vmatpush.bf16.msra.mxu0 0
      %1445 = vmatpush.bf16.msra.mxu0 %v1409
      %1446 = vmatpush.bf16.msra.mxu0 %v1408
      %1447 = vmatmul.bf16.gmra.mxu0 %v1413
      %v1448 = vpop.f32.mrf.mxu0
      %v1449 = vadd.f32 0.0, %v1448
      %v1450 = vpop.f32.mrf.mxu0
      %v1451 = vadd.f32 0.0, %v1450
      %1452 = vmatmul.bf16.gmra.mxu0 %v1416
      %v1453 = vpop.f32.mrf.mxu0
      %v1454 = vadd.f32 0.0, %v1453
      %v1455 = vpop.f32.mrf.mxu0
      %v1456 = vadd.f32 0.0, %v1455
      %1457 = vmatmul.bf16.gmra.mxu0 %v1419
      %v1458 = vpop.f32.mrf.mxu0
      %v1459 = vadd.f32 0.0, %v1458
      %v1460 = vpop.f32.mrf.mxu0
      %v1461 = vadd.f32 0.0, %v1460
      %1462 = vmatmul.bf16.gmra.mxu0 %v1422
      %v1463 = vpop.f32.mrf.mxu0
      %v1464 = vadd.f32 0.0, %v1463
      %v1465 = vpop.f32.mrf.mxu0
      %v1466 = vadd.f32 0.0, %v1465
      %1467 = vmatmul.bf16.gmra.mxu0 %v1425
      %v1468 = vpop.f32.mrf.mxu0
      %v1469 = vadd.f32 0.0, %v1468
      %v1470 = vpop.f32.mrf.mxu0
      %v1471 = vadd.f32 0.0, %v1470
      %1472 = vmatmul.bf16.gmra.mxu0 %v1428
      %v1473 = vpop.f32.mrf.mxu0
      %v1474 = vadd.f32 0.0, %v1473
      %v1475 = vpop.f32.mrf.mxu0
      %v1476 = vadd.f32 0.0, %v1475
      %1477 = vmatmul.bf16.gmra.mxu0 %v1431
      %v1478 = vpop.f32.mrf.mxu0
      %v1479 = vadd.f32 0.0, %v1478
      %v1480 = vpop.f32.mrf.mxu0
      %v1481 = vadd.f32 0.0, %v1480
      %1482 = vmatmul.bf16.gmra.mxu0 %v1434
      %v1483 = vpop.f32.mrf.mxu0
      %v1484 = vadd.f32 0.0, %v1483
      %v1485 = vpop.f32.mrf.mxu0
      %v1486 = vadd.f32 0.0, %v1485
      %1487 = vmatmul.bf16.gmra.mxu0 %v1437
      %v1488 = vpop.f32.mrf.mxu0
      %v1489 = vadd.f32 0.0, %v1488
      %v1490 = vpop.f32.mrf.mxu0
      %v1491 = vadd.f32 0.0, %v1490
      %1492 = vdwg.mxu0
      %v1493 = vadd.f32 %v433, %v1449
      %v1494 = vadd.f32 %v434, %v1451
      %v1495 = vadd.f32 %v435, %v1454
      %v1496 = vadd.f32 %v436, %v1456
      %v1497 = vadd.f32 %v437, %v1459
      %v1498 = vadd.f32 %v438, %v1461
      %v1499 = vadd.f32 %v439, %v1464
      %v1500 = vadd.f32 %v440, %v1466
      %v1501 = vadd.f32 %v441, %v1469
      %v1502 = vadd.f32 %v442, %v1471
      %v1503 = vadd.f32 %v443, %v1474
      %v1504 = vadd.f32 %v444, %v1476
      %v1505 = vadd.f32 %v445, %v1479
      %v1506 = vadd.f32 %v446, %v1481
      %v1507 = vadd.f32 %v447, %v1484
      %v1508 = vadd.f32 %v448, %v1486
      %v1509 = vadd.f32 %v449, %v1489
      %v1510 = vadd.f32 %v450, %v1491
      %v1511 = vld [vmem:[%s4] sm:$0x1]
      %v1513 = vperm.slane %v1511, 0
      %v1515 = vadd.f32 %v1493, %v1513
      %v1516 = vadd.f32 %v1494, %v1513
      %v1517 = vadd.f32 %v1495, %v1513
      %v1518 = vadd.f32 %v1496, %v1513
      %v1519 = vadd.f32 %v1497, %v1513
      %v1520 = vadd.f32 %v1498, %v1513
      %v1521 = vadd.f32 %v1499, %v1513
      %v1522 = vadd.f32 %v1500, %v1513
      %v1523 = vadd.f32 %v1501, %v1513
      %v1524 = vadd.f32 %v1502, %v1513
      %v1525 = vadd.f32 %v1503, %v1513
      %v1526 = vadd.f32 %v1504, %v1513
      %v1527 = vadd.f32 %v1505, %v1513
      %v1528 = vadd.f32 %v1506, %v1513
      %v1529 = vadd.f32 %v1507, %v1513
      %v1530 = vadd.f32 %v1508, %v1513
      %v1531 = vadd.f32 %v1509, %v1513
      %v1532 = vadd.f32 %v1510, %v1513
      %v1533 = vpack.c.bf16 %v1516, %v1515
      %v1534 = vpack.c.bf16 %v1518, %v1517
      %v1535 = vpack.c.bf16 %v1520, %v1519
      %v1536 = vpack.c.bf16 %v1522, %v1521
      %v1537 = vpack.c.bf16 %v1524, %v1523
      %v1538 = vpack.c.bf16 %v1526, %v1525
      %v1539 = vpack.c.bf16 %v1528, %v1527
      %v1540 = vpack.c.bf16 %v1530, %v1529
      %v1541 = vpack.c.bf16 %v1532, %v1531
      %v1542 = vld [vmem:[%s7] sm:$0xff]
      %v1543 = vld [vmem:[%s7 + $0x8] sm:$0x1]
      %v1544 = vld [vmem:[%s5] sm:$0xff]
      %v1545 = vld [vmem:[%s5 + $0x8] sm:$0xff]
      %v1546 = vld [vmem:[%s5 + $0x10] sm:$0xff]
      %v1547 = vld [vmem:[%s5 + $0x18] sm:$0xff]
      %v1548 = vld [vmem:[%s5 + $0x20] sm:$0xff]
      %v1549 = vld [vmem:[%s5 + $0x28] sm:$0xff]
      %v1550 = vld [vmem:[%s5 + $0x30] sm:$0xff]
      %v1551 = vld [vmem:[%s5 + $0x38] sm:$0xff]
      %v1552 = vld [vmem:[%s5 + $0x40] sm:$0xff]
      %v1553 = vld [vmem:[%s5 + $0x48] sm:$0xff]
      %v1554 = vld [vmem:[%s5 + $0x50] sm:$0xff]
      %v1555 = vld [vmem:[%s5 + $0x58] sm:$0xff]
      %v1556 = vld [vmem:[%s5 + $0x60] sm:$0xff]
      %v1557 = vld [vmem:[%s5 + $0x68] sm:$0xff]
      %v1558 = vld [vmem:[%s5 + $0x70] sm:$0xff]
      %v1559 = vld [vmem:[%s5 + $0x78] sm:$0xff]
      %v1560 = vld [vmem:[%s5 + $0x80] sm:$0xff]
      %v1561 = vld [vmem:[%s5 + $0x88] sm:$0xff]
      %v1580 = vunpack.c.l.b16 %v1544
      %v1581 = vunpack.c.h.b16 %v1544
      %v1582 = vunpack.c.l.b16 %v1545
      %v1583 = vunpack.c.h.b16 %v1545
      %v1584 = vunpack.c.l.b16 %v1546
      %v1585 = vunpack.c.h.b16 %v1546
      %v1586 = vunpack.c.l.b16 %v1547
      %v1587 = vunpack.c.h.b16 %v1547
      %v1588 = vunpack.c.l.b16 %v1548
      %v1589 = vunpack.c.h.b16 %v1548
      %v1590 = vunpack.c.l.b16 %v1549
      %v1591 = vunpack.c.h.b16 %v1549
      %v1592 = vunpack.c.l.b16 %v1550
      %v1593 = vunpack.c.h.b16 %v1550
      %v1594 = vunpack.c.l.b16 %v1551
      %v1595 = vunpack.c.h.b16 %v1551
      %v1596 = vunpack.c.l.b16 %v1552
      %v1597 = vunpack.c.h.b16 %v1552
      %v1598 = vunpack.c.l.b16 %v1553
      %v1599 = vunpack.c.h.b16 %v1553
      %v1600 = vunpack.c.l.b16 %v1554
      %v1601 = vunpack.c.h.b16 %v1554
      %v1602 = vunpack.c.l.b16 %v1555
      %v1603 = vunpack.c.h.b16 %v1555
      %v1604 = vunpack.c.l.b16 %v1556
      %v1605 = vunpack.c.h.b16 %v1556
      %v1606 = vunpack.c.l.b16 %v1557
      %v1607 = vunpack.c.h.b16 %v1557
      %v1608 = vunpack.c.l.b16 %v1558
      %v1609 = vunpack.c.h.b16 %v1558
      %v1610 = vunpack.c.l.b16 %v1559
      %v1611 = vunpack.c.h.b16 %v1559
      %v1612 = vunpack.c.l.b16 %v1560
      %v1613 = vunpack.c.h.b16 %v1560
      %v1614 = vunpack.c.l.b16 %v1561
      %v1615 = vunpack.c.h.b16 %v1561
      %v1616 = vpack.c.b16 %v1582, %v1580
      %v1617 = vpack.c.b16 %v1583, %v1581
      %v1618 = vpack.c.b16 %v1586, %v1584
      %v1619 = vpack.c.b16 %v1587, %v1585
      %v1620 = vpack.c.b16 %v1590, %v1588
      %v1621 = vpack.c.b16 %v1591, %v1589
      %v1622 = vpack.c.b16 %v1594, %v1592
      %v1623 = vpack.c.b16 %v1595, %v1593
      %v1624 = vpack.c.b16 %v1598, %v1596
      %v1625 = vpack.c.b16 %v1599, %v1597
      %v1626 = vpack.c.b16 %v1602, %v1600
      %v1627 = vpack.c.b16 %v1603, %v1601
      %v1628 = vpack.c.b16 %v1606, %v1604
      %v1629 = vpack.c.b16 %v1607, %v1605
      %v1630 = vpack.c.b16 %v1610, %v1608
      %v1631 = vpack.c.b16 %v1611, %v1609
      %v1632 = vpack.c.b16 %v1614, %v1612
      %v1633 = vpack.c.b16 %v1615, %v1613
      %v1644 = vsel %vm900, %v1617, 0
      %v1647 = vsel %vm900, %v1619, 0
      %v1650 = vsel %vm900, %v1621, 0
      %v1653 = vsel %vm900, %v1623, 0
      %v1656 = vsel %vm900, %v1625, 0
      %v1659 = vsel %vm900, %v1627, 0
      %v1662 = vsel %vm900, %v1629, 0
      %v1665 = vsel %vm900, %v1631, 0
      %v1668 = vsel %vm900, %v1633, 0
      %1670 = vmatpush.bf16.msra.mxu0 %v1540
      %1671 = vmatpush.bf16.msra.mxu0 %v1539
      %1672 = vmatpush.bf16.msra.mxu0 %v1538
      %1673 = vmatpush.bf16.msra.mxu0 %v1537
      %1674 = vmatpush.bf16.msra.mxu0 %v1536
      %1675 = vmatpush.bf16.msra.mxu0 %v1535
      %1676 = vmatpush.bf16.msra.mxu0 %v1534
      %1677 = vmatpush.bf16.msra.mxu0 %v1533
      %1678 = vmatmul.bf16.gmra.mxu0 %v1616
      %v1679 = vpop.f32.mrf.mxu0
      %v1680 = vadd.f32 0.0, %v1679
      %v1681 = vpop.f32.mrf.mxu0
      %v1682 = vadd.f32 0.0, %v1681
      %1683 = vmatmul.bf16.gmra.mxu0 %v1618
      %v1684 = vpop.f32.mrf.mxu0
      %v1685 = vadd.f32 0.0, %v1684
      %v1686 = vpop.f32.mrf.mxu0
      %v1687 = vadd.f32 0.0, %v1686
      %1688 = vmatmul.bf16.gmra.mxu0 %v1620
      %v1689 = vpop.f32.mrf.mxu0
      %v1690 = vadd.f32 0.0, %v1689
      %v1691 = vpop.f32.mrf.mxu0
      %v1692 = vadd.f32 0.0, %v1691
      %1693 = vmatmul.bf16.gmra.mxu0 %v1622
      %v1694 = vpop.f32.mrf.mxu0
      %v1695 = vadd.f32 0.0, %v1694
      %v1696 = vpop.f32.mrf.mxu0
      %v1697 = vadd.f32 0.0, %v1696
      %1698 = vmatmul.bf16.gmra.mxu0 %v1624
      %v1699 = vpop.f32.mrf.mxu0
      %v1700 = vadd.f32 0.0, %v1699
      %v1701 = vpop.f32.mrf.mxu0
      %v1702 = vadd.f32 0.0, %v1701
      %1703 = vmatmul.bf16.gmra.mxu0 %v1626
      %v1704 = vpop.f32.mrf.mxu0
      %v1705 = vadd.f32 0.0, %v1704
      %v1706 = vpop.f32.mrf.mxu0
      %v1707 = vadd.f32 0.0, %v1706
      %1708 = vmatmul.bf16.gmra.mxu0 %v1628
      %v1709 = vpop.f32.mrf.mxu0
      %v1710 = vadd.f32 0.0, %v1709
      %v1711 = vpop.f32.mrf.mxu0
      %v1712 = vadd.f32 0.0, %v1711
      %1713 = vmatmul.bf16.gmra.mxu0 %v1630
      %v1714 = vpop.f32.mrf.mxu0
      %v1715 = vadd.f32 0.0, %v1714
      %v1716 = vpop.f32.mrf.mxu0
      %v1717 = vadd.f32 0.0, %v1716
      %1718 = vmatmul.bf16.gmra.mxu0 %v1632
      %v1719 = vpop.f32.mrf.mxu0
      %v1720 = vadd.f32 0.0, %v1719
      %v1721 = vpop.f32.mrf.mxu0
      %v1722 = vadd.f32 0.0, %v1721
      %1723 = vdwg.mxu0
      %1724 = vmatpush.bf16.msra.mxu0 0
      %1725 = vmatpush.bf16.msra.mxu0 0
      %1726 = vmatpush.bf16.msra.mxu0 0
      %1727 = vmatpush.bf16.msra.mxu0 0
      %1728 = vmatpush.bf16.msra.mxu0 0
      %1729 = vmatpush.bf16.msra.mxu0 0
      %1730 = vmatpush.bf16.msra.mxu0 0
      %1731 = vmatpush.bf16.msra.mxu0 %v1541
      %1732 = vmatmul.bf16.gmra.mxu0 %v1644
      %v1733 = vpop.f32.mrf.mxu0
      %v1734 = vadd.f32 %v1680, %v1733
      %v1735 = vpop.f32.mrf.mxu0
      %v1736 = vadd.f32 %v1682, %v1735
      %1737 = vmatmul.bf16.gmra.mxu0 %v1647
      %v1738 = vpop.f32.mrf.mxu0
      %v1739 = vadd.f32 %v1685, %v1738
      %v1740 = vpop.f32.mrf.mxu0
      %v1741 = vadd.f32 %v1687, %v1740
      %1742 = vmatmul.bf16.gmra.mxu0 %v1650
      %v1743 = vpop.f32.mrf.mxu0
      %v1744 = vadd.f32 %v1690, %v1743
      %v1745 = vpop.f32.mrf.mxu0
      %v1746 = vadd.f32 %v1692, %v1745
      %1747 = vmatmul.bf16.gmra.mxu0 %v1653
      %v1748 = vpop.f32.mrf.mxu0
      %v1749 = vadd.f32 %v1695, %v1748
      %v1750 = vpop.f32.mrf.mxu0
      %v1751 = vadd.f32 %v1697, %v1750
      %1752 = vmatmul.bf16.gmra.mxu0 %v1656
      %v1753 = vpop.f32.mrf.mxu0
      %v1754 = vadd.f32 %v1700, %v1753
      %v1755 = vpop.f32.mrf.mxu0
      %v1756 = vadd.f32 %v1702, %v1755
      %1757 = vmatmul.bf16.gmra.mxu0 %v1659
      %v1758 = vpop.f32.mrf.mxu0
      %v1759 = vadd.f32 %v1705, %v1758
      %v1760 = vpop.f32.mrf.mxu0
      %v1761 = vadd.f32 %v1707, %v1760
      %1762 = vmatmul.bf16.gmra.mxu0 %v1662
      %v1763 = vpop.f32.mrf.mxu0
      %v1764 = vadd.f32 %v1710, %v1763
      %v1765 = vpop.f32.mrf.mxu0
      %v1766 = vadd.f32 %v1712, %v1765
      %1767 = vmatmul.bf16.gmra.mxu0 %v1665
      %v1768 = vpop.f32.mrf.mxu0
      %v1769 = vadd.f32 %v1715, %v1768
      %v1770 = vpop.f32.mrf.mxu0
      %v1771 = vadd.f32 %v1717, %v1770
      %1772 = vmatmul.bf16.gmra.mxu0 %v1668
      %v1773 = vpop.f32.mrf.mxu0
      %v1774 = vadd.f32 %v1720, %v1773
      %v1775 = vpop.f32.mrf.mxu0
      %v1776 = vadd.f32 %v1722, %v1775
      %1777 = vdwg.mxu0
      %s1778 = scalar_lea.vmem %s5, 144
      %v1779 = vld [vmem:[%s1778] sm:$0xff]
      %v1780 = vld [vmem:[%s1778 + $0x8] sm:$0xff]
      %v1781 = vld [vmem:[%s1778 + $0x10] sm:$0xff]
      %v1782 = vld [vmem:[%s1778 + $0x18] sm:$0xff]
      %v1783 = vld [vmem:[%s1778 + $0x20] sm:$0xff]
      %v1784 = vld [vmem:[%s1778 + $0x28] sm:$0xff]
      %v1785 = vld [vmem:[%s1778 + $0x30] sm:$0xff]
      %v1786 = vld [vmem:[%s1778 + $0x38] sm:$0xff]
      %v1787 = vld [vmem:[%s1778 + $0x40] sm:$0xff]
      %v1788 = vld [vmem:[%s1778 + $0x48] sm:$0xff]
      %v1789 = vld [vmem:[%s1778 + $0x50] sm:$0xff]
      %v1790 = vld [vmem:[%s1778 + $0x58] sm:$0xff]
      %v1791 = vld [vmem:[%s1778 + $0x60] sm:$0xff]
      %v1792 = vld [vmem:[%s1778 + $0x68] sm:$0xff]
      %v1793 = vld [vmem:[%s1778 + $0x70] sm:$0xff]
      %v1794 = vld [vmem:[%s1778 + $0x78] sm:$0xff]
      %v1795 = vld [vmem:[%s1778 + $0x80] sm:$0xff]
      %v1796 = vld [vmem:[%s1778 + $0x88] sm:$0xff]
      %v1815 = vunpack.c.l.b16 %v1779
      %v1816 = vunpack.c.h.b16 %v1779
      %v1817 = vunpack.c.l.b16 %v1780
      %v1818 = vunpack.c.h.b16 %v1780
      %v1819 = vunpack.c.l.b16 %v1781
      %v1820 = vunpack.c.h.b16 %v1781
      %v1821 = vunpack.c.l.b16 %v1782
      %v1822 = vunpack.c.h.b16 %v1782
      %v1823 = vunpack.c.l.b16 %v1783
      %v1824 = vunpack.c.h.b16 %v1783
      %v1825 = vunpack.c.l.b16 %v1784
      %v1826 = vunpack.c.h.b16 %v1784
      %v1827 = vunpack.c.l.b16 %v1785
      %v1828 = vunpack.c.h.b16 %v1785
      %v1829 = vunpack.c.l.b16 %v1786
      %v1830 = vunpack.c.h.b16 %v1786
      %v1831 = vunpack.c.l.b16 %v1787
      %v1832 = vunpack.c.h.b16 %v1787
      %v1833 = vunpack.c.l.b16 %v1788
      %v1834 = vunpack.c.h.b16 %v1788
      %v1835 = vunpack.c.l.b16 %v1789
      %v1836 = vunpack.c.h.b16 %v1789
      %v1837 = vunpack.c.l.b16 %v1790
      %v1838 = vunpack.c.h.b16 %v1790
      %v1839 = vunpack.c.l.b16 %v1791
      %v1840 = vunpack.c.h.b16 %v1791
      %v1841 = vunpack.c.l.b16 %v1792
      %v1842 = vunpack.c.h.b16 %v1792
      %v1843 = vunpack.c.l.b16 %v1793
      %v1844 = vunpack.c.h.b16 %v1793
      %v1845 = vunpack.c.l.b16 %v1794
      %v1846 = vunpack.c.h.b16 %v1794
      %v1847 = vunpack.c.l.b16 %v1795
      %v1848 = vunpack.c.h.b16 %v1795
      %v1849 = vunpack.c.l.b16 %v1796
      %v1850 = vunpack.c.h.b16 %v1796
      %v1851 = vpack.c.b16 %v1817, %v1815
      %v1852 = vpack.c.b16 %v1818, %v1816
      %v1853 = vpack.c.b16 %v1821, %v1819
      %v1854 = vpack.c.b16 %v1822, %v1820
      %v1855 = vpack.c.b16 %v1825, %v1823
      %v1856 = vpack.c.b16 %v1826, %v1824
      %v1857 = vpack.c.b16 %v1829, %v1827
      %v1858 = vpack.c.b16 %v1830, %v1828
      %v1859 = vpack.c.b16 %v1833, %v1831
      %v1860 = vpack.c.b16 %v1834, %v1832
      %v1861 = vpack.c.b16 %v1837, %v1835
      %v1862 = vpack.c.b16 %v1838, %v1836
      %v1863 = vpack.c.b16 %v1841, %v1839
      %v1864 = vpack.c.b16 %v1842, %v1840
      %v1865 = vpack.c.b16 %v1845, %v1843
      %v1866 = vpack.c.b16 %v1846, %v1844
      %v1867 = vpack.c.b16 %v1849, %v1847
      %v1868 = vpack.c.b16 %v1850, %v1848
      %v1879 = vsel %vm900, %v1852, 0
      %v1882 = vsel %vm900, %v1854, 0
      %v1885 = vsel %vm900, %v1856, 0
      %v1888 = vsel %vm900, %v1858, 0
      %v1891 = vsel %vm900, %v1860, 0
      %v1894 = vsel %vm900, %v1862, 0
      %v1897 = vsel %vm900, %v1864, 0
      %v1900 = vsel %vm900, %v1866, 0
      %v1903 = vsel %vm900, %v1868, 0
      %1905 = vmatpush.bf16.msra.mxu0 %v1540
      %1906 = vmatpush.bf16.msra.mxu0 %v1539
      %1907 = vmatpush.bf16.msra.mxu0 %v1538
      %1908 = vmatpush.bf16.msra.mxu0 %v1537
      %1909 = vmatpush.bf16.msra.mxu0 %v1536
      %1910 = vmatpush.bf16.msra.mxu0 %v1535
      %1911 = vmatpush.bf16.msra.mxu0 %v1534
      %1912 = vmatpush.bf16.msra.mxu0 %v1533
      %1913 = vmatmul.bf16.gmra.mxu0 %v1851
      %v1914 = vpop.f32.mrf.mxu0
      %v1915 = vadd.f32 0.0, %v1914
      %v1916 = vpop.f32.mrf.mxu0
      %v1917 = vadd.f32 0.0, %v1916
      %1918 = vmatmul.bf16.gmra.mxu0 %v1853
      %v1919 = vpop.f32.mrf.mxu0
      %v1920 = vadd.f32 0.0, %v1919
      %v1921 = vpop.f32.mrf.mxu0
      %v1922 = vadd.f32 0.0, %v1921
      %1923 = vmatmul.bf16.gmra.mxu0 %v1855
      %v1924 = vpop.f32.mrf.mxu0
      %v1925 = vadd.f32 0.0, %v1924
      %v1926 = vpop.f32.mrf.mxu0
      %v1927 = vadd.f32 0.0, %v1926
      %1928 = vmatmul.bf16.gmra.mxu0 %v1857
      %v1929 = vpop.f32.mrf.mxu0
      %v1930 = vadd.f32 0.0, %v1929
      %v1931 = vpop.f32.mrf.mxu0
      %v1932 = vadd.f32 0.0, %v1931
      %1933 = vmatmul.bf16.gmra.mxu0 %v1859
      %v1934 = vpop.f32.mrf.mxu0
      %v1935 = vadd.f32 0.0, %v1934
      %v1936 = vpop.f32.mrf.mxu0
      %v1937 = vadd.f32 0.0, %v1936
      %1938 = vmatmul.bf16.gmra.mxu0 %v1861
      %v1939 = vpop.f32.mrf.mxu0
      %v1940 = vadd.f32 0.0, %v1939
      %v1941 = vpop.f32.mrf.mxu0
      %v1942 = vadd.f32 0.0, %v1941
      %1943 = vmatmul.bf16.gmra.mxu0 %v1863
      %v1944 = vpop.f32.mrf.mxu0
      %v1945 = vadd.f32 0.0, %v1944
      %v1946 = vpop.f32.mrf.mxu0
      %v1947 = vadd.f32 0.0, %v1946
      %1948 = vmatmul.bf16.gmra.mxu0 %v1865
      %v1949 = vpop.f32.mrf.mxu0
      %v1950 = vadd.f32 0.0, %v1949
      %v1951 = vpop.f32.mrf.mxu0
      %v1952 = vadd.f32 0.0, %v1951
      %1953 = vmatmul.bf16.gmra.mxu0 %v1867
      %v1954 = vpop.f32.mrf.mxu0
      %v1955 = vadd.f32 0.0, %v1954
      %v1956 = vpop.f32.mrf.mxu0
      %v1957 = vadd.f32 0.0, %v1956
      %1958 = vdwg.mxu0
      %1959 = vmatpush.bf16.msra.mxu0 0
      %1960 = vmatpush.bf16.msra.mxu0 0
      %1961 = vmatpush.bf16.msra.mxu0 0
      %1962 = vmatpush.bf16.msra.mxu0 0
      %1963 = vmatpush.bf16.msra.mxu0 0
      %1964 = vmatpush.bf16.msra.mxu0 0
      %1965 = vmatpush.bf16.msra.mxu0 0
      %1966 = vmatpush.bf16.msra.mxu0 %v1541
      %1967 = vmatmul.bf16.gmra.mxu0 %v1879
      %v1968 = vpop.f32.mrf.mxu0
      %v1969 = vadd.f32 %v1915, %v1968
      %v1970 = vpop.f32.mrf.mxu0
      %v1971 = vadd.f32 %v1917, %v1970
      %1972 = vmatmul.bf16.gmra.mxu0 %v1882
      %v1973 = vpop.f32.mrf.mxu0
      %v1974 = vadd.f32 %v1920, %v1973
      %v1975 = vpop.f32.mrf.mxu0
      %v1976 = vadd.f32 %v1922, %v1975
      %1977 = vmatmul.bf16.gmra.mxu0 %v1885
      %v1978 = vpop.f32.mrf.mxu0
      %v1979 = vadd.f32 %v1925, %v1978
      %v1980 = vpop.f32.mrf.mxu0
      %v1981 = vadd.f32 %v1927, %v1980
      %1982 = vmatmul.bf16.gmra.mxu0 %v1888
      %v1983 = vpop.f32.mrf.mxu0
      %v1984 = vadd.f32 %v1930, %v1983
      %v1985 = vpop.f32.mrf.mxu0
      %v1986 = vadd.f32 %v1932, %v1985
      %1987 = vmatmul.bf16.gmra.mxu0 %v1891
      %v1988 = vpop.f32.mrf.mxu0
      %v1989 = vadd.f32 %v1935, %v1988
      %v1990 = vpop.f32.mrf.mxu0
      %v1991 = vadd.f32 %v1937, %v1990
      %1992 = vmatmul.bf16.gmra.mxu0 %v1894
      %v1993 = vpop.f32.mrf.mxu0
      %v1994 = vadd.f32 %v1940, %v1993
      %v1995 = vpop.f32.mrf.mxu0
      %v1996 = vadd.f32 %v1942, %v1995
      %1997 = vmatmul.bf16.gmra.mxu0 %v1897
      %v1998 = vpop.f32.mrf.mxu0
      %v1999 = vadd.f32 %v1945, %v1998
      %v2000 = vpop.f32.mrf.mxu0
      %v2001 = vadd.f32 %v1947, %v2000
      %2002 = vmatmul.bf16.gmra.mxu0 %v1900
      %v2003 = vpop.f32.mrf.mxu0
      %v2004 = vadd.f32 %v1950, %v2003
      %v2005 = vpop.f32.mrf.mxu0
      %v2006 = vadd.f32 %v1952, %v2005
      %2007 = vmatmul.bf16.gmra.mxu0 %v1903
      %v2008 = vpop.f32.mrf.mxu0
      %v2009 = vadd.f32 %v1955, %v2008
      %v2010 = vpop.f32.mrf.mxu0
      %v2011 = vadd.f32 %v1957, %v2010
      %2012 = vdwg.mxu0
      %v2013 = vperm.slane %v1542, 0
      %v2014 = vmul.f32 %v1734, %v2013
      %v2015 = vmul.f32 %v1736, %v2013
      %v2016 = vmul.f32 %v1739, %v2013
      %v2017 = vmul.f32 %v1741, %v2013
      %v2018 = vmul.f32 %v1744, %v2013
      %v2019 = vmul.f32 %v1746, %v2013
      %v2020 = vmul.f32 %v1749, %v2013
      %v2021 = vmul.f32 %v1751, %v2013
      %v2022 = vmul.f32 %v1754, %v2013
      %v2023 = vmul.f32 %v1756, %v2013
      %v2024 = vmul.f32 %v1759, %v2013
      %v2025 = vmul.f32 %v1761, %v2013
      %v2026 = vmul.f32 %v1764, %v2013
      %v2027 = vmul.f32 %v1766, %v2013
      %v2028 = vmul.f32 %v1769, %v2013
      %v2029 = vmul.f32 %v1771, %v2013
      %v2030 = vmul.f32 %v1774, %v2013
      %v2031 = vmul.f32 %v1776, %v2013
      %v2032 = vadd.f32 %v2014, 0.0
      %v2033 = vadd.f32 %v2015, 0.0
      %v2034 = vadd.f32 %v2016, 0.0
      %v2035 = vadd.f32 %v2017, 0.0
      %v2036 = vadd.f32 %v2018, 0.0
      %v2037 = vadd.f32 %v2019, 0.0
      %v2038 = vadd.f32 %v2020, 0.0
      %v2039 = vadd.f32 %v2021, 0.0
      %v2040 = vadd.f32 %v2022, 0.0
      %v2041 = vadd.f32 %v2023, 0.0
      %v2042 = vadd.f32 %v2024, 0.0
      %v2043 = vadd.f32 %v2025, 0.0
      %v2044 = vadd.f32 %v2026, 0.0
      %v2045 = vadd.f32 %v2027, 0.0
      %v2046 = vadd.f32 %v2028, 0.0
      %v2047 = vadd.f32 %v2029, 0.0
      %v2048 = vadd.f32 %v2030, 0.0
      %v2049 = vadd.f32 %v2031, 0.0
      %v2050 = vperm.slane %v1542, 1
      %v2051 = vmul.f32 %v1515, %v2050
      %v2052 = vmul.f32 %v1516, %v2050
      %v2053 = vmul.f32 %v1517, %v2050
      %v2054 = vmul.f32 %v1518, %v2050
      %v2055 = vmul.f32 %v1519, %v2050
      %v2056 = vmul.f32 %v1520, %v2050
      %v2057 = vmul.f32 %v1521, %v2050
      %v2058 = vmul.f32 %v1522, %v2050
      %v2059 = vmul.f32 %v1523, %v2050
      %v2060 = vmul.f32 %v1524, %v2050
      %v2061 = vmul.f32 %v1525, %v2050
      %v2062 = vmul.f32 %v1526, %v2050
      %v2063 = vmul.f32 %v1527, %v2050
      %v2064 = vmul.f32 %v1528, %v2050
      %v2065 = vmul.f32 %v1529, %v2050
      %v2066 = vmul.f32 %v1530, %v2050
      %v2067 = vmul.f32 %v1531, %v2050
      %v2068 = vmul.f32 %v1532, %v2050
      %v2069 = vadd.f32 %v2032, %v2051
      %v2070 = vadd.f32 %v2033, %v2052
      %v2071 = vadd.f32 %v2034, %v2053
      %v2072 = vadd.f32 %v2035, %v2054
      %v2073 = vadd.f32 %v2036, %v2055
      %v2074 = vadd.f32 %v2037, %v2056
      %v2075 = vadd.f32 %v2038, %v2057
      %v2076 = vadd.f32 %v2039, %v2058
      %v2077 = vadd.f32 %v2040, %v2059
      %v2078 = vadd.f32 %v2041, %v2060
      %v2079 = vadd.f32 %v2042, %v2061
      %v2080 = vadd.f32 %v2043, %v2062
      %v2081 = vadd.f32 %v2044, %v2063
      %v2082 = vadd.f32 %v2045, %v2064
      %v2083 = vadd.f32 %v2046, %v2065
      %v2084 = vadd.f32 %v2047, %v2066
      %v2085 = vadd.f32 %v2048, %v2067
      %v2086 = vadd.f32 %v2049, %v2068
      %v2087 = vperm.slane %v1542, 2
      %v2088 = vmul.f32 %v1969, %v2087
      %v2089 = vmul.f32 %v1971, %v2087
      %v2090 = vmul.f32 %v1974, %v2087
      %v2091 = vmul.f32 %v1976, %v2087
      %v2092 = vmul.f32 %v1979, %v2087
      %v2093 = vmul.f32 %v1981, %v2087
      %v2094 = vmul.f32 %v1984, %v2087
      %v2095 = vmul.f32 %v1986, %v2087
      %v2096 = vmul.f32 %v1989, %v2087
      %v2097 = vmul.f32 %v1991, %v2087
      %v2098 = vmul.f32 %v1994, %v2087
      %v2099 = vmul.f32 %v1996, %v2087
      %v2100 = vmul.f32 %v1999, %v2087
      %v2101 = vmul.f32 %v2001, %v2087
      %v2102 = vmul.f32 %v2004, %v2087
      %v2103 = vmul.f32 %v2006, %v2087
      %v2104 = vmul.f32 %v2009, %v2087
      %v2105 = vmul.f32 %v2011, %v2087
      %v2106 = vadd.f32 %v2069, %v2088
      %v2107 = vadd.f32 %v2070, %v2089
      %v2108 = vadd.f32 %v2071, %v2090
      %v2109 = vadd.f32 %v2072, %v2091
      %v2110 = vadd.f32 %v2073, %v2092
      %v2111 = vadd.f32 %v2074, %v2093
      %v2112 = vadd.f32 %v2075, %v2094
      %v2113 = vadd.f32 %v2076, %v2095
      %v2114 = vadd.f32 %v2077, %v2096
      %v2115 = vadd.f32 %v2078, %v2097
      %v2116 = vadd.f32 %v2079, %v2098
      %v2117 = vadd.f32 %v2080, %v2099
      %v2118 = vadd.f32 %v2081, %v2100
      %v2119 = vadd.f32 %v2082, %v2101
      %v2120 = vadd.f32 %v2083, %v2102
      %v2121 = vadd.f32 %v2084, %v2103
      %v2122 = vadd.f32 %v2085, %v2104
      %v2123 = vadd.f32 %v2086, %v2105
      %v2124 = vld [vmem:[%s6] sm:$0xff]
      %v2125 = vld [vmem:[%s6 + $0x8] sm:$0xff]
      %v2126 = vld [vmem:[%s6 + $0x10] sm:$0xff]
      %v2127 = vld [vmem:[%s6 + $0x18] sm:$0xff]
      %v2128 = vld [vmem:[%s6 + $0x20] sm:$0xff]
      %v2129 = vld [vmem:[%s6 + $0x28] sm:$0xff]
      %v2130 = vld [vmem:[%s6 + $0x30] sm:$0xff]
      %v2131 = vld [vmem:[%s6 + $0x38] sm:$0xff]
      %v2132 = vld [vmem:[%s6 + $0x40] sm:$0xff]
      %v2133 = vld [vmem:[%s6 + $0x48] sm:$0xff]
      %v2134 = vld [vmem:[%s6 + $0x50] sm:$0xff]
      %v2135 = vld [vmem:[%s6 + $0x58] sm:$0xff]
      %v2136 = vld [vmem:[%s6 + $0x60] sm:$0xff]
      %v2137 = vld [vmem:[%s6 + $0x68] sm:$0xff]
      %v2138 = vld [vmem:[%s6 + $0x70] sm:$0xff]
      %v2139 = vld [vmem:[%s6 + $0x78] sm:$0xff]
      %v2140 = vld [vmem:[%s6 + $0x80] sm:$0xff]
      %v2141 = vld [vmem:[%s6 + $0x88] sm:$0xff]
      %v2142 = vpack.c.bf16 %v2107, %v2106
      %v2143 = vpack.c.bf16 %v2109, %v2108
      %v2144 = vpack.c.bf16 %v2111, %v2110
      %v2145 = vpack.c.bf16 %v2113, %v2112
      %v2146 = vpack.c.bf16 %v2115, %v2114
      %v2147 = vpack.c.bf16 %v2117, %v2116
      %v2148 = vpack.c.bf16 %v2119, %v2118
      %v2149 = vpack.c.bf16 %v2121, %v2120
      %v2150 = vpack.c.bf16 %v2123, %v2122
      %v2151 = vperm.slane %v1542, 3
      %v2152 = vmul.f32 %v1734, %v2151
      %v2153 = vmul.f32 %v1736, %v2151
      %v2154 = vmul.f32 %v1739, %v2151
      %v2155 = vmul.f32 %v1741, %v2151
      %v2156 = vmul.f32 %v1744, %v2151
      %v2157 = vmul.f32 %v1746, %v2151
      %v2158 = vmul.f32 %v1749, %v2151
      %v2159 = vmul.f32 %v1751, %v2151
      %v2160 = vmul.f32 %v1754, %v2151
      %v2161 = vmul.f32 %v1756, %v2151
      %v2162 = vmul.f32 %v1759, %v2151
      %v2163 = vmul.f32 %v1761, %v2151
      %v2164 = vmul.f32 %v1764, %v2151
      %v2165 = vmul.f32 %v1766, %v2151
      %v2166 = vmul.f32 %v1769, %v2151
      %v2167 = vmul.f32 %v1771, %v2151
      %v2168 = vmul.f32 %v1774, %v2151
      %v2169 = vmul.f32 %v1776, %v2151
      %v2170 = vadd.f32 %v2152, 0.0
      %v2171 = vadd.f32 %v2153, 0.0
      %v2172 = vadd.f32 %v2154, 0.0
      %v2173 = vadd.f32 %v2155, 0.0
      %v2174 = vadd.f32 %v2156, 0.0
      %v2175 = vadd.f32 %v2157, 0.0
      %v2176 = vadd.f32 %v2158, 0.0
      %v2177 = vadd.f32 %v2159, 0.0
      %v2178 = vadd.f32 %v2160, 0.0
      %v2179 = vadd.f32 %v2161, 0.0
      %v2180 = vadd.f32 %v2162, 0.0
      %v2181 = vadd.f32 %v2163, 0.0
      %v2182 = vadd.f32 %v2164, 0.0
      %v2183 = vadd.f32 %v2165, 0.0
      %v2184 = vadd.f32 %v2166, 0.0
      %v2185 = vadd.f32 %v2167, 0.0
      %v2186 = vadd.f32 %v2168, 0.0
      %v2187 = vadd.f32 %v2169, 0.0
      %v2188 = vperm.slane %v1542, 4
      %v2189 = vmul.f32 %v1515, %v2188
      %v2190 = vmul.f32 %v1516, %v2188
      %v2191 = vmul.f32 %v1517, %v2188
      %v2192 = vmul.f32 %v1518, %v2188
      %v2193 = vmul.f32 %v1519, %v2188
      %v2194 = vmul.f32 %v1520, %v2188
      %v2195 = vmul.f32 %v1521, %v2188
      %v2196 = vmul.f32 %v1522, %v2188
      %v2197 = vmul.f32 %v1523, %v2188
      %v2198 = vmul.f32 %v1524, %v2188
      %v2199 = vmul.f32 %v1525, %v2188
      %v2200 = vmul.f32 %v1526, %v2188
      %v2201 = vmul.f32 %v1527, %v2188
      %v2202 = vmul.f32 %v1528, %v2188
      %v2203 = vmul.f32 %v1529, %v2188
      %v2204 = vmul.f32 %v1530, %v2188
      %v2205 = vmul.f32 %v1531, %v2188
      %v2206 = vmul.f32 %v1532, %v2188
      %v2207 = vadd.f32 %v2170, %v2189
      %v2208 = vadd.f32 %v2171, %v2190
      %v2209 = vadd.f32 %v2172, %v2191
      %v2210 = vadd.f32 %v2173, %v2192
      %v2211 = vadd.f32 %v2174, %v2193
      %v2212 = vadd.f32 %v2175, %v2194
      %v2213 = vadd.f32 %v2176, %v2195
      %v2214 = vadd.f32 %v2177, %v2196
      %v2215 = vadd.f32 %v2178, %v2197
      %v2216 = vadd.f32 %v2179, %v2198
      %v2217 = vadd.f32 %v2180, %v2199
      %v2218 = vadd.f32 %v2181, %v2200
      %v2219 = vadd.f32 %v2182, %v2201
      %v2220 = vadd.f32 %v2183, %v2202
      %v2221 = vadd.f32 %v2184, %v2203
      %v2222 = vadd.f32 %v2185, %v2204
      %v2223 = vadd.f32 %v2186, %v2205
      %v2224 = vadd.f32 %v2187, %v2206
      %v2225 = vperm.slane %v1542, 5
      %v2226 = vmul.f32 %v1969, %v2225
      %v2227 = vmul.f32 %v1971, %v2225
      %v2228 = vmul.f32 %v1974, %v2225
      %v2229 = vmul.f32 %v1976, %v2225
      %v2230 = vmul.f32 %v1979, %v2225
      %v2231 = vmul.f32 %v1981, %v2225
      %v2232 = vmul.f32 %v1984, %v2225
      %v2233 = vmul.f32 %v1986, %v2225
      %v2234 = vmul.f32 %v1989, %v2225
      %v2235 = vmul.f32 %v1991, %v2225
      %v2236 = vmul.f32 %v1994, %v2225
      %v2237 = vmul.f32 %v1996, %v2225
      %v2238 = vmul.f32 %v1999, %v2225
      %v2239 = vmul.f32 %v2001, %v2225
      %v2240 = vmul.f32 %v2004, %v2225
      %v2241 = vmul.f32 %v2006, %v2225
      %v2242 = vmul.f32 %v2009, %v2225
      %v2243 = vmul.f32 %v2011, %v2225
      %v2244 = vadd.f32 %v2207, %v2226
      %v2245 = vadd.f32 %v2208, %v2227
      %v2246 = vadd.f32 %v2209, %v2228
      %v2247 = vadd.f32 %v2210, %v2229
      %v2248 = vadd.f32 %v2211, %v2230
      %v2249 = vadd.f32 %v2212, %v2231
      %v2250 = vadd.f32 %v2213, %v2232
      %v2251 = vadd.f32 %v2214, %v2233
      %v2252 = vadd.f32 %v2215, %v2234
      %v2253 = vadd.f32 %v2216, %v2235
      %v2254 = vadd.f32 %v2217, %v2236
      %v2255 = vadd.f32 %v2218, %v2237
      %v2256 = vadd.f32 %v2219, %v2238
      %v2257 = vadd.f32 %v2220, %v2239
      %v2258 = vadd.f32 %v2221, %v2240
      %v2259 = vadd.f32 %v2222, %v2241
      %v2260 = vadd.f32 %v2223, %v2242
      %v2261 = vadd.f32 %v2224, %v2243
      %v2280 = vunpack.c.l.b16 %v2124
      %v2281 = vunpack.c.h.b16 %v2124
      %v2282 = vunpack.c.l.b16 %v2125
      %v2283 = vunpack.c.h.b16 %v2125
      %v2284 = vunpack.c.l.b16 %v2126
      %v2285 = vunpack.c.h.b16 %v2126
      %v2286 = vunpack.c.l.b16 %v2127
      %v2287 = vunpack.c.h.b16 %v2127
      %v2288 = vunpack.c.l.b16 %v2128
      %v2289 = vunpack.c.h.b16 %v2128
      %v2290 = vunpack.c.l.b16 %v2129
      %v2291 = vunpack.c.h.b16 %v2129
      %v2292 = vunpack.c.l.b16 %v2130
      %v2293 = vunpack.c.h.b16 %v2130
      %v2294 = vunpack.c.l.b16 %v2131
      %v2295 = vunpack.c.h.b16 %v2131
      %v2296 = vunpack.c.l.b16 %v2132
      %v2297 = vunpack.c.h.b16 %v2132
      %v2298 = vunpack.c.l.b16 %v2133
      %v2299 = vunpack.c.h.b16 %v2133
      %v2300 = vunpack.c.l.b16 %v2134
      %v2301 = vunpack.c.h.b16 %v2134
      %v2302 = vunpack.c.l.b16 %v2135
      %v2303 = vunpack.c.h.b16 %v2135
      %v2304 = vunpack.c.l.b16 %v2136
      %v2305 = vunpack.c.h.b16 %v2136
      %v2306 = vunpack.c.l.b16 %v2137
      %v2307 = vunpack.c.h.b16 %v2137
      %v2308 = vunpack.c.l.b16 %v2138
      %v2309 = vunpack.c.h.b16 %v2138
      %v2310 = vunpack.c.l.b16 %v2139
      %v2311 = vunpack.c.h.b16 %v2139
      %v2312 = vunpack.c.l.b16 %v2140
      %v2313 = vunpack.c.h.b16 %v2140
      %v2314 = vunpack.c.l.b16 %v2141
      %v2315 = vunpack.c.h.b16 %v2141
      %v2316 = vpack.c.b16 %v2282, %v2280
      %v2317 = vpack.c.b16 %v2283, %v2281
      %v2318 = vpack.c.b16 %v2286, %v2284
      %v2319 = vpack.c.b16 %v2287, %v2285
      %v2320 = vpack.c.b16 %v2290, %v2288
      %v2321 = vpack.c.b16 %v2291, %v2289
      %v2322 = vpack.c.b16 %v2294, %v2292
      %v2323 = vpack.c.b16 %v2295, %v2293
      %v2324 = vpack.c.b16 %v2298, %v2296
      %v2325 = vpack.c.b16 %v2299, %v2297
      %v2326 = vpack.c.b16 %v2302, %v2300
      %v2327 = vpack.c.b16 %v2303, %v2301
      %v2328 = vpack.c.b16 %v2306, %v2304
      %v2329 = vpack.c.b16 %v2307, %v2305
      %v2330 = vpack.c.b16 %v2310, %v2308
      %v2331 = vpack.c.b16 %v2311, %v2309
      %v2332 = vpack.c.b16 %v2314, %v2312
      %v2333 = vpack.c.b16 %v2315, %v2313
      %v2344 = vsel %vm900, %v2317, 0
      %v2347 = vsel %vm900, %v2319, 0
      %v2350 = vsel %vm900, %v2321, 0
      %v2353 = vsel %vm900, %v2323, 0
      %v2356 = vsel %vm900, %v2325, 0
      %v2359 = vsel %vm900, %v2327, 0
      %v2362 = vsel %vm900, %v2329, 0
      %v2365 = vsel %vm900, %v2331, 0
      %v2368 = vsel %vm900, %v2333, 0
      %2370 = vmatpush.bf16.msra.mxu0 %v2149
      %2371 = vmatpush.bf16.msra.mxu0 %v2148
      %2372 = vmatpush.bf16.msra.mxu0 %v2147
      %2373 = vmatpush.bf16.msra.mxu0 %v2146
      %2374 = vmatpush.bf16.msra.mxu0 %v2145
      %2375 = vmatpush.bf16.msra.mxu0 %v2144
      %2376 = vmatpush.bf16.msra.mxu0 %v2143
      %2377 = vmatpush.bf16.msra.mxu0 %v2142
      %2378 = vmatmul.bf16.gmra.mxu0 %v2316
      %v2379 = vpop.f32.mrf.mxu0
      %v2380 = vadd.f32 %v2244, %v2379
      %v2381 = vpop.f32.mrf.mxu0
      %v2382 = vadd.f32 %v2245, %v2381
      %2383 = vmatmul.bf16.gmra.mxu0 %v2318
      %v2384 = vpop.f32.mrf.mxu0
      %v2385 = vadd.f32 %v2246, %v2384
      %v2386 = vpop.f32.mrf.mxu0
      %v2387 = vadd.f32 %v2247, %v2386
      %2388 = vmatmul.bf16.gmra.mxu0 %v2320
      %v2389 = vpop.f32.mrf.mxu0
      %v2390 = vadd.f32 %v2248, %v2389
      %v2391 = vpop.f32.mrf.mxu0
      %v2392 = vadd.f32 %v2249, %v2391
      %2393 = vmatmul.bf16.gmra.mxu0 %v2322
      %v2394 = vpop.f32.mrf.mxu0
      %v2395 = vadd.f32 %v2250, %v2394
      %v2396 = vpop.f32.mrf.mxu0
      %v2397 = vadd.f32 %v2251, %v2396
      %2398 = vmatmul.bf16.gmra.mxu0 %v2324
      %v2399 = vpop.f32.mrf.mxu0
      %v2400 = vadd.f32 %v2252, %v2399
      %v2401 = vpop.f32.mrf.mxu0
      %v2402 = vadd.f32 %v2253, %v2401
      %2403 = vmatmul.bf16.gmra.mxu0 %v2326
      %v2404 = vpop.f32.mrf.mxu0
      %v2405 = vadd.f32 %v2254, %v2404
      %v2406 = vpop.f32.mrf.mxu0
      %v2407 = vadd.f32 %v2255, %v2406
      %2408 = vmatmul.bf16.gmra.mxu0 %v2328
      %v2409 = vpop.f32.mrf.mxu0
      %v2410 = vadd.f32 %v2256, %v2409
      %v2411 = vpop.f32.mrf.mxu0
      %v2412 = vadd.f32 %v2257, %v2411
      %2413 = vmatmul.bf16.gmra.mxu0 %v2330
      %v2414 = vpop.f32.mrf.mxu0
      %v2415 = vadd.f32 %v2258, %v2414
      %v2416 = vpop.f32.mrf.mxu0
      %v2417 = vadd.f32 %v2259, %v2416
      %2418 = vmatmul.bf16.gmra.mxu0 %v2332
      %v2419 = vpop.f32.mrf.mxu0
      %v2420 = vadd.f32 %v2260, %v2419
      %v2421 = vpop.f32.mrf.mxu0
      %v2422 = vadd.f32 %v2261, %v2421
      %2423 = vdwg.mxu0
      %2424 = vmatpush.bf16.msra.mxu0 0
      %2425 = vmatpush.bf16.msra.mxu0 0
      %2426 = vmatpush.bf16.msra.mxu0 0
      %2427 = vmatpush.bf16.msra.mxu0 0
      %2428 = vmatpush.bf16.msra.mxu0 0
      %2429 = vmatpush.bf16.msra.mxu0 0
      %2430 = vmatpush.bf16.msra.mxu0 0
      %2431 = vmatpush.bf16.msra.mxu0 %v2150
      %2432 = vmatmul.bf16.gmra.mxu0 %v2344
      %v2433 = vpop.f32.mrf.mxu0
      %v2434 = vadd.f32 %v2380, %v2433
      %v2435 = vpop.f32.mrf.mxu0
      %v2436 = vadd.f32 %v2382, %v2435
      %2437 = vmatmul.bf16.gmra.mxu0 %v2347
      %v2438 = vpop.f32.mrf.mxu0
      %v2439 = vadd.f32 %v2385, %v2438
      %v2440 = vpop.f32.mrf.mxu0
      %v2441 = vadd.f32 %v2387, %v2440
      %2442 = vmatmul.bf16.gmra.mxu0 %v2350
      %v2443 = vpop.f32.mrf.mxu0
      %v2444 = vadd.f32 %v2390, %v2443
      %v2445 = vpop.f32.mrf.mxu0
      %v2446 = vadd.f32 %v2392, %v2445
      %2447 = vmatmul.bf16.gmra.mxu0 %v2353
      %v2448 = vpop.f32.mrf.mxu0
      %v2449 = vadd.f32 %v2395, %v2448
      %v2450 = vpop.f32.mrf.mxu0
      %v2451 = vadd.f32 %v2397, %v2450
      %2452 = vmatmul.bf16.gmra.mxu0 %v2356
      %v2453 = vpop.f32.mrf.mxu0
      %v2454 = vadd.f32 %v2400, %v2453
      %v2455 = vpop.f32.mrf.mxu0
      %v2456 = vadd.f32 %v2402, %v2455
      %2457 = vmatmul.bf16.gmra.mxu0 %v2359
      %v2458 = vpop.f32.mrf.mxu0
      %v2459 = vadd.f32 %v2405, %v2458
      %v2460 = vpop.f32.mrf.mxu0
      %v2461 = vadd.f32 %v2407, %v2460
      %2462 = vmatmul.bf16.gmra.mxu0 %v2362
      %v2463 = vpop.f32.mrf.mxu0
      %v2464 = vadd.f32 %v2410, %v2463
      %v2465 = vpop.f32.mrf.mxu0
      %v2466 = vadd.f32 %v2412, %v2465
      %2467 = vmatmul.bf16.gmra.mxu0 %v2365
      %v2468 = vpop.f32.mrf.mxu0
      %v2469 = vadd.f32 %v2415, %v2468
      %v2470 = vpop.f32.mrf.mxu0
      %v2471 = vadd.f32 %v2417, %v2470
      %2472 = vmatmul.bf16.gmra.mxu0 %v2368
      %v2473 = vpop.f32.mrf.mxu0
      %v2474 = vadd.f32 %v2420, %v2473
      %v2475 = vpop.f32.mrf.mxu0
      %v2476 = vadd.f32 %v2422, %v2475
      %2477 = vdwg.mxu0
      %v2478 = vperm.slane %v1542, 6
      %v2479 = vmul.f32 %v1734, %v2478
      %v2480 = vmul.f32 %v1736, %v2478
      %v2481 = vmul.f32 %v1739, %v2478
      %v2482 = vmul.f32 %v1741, %v2478
      %v2483 = vmul.f32 %v1744, %v2478
      %v2484 = vmul.f32 %v1746, %v2478
      %v2485 = vmul.f32 %v1749, %v2478
      %v2486 = vmul.f32 %v1751, %v2478
      %v2487 = vmul.f32 %v1754, %v2478
      %v2488 = vmul.f32 %v1756, %v2478
      %v2489 = vmul.f32 %v1759, %v2478
      %v2490 = vmul.f32 %v1761, %v2478
      %v2491 = vmul.f32 %v1764, %v2478
      %v2492 = vmul.f32 %v1766, %v2478
      %v2493 = vmul.f32 %v1769, %v2478
      %v2494 = vmul.f32 %v1771, %v2478
      %v2495 = vmul.f32 %v1774, %v2478
      %v2496 = vmul.f32 %v1776, %v2478
      %v2497 = vadd.f32 %v2479, 0.0
      %v2498 = vadd.f32 %v2480, 0.0
      %v2499 = vadd.f32 %v2481, 0.0
      %v2500 = vadd.f32 %v2482, 0.0
      %v2501 = vadd.f32 %v2483, 0.0
      %v2502 = vadd.f32 %v2484, 0.0
      %v2503 = vadd.f32 %v2485, 0.0
      %v2504 = vadd.f32 %v2486, 0.0
      %v2505 = vadd.f32 %v2487, 0.0
      %v2506 = vadd.f32 %v2488, 0.0
      %v2507 = vadd.f32 %v2489, 0.0
      %v2508 = vadd.f32 %v2490, 0.0
      %v2509 = vadd.f32 %v2491, 0.0
      %v2510 = vadd.f32 %v2492, 0.0
      %v2511 = vadd.f32 %v2493, 0.0
      %v2512 = vadd.f32 %v2494, 0.0
      %v2513 = vadd.f32 %v2495, 0.0
      %v2514 = vadd.f32 %v2496, 0.0
      %v2515 = vperm.slane %v1542, 7
      %v2516 = vmul.f32 %v1515, %v2515
      %v2517 = vmul.f32 %v1516, %v2515
      %v2518 = vmul.f32 %v1517, %v2515
      %v2519 = vmul.f32 %v1518, %v2515
      %v2520 = vmul.f32 %v1519, %v2515
      %v2521 = vmul.f32 %v1520, %v2515
      %v2522 = vmul.f32 %v1521, %v2515
      %v2523 = vmul.f32 %v1522, %v2515
      %v2524 = vmul.f32 %v1523, %v2515
      %v2525 = vmul.f32 %v1524, %v2515
      %v2526 = vmul.f32 %v1525, %v2515
      %v2527 = vmul.f32 %v1526, %v2515
      %v2528 = vmul.f32 %v1527, %v2515
      %v2529 = vmul.f32 %v1528, %v2515
      %v2530 = vmul.f32 %v1529, %v2515
      %v2531 = vmul.f32 %v1530, %v2515
      %v2532 = vmul.f32 %v1531, %v2515
      %v2533 = vmul.f32 %v1532, %v2515
      %v2534 = vadd.f32 %v2497, %v2516
      %v2535 = vadd.f32 %v2498, %v2517
      %v2536 = vadd.f32 %v2499, %v2518
      %v2537 = vadd.f32 %v2500, %v2519
      %v2538 = vadd.f32 %v2501, %v2520
      %v2539 = vadd.f32 %v2502, %v2521
      %v2540 = vadd.f32 %v2503, %v2522
      %v2541 = vadd.f32 %v2504, %v2523
      %v2542 = vadd.f32 %v2505, %v2524
      %v2543 = vadd.f32 %v2506, %v2525
      %v2544 = vadd.f32 %v2507, %v2526
      %v2545 = vadd.f32 %v2508, %v2527
      %v2546 = vadd.f32 %v2509, %v2528
      %v2547 = vadd.f32 %v2510, %v2529
      %v2548 = vadd.f32 %v2511, %v2530
      %v2549 = vadd.f32 %v2512, %v2531
      %v2550 = vadd.f32 %v2513, %v2532
      %v2551 = vadd.f32 %v2514, %v2533
      %v2552 = vperm.slane %v1543, 0
      %v2553 = vmul.f32 %v1969, %v2552
      %v2554 = vmul.f32 %v1971, %v2552
      %v2555 = vmul.f32 %v1974, %v2552
      %v2556 = vmul.f32 %v1976, %v2552
      %v2557 = vmul.f32 %v1979, %v2552
      %v2558 = vmul.f32 %v1981, %v2552
      %v2559 = vmul.f32 %v1984, %v2552
      %v2560 = vmul.f32 %v1986, %v2552
      %v2561 = vmul.f32 %v1989, %v2552
      %v2562 = vmul.f32 %v1991, %v2552
      %v2563 = vmul.f32 %v1994, %v2552
      %v2564 = vmul.f32 %v1996, %v2552
      %v2565 = vmul.f32 %v1999, %v2552
      %v2566 = vmul.f32 %v2001, %v2552
      %v2567 = vmul.f32 %v2004, %v2552
      %v2568 = vmul.f32 %v2006, %v2552
      %v2569 = vmul.f32 %v2009, %v2552
      %v2570 = vmul.f32 %v2011, %v2552
      %v2571 = vadd.f32 %v2534, %v2553
      %v2572 = vadd.f32 %v2535, %v2554
      %v2573 = vadd.f32 %v2536, %v2555
      %v2574 = vadd.f32 %v2537, %v2556
      %v2575 = vadd.f32 %v2538, %v2557
      %v2576 = vadd.f32 %v2539, %v2558
      %v2577 = vadd.f32 %v2540, %v2559
      %v2578 = vadd.f32 %v2541, %v2560
      %v2579 = vadd.f32 %v2542, %v2561
      %v2580 = vadd.f32 %v2543, %v2562
      %v2581 = vadd.f32 %v2544, %v2563
      %v2582 = vadd.f32 %v2545, %v2564
      %v2583 = vadd.f32 %v2546, %v2565
      %v2584 = vadd.f32 %v2547, %v2566
      %v2585 = vadd.f32 %v2548, %v2567
      %v2586 = vadd.f32 %v2549, %v2568
      %v2587 = vadd.f32 %v2550, %v2569
      %v2588 = vadd.f32 %v2551, %v2570
      %s2589 = scalar_lea.vmem %s6, 144
      %v2590 = vld [vmem:[%s2589] sm:$0xff]
      %v2591 = vld [vmem:[%s2589 + $0x8] sm:$0xff]
      %v2592 = vld [vmem:[%s2589 + $0x10] sm:$0xff]
      %v2593 = vld [vmem:[%s2589 + $0x18] sm:$0xff]
      %v2594 = vld [vmem:[%s2589 + $0x20] sm:$0xff]
      %v2595 = vld [vmem:[%s2589 + $0x28] sm:$0xff]
      %v2596 = vld [vmem:[%s2589 + $0x30] sm:$0xff]
      %v2597 = vld [vmem:[%s2589 + $0x38] sm:$0xff]
      %v2598 = vld [vmem:[%s2589 + $0x40] sm:$0xff]
      %v2599 = vld [vmem:[%s2589 + $0x48] sm:$0xff]
      %v2600 = vld [vmem:[%s2589 + $0x50] sm:$0xff]
      %v2601 = vld [vmem:[%s2589 + $0x58] sm:$0xff]
      %v2602 = vld [vmem:[%s2589 + $0x60] sm:$0xff]
      %v2603 = vld [vmem:[%s2589 + $0x68] sm:$0xff]
      %v2604 = vld [vmem:[%s2589 + $0x70] sm:$0xff]
      %v2605 = vld [vmem:[%s2589 + $0x78] sm:$0xff]
      %v2606 = vld [vmem:[%s2589 + $0x80] sm:$0xff]
      %v2607 = vld [vmem:[%s2589 + $0x88] sm:$0xff]
      %v2608 = vpack.c.bf16 %v2572, %v2571
      %v2609 = vpack.c.bf16 %v2574, %v2573
      %v2610 = vpack.c.bf16 %v2576, %v2575
      %v2611 = vpack.c.bf16 %v2578, %v2577
      %v2612 = vpack.c.bf16 %v2580, %v2579
      %v2613 = vpack.c.bf16 %v2582, %v2581
      %v2614 = vpack.c.bf16 %v2584, %v2583
      %v2615 = vpack.c.bf16 %v2586, %v2585
      %v2616 = vpack.c.bf16 %v2588, %v2587
      %v2635 = vunpack.c.l.b16 %v2590
      %v2636 = vunpack.c.h.b16 %v2590
      %v2637 = vunpack.c.l.b16 %v2591
      %v2638 = vunpack.c.h.b16 %v2591
      %v2639 = vunpack.c.l.b16 %v2592
      %v2640 = vunpack.c.h.b16 %v2592
      %v2641 = vunpack.c.l.b16 %v2593
      %v2642 = vunpack.c.h.b16 %v2593
      %v2643 = vunpack.c.l.b16 %v2594
      %v2644 = vunpack.c.h.b16 %v2594
      %v2645 = vunpack.c.l.b16 %v2595
      %v2646 = vunpack.c.h.b16 %v2595
      %v2647 = vunpack.c.l.b16 %v2596
      %v2648 = vunpack.c.h.b16 %v2596
      %v2649 = vunpack.c.l.b16 %v2597
      %v2650 = vunpack.c.h.b16 %v2597
      %v2651 = vunpack.c.l.b16 %v2598
      %v2652 = vunpack.c.h.b16 %v2598
      %v2653 = vunpack.c.l.b16 %v2599
      %v2654 = vunpack.c.h.b16 %v2599
      %v2655 = vunpack.c.l.b16 %v2600
      %v2656 = vunpack.c.h.b16 %v2600
      %v2657 = vunpack.c.l.b16 %v2601
      %v2658 = vunpack.c.h.b16 %v2601
      %v2659 = vunpack.c.l.b16 %v2602
      %v2660 = vunpack.c.h.b16 %v2602
      %v2661 = vunpack.c.l.b16 %v2603
      %v2662 = vunpack.c.h.b16 %v2603
      %v2663 = vunpack.c.l.b16 %v2604
      %v2664 = vunpack.c.h.b16 %v2604
      %v2665 = vunpack.c.l.b16 %v2605
      %v2666 = vunpack.c.h.b16 %v2605
      %v2667 = vunpack.c.l.b16 %v2606
      %v2668 = vunpack.c.h.b16 %v2606
      %v2669 = vunpack.c.l.b16 %v2607
      %v2670 = vunpack.c.h.b16 %v2607
      %v2671 = vpack.c.b16 %v2637, %v2635
      %v2672 = vpack.c.b16 %v2638, %v2636
      %v2673 = vpack.c.b16 %v2641, %v2639
      %v2674 = vpack.c.b16 %v2642, %v2640
      %v2675 = vpack.c.b16 %v2645, %v2643
      %v2676 = vpack.c.b16 %v2646, %v2644
      %v2677 = vpack.c.b16 %v2649, %v2647
      %v2678 = vpack.c.b16 %v2650, %v2648
      %v2679 = vpack.c.b16 %v2653, %v2651
      %v2680 = vpack.c.b16 %v2654, %v2652
      %v2681 = vpack.c.b16 %v2657, %v2655
      %v2682 = vpack.c.b16 %v2658, %v2656
      %v2683 = vpack.c.b16 %v2661, %v2659
      %v2684 = vpack.c.b16 %v2662, %v2660
      %v2685 = vpack.c.b16 %v2665, %v2663
      %v2686 = vpack.c.b16 %v2666, %v2664
      %v2687 = vpack.c.b16 %v2669, %v2667
      %v2688 = vpack.c.b16 %v2670, %v2668
      %v2699 = vsel %vm900, %v2672, 0
      %v2702 = vsel %vm900, %v2674, 0
      %v2705 = vsel %vm900, %v2676, 0
      %v2708 = vsel %vm900, %v2678, 0
      %v2711 = vsel %vm900, %v2680, 0
      %v2714 = vsel %vm900, %v2682, 0
      %v2717 = vsel %vm900, %v2684, 0
      %v2720 = vsel %vm900, %v2686, 0
      %v2723 = vsel %vm900, %v2688, 0
      %2725 = vmatpush.bf16.msra.mxu0 %v2615
      %2726 = vmatpush.bf16.msra.mxu0 %v2614
      %2727 = vmatpush.bf16.msra.mxu0 %v2613
      %2728 = vmatpush.bf16.msra.mxu0 %v2612
      %2729 = vmatpush.bf16.msra.mxu0 %v2611
      %2730 = vmatpush.bf16.msra.mxu0 %v2610
      %2731 = vmatpush.bf16.msra.mxu0 %v2609
      %2732 = vmatpush.bf16.msra.mxu0 %v2608
      %2733 = vmatmul.bf16.gmra.mxu0 %v2671
      %v2734 = vpop.f32.mrf.mxu0
      %v2735 = vadd.f32 0.0, %v2734
      %v2736 = vpop.f32.mrf.mxu0
      %v2737 = vadd.f32 0.0, %v2736
      %2738 = vmatmul.bf16.gmra.mxu0 %v2673
      %v2739 = vpop.f32.mrf.mxu0
      %v2740 = vadd.f32 0.0, %v2739
      %v2741 = vpop.f32.mrf.mxu0
      %v2742 = vadd.f32 0.0, %v2741
      %2743 = vmatmul.bf16.gmra.mxu0 %v2675
      %v2744 = vpop.f32.mrf.mxu0
      %v2745 = vadd.f32 0.0, %v2744
      %v2746 = vpop.f32.mrf.mxu0
      %v2747 = vadd.f32 0.0, %v2746
      %2748 = vmatmul.bf16.gmra.mxu0 %v2677
      %v2749 = vpop.f32.mrf.mxu0
      %v2750 = vadd.f32 0.0, %v2749
      %v2751 = vpop.f32.mrf.mxu0
      %v2752 = vadd.f32 0.0, %v2751
      %2753 = vmatmul.bf16.gmra.mxu0 %v2679
      %v2754 = vpop.f32.mrf.mxu0
      %v2755 = vadd.f32 0.0, %v2754
      %v2756 = vpop.f32.mrf.mxu0
      %v2757 = vadd.f32 0.0, %v2756
      %2758 = vmatmul.bf16.gmra.mxu0 %v2681
      %v2759 = vpop.f32.mrf.mxu0
      %v2760 = vadd.f32 0.0, %v2759
      %v2761 = vpop.f32.mrf.mxu0
      %v2762 = vadd.f32 0.0, %v2761
      %2763 = vmatmul.bf16.gmra.mxu0 %v2683
      %v2764 = vpop.f32.mrf.mxu0
      %v2765 = vadd.f32 0.0, %v2764
      %v2766 = vpop.f32.mrf.mxu0
      %v2767 = vadd.f32 0.0, %v2766
      %2768 = vmatmul.bf16.gmra.mxu0 %v2685
      %v2769 = vpop.f32.mrf.mxu0
      %v2770 = vadd.f32 0.0, %v2769
      %v2771 = vpop.f32.mrf.mxu0
      %v2772 = vadd.f32 0.0, %v2771
      %2773 = vmatmul.bf16.gmra.mxu0 %v2687
      %v2774 = vpop.f32.mrf.mxu0
      %v2775 = vadd.f32 0.0, %v2774
      %v2776 = vpop.f32.mrf.mxu0
      %v2777 = vadd.f32 0.0, %v2776
      %2778 = vdwg.mxu0
      %2779 = vmatpush.bf16.msra.mxu0 0
      %2780 = vmatpush.bf16.msra.mxu0 0
      %2781 = vmatpush.bf16.msra.mxu0 0
      %2782 = vmatpush.bf16.msra.mxu0 0
      %2783 = vmatpush.bf16.msra.mxu0 0
      %2784 = vmatpush.bf16.msra.mxu0 0
      %2785 = vmatpush.bf16.msra.mxu0 0
      %2786 = vmatpush.bf16.msra.mxu0 %v2616
      %2787 = vmatmul.bf16.gmra.mxu0 %v2699
      %v2788 = vpop.f32.mrf.mxu0
      %v2789 = vadd.f32 %v2735, %v2788
      %v2790 = vpop.f32.mrf.mxu0
      %v2791 = vadd.f32 %v2737, %v2790
      %2792 = vmatmul.bf16.gmra.mxu0 %v2702
      %v2793 = vpop.f32.mrf.mxu0
      %v2794 = vadd.f32 %v2740, %v2793
      %v2795 = vpop.f32.mrf.mxu0
      %v2796 = vadd.f32 %v2742, %v2795
      %2797 = vmatmul.bf16.gmra.mxu0 %v2705
      %v2798 = vpop.f32.mrf.mxu0
      %v2799 = vadd.f32 %v2745, %v2798
      %v2800 = vpop.f32.mrf.mxu0
      %v2801 = vadd.f32 %v2747, %v2800
      %2802 = vmatmul.bf16.gmra.mxu0 %v2708
      %v2803 = vpop.f32.mrf.mxu0
      %v2804 = vadd.f32 %v2750, %v2803
      %v2805 = vpop.f32.mrf.mxu0
      %v2806 = vadd.f32 %v2752, %v2805
      %2807 = vmatmul.bf16.gmra.mxu0 %v2711
      %v2808 = vpop.f32.mrf.mxu0
      %v2809 = vadd.f32 %v2755, %v2808
      %v2810 = vpop.f32.mrf.mxu0
      %v2811 = vadd.f32 %v2757, %v2810
      %2812 = vmatmul.bf16.gmra.mxu0 %v2714
      %v2813 = vpop.f32.mrf.mxu0
      %v2814 = vadd.f32 %v2760, %v2813
      %v2815 = vpop.f32.mrf.mxu0
      %v2816 = vadd.f32 %v2762, %v2815
      %2817 = vmatmul.bf16.gmra.mxu0 %v2717
      %v2818 = vpop.f32.mrf.mxu0
      %v2819 = vadd.f32 %v2765, %v2818
      %v2820 = vpop.f32.mrf.mxu0
      %v2821 = vadd.f32 %v2767, %v2820
      %2822 = vmatmul.bf16.gmra.mxu0 %v2720
      %v2823 = vpop.f32.mrf.mxu0
      %v2824 = vadd.f32 %v2770, %v2823
      %v2825 = vpop.f32.mrf.mxu0
      %v2826 = vadd.f32 %v2772, %v2825
      %2827 = vmatmul.bf16.gmra.mxu0 %v2723
      %v2828 = vpop.f32.mrf.mxu0
      %v2829 = vadd.f32 %v2775, %v2828
      %v2830 = vpop.f32.mrf.mxu0
      %v2831 = vadd.f32 %v2777, %v2830
      %2832 = vdwg.mxu0
      %v2833 = vadd.f32 %v2434, %v2789
      %v2834 = vadd.f32 %v2436, %v2791
      %v2835 = vadd.f32 %v2439, %v2794
      %v2836 = vadd.f32 %v2441, %v2796
      %v2837 = vadd.f32 %v2444, %v2799
      %v2838 = vadd.f32 %v2446, %v2801
      %v2839 = vadd.f32 %v2449, %v2804
      %v2840 = vadd.f32 %v2451, %v2806
      %v2841 = vadd.f32 %v2454, %v2809
      %v2842 = vadd.f32 %v2456, %v2811
      %v2843 = vadd.f32 %v2459, %v2814
      %v2844 = vadd.f32 %v2461, %v2816
      %v2845 = vadd.f32 %v2464, %v2819
      %v2846 = vadd.f32 %v2466, %v2821
      %v2847 = vadd.f32 %v2469, %v2824
      %v2848 = vadd.f32 %v2471, %v2826
      %v2849 = vadd.f32 %v2474, %v2829
      %v2850 = vadd.f32 %v2476, %v2831
      %v2851 = vadd.f32 %v1515, %v2833
      %v2852 = vadd.f32 %v1516, %v2834
      %v2853 = vadd.f32 %v1517, %v2835
      %v2854 = vadd.f32 %v1518, %v2836
      %v2855 = vadd.f32 %v1519, %v2837
      %v2856 = vadd.f32 %v1520, %v2838
      %v2857 = vadd.f32 %v1521, %v2839
      %v2858 = vadd.f32 %v1522, %v2840
      %v2859 = vadd.f32 %v1523, %v2841
      %v2860 = vadd.f32 %v1524, %v2842
      %v2861 = vadd.f32 %v1525, %v2843
      %v2862 = vadd.f32 %v1526, %v2844
      %v2863 = vadd.f32 %v1527, %v2845
      %v2864 = vadd.f32 %v1528, %v2846
      %v2865 = vadd.f32 %v1529, %v2847
      %v2866 = vadd.f32 %v1530, %v2848
      %v2867 = vadd.f32 %v1531, %v2849
      %v2868 = vadd.f32 %v1532, %v2850
      %v2869 = vpack.c.bf16 %v2852, %v2851
      %v2870 = vpack.c.bf16 %v2854, %v2853
      %v2871 = vpack.c.bf16 %v2856, %v2855
      %v2872 = vpack.c.bf16 %v2858, %v2857
      %v2873 = vpack.c.bf16 %v2860, %v2859
      %v2874 = vpack.c.bf16 %v2862, %v2861
      %v2875 = vpack.c.bf16 %v2864, %v2863
      %v2876 = vpack.c.bf16 %v2866, %v2865
      %v2877 = vpack.c.bf16 %v2868, %v2867
      %v2878 = vld [vmem:[%s8] sm:$0xf]
      %v2879 = vld [vmem:[%s8 + $0x4] sm:$0xf]
      %v2880 = vld [vmem:[%s8 + $0x8] sm:$0xf]
      %v2881 = vld [vmem:[%s8 + $0xc] sm:$0xf]
      %v2882 = vld [vmem:[%s9] sm:$0x1]
      %v2884 = vperm.slane %v2882, 0
      %v2890 = vunpack.c.l.b16 %v2878
      %v2891 = vunpack.c.l.b16 %v2879
      %v2892 = vunpack.c.l.b16 %v2880
      %v2893 = vunpack.c.l.b16 %v2881
      %v2894 = vpack.c.b16 %v2891, %v2890
      %v2895 = vpack.c.b16 %v2893, %v2892
      %v2899 = vsel %vm512, %v2869, 0
      %v2902 = vsel %vm512, %v2870, 0
      %v2905 = vsel %vm512, %v2871, 0
      %v2908 = vsel %vm512, %v2872, 0
      %v2911 = vsel %vm512, %v2873, 0
      %v2914 = vsel %vm512, %v2874, 0
      %v2917 = vsel %vm512, %v2875, 0
      %v2920 = vsel %vm512, %v2876, 0
      %v2923 = vsel %vm512, %v2877, 0
      %2925 = vmatpush.bf16.msra.mxu0 0
      %2926 = vmatpush.bf16.msra.mxu0 0
      %2927 = vmatpush.bf16.msra.mxu0 0
      %2928 = vmatpush.bf16.msra.mxu0 0
      %2929 = vmatpush.bf16.msra.mxu0 0
      %2930 = vmatpush.bf16.msra.mxu0 0
      %2931 = vmatpush.bf16.msra.mxu0 %v2895
      %2932 = vmatpush.bf16.msra.mxu0 %v2894
      %2933 = vmatmul.bf16.gmra.mxu0 %v2899
      %v2934 = vpop.f32.mrf.mxu0
      %v2935 = vadd.f32 %v2884, %v2934
      %v2936 = vpop.f32.mrf.mxu0
      %v2937 = vadd.f32 %v2884, %v2936
      %2938 = vmatmul.bf16.gmra.mxu0 %v2902
      %v2939 = vpop.f32.mrf.mxu0
      %v2940 = vadd.f32 %v2884, %v2939
      %v2941 = vpop.f32.mrf.mxu0
      %v2942 = vadd.f32 %v2884, %v2941
      %2943 = vmatmul.bf16.gmra.mxu0 %v2905
      %v2944 = vpop.f32.mrf.mxu0
      %v2945 = vadd.f32 %v2884, %v2944
      %v2946 = vpop.f32.mrf.mxu0
      %v2947 = vadd.f32 %v2884, %v2946
      %2948 = vmatmul.bf16.gmra.mxu0 %v2908
      %v2949 = vpop.f32.mrf.mxu0
      %v2950 = vadd.f32 %v2884, %v2949
      %v2951 = vpop.f32.mrf.mxu0
      %v2952 = vadd.f32 %v2884, %v2951
      %2953 = vmatmul.bf16.gmra.mxu0 %v2911
      %v2954 = vpop.f32.mrf.mxu0
      %v2955 = vadd.f32 %v2884, %v2954
      %v2956 = vpop.f32.mrf.mxu0
      %v2957 = vadd.f32 %v2884, %v2956
      %2958 = vmatmul.bf16.gmra.mxu0 %v2914
      %v2959 = vpop.f32.mrf.mxu0
      %v2960 = vadd.f32 %v2884, %v2959
      %v2961 = vpop.f32.mrf.mxu0
      %v2962 = vadd.f32 %v2884, %v2961
      %2963 = vmatmul.bf16.gmra.mxu0 %v2917
      %v2964 = vpop.f32.mrf.mxu0
      %v2965 = vadd.f32 %v2884, %v2964
      %v2966 = vpop.f32.mrf.mxu0
      %v2967 = vadd.f32 %v2884, %v2966
      %2968 = vmatmul.bf16.gmra.mxu0 %v2920
      %v2969 = vpop.f32.mrf.mxu0
      %v2970 = vadd.f32 %v2884, %v2969
      %v2971 = vpop.f32.mrf.mxu0
      %v2972 = vadd.f32 %v2884, %v2971
      %2973 = vmatmul.bf16.gmra.mxu0 %v2923
      %v2974 = vpop.f32.mrf.mxu0
      %v2975 = vadd.f32 %v2884, %v2974
      %v2976 = vpop.f32.mrf.mxu0
      %v2977 = vadd.f32 %v2884, %v2976
      %2978 = vdwg.mxu0
      %v2979 = vmax.f32 %v2935, 0.0
      %v2980 = vmax.f32 %v2937, 0.0
      %v2981 = vmax.f32 %v2940, 0.0
      %v2982 = vmax.f32 %v2942, 0.0
      %v2983 = vmax.f32 %v2945, 0.0
      %v2984 = vmax.f32 %v2947, 0.0
      %v2985 = vmax.f32 %v2950, 0.0
      %v2986 = vmax.f32 %v2952, 0.0
      %v2987 = vmax.f32 %v2955, 0.0
      %v2988 = vmax.f32 %v2957, 0.0
      %v2989 = vmax.f32 %v2960, 0.0
      %v2990 = vmax.f32 %v2962, 0.0
      %v2991 = vmax.f32 %v2965, 0.0
      %v2992 = vmax.f32 %v2967, 0.0
      %v2993 = vmax.f32 %v2970, 0.0
      %v2994 = vmax.f32 %v2972, 0.0
      %v2995 = vmax.f32 %v2975, 0.0
      %v2996 = vmax.f32 %v2977, 0.0
      %v2997 = vmin.f32 %v2979, 6.0
      %v2998 = vmin.f32 %v2980, 6.0
      %v2999 = vmin.f32 %v2981, 6.0
      %v3000 = vmin.f32 %v2982, 6.0
      %v3001 = vmin.f32 %v2983, 6.0
      %v3002 = vmin.f32 %v2984, 6.0
      %v3003 = vmin.f32 %v2985, 6.0
      %v3004 = vmin.f32 %v2986, 6.0
      %v3005 = vmin.f32 %v2987, 6.0
      %v3006 = vmin.f32 %v2988, 6.0
      %v3007 = vmin.f32 %v2989, 6.0
      %v3008 = vmin.f32 %v2990, 6.0
      %v3009 = vmin.f32 %v2991, 6.0
      %v3010 = vmin.f32 %v2992, 6.0
      %v3011 = vmin.f32 %v2993, 6.0
      %v3012 = vmin.f32 %v2994, 6.0
      %v3013 = vmin.f32 %v2995, 6.0
      %v3014 = vmin.f32 %v2996, 6.0
      %v3015 = vpack.c.bf16 %v2998, %v2997
      %v3016 = vpack.c.bf16 %v3000, %v2999
      %v3017 = vpack.c.bf16 %v3002, %v3001
      %v3018 = vpack.c.bf16 %v3004, %v3003
      %v3019 = vpack.c.bf16 %v3006, %v3005
      %v3020 = vpack.c.bf16 %v3008, %v3007
      %v3021 = vpack.c.bf16 %v3010, %v3009
      %v3022 = vpack.c.bf16 %v3012, %v3011
      %v3023 = vpack.c.bf16 %v3014, %v3013
      %v3024 = vld [vmem:[%s10] sm:$0xf]
      %v3025 = vld [vmem:[%s10 + $0x4] sm:$0xf]
      %v3026 = vld [vmem:[%s10 + $0x8] sm:$0xf]
      %v3027 = vld [vmem:[%s10 + $0xc] sm:$0xf]
      %v3028 = vld [vmem:[%s10 + $0x10] sm:$0xf]
      %v3029 = vld [vmem:[%s10 + $0x14] sm:$0xf]
      %v3030 = vld [vmem:[%s10 + $0x18] sm:$0xf]
      %v3031 = vld [vmem:[%s10 + $0x1c] sm:$0xf]
      %v3032 = vld [vmem:[%s11] sm:$0x1]
      %v3034 = vperm.slane %v3032, 0
      %v3044 = vunpack.c.l.b16 %v3024
      %v3045 = vunpack.c.l.b16 %v3025
      %v3046 = vunpack.c.l.b16 %v3026
      %v3047 = vunpack.c.l.b16 %v3027
      %v3048 = vunpack.c.l.b16 %v3028
      %v3049 = vunpack.c.l.b16 %v3029
      %v3050 = vunpack.c.l.b16 %v3030
      %v3051 = vunpack.c.l.b16 %v3031
      %v3052 = vpack.c.b16 %v3045, %v3044
      %v3053 = vpack.c.b16 %v3047, %v3046
      %v3054 = vpack.c.b16 %v3049, %v3048
      %v3055 = vpack.c.b16 %v3051, %v3050
      %vm3060 = vcmask 523264
      %v3062 = vsel %vm3060, %v3015, 0
      %v3065 = vsel %vm3060, %v3016, 0
      %v3068 = vsel %vm3060, %v3017, 0
      %v3071 = vsel %vm3060, %v3018, 0
      %v3074 = vsel %vm3060, %v3019, 0
      %v3077 = vsel %vm3060, %v3020, 0
      %v3080 = vsel %vm3060, %v3021, 0
      %v3083 = vsel %vm3060, %v3022, 0
      %v3086 = vsel %vm3060, %v3023, 0
      %3088 = vmatpush.bf16.msra.mxu0 0
      %3089 = vmatpush.bf16.msra.mxu0 0
      %3090 = vmatpush.bf16.msra.mxu0 0
      %3091 = vmatpush.bf16.msra.mxu0 0
      %3092 = vmatpush.bf16.msra.mxu0 %v3055
      %3093 = vmatpush.bf16.msra.mxu0 %v3054
      %3094 = vmatpush.bf16.msra.mxu0 %v3053
      %3095 = vmatpush.bf16.msra.mxu0 %v3052
      %3096 = vmatmul.bf16.gmra.mxu0 %v3062
      %v3097 = vpop.f32.mrf.mxu0
      %v3098 = vadd.f32 %v3034, %v3097
      %v3099 = vpop.f32.mrf.mxu0
      %v3100 = vadd.f32 %v3034, %v3099
      %3101 = vmatmul.bf16.gmra.mxu0 %v3065
      %v3102 = vpop.f32.mrf.mxu0
      %v3103 = vadd.f32 %v3034, %v3102
      %v3104 = vpop.f32.mrf.mxu0
      %v3105 = vadd.f32 %v3034, %v3104
      %3106 = vmatmul.bf16.gmra.mxu0 %v3068
      %v3107 = vpop.f32.mrf.mxu0
      %v3108 = vadd.f32 %v3034, %v3107
      %v3109 = vpop.f32.mrf.mxu0
      %v3110 = vadd.f32 %v3034, %v3109
      %3111 = vmatmul.bf16.gmra.mxu0 %v3071
      %v3112 = vpop.f32.mrf.mxu0
      %v3113 = vadd.f32 %v3034, %v3112
      %v3114 = vpop.f32.mrf.mxu0
      %v3115 = vadd.f32 %v3034, %v3114
      %3116 = vmatmul.bf16.gmra.mxu0 %v3074
      %v3117 = vpop.f32.mrf.mxu0
      %v3118 = vadd.f32 %v3034, %v3117
      %v3119 = vpop.f32.mrf.mxu0
      %v3120 = vadd.f32 %v3034, %v3119
      %3121 = vmatmul.bf16.gmra.mxu0 %v3077
      %v3122 = vpop.f32.mrf.mxu0
      %v3123 = vadd.f32 %v3034, %v3122
      %v3124 = vpop.f32.mrf.mxu0
      %v3125 = vadd.f32 %v3034, %v3124
      %3126 = vmatmul.bf16.gmra.mxu0 %v3080
      %v3127 = vpop.f32.mrf.mxu0
      %v3128 = vadd.f32 %v3034, %v3127
      %v3129 = vpop.f32.mrf.mxu0
      %v3130 = vadd.f32 %v3034, %v3129
      %3131 = vmatmul.bf16.gmra.mxu0 %v3083
      %v3132 = vpop.f32.mrf.mxu0
      %v3133 = vadd.f32 %v3034, %v3132
      %v3134 = vpop.f32.mrf.mxu0
      %v3135 = vadd.f32 %v3034, %v3134
      %3136 = vmatmul.bf16.gmra.mxu0 %v3086
      %v3137 = vpop.f32.mrf.mxu0
      %v3138 = vadd.f32 %v3034, %v3137
      %v3139 = vpop.f32.mrf.mxu0
      %v3140 = vadd.f32 %v3034, %v3139
      %3141 = vdwg.mxu0
      %v3142 = vadd.f32 %v2851, %v3098
      %v3143 = vadd.f32 %v2852, %v3100
      %v3144 = vadd.f32 %v2853, %v3103
      %v3145 = vadd.f32 %v2854, %v3105
      %v3146 = vadd.f32 %v2855, %v3108
      %v3147 = vadd.f32 %v2856, %v3110
      %v3148 = vadd.f32 %v2857, %v3113
      %v3149 = vadd.f32 %v2858, %v3115
      %v3150 = vadd.f32 %v2859, %v3118
      %v3151 = vadd.f32 %v2860, %v3120
      %v3152 = vadd.f32 %v2861, %v3123
      %v3153 = vadd.f32 %v2862, %v3125
      %v3154 = vadd.f32 %v2863, %v3128
      %v3155 = vadd.f32 %v2864, %v3130
      %v3156 = vadd.f32 %v2865, %v3133
      %v3157 = vadd.f32 %v2866, %v3135
      %v3158 = vadd.f32 %v2867, %v3138
      %v3159 = vadd.f32 %v2868, %v3140
      %v3160 = vpack.c.bf16 %v3142, %v3142
      %v3161 = vpack.c.bf16 %v3143, %v3143
      %v3162 = vpack.c.bf16 %v3144, %v3144
      %v3163 = vpack.c.bf16 %v3145, %v3145
      %v3164 = vpack.c.bf16 %v3146, %v3146
      %v3165 = vpack.c.bf16 %v3147, %v3147
      %v3166 = vpack.c.bf16 %v3148, %v3148
      %v3167 = vpack.c.bf16 %v3149, %v3149
      %v3168 = vpack.c.bf16 %v3150, %v3150
      %v3169 = vpack.c.bf16 %v3151, %v3151
      %v3170 = vpack.c.bf16 %v3152, %v3152
      %v3171 = vpack.c.bf16 %v3153, %v3153
      %v3172 = vpack.c.bf16 %v3154, %v3154
      %v3173 = vpack.c.bf16 %v3155, %v3155
      %v3174 = vpack.c.bf16 %v3156, %v3156
      %v3175 = vpack.c.bf16 %v3157, %v3157
      %v3176 = vpack.c.bf16 %v3158, %v3158
      %v3177 = vpack.c.bf16 %v3159, %v3159
      %vm3178 = vcmask 257024
      %3179 = vst.msk [vmem:[%s413] sm:$0xf] %vm3178, %v3160
      %3180 = vst.msk [vmem:[%s413 + $0x4] sm:$0xf] %vm3178, %v3161
      %3181 = vst.msk [vmem:[%s413 + $0x8] sm:$0xf] %vm3178, %v3162
      %3182 = vst.msk [vmem:[%s413 + $0xc] sm:$0xf] %vm3178, %v3163
      %3183 = vst.msk [vmem:[%s413 + $0x10] sm:$0xf] %vm3178, %v3164
      %3184 = vst.msk [vmem:[%s413 + $0x14] sm:$0xf] %vm3178, %v3165
      %3185 = vst.msk [vmem:[%s413 + $0x18] sm:$0xf] %vm3178, %v3166
      %3186 = vst.msk [vmem:[%s413 + $0x1c] sm:$0xf] %vm3178, %v3167
      %3187 = vst.msk [vmem:[%s413 + $0x20] sm:$0xf] %vm3178, %v3168
      %3188 = vst.msk [vmem:[%s413 + $0x24] sm:$0xf] %vm3178, %v3169
      %3189 = vst.msk [vmem:[%s413 + $0x28] sm:$0xf] %vm3178, %v3170
      %3190 = vst.msk [vmem:[%s413 + $0x2c] sm:$0xf] %vm3178, %v3171
      %3191 = vst.msk [vmem:[%s413 + $0x30] sm:$0xf] %vm3178, %v3172
      %3192 = vst.msk [vmem:[%s413 + $0x34] sm:$0xf] %vm3178, %v3173
      %3193 = vst.msk [vmem:[%s413 + $0x38] sm:$0xf] %vm3178, %v3174
      %3194 = vst.msk [vmem:[%s413 + $0x3c] sm:$0xf] %vm3178, %v3175
      %3195 = vst.msk [vmem:[%s413 + $0x40] sm:$0xf] %vm3178, %v3176
      %3196 = vst.msk [vmem:[%s413 + $0x44] sm:$0xf] %vm3178, %v3177
      %p3197 = scmp.lt.s32.totalorder %s23, 1
      %s3198 = scalar_select %p3197, %s23, 1
      %s3199 = smul.addr %s3198, 18
      %s3200 = smul.addr %s3199, 4
      %s3201 = scalar_lea.vmem %s12, %s3200
      // Predicated region
      $region69: #{_lambda_.13} parent=67 // pred_check
        %p3202 = pneg %p298
      $region70: #{_lambda_.13} parent=67 // pred_check_branch
        %3204 = sbr.rel (%p3202) target = $region72
      $region71: #{_lambda_.13} parent=67 // pred_region
        _
      $region72: #{_lambda_.13} parent=67 // pred_fallthru
        _
    $region68: #{_lambda_.13} parent=5 // pred_fallthru
      _
    %p3205 = scmp.le.s32.totalorder 2, %s18
    // Predicated region
    $region73: #{_lambda_.13} parent=5 // pred_check
      %p3206 = pneg %p3205
    $region74: #{_lambda_.13} parent=5 // pred_check_branch
      %3208 = sbr.rel (%p3206) target = $region76
    $region75: #{_lambda_.13} parent=5 // pred_region
      %s3209 = ssub.s32 %s18, 2
      // Predicated region
      $region77: #{_lambda_.13} parent=75 // pred_check
        %p3210 = pneg %p304
      $region78: #{_lambda_.13} parent=75 // pred_check_branch
        %3212 = sbr.rel (%p3210) target = $region80
      $region79: #{_lambda_.13} parent=75 // pred_region
        %p3213 = scmp.lt.s32.totalorder %s24, 1
        %s3214 = scalar_select %p3213, %s24, 1
        %s3215 = smul.addr %s3214, 18
        %s3216 = smul.addr %s3215, 4
        %s3217 = scalar_lea.vmem %s12, %s3216
      $region80: #{_lambda_.13} parent=75 // pred_fallthru
        _
    $region76: #{_lambda_.13} parent=5 // pred_fallthru
      _
  $region6: #{_lambda_.13} parent=0 // loop_footer
    %s22 = sadd.s32 1, %s18
  $region7: #{_lambda_.13} parent=0 // loop_footer_branch
    %17 = sbr.rel target = $region3
  $region8: #{_lambda_.13} parent=0 // loop_exit
    _

// kernel: _lambda_.16
$region0: #{_lambda_.16}
  #allocation0 [shape = 'u32[]', space=smem, size = 0x4, offset = 0x4, fixed_abs, tag = 'smem constant byte address 0x4 - core index']
  #allocation1 [shape = 'u32[72,128]{1,0:T(1,128)}', space=vmem, size = 0x9000, scoped, tag = 'internal scratch']
  %s0 = inlined_call_operand.vmem [shape: bf16[2,144,32], index: 0, kind: input, shape index: {}]
  %s1 = inlined_call_operand.vmem [shape: bf16[32,96], index: 1, kind: input, shape index: {}]
  %s2 = inlined_call_operand.vmem [shape: f32[1,144,144], index: 2, kind: input, shape index: {}]
  %s3 = inlined_call_operand.vmem [shape: bf16[32,32], index: 3, kind: input, shape index: {}]
  %s4 = inlined_call_operand.hbm [shape: f32[1,32], index: 4, kind: input, shape index: {}]
  %s5 = inlined_call_operand.vmem [shape: bf16[2,144,144], index: 5, kind: input, shape index: {}]
  %s6 = inlined_call_operand.vmem [shape: bf16[2,144,144], index: 6, kind: input, shape index: {}]
  %s7 = inlined_call_operand.vmem [shape: f32[9,32], index: 7, kind: input, shape index: {}]
  %s8 = inlined_call_operand.vmem [shape: bf16[32,64], index: 8, kind: input, shape index: {}]
  %s9 = inlined_call_operand.hbm [shape: f32[1,64], index: 9, kind: input, shape index: {}]
  %s10 = inlined_call_operand.vmem [shape: bf16[64,32], index: 10, kind: input, shape index: {}]
  %s11 = inlined_call_operand.hbm [shape: f32[1,32], index: 11, kind: input, shape index: {}]
  %s12 = inlined_call_operand.vmem [shape: bf16[2,144,32], index: 12, kind: output, shape index: {}]
  %s13 = sld [smem:[#allocation0]]
  $region93: #{_lambda_.16} parent=0
    _
  %s15 = ssub.s32 1, %s13
  %s16 = scalar_select 0, %s15, %s13
  $region1: #{_lambda_.16} parent=0
    #allocation2 [shape = 'u8[512]{0}', space=vmem, size = 0x400, scoped, tag = 'input window, operand 4, single buffered']
    #allocation3 [shape = 's32[2]{0}', space=sflag, size = 0x8, scoped, tag = 'scoped memory for _lambda_.16']
    #allocation4 [shape = 'u8[512]{0}', space=vmem, size = 0x400, scoped, tag = 'input window, operand 9, single buffered']
    #allocation5 [shape = 's32[1]{0}', space=sflag, size = 0x4, scoped, tag = 'scoped memory for _lambda_.16']
    #allocation6 [shape = 'u8[512]{0}', space=vmem, size = 0x400, scoped, tag = 'input window, operand 11, single buffered']
    %17 = vsyncpa [#allocation3], 0
    %18 = vsyncpa [#allocation5], 0
    loop: start=0, step=1, limit=4
    $region2: #{_lambda_.16} parent=1 // loop_pre_header
      _
    $region3: #{_lambda_.16} parent=1 // loop_header
      %s20 = sphi 0, %s24
      %p21 = scmp.ge.s32.totalorder %s20, 4
      %s30 = sphi 0, %s32
      %s33 = sphi 0, %s30
      %s34 = sphi 0, %s33
      %s50 = sphi 0, %s34
      %s54 = sphi 0, %s54
      %s56 = sphi 0, %s54
      %s57 = sphi 0, %s56
      %s71 = sphi 0, %s57
      %s75 = sphi 0, %s75
      %s77 = sphi 0, %s75
      %s78 = sphi 0, %s77
      %s92 = sphi 0, %s78
      %s96 = sphi 0, %s96
      %s98 = sphi 0, %s96
      %s99 = sphi 0, %s98
      %s113 = sphi 0, %s99
      %s117 = sphi 0, %s117
      %s119 = sphi 0, %s117
      %s120 = sphi 0, %s119
      %s134 = sphi 0, %s120
      %s138 = sphi 0, %s138
      %s140 = sphi 0, %s138
      %s141 = sphi 0, %s140
      %s155 = sphi 0, %s141
      %s159 = sphi 0, %s159
      %s161 = sphi 0, %s159
      %s162 = sphi 0, %s161
      %s176 = sphi 0, %s162
      %s180 = sphi 0, %s180
      %s182 = sphi 0, %s180
      %s183 = sphi 0, %s182
      %s197 = sphi 0, %s183
      %s201 = sphi 0, %s201
      %s203 = sphi 0, %s201
      %s204 = sphi 0, %s203
      %s218 = sphi 0, %s204
      %s222 = sphi 0, %s222
      %s224 = sphi 0, %s222
      %s225 = sphi 0, %s224
      %s239 = sphi 0, %s225
      %s243 = sphi 0, %s243
      %s245 = sphi 0, %s243
      %s246 = sphi 0, %s245
      %s260 = sphi 0, %s246
      %s264 = sphi 0, %s264
      %s266 = sphi 0, %s264
      %s267 = sphi 0, %s266
      %s281 = sphi 0, %s267
      %s287 = sphi 0, %s289
      %s290 = sphi 0, %s287
      %s291 = sphi 0, %s290
      %s307 = sphi 0, %s291
    $region4: #{_lambda_.16} parent=1 // loop_header_branch
      %23 = sbr.rel (%p21) target = $region8
    $region5: #{_lambda_.16} parent=1 // loop_body
      %s25 = ssub.s32 %s20, 1
      %s26 = ssub.s32 %s20, 2
      %s27 = sadd.s32 %s20, 1
      %s28 = ssub.s32 %s20, %s27
      %p29 = scmp.eq.s32.totalorder %s28, 0
      %s31 = sadd.s32 %s30, 1
      %s32 = scalar_select %p29, %s30, %s31
      %p35 = pneg %p29
      %p36 = scmp.eq.s32.totalorder %s20, 1
      %p37 = por %p35, %p36
      %p38 = scmp.ne.s32.totalorder %s30, %s33
      %p39 = scmp.eq.s32.totalorder %s20, 0
      %p40 = por %p38, %p39
      %p41 = scmp.ne.s32.totalorder %s30, %s33
      %p42 = scmp.eq.s32.totalorder %s25, 1
      %p43 = por %p41, %p42
      %p44 = scmp.ne.s32.totalorder %s33, %s34
      %p45 = scmp.eq.s32.totalorder %s25, 0
      %p46 = por %p44, %p45
      %p47 = scmp.ne.s32.totalorder %s33, %s34
      %p48 = scmp.eq.s32.totalorder %s26, 1
      %p49 = por %p47, %p48
      %p51 = scmp.ne.s32.totalorder %s34, %s50
      %p52 = scmp.eq.s32.totalorder %s26, 0
      %p53 = por %p51, %p52
      %s55 = sadd.s32 %s54, 1
      %p58 = scmp.eq.s32.totalorder %s20, 1
      %p59 = scmp.ne.s32.totalorder %s54, %s56
      %p60 = scmp.eq.s32.totalorder %s20, 0
      %p61 = por %p59, %p60
      %p62 = scmp.ne.s32.totalorder %s54, %s56
      %p63 = scmp.eq.s32.totalorder %s25, 1
      %p64 = por %p62, %p63
      %p65 = scmp.ne.s32.totalorder %s56, %s57
      %p66 = scmp.eq.s32.totalorder %s25, 0
      %p67 = por %p65, %p66
      %p68 = scmp.ne.s32.totalorder %s56, %s57
      %p69 = scmp.eq.s32.totalorder %s26, 1
      %p70 = por %p68, %p69
      %p72 = scmp.ne.s32.totalorder %s57, %s71
      %p73 = scmp.eq.s32.totalorder %s26, 0
      %p74 = por %p72, %p73
      %s76 = sadd.s32 %s75, 1
      %p79 = scmp.eq.s32.totalorder %s20, 1
      %p80 = scmp.ne.s32.totalorder %s75, %s77
      %p81 = scmp.eq.s32.totalorder %s20, 0
      %p82 = por %p80, %p81
      %p83 = scmp.ne.s32.totalorder %s75, %s77
      %p84 = scmp.eq.s32.totalorder %s25, 1
      %p85 = por %p83, %p84
      %p86 = scmp.ne.s32.totalorder %s77, %s78
      %p87 = scmp.eq.s32.totalorder %s25, 0
      %p88 = por %p86, %p87
      %p89 = scmp.ne.s32.totalorder %s77, %s78
      %p90 = scmp.eq.s32.totalorder %s26, 1
      %p91 = por %p89, %p90
      %p93 = scmp.ne.s32.totalorder %s78, %s92
      %p94 = scmp.eq.s32.totalorder %s26, 0
      %p95 = por %p93, %p94
      %s97 = sadd.s32 %s96, 1
      %p100 = scmp.eq.s32.totalorder %s20, 1
      %p101 = scmp.ne.s32.totalorder %s96, %s98
      %p102 = scmp.eq.s32.totalorder %s20, 0
      %p103 = por %p101, %p102
      %p104 = scmp.ne.s32.totalorder %s96, %s98
      %p105 = scmp.eq.s32.totalorder %s25, 1
      %p106 = por %p104, %p105
      %p107 = scmp.ne.s32.totalorder %s98, %s99
      %p108 = scmp.eq.s32.totalorder %s25, 0
      %p109 = por %p107, %p108
      %p110 = scmp.ne.s32.totalorder %s98, %s99
      %p111 = scmp.eq.s32.totalorder %s26, 1
      %p112 = por %p110, %p111
      %p114 = scmp.ne.s32.totalorder %s99, %s113
      %p115 = scmp.eq.s32.totalorder %s26, 0
      %p116 = por %p114, %p115
      %s118 = sadd.s32 %s117, 1
      %p121 = scmp.eq.s32.totalorder %s20, 1
      %p122 = scmp.ne.s32.totalorder %s117, %s119
      %p123 = scmp.eq.s32.totalorder %s20, 0
      %p124 = por %p122, %p123
      %p125 = scmp.ne.s32.totalorder %s117, %s119
      %p126 = scmp.eq.s32.totalorder %s25, 1
      %p127 = por %p125, %p126
      %p128 = scmp.ne.s32.totalorder %s119, %s120
      %p129 = scmp.eq.s32.totalorder %s25, 0
      %p130 = por %p128, %p129
      %p131 = scmp.ne.s32.totalorder %s119, %s120
      %p132 = scmp.eq.s32.totalorder %s26, 1
      %p133 = por %p131, %p132
      %p135 = scmp.ne.s32.totalorder %s120, %s134
      %p136 = scmp.eq.s32.totalorder %s26, 0
      %p137 = por %p135, %p136
      %s139 = sadd.s32 %s138, 1
      %p142 = scmp.eq.s32.totalorder %s20, 1
      %p143 = scmp.ne.s32.totalorder %s138, %s140
      %p144 = scmp.eq.s32.totalorder %s20, 0
      %p145 = por %p143, %p144
      %p146 = scmp.ne.s32.totalorder %s138, %s140
      %p147 = scmp.eq.s32.totalorder %s25, 1
      %p148 = por %p146, %p147
      %p149 = scmp.ne.s32.totalorder %s140, %s141
      %p150 = scmp.eq.s32.totalorder %s25, 0
      %p151 = por %p149, %p150
      %p152 = scmp.ne.s32.totalorder %s140, %s141
      %p153 = scmp.eq.s32.totalorder %s26, 1
      %p154 = por %p152, %p153
      %p156 = scmp.ne.s32.totalorder %s141, %s155
      %p157 = scmp.eq.s32.totalorder %s26, 0
      %p158 = por %p156, %p157
      %s160 = sadd.s32 %s159, 1
      %p163 = scmp.eq.s32.totalorder %s20, 1
      %p164 = scmp.ne.s32.totalorder %s159, %s161
      %p165 = scmp.eq.s32.totalorder %s20, 0
      %p166 = por %p164, %p165
      %p167 = scmp.ne.s32.totalorder %s159, %s161
      %p168 = scmp.eq.s32.totalorder %s25, 1
      %p169 = por %p167, %p168
      %p170 = scmp.ne.s32.totalorder %s161, %s162
      %p171 = scmp.eq.s32.totalorder %s25, 0
      %p172 = por %p170, %p171
      %p173 = scmp.ne.s32.totalorder %s161, %s162
      %p174 = scmp.eq.s32.totalorder %s26, 1
      %p175 = por %p173, %p174
      %p177 = scmp.ne.s32.totalorder %s162, %s176
      %p178 = scmp.eq.s32.totalorder %s26, 0
      %p179 = por %p177, %p178
      %s181 = sadd.s32 %s180, 1
      %p184 = scmp.eq.s32.totalorder %s20, 1
      %p185 = scmp.ne.s32.totalorder %s180, %s182
      %p186 = scmp.eq.s32.totalorder %s20, 0
      %p187 = por %p185, %p186
      %p188 = scmp.ne.s32.totalorder %s180, %s182
      %p189 = scmp.eq.s32.totalorder %s25, 1
      %p190 = por %p188, %p189
      %p191 = scmp.ne.s32.totalorder %s182, %s183
      %p192 = scmp.eq.s32.totalorder %s25, 0
      %p193 = por %p191, %p192
      %p194 = scmp.ne.s32.totalorder %s182, %s183
      %p195 = scmp.eq.s32.totalorder %s26, 1
      %p196 = por %p194, %p195
      %p198 = scmp.ne.s32.totalorder %s183, %s197
      %p199 = scmp.eq.s32.totalorder %s26, 0
      %p200 = por %p198, %p199
      %s202 = sadd.s32 %s201, 1
      %p205 = scmp.eq.s32.totalorder %s20, 1
      %p206 = scmp.ne.s32.totalorder %s201, %s203
      %p207 = scmp.eq.s32.totalorder %s20, 0
      %p208 = por %p206, %p207
      %p209 = scmp.ne.s32.totalorder %s201, %s203
      %p210 = scmp.eq.s32.totalorder %s25, 1
      %p211 = por %p209, %p210
      %p212 = scmp.ne.s32.totalorder %s203, %s204
      %p213 = scmp.eq.s32.totalorder %s25, 0
      %p214 = por %p212, %p213
      %p215 = scmp.ne.s32.totalorder %s203, %s204
      %p216 = scmp.eq.s32.totalorder %s26, 1
      %p217 = por %p215, %p216
      %p219 = scmp.ne.s32.totalorder %s204, %s218
      %p220 = scmp.eq.s32.totalorder %s26, 0
      %p221 = por %p219, %p220
      %s223 = sadd.s32 %s222, 1
      %p226 = scmp.eq.s32.totalorder %s20, 1
      %p227 = scmp.ne.s32.totalorder %s222, %s224
      %p228 = scmp.eq.s32.totalorder %s20, 0
      %p229 = por %p227, %p228
      %p230 = scmp.ne.s32.totalorder %s222, %s224
      %p231 = scmp.eq.s32.totalorder %s25, 1
      %p232 = por %p230, %p231
      %p233 = scmp.ne.s32.totalorder %s224, %s225
      %p234 = scmp.eq.s32.totalorder %s25, 0
      %p235 = por %p233, %p234
      %p236 = scmp.ne.s32.totalorder %s224, %s225
      %p237 = scmp.eq.s32.totalorder %s26, 1
      %p238 = por %p236, %p237
      %p240 = scmp.ne.s32.totalorder %s225, %s239
      %p241 = scmp.eq.s32.totalorder %s26, 0
      %p242 = por %p240, %p241
      %s244 = sadd.s32 %s243, 1
      %p247 = scmp.eq.s32.totalorder %s20, 1
      %p248 = scmp.ne.s32.totalorder %s243, %s245
      %p249 = scmp.eq.s32.totalorder %s20, 0
      %p250 = por %p248, %p249
      %p251 = scmp.ne.s32.totalorder %s243, %s245
      %p252 = scmp.eq.s32.totalorder %s25, 1
      %p253 = por %p251, %p252
      %p254 = scmp.ne.s32.totalorder %s245, %s246
      %p255 = scmp.eq.s32.totalorder %s25, 0
      %p256 = por %p254, %p255
      %p257 = scmp.ne.s32.totalorder %s245, %s246
      %p258 = scmp.eq.s32.totalorder %s26, 1
      %p259 = por %p257, %p258
      %p261 = scmp.ne.s32.totalorder %s246, %s260
      %p262 = scmp.eq.s32.totalorder %s26, 0
      %p263 = por %p261, %p262
      %s265 = sadd.s32 %s264, 1
      %p268 = scmp.eq.s32.totalorder %s20, 1
      %p269 = scmp.ne.s32.totalorder %s264, %s266
      %p270 = scmp.eq.s32.totalorder %s20, 0
      %p271 = por %p269, %p270
      %p272 = scmp.ne.s32.totalorder %s264, %s266
      %p273 = scmp.eq.s32.totalorder %s25, 1
      %p274 = por %p272, %p273
      %p275 = scmp.ne.s32.totalorder %s266, %s267
      %p276 = scmp.eq.s32.totalorder %s25, 0
      %p277 = por %p275, %p276
      %p278 = scmp.ne.s32.totalorder %s266, %s267
      %p279 = scmp.eq.s32.totalorder %s26, 1
      %p280 = por %p278, %p279
      %p282 = scmp.ne.s32.totalorder %s267, %s281
      %p283 = scmp.eq.s32.totalorder %s26, 0
      %p284 = por %p282, %p283
      %s285 = ssub.s32 %s20, %s27
      %p286 = scmp.eq.s32.totalorder %s285, 0
      %s288 = sadd.s32 %s287, 1
      %s289 = scalar_select %p286, %s287, %s288
      %p292 = pneg %p286
      %p293 = scmp.eq.s32.totalorder %s20, 1
      %p294 = por %p292, %p293
      %p295 = scmp.ne.s32.totalorder %s287, %s290
      %p296 = scmp.eq.s32.totalorder %s20, 0
      %p297 = por %p295, %p296
      %p298 = scmp.ne.s32.totalorder %s287, %s290
      %p299 = scmp.eq.s32.totalorder %s25, 1
      %p300 = por %p298, %p299
      %p301 = scmp.ne.s32.totalorder %s290, %s291
      %p302 = scmp.eq.s32.totalorder %s25, 0
      %p303 = por %p301, %p302
      %p304 = scmp.ne.s32.totalorder %s290, %s291
      %p305 = scmp.eq.s32.totalorder %s26, 1
      %p306 = por %p304, %p305
      %p308 = scmp.ne.s32.totalorder %s291, %s307
      %p309 = scmp.eq.s32.totalorder %s26, 0
      %p310 = por %p308, %p309
      %p311 = scmp.le.s32.totalorder 1, %s20
      %p312 = scmp.lt.s32.totalorder %s20, 3
      %p313 = pnand %p311, %p312
      %p314 = pneg %p313
      // Predicated region
      $region9: #{_lambda_.16} parent=5 // pred_check
        _
      $region10: #{_lambda_.16} parent=5 // pred_check_branch
        %316 = sbr.rel (%p313) target = $region12
      $region11: #{_lambda_.16} parent=5 // pred_region
        %s317 = ssub.s32 %s20, 1
        // Predicated region
        $region13: #{_lambda_.16} parent=11 // pred_check
          %p318 = pneg %p67
        $region14: #{_lambda_.16} parent=11 // pred_check_branch
          %320 = sbr.rel (%p318) target = $region16
        $region15: #{_lambda_.16} parent=11 // pred_region
          _
        $region16: #{_lambda_.16} parent=11 // pred_fallthru
          _
        // Predicated region
        $region17: #{_lambda_.16} parent=11 // pred_check
          %p321 = pneg %p88
        $region18: #{_lambda_.16} parent=11 // pred_check_branch
          %323 = sbr.rel (%p321) target = $region20
        $region19: #{_lambda_.16} parent=11 // pred_region
          _
        $region20: #{_lambda_.16} parent=11 // pred_fallthru
          _
        // Predicated region
        $region21: #{_lambda_.16} parent=11 // pred_check
          %p324 = pneg %p109
        $region22: #{_lambda_.16} parent=11 // pred_check_branch
          %326 = sbr.rel (%p324) target = $region24
        $region23: #{_lambda_.16} parent=11 // pred_region
          _
        $region24: #{_lambda_.16} parent=11 // pred_fallthru
          _
        // Predicated region
        $region25: #{_lambda_.16} parent=11 // pred_check
          %p327 = pneg %p130
        $region26: #{_lambda_.16} parent=11 // pred_check_branch
          %329 = sbr.rel (%p327) target = $region28
        $region27: #{_lambda_.16} parent=11 // pred_region
          %331 = vsyncadd [#allocation3], 0
          %s333 = sshll.u32 %s4, 4
          %s334 = int_to_ptr.hbm [resolvable:$true] %s333
          %s335 = sshll.u32 [#allocation2], 4
          %s336 = int_to_ptr.vmem [resolvable:$true] %s335
          %338 = dma.hbm_to_vmem [thread:$0]  %s334, 16, %s336, [#allocation3]
        $region28: #{_lambda_.16} parent=11 // pred_fallthru
          _
        // Predicated region
        $region29: #{_lambda_.16} parent=11 // pred_check
          %p339 = pneg %p151
        $region30: #{_lambda_.16} parent=11 // pred_check_branch
          %341 = sbr.rel (%p339) target = $region32
        $region31: #{_lambda_.16} parent=11 // pred_region
          _
        $region32: #{_lambda_.16} parent=11 // pred_fallthru
          _
        // Predicated region
        $region33: #{_lambda_.16} parent=11 // pred_check
          %p342 = pneg %p172
        $region34: #{_lambda_.16} parent=11 // pred_check_branch
          %344 = sbr.rel (%p342) target = $region36
        $region35: #{_lambda_.16} parent=11 // pred_region
          _
        $region36: #{_lambda_.16} parent=11 // pred_fallthru
          _
        // Predicated region
        $region37: #{_lambda_.16} parent=11 // pred_check
          %p345 = pneg %p193
        $region38: #{_lambda_.16} parent=11 // pred_check_branch
          %347 = sbr.rel (%p345) target = $region40
        $region39: #{_lambda_.16} parent=11 // pred_region
          _
        $region40: #{_lambda_.16} parent=11 // pred_fallthru
          _
        // Predicated region
        $region41: #{_lambda_.16} parent=11 // pred_check
          %p348 = pneg %p214
        $region42: #{_lambda_.16} parent=11 // pred_check_branch
          %350 = sbr.rel (%p348) target = $region44
        $region43: #{_lambda_.16} parent=11 // pred_region
          _
        $region44: #{_lambda_.16} parent=11 // pred_fallthru
          _
        // Predicated region
        $region45: #{_lambda_.16} parent=11 // pred_check
          %p351 = pneg %p235
        $region46: #{_lambda_.16} parent=11 // pred_check_branch
          %353 = sbr.rel (%p351) target = $region48
        $region47: #{_lambda_.16} parent=11 // pred_region
          %355 = vsyncadd [#allocation5], 0
          %s357 = sshll.u32 %s9, 4
          %s358 = int_to_ptr.hbm [resolvable:$true] %s357
          %s359 = sshll.u32 [#allocation4], 4
          %s360 = int_to_ptr.vmem [resolvable:$true] %s359
          %362 = dma.hbm_to_vmem [thread:$0]  %s358, 16, %s360, [#allocation5]
        $region48: #{_lambda_.16} parent=11 // pred_fallthru
          _
        // Predicated region
        $region49: #{_lambda_.16} parent=11 // pred_check
          %p363 = pneg %p256
        $region50: #{_lambda_.16} parent=11 // pred_check_branch
          %365 = sbr.rel (%p363) target = $region52
        $region51: #{_lambda_.16} parent=11 // pred_region
          _
        $region52: #{_lambda_.16} parent=11 // pred_fallthru
          _
        // Predicated region
        $region53: #{_lambda_.16} parent=11 // pred_check
          %p366 = pneg %p277
        $region54: #{_lambda_.16} parent=11 // pred_check_branch
          %368 = sbr.rel (%p366) target = $region56
        $region55: #{_lambda_.16} parent=11 // pred_region
          %370 = vsyncadd [#allocation5], 0
          %s372 = sshll.u32 %s11, 4
          %s373 = int_to_ptr.hbm [resolvable:$true] %s372
          %s374 = sshll.u32 [#allocation6], 4
          %s375 = int_to_ptr.vmem [resolvable:$true] %s374
          %377 = dma.hbm_to_vmem [thread:$0]  %s373, 16, %s375, [#allocation5]
        $region56: #{_lambda_.16} parent=11 // pred_fallthru
          _
      $region12: #{_lambda_.16} parent=5 // pred_fallthru
        _
      %p378 = scmp.lt.s32.totalorder %s20, 2
      // Predicated region
      $region57: #{_lambda_.16} parent=5 // pred_check
        %p379 = pneg %p378
      $region58: #{_lambda_.16} parent=5 // pred_check_branch
        %381 = sbr.rel (%p379) target = $region60
      $region59: #{_lambda_.16} parent=5 // pred_region
        // Predicated region
        $region61: #{_lambda_.16} parent=59 // pred_check
          %p382 = pneg %p40
        $region62: #{_lambda_.16} parent=59 // pred_check_branch
          %384 = sbr.rel (%p382) target = $region64
        $region63: #{_lambda_.16} parent=59 // pred_region
          %p385 = scmp.lt.s32.totalorder %s20, 1
          %s386 = scalar_select %p385, %s20, 1
          %s387 = smul.addr %s386, 18
          %s388 = smul.addr %s387, 4
          %s389 = scalar_lea.vmem %s0, %s388
        $region64: #{_lambda_.16} parent=59 // pred_fallthru
          _
      $region60: #{_lambda_.16} parent=5 // pred_fallthru
        _
      %p390 = scmp.le.s32.totalorder 1, %s20
      %p391 = scmp.lt.s32.totalorder %s20, 3
      %p392 = pnand %p390, %p391
      %p393 = pneg %p392
      // Predicated region
      $region65: #{_lambda_.16} parent=5 // pred_check
        _
      $region66: #{_lambda_.16} parent=5 // pred_check_branch
        %395 = sbr.rel (%p392) target = $region68
      $region67: #{_lambda_.16} parent=5 // pred_region
        %s396 = ssub.s32 %s20, 1
        // Predicated region
        $region69: #{_lambda_.16} parent=67 // pred_check
          %p397 = pneg %p130
        $region70: #{_lambda_.16} parent=67 // pred_check_branch
          %399 = sbr.rel (%p397) target = $region72
        $region71: #{_lambda_.16} parent=67 // pred_region
          %401 = dma.done [#allocation3], 16
        $region72: #{_lambda_.16} parent=67 // pred_fallthru
          _
        // Predicated region
        $region73: #{_lambda_.16} parent=67 // pred_check
          %p402 = pneg %p235
        $region74: #{_lambda_.16} parent=67 // pred_check_branch
          %404 = sbr.rel (%p402) target = $region76
        $region75: #{_lambda_.16} parent=67 // pred_region
          %406 = dma.done [#allocation5], 16
        $region76: #{_lambda_.16} parent=67 // pred_fallthru
          _
        // Predicated region
        $region77: #{_lambda_.16} parent=67 // pred_check
          %p407 = pneg %p277
        $region78: #{_lambda_.16} parent=67 // pred_check_branch
          %409 = sbr.rel (%p407) target = $region80
        $region79: #{_lambda_.16} parent=67 // pred_region
          %411 = dma.done [#allocation5], 16
        $region80: #{_lambda_.16} parent=67 // pred_fallthru
          _
        %p412 = scmp.lt.s32.totalorder %s25, 1
        %s413 = scalar_select %p412, %s25, 1
        %s414 = smul.addr %s413, 18
        %s415 = smul.addr %s414, 4
        %s416 = scalar_lea.vmem %s0, %s415
        %p417 = pneg %p46
        %p418 = pneg %p43
        %p419 = pneg %p67
        %p420 = pneg %p64
        %p421 = pneg %p88
        %p422 = pneg %p85
        %p423 = pneg %p109
        %p424 = pneg %p106
        %p425 = pneg %p130
        %p426 = pneg %p127
        %p427 = pneg %p151
        %p428 = pneg %p148
        %p429 = pneg %p172
        %p430 = pneg %p169
        %p431 = pneg %p193
        %p432 = pneg %p190
        %p433 = pneg %p214
        %p434 = pneg %p211
        %p435 = pneg %p235
        %p436 = pneg %p232
        %p437 = pneg %p256
        %p438 = pneg %p253
        %p439 = pneg %p277
        %p440 = pneg %p274
        %p441 = pneg %p303
        %p442 = pneg %p300
        %p443 = scmp.lt.s32.totalorder %s25, 1
        %s444 = scalar_select %p443, %s25, 1
        %s445 = smul.addr %s444, 18
        %s446 = smul.addr %s445, 4
        %s447 = scalar_lea.vmem %s12, %s446
        %p448 = scmp.lt.s32.totalorder %s25, 1
        %s449 = scalar_select %p448, %s25, 1
        %s450 = smul.addr %s449, 18
        %s451 = smul.addr %s450, 4
        %s452 = scalar_lea.vmem %s0, %s451
        %p453 = scmp.lt.s32.totalorder %s25, 1
        %s454 = scalar_select %p453, %s25, 1
        %s455 = smul.addr %s454, 18
        %s456 = smul.addr %s455, 4
        %s457 = scalar_lea.vmem %s12, %s456
        %v459 = vld [vmem:[%s452] sm:$0xf]
        %v460 = vld [vmem:[%s452 + $0x4] sm:$0xf]
        %v461 = vld [vmem:[%s452 + $0x8] sm:$0xf]
        %v462 = vld [vmem:[%s452 + $0xc] sm:$0xf]
        %v463 = vld [vmem:[%s452 + $0x10] sm:$0xf]
        %v464 = vld [vmem:[%s452 + $0x14] sm:$0xf]
        %v465 = vld [vmem:[%s452 + $0x18] sm:$0xf]
        %v466 = vld [vmem:[%s452 + $0x1c] sm:$0xf]
        %v467 = vld [vmem:[%s452 + $0x20] sm:$0xf]
        %v468 = vld [vmem:[%s452 + $0x24] sm:$0xf]
        %v469 = vld [vmem:[%s452 + $0x28] sm:$0xf]
        %v470 = vld [vmem:[%s452 + $0x2c] sm:$0xf]
        %v471 = vld [vmem:[%s452 + $0x30] sm:$0xf]
        %v472 = vld [vmem:[%s452 + $0x34] sm:$0xf]
        %v473 = vld [vmem:[%s452 + $0x38] sm:$0xf]
        %v474 = vld [vmem:[%s452 + $0x3c] sm:$0xf]
        %v475 = vld [vmem:[%s452 + $0x40] sm:$0xf]
        %v476 = vld [vmem:[%s452 + $0x44] sm:$0xf]
        %v477 = vunpack.c.l.bf16 %v459
        %v478 = vunpack.c.l.bf16 %v460
        %v479 = vunpack.c.l.bf16 %v461
        %v480 = vunpack.c.l.bf16 %v462
        %v481 = vunpack.c.l.bf16 %v463
        %v482 = vunpack.c.l.bf16 %v464
        %v483 = vunpack.c.l.bf16 %v465
        %v484 = vunpack.c.l.bf16 %v466
        %v485 = vunpack.c.l.bf16 %v467
        %v486 = vunpack.c.l.bf16 %v468
        %v487 = vunpack.c.l.bf16 %v469
        %v488 = vunpack.c.l.bf16 %v470
        %v489 = vunpack.c.l.bf16 %v471
        %v490 = vunpack.c.l.bf16 %v472
        %v491 = vunpack.c.l.bf16 %v473
        %v492 = vunpack.c.l.bf16 %v474
        %v493 = vunpack.c.l.bf16 %v475
        %v494 = vunpack.c.l.bf16 %v476
        %v495 = vld [vmem:[%s1] sm:$0xf]
        %v496 = vld [vmem:[%s1 + $0x4] sm:$0xf]
        %v497 = vld [vmem:[%s1 + $0x8] sm:$0xf]
        %v498 = vld [vmem:[%s1 + $0xc] sm:$0xf]
        %v517 = vunpack.c.l.b16 %v459
        %v518 = vunpack.c.l.b16 %v460
        %v519 = vunpack.c.l.b16 %v461
        %v520 = vunpack.c.l.b16 %v462
        %v521 = vunpack.c.l.b16 %v463
        %v522 = vunpack.c.l.b16 %v464
        %v523 = vunpack.c.l.b16 %v465
        %v524 = vunpack.c.l.b16 %v466
        %v525 = vunpack.c.l.b16 %v467
        %v526 = vunpack.c.l.b16 %v468
        %v527 = vunpack.c.l.b16 %v469
        %v528 = vunpack.c.l.b16 %v470
        %v529 = vunpack.c.l.b16 %v471
        %v530 = vunpack.c.l.b16 %v472
        %v531 = vunpack.c.l.b16 %v473
        %v532 = vunpack.c.l.b16 %v474
        %v533 = vunpack.c.l.b16 %v475
        %v534 = vunpack.c.l.b16 %v476
        %v535 = vpack.c.b16 %v518, %v517
        %v536 = vpack.c.b16 %v520, %v519
        %v537 = vpack.c.b16 %v522, %v521
        %v538 = vpack.c.b16 %v524, %v523
        %v539 = vpack.c.b16 %v526, %v525
        %v540 = vpack.c.b16 %v528, %v527
        %v541 = vpack.c.b16 %v530, %v529
        %v542 = vpack.c.b16 %v532, %v531
        %v543 = vpack.c.b16 %v534, %v533
        %v548 = vunpack.c.l.b16 %v495
        %v549 = vunpack.c.l.b16 %v496
        %v550 = vunpack.c.l.b16 %v497
        %v551 = vunpack.c.l.b16 %v498
        %v552 = vpack.c.b16 %v549, %v548
        %v553 = vpack.c.b16 %v551, %v550
        %vm556 = vcmask 261120
        %v558 = vsel %vm556, %v535, 0
        %v561 = vsel %vm556, %v536, 0
        %v564 = vsel %vm556, %v537, 0
        %v567 = vsel %vm556, %v538, 0
        %v570 = vsel %vm556, %v539, 0
        %v573 = vsel %vm556, %v540, 0
        %v576 = vsel %vm556, %v541, 0
        %v579 = vsel %vm556, %v542, 0
        %v582 = vsel %vm556, %v543, 0
        %584 = vmatpush.bf16.msra.mxu0 0
        %585 = vmatpush.bf16.msra.mxu0 0
        %586 = vmatpush.bf16.msra.mxu0 0
        %587 = vmatpush.bf16.msra.mxu0 0
        %588 = vmatpush.bf16.msra.mxu0 0
        %589 = vmatpush.bf16.msra.mxu0 0
        %590 = vmatpush.bf16.msra.mxu0 %v553
        %591 = vmatpush.bf16.msra.mxu0 %v552
        %592 = vmatmul.bf16.gmra.mxu0 %v558
        %v593 = vpop.f32.mrf.mxu0
        %v594 = vadd.f32 0.0, %v593
        %v595 = vpop.f32.mrf.mxu0
        %v596 = vadd.f32 0.0, %v595
        %597 = vmatmul.bf16.gmra.mxu0 %v561
        %v598 = vpop.f32.mrf.mxu0
        %v599 = vadd.f32 0.0, %v598
        %v600 = vpop.f32.mrf.mxu0
        %v601 = vadd.f32 0.0, %v600
        %602 = vmatmul.bf16.gmra.mxu0 %v564
        %v603 = vpop.f32.mrf.mxu0
        %v604 = vadd.f32 0.0, %v603
        %v605 = vpop.f32.mrf.mxu0
        %v606 = vadd.f32 0.0, %v605
        %607 = vmatmul.bf16.gmra.mxu0 %v567
        %v608 = vpop.f32.mrf.mxu0
        %v609 = vadd.f32 0.0, %v608
        %v610 = vpop.f32.mrf.mxu0
        %v611 = vadd.f32 0.0, %v610
        %612 = vmatmul.bf16.gmra.mxu0 %v570
        %v613 = vpop.f32.mrf.mxu0
        %v614 = vadd.f32 0.0, %v613
        %v615 = vpop.f32.mrf.mxu0
        %v616 = vadd.f32 0.0, %v615
        %617 = vmatmul.bf16.gmra.mxu0 %v573
        %v618 = vpop.f32.mrf.mxu0
        %v619 = vadd.f32 0.0, %v618
        %v620 = vpop.f32.mrf.mxu0
        %v621 = vadd.f32 0.0, %v620
        %622 = vmatmul.bf16.gmra.mxu0 %v576
        %v623 = vpop.f32.mrf.mxu0
        %v624 = vadd.f32 0.0, %v623
        %v625 = vpop.f32.mrf.mxu0
        %v626 = vadd.f32 0.0, %v625
        %627 = vmatmul.bf16.gmra.mxu0 %v579
        %v628 = vpop.f32.mrf.mxu0
        %v629 = vadd.f32 0.0, %v628
        %v630 = vpop.f32.mrf.mxu0
        %v631 = vadd.f32 0.0, %v630
        %632 = vmatmul.bf16.gmra.mxu0 %v582
        %v633 = vpop.f32.mrf.mxu0
        %v634 = vadd.f32 0.0, %v633
        %v635 = vpop.f32.mrf.mxu0
        %v636 = vadd.f32 0.0, %v635
        %637 = vdwg.mxu0
        %v638 = vpack.c.bf16 %v596, %v594
        %v639 = vpack.c.bf16 %v601, %v599
        %v640 = vpack.c.bf16 %v606, %v604
        %v641 = vpack.c.bf16 %v611, %v609
        %v642 = vpack.c.bf16 %v616, %v614
        %v643 = vpack.c.bf16 %v621, %v619
        %v644 = vpack.c.bf16 %v626, %v624
        %v645 = vpack.c.bf16 %v631, %v629
        %v646 = vpack.c.bf16 %v636, %v634
        %656 = vrot.lane.b32.xlu0 %v638, 96
        %v657 = vpop.permute.xlu0 %656
        %658 = vrot.lane.b32.xlu0 %v639, 96
        %v659 = vpop.permute.xlu0 %658
        %660 = vrot.lane.b32.xlu0 %v640, 96
        %v661 = vpop.permute.xlu0 %660
        %662 = vrot.lane.b32.xlu0 %v641, 96
        %v663 = vpop.permute.xlu0 %662
        %664 = vrot.lane.b32.xlu0 %v642, 96
        %v665 = vpop.permute.xlu0 %664
        %666 = vrot.lane.b32.xlu0 %v643, 96
        %v667 = vpop.permute.xlu0 %666
        %668 = vrot.lane.b32.xlu0 %v644, 96
        %v669 = vpop.permute.xlu0 %668
        %670 = vrot.lane.b32.xlu0 %v645, 96
        %v671 = vpop.permute.xlu0 %670
        %672 = vrot.lane.b32.xlu0 %v646, 96
        %v673 = vpop.permute.xlu0 %672
        %v675 = vsel %vm556, %v638, 0
        %v678 = vsel %vm556, %v639, 0
        %v681 = vsel %vm556, %v640, 0
        %v684 = vsel %vm556, %v641, 0
        %v687 = vsel %vm556, %v642, 0
        %v690 = vsel %vm556, %v643, 0
        %v693 = vsel %vm556, %v644, 0
        %v696 = vsel %vm556, %v645, 0
        %v699 = vsel %vm556, %v646, 0
        %v702 = vsel %vm556, %v657, 0
        %v705 = vsel %vm556, %v659, 0
        %v708 = vsel %vm556, %v661, 0
        %v711 = vsel %vm556, %v663, 0
        %v714 = vsel %vm556, %v665, 0
        %v717 = vsel %vm556, %v667, 0
        %v720 = vsel %vm556, %v669, 0
        %v723 = vsel %vm556, %v671, 0
        %v726 = vsel %vm556, %v673, 0
        %728 = vmatpush.bf16.xpose.msra.mxu0 %v723
        %729 = vmatpush.bf16.xpose.msra.mxu0 %v720
        %730 = vmatpush.bf16.xpose.msra.mxu0 %v717
        %731 = vmatpush.bf16.xpose.msra.mxu0 %v714
        %732 = vmatpush.bf16.xpose.msra.mxu0 %v711
        %733 = vmatpush.bf16.xpose.msra.mxu0 %v708
        %734 = vmatpush.bf16.xpose.msra.mxu0 %v705
        %735 = vmatpush.bf16.xpose.msra.mxu0 %v702
        %736 = vmatmul.bf16.gmra.mxu0 %v675
        %v737 = vpop.f32.mrf.mxu0
        %v738 = vadd.f32 0.0, %v737
        %v739 = vpop.f32.mrf.mxu0
        %v740 = vadd.f32 0.0, %v739
        %741 = vmatmul.bf16.gmra.mxu0 %v678
        %v742 = vpop.f32.mrf.mxu0
        %v743 = vadd.f32 0.0, %v742
        %v744 = vpop.f32.mrf.mxu0
        %v745 = vadd.f32 0.0, %v744
        %746 = vmatmul.bf16.gmra.mxu0 %v681
        %v747 = vpop.f32.mrf.mxu0
        %v748 = vadd.f32 0.0, %v747
        %v749 = vpop.f32.mrf.mxu0
        %v750 = vadd.f32 0.0, %v749
        %751 = vmatmul.bf16.gmra.mxu0 %v684
        %v752 = vpop.f32.mrf.mxu0
        %v753 = vadd.f32 0.0, %v752
        %v754 = vpop.f32.mrf.mxu0
        %v755 = vadd.f32 0.0, %v754
        %756 = vmatmul.bf16.gmra.mxu0 %v687
        %v757 = vpop.f32.mrf.mxu0
        %v758 = vadd.f32 0.0, %v757
        %v759 = vpop.f32.mrf.mxu0
        %v760 = vadd.f32 0.0, %v759
        %761 = vmatmul.bf16.gmra.mxu0 %v690
        %v762 = vpop.f32.mrf.mxu0
        %v763 = vadd.f32 0.0, %v762
        %v764 = vpop.f32.mrf.mxu0
        %v765 = vadd.f32 0.0, %v764
        %766 = vmatmul.bf16.gmra.mxu0 %v693
        %v767 = vpop.f32.mrf.mxu0
        %v768 = vadd.f32 0.0, %v767
        %v769 = vpop.f32.mrf.mxu0
        %v770 = vadd.f32 0.0, %v769
        %771 = vmatmul.bf16.gmra.mxu0 %v696
        %v772 = vpop.f32.mrf.mxu0
        %v773 = vadd.f32 0.0, %v772
        %v774 = vpop.f32.mrf.mxu0
        %v775 = vadd.f32 0.0, %v774
        %776 = vmatmul.bf16.gmra.mxu0 %v699
        %v777 = vpop.f32.mrf.mxu0
        %v778 = vadd.f32 0.0, %v777
        %v779 = vpop.f32.mrf.mxu0
        %v780 = vadd.f32 0.0, %v779
        %781 = vdwg.mxu0
        %782 = vmatpush.bf16.xpose.msra.mxu0 0
        %783 = vmatpush.bf16.xpose.msra.mxu0 0
        %784 = vmatpush.bf16.xpose.msra.mxu0 0
        %785 = vmatpush.bf16.xpose.msra.mxu0 0
        %786 = vmatpush.bf16.xpose.msra.mxu0 0
        %787 = vmatpush.bf16.xpose.msra.mxu0 0
        %788 = vmatpush.bf16.xpose.msra.mxu0 0
        %789 = vmatpush.bf16.xpose.msra.mxu0 %v726
        %790 = vmatmul.bf16.gmra.mxu0 %v675
        %v791 = vpop.f32.mrf.mxu0
        %v792 = vadd.f32 0.0, %v791
        %v793 = vpop.f32.mrf.mxu0
        %v794 = vadd.f32 0.0, %v793
        %795 = vmatmul.bf16.gmra.mxu0 %v678
        %v796 = vpop.f32.mrf.mxu0
        %v797 = vadd.f32 0.0, %v796
        %v798 = vpop.f32.mrf.mxu0
        %v799 = vadd.f32 0.0, %v798
        %800 = vmatmul.bf16.gmra.mxu0 %v681
        %v801 = vpop.f32.mrf.mxu0
        %v802 = vadd.f32 0.0, %v801
        %v803 = vpop.f32.mrf.mxu0
        %v804 = vadd.f32 0.0, %v803
        %805 = vmatmul.bf16.gmra.mxu0 %v684
        %v806 = vpop.f32.mrf.mxu0
        %v807 = vadd.f32 0.0, %v806
        %v808 = vpop.f32.mrf.mxu0
        %v809 = vadd.f32 0.0, %v808
        %810 = vmatmul.bf16.gmra.mxu0 %v687
        %v811 = vpop.f32.mrf.mxu0
        %v812 = vadd.f32 0.0, %v811
        %v813 = vpop.f32.mrf.mxu0
        %v814 = vadd.f32 0.0, %v813
        %815 = vmatmul.bf16.gmra.mxu0 %v690
        %v816 = vpop.f32.mrf.mxu0
        %v817 = vadd.f32 0.0, %v816
        %v818 = vpop.f32.mrf.mxu0
        %v819 = vadd.f32 0.0, %v818
        %820 = vmatmul.bf16.gmra.mxu0 %v693
        %v821 = vpop.f32.mrf.mxu0
        %v822 = vadd.f32 0.0, %v821
        %v823 = vpop.f32.mrf.mxu0
        %v824 = vadd.f32 0.0, %v823
        %825 = vmatmul.bf16.gmra.mxu0 %v696
        %v826 = vpop.f32.mrf.mxu0
        %v827 = vadd.f32 0.0, %v826
        %v828 = vpop.f32.mrf.mxu0
        %v829 = vadd.f32 0.0, %v828
        %830 = vmatmul.bf16.gmra.mxu0 %v699
        %v831 = vpop.f32.mrf.mxu0
        %v832 = vadd.f32 0.0, %v831
        %v833 = vpop.f32.mrf.mxu0
        %v834 = vadd.f32 0.0, %v833
        %835 = vdwg.mxu0
        %v836 = vmul.f32 %v738, 0.17677669
        %v837 = vmul.f32 %v792, 0.17677669
        %v838 = vmul.f32 %v740, 0.17677669
        %v839 = vmul.f32 %v794, 0.17677669
        %v840 = vmul.f32 %v743, 0.17677669
        %v841 = vmul.f32 %v797, 0.17677669
        %v842 = vmul.f32 %v745, 0.17677669
        %v843 = vmul.f32 %v799, 0.17677669
        %v844 = vmul.f32 %v748, 0.17677669
        %v845 = vmul.f32 %v802, 0.17677669
        %v846 = vmul.f32 %v750, 0.17677669
        %v847 = vmul.f32 %v804, 0.17677669
        %v848 = vmul.f32 %v753, 0.17677669
        %v849 = vmul.f32 %v807, 0.17677669
        %v850 = vmul.f32 %v755, 0.17677669
        %v851 = vmul.f32 %v809, 0.17677669
        %v852 = vmul.f32 %v758, 0.17677669
        %v853 = vmul.f32 %v812, 0.17677669
        %v854 = vmul.f32 %v760, 0.17677669
        %v855 = vmul.f32 %v814, 0.17677669
        %v856 = vmul.f32 %v763, 0.17677669
        %v857 = vmul.f32 %v817, 0.17677669
        %v858 = vmul.f32 %v765, 0.17677669
        %v859 = vmul.f32 %v819, 0.17677669
        %v860 = vmul.f32 %v768, 0.17677669
        %v861 = vmul.f32 %v822, 0.17677669
        %v862 = vmul.f32 %v770, 0.17677669
        %v863 = vmul.f32 %v824, 0.17677669
        %v864 = vmul.f32 %v773, 0.17677669
        %v865 = vmul.f32 %v827, 0.17677669
        %v866 = vmul.f32 %v775, 0.17677669
        %v867 = vmul.f32 %v829, 0.17677669
        %v868 = vmul.f32 %v778, 0.17677669
        %v869 = vmul.f32 %v832, 0.17677669
        %v870 = vmul.f32 %v780, 0.17677669
        %v871 = vmul.f32 %v834, 0.17677669
        %v872 = vld [vmem:[%s2] sm:$0xff]
        %v873 = vld [vmem:[%s2 + $0x8] sm:$0xff]
        %v874 = vld [vmem:[%s2 + $0x10] sm:$0xff]
        %v875 = vld [vmem:[%s2 + $0x18] sm:$0xff]
        %v876 = vld [vmem:[%s2 + $0x20] sm:$0xff]
        %v877 = vld [vmem:[%s2 + $0x28] sm:$0xff]
        %v878 = vld [vmem:[%s2 + $0x30] sm:$0xff]
        %v879 = vld [vmem:[%s2 + $0x38] sm:$0xff]
        %v880 = vld [vmem:[%s2 + $0x40] sm:$0xff]
        %v881 = vld [vmem:[%s2 + $0x48] sm:$0xff]
        %v882 = vld [vmem:[%s2 + $0x50] sm:$0xff]
        %v883 = vld [vmem:[%s2 + $0x58] sm:$0xff]
        %v884 = vld [vmem:[%s2 + $0x60] sm:$0xff]
        %v885 = vld [vmem:[%s2 + $0x68] sm:$0xff]
        %v886 = vld [vmem:[%s2 + $0x70] sm:$0xff]
        %v887 = vld [vmem:[%s2 + $0x78] sm:$0xff]
        %v888 = vld [vmem:[%s2 + $0x80] sm:$0xff]
        %v889 = vld [vmem:[%s2 + $0x88] sm:$0xff]
        %v890 = vld [vmem:[%s2 + $0x90] sm:$0xff]
        %v891 = vld [vmem:[%s2 + $0x98] sm:$0xff]
        %v892 = vld [vmem:[%s2 + $0xa0] sm:$0xff]
        %v893 = vld [vmem:[%s2 + $0xa8] sm:$0xff]
        %v894 = vld [vmem:[%s2 + $0xb0] sm:$0xff]
        %v895 = vld [vmem:[%s2 + $0xb8] sm:$0xff]
        %v896 = vld [vmem:[%s2 + $0xc0] sm:$0xff]
        %v897 = vld [vmem:[%s2 + $0xc8] sm:$0xff]
        %v898 = vld [vmem:[%s2 + $0xd0] sm:$0xff]
        %v899 = vld [vmem:[%s2 + $0xd8] sm:$0xff]
        %v900 = vld [vmem:[%s2 + $0xe0] sm:$0xff]
        %v901 = vld [vmem:[%s2 + $0xe8] sm:$0xff]
        %v902 = vld [vmem:[%s2 + $0xf0] sm:$0xff]
        %v903 = vld [vmem:[%s2 + $0xf8] sm:$0xff]
        %v904 = vld [vmem:[%s2 + $0x100] sm:$0xff]
        %v905 = vld [vmem:[%s2 + $0x108] sm:$0xff]
        %v906 = vld [vmem:[%s2 + $0x110] sm:$0xff]
        %v907 = vld [vmem:[%s2 + $0x118] sm:$0xff]
        %v908 = vadd.f32 %v836, %v872
        %v909 = vadd.f32 %v837, %v873
        %v910 = vadd.f32 %v838, %v874
        %v911 = vadd.f32 %v839, %v875
        %v912 = vadd.f32 %v840, %v876
        %v913 = vadd.f32 %v841, %v877
        %v914 = vadd.f32 %v842, %v878
        %v915 = vadd.f32 %v843, %v879
        %v916 = vadd.f32 %v844, %v880
        %v917 = vadd.f32 %v845, %v881
        %v918 = vadd.f32 %v846, %v882
        %v919 = vadd.f32 %v847, %v883
        %v920 = vadd.f32 %v848, %v884
        %v921 = vadd.f32 %v849, %v885
        %v922 = vadd.f32 %v850, %v886
        %v923 = vadd.f32 %v851, %v887
        %v924 = vadd.f32 %v852, %v888
        %v925 = vadd.f32 %v853, %v889
        %v926 = vadd.f32 %v854, %v890
        %v927 = vadd.f32 %v855, %v891
        %v928 = vadd.f32 %v856, %v892
        %v929 = vadd.f32 %v857, %v893
        %v930 = vadd.f32 %v858, %v894
        %v931 = vadd.f32 %v859, %v895
        %v932 = vadd.f32 %v860, %v896
        %v933 = vadd.f32 %v861, %v897
        %v934 = vadd.f32 %v862, %v898
        %v935 = vadd.f32 %v863, %v899
        %v936 = vadd.f32 %v864, %v900
        %v937 = vadd.f32 %v865, %v901
        %v938 = vadd.f32 %v866, %v902
        %v939 = vadd.f32 %v867, %v903
        %v940 = vadd.f32 %v868, %v904
        %v941 = vadd.f32 %v869, %v905
        %v942 = vadd.f32 %v870, %v906
        %v943 = vadd.f32 %v871, %v907
        %vm944 = vcmask 130048
        %v945 = vsel %vm944, %v909, -inf
        %v946 = vmax.f32 %v908, %v945
        %947 = vmax.xlane.f32.xlu0 %v946
        %v948 = vpop.xlane.xlu0 %947
        %v949 = vsel %vm944, %v911, -inf
        %v950 = vmax.f32 %v910, %v949
        %951 = vmax.xlane.f32.xlu0 %v950
        %v952 = vpop.xlane.xlu0 %951
        %v953 = vsel %vm944, %v913, -inf
        %v954 = vmax.f32 %v912, %v953
        %955 = vmax.xlane.f32.xlu0 %v954
        %v956 = vpop.xlane.xlu0 %955
        %v957 = vsel %vm944, %v915, -inf
        %v958 = vmax.f32 %v914, %v957
        %959 = vmax.xlane.f32.xlu0 %v958
        %v960 = vpop.xlane.xlu0 %959
        %v961 = vsel %vm944, %v917, -inf
        %v962 = vmax.f32 %v916, %v961
        %963 = vmax.xlane.f32.xlu0 %v962
        %v964 = vpop.xlane.xlu0 %963
        %v965 = vsel %vm944, %v919, -inf
        %v966 = vmax.f32 %v918, %v965
        %967 = vmax.xlane.f32.xlu0 %v966
        %v968 = vpop.xlane.xlu0 %967
        %v969 = vsel %vm944, %v921, -inf
        %v970 = vmax.f32 %v920, %v969
        %971 = vmax.xlane.f32.xlu0 %v970
        %v972 = vpop.xlane.xlu0 %971
        %v973 = vsel %vm944, %v923, -inf
        %v974 = vmax.f32 %v922, %v973
        %975 = vmax.xlane.f32.xlu0 %v974
        %v976 = vpop.xlane.xlu0 %975
        %v977 = vsel %vm944, %v925, -inf
        %v978 = vmax.f32 %v924, %v977
        %979 = vmax.xlane.f32.xlu0 %v978
        %v980 = vpop.xlane.xlu0 %979
        %v981 = vsel %vm944, %v927, -inf
        %v982 = vmax.f32 %v926, %v981
        %983 = vmax.xlane.f32.xlu0 %v982
        %v984 = vpop.xlane.xlu0 %983
        %v985 = vsel %vm944, %v929, -inf
        %v986 = vmax.f32 %v928, %v985
        %987 = vmax.xlane.f32.xlu0 %v986
        %v988 = vpop.xlane.xlu0 %987
        %v989 = vsel %vm944, %v931, -inf
        %v990 = vmax.f32 %v930, %v989
        %991 = vmax.xlane.f32.xlu0 %v990
        %v992 = vpop.xlane.xlu0 %991
        %v993 = vsel %vm944, %v933, -inf
        %v994 = vmax.f32 %v932, %v993
        %995 = vmax.xlane.f32.xlu0 %v994
        %v996 = vpop.xlane.xlu0 %995
        %v997 = vsel %vm944, %v935, -inf
        %v998 = vmax.f32 %v934, %v997
        %999 = vmax.xlane.f32.xlu0 %v998
        %v1000 = vpop.xlane.xlu0 %999
        %v1001 = vsel %vm944, %v937, -inf
        %v1002 = vmax.f32 %v936, %v1001
        %1003 = vmax.xlane.f32.xlu0 %v1002
        %v1004 = vpop.xlane.xlu0 %1003
        %v1005 = vsel %vm944, %v939, -inf
        %v1006 = vmax.f32 %v938, %v1005
        %1007 = vmax.xlane.f32.xlu0 %v1006
        %v1008 = vpop.xlane.xlu0 %1007
        %v1009 = vsel %vm944, %v941, -inf
        %v1010 = vmax.f32 %v940, %v1009
        %1011 = vmax.xlane.f32.xlu0 %v1010
        %v1012 = vpop.xlane.xlu0 %1011
        %v1013 = vsel %vm944, %v943, -inf
        %v1014 = vmax.f32 %v942, %v1013
        %1015 = vmax.xlane.f32.xlu0 %v1014
        %v1016 = vpop.xlane.xlu0 %1015
        %v1017 = vsub.f32 %v908, %v948
        %v1018 = vsub.f32 %v909, %v948
        %v1019 = vsub.f32 %v910, %v952
        %v1020 = vsub.f32 %v911, %v952
        %v1021 = vsub.f32 %v912, %v956
        %v1022 = vsub.f32 %v913, %v956
        %v1023 = vsub.f32 %v914, %v960
        %v1024 = vsub.f32 %v915, %v960
        %v1025 = vsub.f32 %v916, %v964
        %v1026 = vsub.f32 %v917, %v964
        %v1027 = vsub.f32 %v918, %v968
        %v1028 = vsub.f32 %v919, %v968
        %v1029 = vsub.f32 %v920, %v972
        %v1030 = vsub.f32 %v921, %v972
        %v1031 = vsub.f32 %v922, %v976
        %v1032 = vsub.f32 %v923, %v976
        %v1033 = vsub.f32 %v924, %v980
        %v1034 = vsub.f32 %v925, %v980
        %v1035 = vsub.f32 %v926, %v984
        %v1036 = vsub.f32 %v927, %v984
        %v1037 = vsub.f32 %v928, %v988
        %v1038 = vsub.f32 %v929, %v988
        %v1039 = vsub.f32 %v930, %v992
        %v1040 = vsub.f32 %v931, %v992
        %v1041 = vsub.f32 %v932, %v996
        %v1042 = vsub.f32 %v933, %v996
        %v1043 = vsub.f32 %v934, %v1000
        %v1044 = vsub.f32 %v935, %v1000
        %v1045 = vsub.f32 %v936, %v1004
        %v1046 = vsub.f32 %v937, %v1004
        %v1047 = vsub.f32 %v938, %v1008
        %v1048 = vsub.f32 %v939, %v1008
        %v1049 = vsub.f32 %v940, %v1012
        %v1050 = vsub.f32 %v941, %v1012
        %v1051 = vsub.f32 %v942, %v1016
        %v1052 = vsub.f32 %v943, %v1016
        %v1053 = vmul.f32 %v1017, 1.442695
        %v1054 = vpow.pop %v1053
        %v1055 = vmul.f32 %v1018, 1.442695
        %v1056 = vpow.pop %v1055
        %v1057 = vmul.f32 %v1019, 1.442695
        %v1058 = vpow.pop %v1057
        %v1059 = vmul.f32 %v1020, 1.442695
        %v1060 = vpow.pop %v1059
        %v1061 = vmul.f32 %v1021, 1.442695
        %v1062 = vpow.pop %v1061
        %v1063 = vmul.f32 %v1022, 1.442695
        %v1064 = vpow.pop %v1063
        %v1065 = vmul.f32 %v1023, 1.442695
        %v1066 = vpow.pop %v1065
        %v1067 = vmul.f32 %v1024, 1.442695
        %v1068 = vpow.pop %v1067
        %v1069 = vmul.f32 %v1025, 1.442695
        %v1070 = vpow.pop %v1069
        %v1071 = vmul.f32 %v1026, 1.442695
        %v1072 = vpow.pop %v1071
        %v1073 = vmul.f32 %v1027, 1.442695
        %v1074 = vpow.pop %v1073
        %v1075 = vmul.f32 %v1028, 1.442695
        %v1076 = vpow.pop %v1075
        %v1077 = vmul.f32 %v1029, 1.442695
        %v1078 = vpow.pop %v1077
        %v1079 = vmul.f32 %v1030, 1.442695
        %v1080 = vpow.pop %v1079
        %v1081 = vmul.f32 %v1031, 1.442695
        %v1082 = vpow.pop %v1081
        %v1083 = vmul.f32 %v1032, 1.442695
        %v1084 = vpow.pop %v1083
        %v1085 = vmul.f32 %v1033, 1.442695
        %v1086 = vpow.pop %v1085
        %v1087 = vmul.f32 %v1034, 1.442695
        %v1088 = vpow.pop %v1087
        %v1089 = vmul.f32 %v1035, 1.442695
        %v1090 = vpow.pop %v1089
        %v1091 = vmul.f32 %v1036, 1.442695
        %v1092 = vpow.pop %v1091
        %v1093 = vmul.f32 %v1037, 1.442695
        %v1094 = vpow.pop %v1093
        %v1095 = vmul.f32 %v1038, 1.442695
        %v1096 = vpow.pop %v1095
        %v1097 = vmul.f32 %v1039, 1.442695
        %v1098 = vpow.pop %v1097
        %v1099 = vmul.f32 %v1040, 1.442695
        %v1100 = vpow.pop %v1099
        %v1101 = vmul.f32 %v1041, 1.442695
        %v1102 = vpow.pop %v1101
        %v1103 = vmul.f32 %v1042, 1.442695
        %v1104 = vpow.pop %v1103
        %v1105 = vmul.f32 %v1043, 1.442695
        %v1106 = vpow.pop %v1105
        %v1107 = vmul.f32 %v1044, 1.442695
        %v1108 = vpow.pop %v1107
        %v1109 = vmul.f32 %v1045, 1.442695
        %v1110 = vpow.pop %v1109
        %v1111 = vmul.f32 %v1046, 1.442695
        %v1112 = vpow.pop %v1111
        %v1113 = vmul.f32 %v1047, 1.442695
        %v1114 = vpow.pop %v1113
        %v1115 = vmul.f32 %v1048, 1.442695
        %v1116 = vpow.pop %v1115
        %v1117 = vmul.f32 %v1049, 1.442695
        %v1118 = vpow.pop %v1117
        %v1119 = vmul.f32 %v1050, 1.442695
        %v1120 = vpow.pop %v1119
        %v1121 = vmul.f32 %v1051, 1.442695
        %v1122 = vpow.pop %v1121
        %v1123 = vmul.f32 %v1052, 1.442695
        %v1124 = vpow.pop %v1123
        %v1125 = vsel %vm944, %v1056, 0.0
        %v1126 = vadd.f32 %v1054, %v1125
        %1127 = vadd.xlane.f32.xlu0 %v1126
        %v1128 = vpop.xlane.xlu0 %1127
        %v1129 = vsel %vm944, %v1060, 0.0
        %v1130 = vadd.f32 %v1058, %v1129
        %1131 = vadd.xlane.f32.xlu0 %v1130
        %v1132 = vpop.xlane.xlu0 %1131
        %v1133 = vsel %vm944, %v1064, 0.0
        %v1134 = vadd.f32 %v1062, %v1133
        %1135 = vadd.xlane.f32.xlu0 %v1134
        %v1136 = vpop.xlane.xlu0 %1135
        %v1137 = vsel %vm944, %v1068, 0.0
        %v1138 = vadd.f32 %v1066, %v1137
        %1139 = vadd.xlane.f32.xlu0 %v1138
        %v1140 = vpop.xlane.xlu0 %1139
        %v1141 = vsel %vm944, %v1072, 0.0
        %v1142 = vadd.f32 %v1070, %v1141
        %1143 = vadd.xlane.f32.xlu0 %v1142
        %v1144 = vpop.xlane.xlu0 %1143
        %v1145 = vsel %vm944, %v1076, 0.0
        %v1146 = vadd.f32 %v1074, %v1145
        %1147 = vadd.xlane.f32.xlu0 %v1146
        %v1148 = vpop.xlane.xlu0 %1147
        %v1149 = vsel %vm944, %v1080, 0.0
        %v1150 = vadd.f32 %v1078, %v1149
        %1151 = vadd.xlane.f32.xlu0 %v1150
        %v1152 = vpop.xlane.xlu0 %1151
        %v1153 = vsel %vm944, %v1084, 0.0
        %v1154 = vadd.f32 %v1082, %v1153
        %1155 = vadd.xlane.f32.xlu0 %v1154
        %v1156 = vpop.xlane.xlu0 %1155
        %v1157 = vsel %vm944, %v1088, 0.0
        %v1158 = vadd.f32 %v1086, %v1157
        %1159 = vadd.xlane.f32.xlu0 %v1158
        %v1160 = vpop.xlane.xlu0 %1159
        %v1161 = vsel %vm944, %v1092, 0.0
        %v1162 = vadd.f32 %v1090, %v1161
        %1163 = vadd.xlane.f32.xlu0 %v1162
        %v1164 = vpop.xlane.xlu0 %1163
        %v1165 = vsel %vm944, %v1096, 0.0
        %v1166 = vadd.f32 %v1094, %v1165
        %1167 = vadd.xlane.f32.xlu0 %v1166
        %v1168 = vpop.xlane.xlu0 %1167
        %v1169 = vsel %vm944, %v1100, 0.0
        %v1170 = vadd.f32 %v1098, %v1169
        %1171 = vadd.xlane.f32.xlu0 %v1170
        %v1172 = vpop.xlane.xlu0 %1171
        %v1173 = vsel %vm944, %v1104, 0.0
        %v1174 = vadd.f32 %v1102, %v1173
        %1175 = vadd.xlane.f32.xlu0 %v1174
        %v1176 = vpop.xlane.xlu0 %1175
        %v1177 = vsel %vm944, %v1108, 0.0
        %v1178 = vadd.f32 %v1106, %v1177
        %1179 = vadd.xlane.f32.xlu0 %v1178
        %v1180 = vpop.xlane.xlu0 %1179
        %v1181 = vsel %vm944, %v1112, 0.0
        %v1182 = vadd.f32 %v1110, %v1181
        %1183 = vadd.xlane.f32.xlu0 %v1182
        %v1184 = vpop.xlane.xlu0 %1183
        %v1185 = vsel %vm944, %v1116, 0.0
        %v1186 = vadd.f32 %v1114, %v1185
        %1187 = vadd.xlane.f32.xlu0 %v1186
        %v1188 = vpop.xlane.xlu0 %1187
        %v1189 = vsel %vm944, %v1120, 0.0
        %v1190 = vadd.f32 %v1118, %v1189
        %1191 = vadd.xlane.f32.xlu0 %v1190
        %v1192 = vpop.xlane.xlu0 %1191
        %v1193 = vsel %vm944, %v1124, 0.0
        %v1194 = vadd.f32 %v1122, %v1193
        %1195 = vadd.xlane.f32.xlu0 %v1194
        %v1196 = vpop.xlane.xlu0 %1195
        %v1197 = vrcp.pop %v1128
        %v1198 = vrcp.pop %v1132
        %v1199 = vrcp.pop %v1136
        %v1200 = vrcp.pop %v1140
        %v1201 = vrcp.pop %v1144
        %v1202 = vrcp.pop %v1148
        %v1203 = vrcp.pop %v1152
        %v1204 = vrcp.pop %v1156
        %v1205 = vrcp.pop %v1160
        %v1206 = vrcp.pop %v1164
        %v1207 = vrcp.pop %v1168
        %v1208 = vrcp.pop %v1172
        %v1209 = vrcp.pop %v1176
        %v1210 = vrcp.pop %v1180
        %v1211 = vrcp.pop %v1184
        %v1212 = vrcp.pop %v1188
        %v1213 = vrcp.pop %v1192
        %v1214 = vrcp.pop %v1196
        %v1215 = vmul.f32 %v1054, %v1197
        %v1216 = vmul.f32 %v1056, %v1197
        %v1217 = vmul.f32 %v1058, %v1198
        %v1218 = vmul.f32 %v1060, %v1198
        %v1219 = vmul.f32 %v1062, %v1199
        %v1220 = vmul.f32 %v1064, %v1199
        %v1221 = vmul.f32 %v1066, %v1200
        %v1222 = vmul.f32 %v1068, %v1200
        %v1223 = vmul.f32 %v1070, %v1201
        %v1224 = vmul.f32 %v1072, %v1201
        %v1225 = vmul.f32 %v1074, %v1202
        %v1226 = vmul.f32 %v1076, %v1202
        %v1227 = vmul.f32 %v1078, %v1203
        %v1228 = vmul.f32 %v1080, %v1203
        %v1229 = vmul.f32 %v1082, %v1204
        %v1230 = vmul.f32 %v1084, %v1204
        %v1231 = vmul.f32 %v1086, %v1205
        %v1232 = vmul.f32 %v1088, %v1205
        %v1233 = vmul.f32 %v1090, %v1206
        %v1234 = vmul.f32 %v1092, %v1206
        %v1235 = vmul.f32 %v1094, %v1207
        %v1236 = vmul.f32 %v1096, %v1207
        %v1237 = vmul.f32 %v1098, %v1208
        %v1238 = vmul.f32 %v1100, %v1208
        %v1239 = vmul.f32 %v1102, %v1209
        %v1240 = vmul.f32 %v1104, %v1209
        %v1241 = vmul.f32 %v1106, %v1210
        %v1242 = vmul.f32 %v1108, %v1210
        %v1243 = vmul.f32 %v1110, %v1211
        %v1244 = vmul.f32 %v1112, %v1211
        %v1245 = vmul.f32 %v1114, %v1212
        %v1246 = vmul.f32 %v1116, %v1212
        %v1247 = vmul.f32 %v1118, %v1213
        %v1248 = vmul.f32 %v1120, %v1213
        %v1249 = vmul.f32 %v1122, %v1214
        %v1250 = vmul.f32 %v1124, %v1214
        %v1251 = vpack.c.bf16 %v1217, %v1215
        %v1252 = vpack.c.bf16 %v1218, %v1216
        %v1253 = vpack.c.bf16 %v1221, %v1219
        %v1254 = vpack.c.bf16 %v1222, %v1220
        %v1255 = vpack.c.bf16 %v1225, %v1223
        %v1256 = vpack.c.bf16 %v1226, %v1224
        %v1257 = vpack.c.bf16 %v1229, %v1227
        %v1258 = vpack.c.bf16 %v1230, %v1228
        %v1259 = vpack.c.bf16 %v1233, %v1231
        %v1260 = vpack.c.bf16 %v1234, %v1232
        %v1261 = vpack.c.bf16 %v1237, %v1235
        %v1262 = vpack.c.bf16 %v1238, %v1236
        %v1263 = vpack.c.bf16 %v1241, %v1239
        %v1264 = vpack.c.bf16 %v1242, %v1240
        %v1265 = vpack.c.bf16 %v1245, %v1243
        %v1266 = vpack.c.bf16 %v1246, %v1244
        %v1267 = vpack.c.bf16 %v1249, %v1247
        %v1268 = vpack.c.bf16 %v1250, %v1248
        %1269 = vrot.lane.b32.xlu0 %v638, 64
        %v1270 = vpop.permute.xlu0 %1269
        %1271 = vrot.lane.b32.xlu0 %v639, 64
        %v1272 = vpop.permute.xlu0 %1271
        %1273 = vrot.lane.b32.xlu0 %v640, 64
        %v1274 = vpop.permute.xlu0 %1273
        %1275 = vrot.lane.b32.xlu0 %v641, 64
        %v1276 = vpop.permute.xlu0 %1275
        %1277 = vrot.lane.b32.xlu0 %v642, 64
        %v1278 = vpop.permute.xlu0 %1277
        %1279 = vrot.lane.b32.xlu0 %v643, 64
        %v1280 = vpop.permute.xlu0 %1279
        %1281 = vrot.lane.b32.xlu0 %v644, 64
        %v1282 = vpop.permute.xlu0 %1281
        %1283 = vrot.lane.b32.xlu0 %v645, 64
        %v1284 = vpop.permute.xlu0 %1283
        %1285 = vrot.lane.b32.xlu0 %v646, 64
        %v1286 = vpop.permute.xlu0 %1285
        %v1297 = vsel %vm944, %v1252, 0
        %v1300 = vsel %vm944, %v1254, 0
        %v1303 = vsel %vm944, %v1256, 0
        %v1306 = vsel %vm944, %v1258, 0
        %v1309 = vsel %vm944, %v1260, 0
        %v1312 = vsel %vm944, %v1262, 0
        %v1315 = vsel %vm944, %v1264, 0
        %v1318 = vsel %vm944, %v1266, 0
        %v1321 = vsel %vm944, %v1268, 0
        %1323 = vmatpush.bf16.msra.mxu0 %v1284
        %1324 = vmatpush.bf16.msra.mxu0 %v1282
        %1325 = vmatpush.bf16.msra.mxu0 %v1280
        %1326 = vmatpush.bf16.msra.mxu0 %v1278
        %1327 = vmatpush.bf16.msra.mxu0 %v1276
        %1328 = vmatpush.bf16.msra.mxu0 %v1274
        %1329 = vmatpush.bf16.msra.mxu0 %v1272
        %1330 = vmatpush.bf16.msra.mxu0 %v1270
        %1331 = vmatmul.bf16.gmra.mxu0 %v1251
        %v1332 = vpop.f32.mrf.mxu0
        %v1333 = vadd.f32 0.0, %v1332
        %v1334 = vpop.f32.mrf.mxu0
        %v1335 = vadd.f32 0.0, %v1334
        %1336 = vmatmul.bf16.gmra.mxu0 %v1253
        %v1337 = vpop.f32.mrf.mxu0
        %v1338 = vadd.f32 0.0, %v1337
        %v1339 = vpop.f32.mrf.mxu0
        %v1340 = vadd.f32 0.0, %v1339
        %1341 = vmatmul.bf16.gmra.mxu0 %v1255
        %v1342 = vpop.f32.mrf.mxu0
        %v1343 = vadd.f32 0.0, %v1342
        %v1344 = vpop.f32.mrf.mxu0
        %v1345 = vadd.f32 0.0, %v1344
        %1346 = vmatmul.bf16.gmra.mxu0 %v1257
        %v1347 = vpop.f32.mrf.mxu0
        %v1348 = vadd.f32 0.0, %v1347
        %v1349 = vpop.f32.mrf.mxu0
        %v1350 = vadd.f32 0.0, %v1349
        %1351 = vmatmul.bf16.gmra.mxu0 %v1259
        %v1352 = vpop.f32.mrf.mxu0
        %v1353 = vadd.f32 0.0, %v1352
        %v1354 = vpop.f32.mrf.mxu0
        %v1355 = vadd.f32 0.0, %v1354
        %1356 = vmatmul.bf16.gmra.mxu0 %v1261
        %v1357 = vpop.f32.mrf.mxu0
        %v1358 = vadd.f32 0.0, %v1357
        %v1359 = vpop.f32.mrf.mxu0
        %v1360 = vadd.f32 0.0, %v1359
        %1361 = vmatmul.bf16.gmra.mxu0 %v1263
        %v1362 = vpop.f32.mrf.mxu0
        %v1363 = vadd.f32 0.0, %v1362
        %v1364 = vpop.f32.mrf.mxu0
        %v1365 = vadd.f32 0.0, %v1364
        %1366 = vmatmul.bf16.gmra.mxu0 %v1265
        %v1367 = vpop.f32.mrf.mxu0
        %v1368 = vadd.f32 0.0, %v1367
        %v1369 = vpop.f32.mrf.mxu0
        %v1370 = vadd.f32 0.0, %v1369
        %1371 = vmatmul.bf16.gmra.mxu0 %v1267
        %v1372 = vpop.f32.mrf.mxu0
        %v1373 = vadd.f32 0.0, %v1372
        %v1374 = vpop.f32.mrf.mxu0
        %v1375 = vadd.f32 0.0, %v1374
        %1376 = vdwg.mxu0
        %1377 = vmatpush.bf16.msra.mxu0 0
        %1378 = vmatpush.bf16.msra.mxu0 0
        %1379 = vmatpush.bf16.msra.mxu0 0
        %1380 = vmatpush.bf16.msra.mxu0 0
        %1381 = vmatpush.bf16.msra.mxu0 0
        %1382 = vmatpush.bf16.msra.mxu0 0
        %1383 = vmatpush.bf16.msra.mxu0 0
        %1384 = vmatpush.bf16.msra.mxu0 %v1286
        %1385 = vmatmul.bf16.gmra.mxu0 %v1297
        %v1386 = vpop.f32.mrf.mxu0
        %v1387 = vadd.f32 %v1333, %v1386
        %v1388 = vpop.f32.mrf.mxu0
        %v1389 = vadd.f32 %v1335, %v1388
        %1390 = vmatmul.bf16.gmra.mxu0 %v1300
        %v1391 = vpop.f32.mrf.mxu0
        %v1392 = vadd.f32 %v1338, %v1391
        %v1393 = vpop.f32.mrf.mxu0
        %v1394 = vadd.f32 %v1340, %v1393
        %1395 = vmatmul.bf16.gmra.mxu0 %v1303
        %v1396 = vpop.f32.mrf.mxu0
        %v1397 = vadd.f32 %v1343, %v1396
        %v1398 = vpop.f32.mrf.mxu0
        %v1399 = vadd.f32 %v1345, %v1398
        %1400 = vmatmul.bf16.gmra.mxu0 %v1306
        %v1401 = vpop.f32.mrf.mxu0
        %v1402 = vadd.f32 %v1348, %v1401
        %v1403 = vpop.f32.mrf.mxu0
        %v1404 = vadd.f32 %v1350, %v1403
        %1405 = vmatmul.bf16.gmra.mxu0 %v1309
        %v1406 = vpop.f32.mrf.mxu0
        %v1407 = vadd.f32 %v1353, %v1406
        %v1408 = vpop.f32.mrf.mxu0
        %v1409 = vadd.f32 %v1355, %v1408
        %1410 = vmatmul.bf16.gmra.mxu0 %v1312
        %v1411 = vpop.f32.mrf.mxu0
        %v1412 = vadd.f32 %v1358, %v1411
        %v1413 = vpop.f32.mrf.mxu0
        %v1414 = vadd.f32 %v1360, %v1413
        %1415 = vmatmul.bf16.gmra.mxu0 %v1315
        %v1416 = vpop.f32.mrf.mxu0
        %v1417 = vadd.f32 %v1363, %v1416
        %v1418 = vpop.f32.mrf.mxu0
        %v1419 = vadd.f32 %v1365, %v1418
        %1420 = vmatmul.bf16.gmra.mxu0 %v1318
        %v1421 = vpop.f32.mrf.mxu0
        %v1422 = vadd.f32 %v1368, %v1421
        %v1423 = vpop.f32.mrf.mxu0
        %v1424 = vadd.f32 %v1370, %v1423
        %1425 = vmatmul.bf16.gmra.mxu0 %v1321
        %v1426 = vpop.f32.mrf.mxu0
        %v1427 = vadd.f32 %v1373, %v1426
        %v1428 = vpop.f32.mrf.mxu0
        %v1429 = vadd.f32 %v1375, %v1428
        %1430 = vdwg.mxu0
        %v1431 = vpack.c.bf16 %v1389, %v1387
        %v1432 = vpack.c.bf16 %v1394, %v1392
        %v1433 = vpack.c.bf16 %v1399, %v1397
        %v1434 = vpack.c.bf16 %v1404, %v1402
        %v1435 = vpack.c.bf16 %v1409, %v1407
        %v1436 = vpack.c.bf16 %v1414, %v1412
        %v1437 = vpack.c.bf16 %v1419, %v1417
        %v1438 = vpack.c.bf16 %v1424, %v1422
        %v1439 = vpack.c.bf16 %v1429, %v1427
        %v1440 = vld [vmem:[%s3] sm:$0xf]
        %v1441 = vld [vmem:[%s3 + $0x4] sm:$0xf]
        %v1442 = vld [vmem:[%s3 + $0x8] sm:$0xf]
        %v1443 = vld [vmem:[%s3 + $0xc] sm:$0xf]
        %v1448 = vunpack.c.l.b16 %v1440
        %v1449 = vunpack.c.l.b16 %v1441
        %v1450 = vunpack.c.l.b16 %v1442
        %v1451 = vunpack.c.l.b16 %v1443
        %v1452 = vpack.c.b16 %v1449, %v1448
        %v1453 = vpack.c.b16 %v1451, %v1450
        %v1457 = vsel %vm556, %v1431, 0
        %v1460 = vsel %vm556, %v1432, 0
        %v1463 = vsel %vm556, %v1433, 0
        %v1466 = vsel %vm556, %v1434, 0
        %v1469 = vsel %vm556, %v1435, 0
        %v1472 = vsel %vm556, %v1436, 0
        %v1475 = vsel %vm556, %v1437, 0
        %v1478 = vsel %vm556, %v1438, 0
        %v1481 = vsel %vm556, %v1439, 0
        %1483 = vmatpush.bf16.msra.mxu0 0
        %1484 = vmatpush.bf16.msra.mxu0 0
        %1485 = vmatpush.bf16.msra.mxu0 0
        %1486 = vmatpush.bf16.msra.mxu0 0
        %1487 = vmatpush.bf16.msra.mxu0 0
        %1488 = vmatpush.bf16.msra.mxu0 0
        %1489 = vmatpush.bf16.msra.mxu0 %v1453
        %1490 = vmatpush.bf16.msra.mxu0 %v1452
        %1491 = vmatmul.bf16.gmra.mxu0 %v1457
        %v1492 = vpop.f32.mrf.mxu0
        %v1493 = vadd.f32 0.0, %v1492
        %v1494 = vpop.f32.mrf.mxu0
        %v1495 = vadd.f32 0.0, %v1494
        %1496 = vmatmul.bf16.gmra.mxu0 %v1460
        %v1497 = vpop.f32.mrf.mxu0
        %v1498 = vadd.f32 0.0, %v1497
        %v1499 = vpop.f32.mrf.mxu0
        %v1500 = vadd.f32 0.0, %v1499
        %1501 = vmatmul.bf16.gmra.mxu0 %v1463
        %v1502 = vpop.f32.mrf.mxu0
        %v1503 = vadd.f32 0.0, %v1502
        %v1504 = vpop.f32.mrf.mxu0
        %v1505 = vadd.f32 0.0, %v1504
        %1506 = vmatmul.bf16.gmra.mxu0 %v1466
        %v1507 = vpop.f32.mrf.mxu0
        %v1508 = vadd.f32 0.0, %v1507
        %v1509 = vpop.f32.mrf.mxu0
        %v1510 = vadd.f32 0.0, %v1509
        %1511 = vmatmul.bf16.gmra.mxu0 %v1469
        %v1512 = vpop.f32.mrf.mxu0
        %v1513 = vadd.f32 0.0, %v1512
        %v1514 = vpop.f32.mrf.mxu0
        %v1515 = vadd.f32 0.0, %v1514
        %1516 = vmatmul.bf16.gmra.mxu0 %v1472
        %v1517 = vpop.f32.mrf.mxu0
        %v1518 = vadd.f32 0.0, %v1517
        %v1519 = vpop.f32.mrf.mxu0
        %v1520 = vadd.f32 0.0, %v1519
        %1521 = vmatmul.bf16.gmra.mxu0 %v1475
        %v1522 = vpop.f32.mrf.mxu0
        %v1523 = vadd.f32 0.0, %v1522
        %v1524 = vpop.f32.mrf.mxu0
        %v1525 = vadd.f32 0.0, %v1524
        %1526 = vmatmul.bf16.gmra.mxu0 %v1478
        %v1527 = vpop.f32.mrf.mxu0
        %v1528 = vadd.f32 0.0, %v1527
        %v1529 = vpop.f32.mrf.mxu0
        %v1530 = vadd.f32 0.0, %v1529
        %1531 = vmatmul.bf16.gmra.mxu0 %v1481
        %v1532 = vpop.f32.mrf.mxu0
        %v1533 = vadd.f32 0.0, %v1532
        %v1534 = vpop.f32.mrf.mxu0
        %v1535 = vadd.f32 0.0, %v1534
        %1536 = vdwg.mxu0
        %v1537 = vadd.f32 %v477, %v1493
        %v1538 = vadd.f32 %v478, %v1495
        %v1539 = vadd.f32 %v479, %v1498
        %v1540 = vadd.f32 %v480, %v1500
        %v1541 = vadd.f32 %v481, %v1503
        %v1542 = vadd.f32 %v482, %v1505
        %v1543 = vadd.f32 %v483, %v1508
        %v1544 = vadd.f32 %v484, %v1510
        %v1545 = vadd.f32 %v485, %v1513
        %v1546 = vadd.f32 %v486, %v1515
        %v1547 = vadd.f32 %v487, %v1518
        %v1548 = vadd.f32 %v488, %v1520
        %v1549 = vadd.f32 %v489, %v1523
        %v1550 = vadd.f32 %v490, %v1525
        %v1551 = vadd.f32 %v491, %v1528
        %v1552 = vadd.f32 %v492, %v1530
        %v1553 = vadd.f32 %v493, %v1533
        %v1554 = vadd.f32 %v494, %v1535
        %v1555 = vld [vmem:[#allocation2] sm:$0x1]
        %v1557 = vperm.slane %v1555, 0
        %v1559 = vadd.f32 %v1537, %v1557
        %v1560 = vadd.f32 %v1538, %v1557
        %v1561 = vadd.f32 %v1539, %v1557
        %v1562 = vadd.f32 %v1540, %v1557
        %v1563 = vadd.f32 %v1541, %v1557
        %v1564 = vadd.f32 %v1542, %v1557
        %v1565 = vadd.f32 %v1543, %v1557
        %v1566 = vadd.f32 %v1544, %v1557
        %v1567 = vadd.f32 %v1545, %v1557
        %v1568 = vadd.f32 %v1546, %v1557
        %v1569 = vadd.f32 %v1547, %v1557
        %v1570 = vadd.f32 %v1548, %v1557
        %v1571 = vadd.f32 %v1549, %v1557
        %v1572 = vadd.f32 %v1550, %v1557
        %v1573 = vadd.f32 %v1551, %v1557
        %v1574 = vadd.f32 %v1552, %v1557
        %v1575 = vadd.f32 %v1553, %v1557
        %v1576 = vadd.f32 %v1554, %v1557
        %v1577 = vpack.c.bf16 %v1560, %v1559
        %v1578 = vpack.c.bf16 %v1562, %v1561
        %v1579 = vpack.c.bf16 %v1564, %v1563
        %v1580 = vpack.c.bf16 %v1566, %v1565
        %v1581 = vpack.c.bf16 %v1568, %v1567
        %v1582 = vpack.c.bf16 %v1570, %v1569
        %v1583 = vpack.c.bf16 %v1572, %v1571
        %v1584 = vpack.c.bf16 %v1574, %v1573
        %v1585 = vpack.c.bf16 %v1576, %v1575
        %v1586 = vld [vmem:[%s7] sm:$0xff]
        %v1587 = vld [vmem:[%s7 + $0x8] sm:$0x1]
        %v1588 = vld [vmem:[%s5] sm:$0xff]
        %v1589 = vld [vmem:[%s5 + $0x8] sm:$0xff]
        %v1590 = vld [vmem:[%s5 + $0x10] sm:$0xff]
        %v1591 = vld [vmem:[%s5 + $0x18] sm:$0xff]
        %v1592 = vld [vmem:[%s5 + $0x20] sm:$0xff]
        %v1593 = vld [vmem:[%s5 + $0x28] sm:$0xff]
        %v1594 = vld [vmem:[%s5 + $0x30] sm:$0xff]
        %v1595 = vld [vmem:[%s5 + $0x38] sm:$0xff]
        %v1596 = vld [vmem:[%s5 + $0x40] sm:$0xff]
        %v1597 = vld [vmem:[%s5 + $0x48] sm:$0xff]
        %v1598 = vld [vmem:[%s5 + $0x50] sm:$0xff]
        %v1599 = vld [vmem:[%s5 + $0x58] sm:$0xff]
        %v1600 = vld [vmem:[%s5 + $0x60] sm:$0xff]
        %v1601 = vld [vmem:[%s5 + $0x68] sm:$0xff]
        %v1602 = vld [vmem:[%s5 + $0x70] sm:$0xff]
        %v1603 = vld [vmem:[%s5 + $0x78] sm:$0xff]
        %v1604 = vld [vmem:[%s5 + $0x80] sm:$0xff]
        %v1605 = vld [vmem:[%s5 + $0x88] sm:$0xff]
        %v1624 = vunpack.c.l.b16 %v1588
        %v1625 = vunpack.c.h.b16 %v1588
        %v1626 = vunpack.c.l.b16 %v1589
        %v1627 = vunpack.c.h.b16 %v1589
        %v1628 = vunpack.c.l.b16 %v1590
        %v1629 = vunpack.c.h.b16 %v1590
        %v1630 = vunpack.c.l.b16 %v1591
        %v1631 = vunpack.c.h.b16 %v1591
        %v1632 = vunpack.c.l.b16 %v1592
        %v1633 = vunpack.c.h.b16 %v1592
        %v1634 = vunpack.c.l.b16 %v1593
        %v1635 = vunpack.c.h.b16 %v1593
        %v1636 = vunpack.c.l.b16 %v1594
        %v1637 = vunpack.c.h.b16 %v1594
        %v1638 = vunpack.c.l.b16 %v1595
        %v1639 = vunpack.c.h.b16 %v1595
        %v1640 = vunpack.c.l.b16 %v1596
        %v1641 = vunpack.c.h.b16 %v1596
        %v1642 = vunpack.c.l.b16 %v1597
        %v1643 = vunpack.c.h.b16 %v1597
        %v1644 = vunpack.c.l.b16 %v1598
        %v1645 = vunpack.c.h.b16 %v1598
        %v1646 = vunpack.c.l.b16 %v1599
        %v1647 = vunpack.c.h.b16 %v1599
        %v1648 = vunpack.c.l.b16 %v1600
        %v1649 = vunpack.c.h.b16 %v1600
        %v1650 = vunpack.c.l.b16 %v1601
        %v1651 = vunpack.c.h.b16 %v1601
        %v1652 = vunpack.c.l.b16 %v1602
        %v1653 = vunpack.c.h.b16 %v1602
        %v1654 = vunpack.c.l.b16 %v1603
        %v1655 = vunpack.c.h.b16 %v1603
        %v1656 = vunpack.c.l.b16 %v1604
        %v1657 = vunpack.c.h.b16 %v1604
        %v1658 = vunpack.c.l.b16 %v1605
        %v1659 = vunpack.c.h.b16 %v1605
        %v1660 = vpack.c.b16 %v1626, %v1624
        %v1661 = vpack.c.b16 %v1627, %v1625
        %v1662 = vpack.c.b16 %v1630, %v1628
        %v1663 = vpack.c.b16 %v1631, %v1629
        %v1664 = vpack.c.b16 %v1634, %v1632
        %v1665 = vpack.c.b16 %v1635, %v1633
        %v1666 = vpack.c.b16 %v1638, %v1636
        %v1667 = vpack.c.b16 %v1639, %v1637
        %v1668 = vpack.c.b16 %v1642, %v1640
        %v1669 = vpack.c.b16 %v1643, %v1641
        %v1670 = vpack.c.b16 %v1646, %v1644
        %v1671 = vpack.c.b16 %v1647, %v1645
        %v1672 = vpack.c.b16 %v1650, %v1648
        %v1673 = vpack.c.b16 %v1651, %v1649
        %v1674 = vpack.c.b16 %v1654, %v1652
        %v1675 = vpack.c.b16 %v1655, %v1653
        %v1676 = vpack.c.b16 %v1658, %v1656
        %v1677 = vpack.c.b16 %v1659, %v1657
        %v1688 = vsel %vm944, %v1661, 0
        %v1691 = vsel %vm944, %v1663, 0
        %v1694 = vsel %vm944, %v1665, 0
        %v1697 = vsel %vm944, %v1667, 0
        %v1700 = vsel %vm944, %v1669, 0
        %v1703 = vsel %vm944, %v1671, 0
        %v1706 = vsel %vm944, %v1673, 0
        %v1709 = vsel %vm944, %v1675, 0
        %v1712 = vsel %vm944, %v1677, 0
        %1714 = vmatpush.bf16.msra.mxu0 %v1584
        %1715 = vmatpush.bf16.msra.mxu0 %v1583
        %1716 = vmatpush.bf16.msra.mxu0 %v1582
        %1717 = vmatpush.bf16.msra.mxu0 %v1581
        %1718 = vmatpush.bf16.msra.mxu0 %v1580
        %1719 = vmatpush.bf16.msra.mxu0 %v1579
        %1720 = vmatpush.bf16.msra.mxu0 %v1578
        %1721 = vmatpush.bf16.msra.mxu0 %v1577
        %1722 = vmatmul.bf16.gmra.mxu0 %v1660
        %v1723 = vpop.f32.mrf.mxu0
        %v1724 = vadd.f32 0.0, %v1723
        %v1725 = vpop.f32.mrf.mxu0
        %v1726 = vadd.f32 0.0, %v1725
        %1727 = vmatmul.bf16.gmra.mxu0 %v1662
        %v1728 = vpop.f32.mrf.mxu0
        %v1729 = vadd.f32 0.0, %v1728
        %v1730 = vpop.f32.mrf.mxu0
        %v1731 = vadd.f32 0.0, %v1730
        %1732 = vmatmul.bf16.gmra.mxu0 %v1664
        %v1733 = vpop.f32.mrf.mxu0
        %v1734 = vadd.f32 0.0, %v1733
        %v1735 = vpop.f32.mrf.mxu0
        %v1736 = vadd.f32 0.0, %v1735
        %1737 = vmatmul.bf16.gmra.mxu0 %v1666
        %v1738 = vpop.f32.mrf.mxu0
        %v1739 = vadd.f32 0.0, %v1738
        %v1740 = vpop.f32.mrf.mxu0
        %v1741 = vadd.f32 0.0, %v1740
        %1742 = vmatmul.bf16.gmra.mxu0 %v1668
        %v1743 = vpop.f32.mrf.mxu0
        %v1744 = vadd.f32 0.0, %v1743
        %v1745 = vpop.f32.mrf.mxu0
        %v1746 = vadd.f32 0.0, %v1745
        %1747 = vmatmul.bf16.gmra.mxu0 %v1670
        %v1748 = vpop.f32.mrf.mxu0
        %v1749 = vadd.f32 0.0, %v1748
        %v1750 = vpop.f32.mrf.mxu0
        %v1751 = vadd.f32 0.0, %v1750
        %1752 = vmatmul.bf16.gmra.mxu0 %v1672
        %v1753 = vpop.f32.mrf.mxu0
        %v1754 = vadd.f32 0.0, %v1753
        %v1755 = vpop.f32.mrf.mxu0
        %v1756 = vadd.f32 0.0, %v1755
        %1757 = vmatmul.bf16.gmra.mxu0 %v1674
        %v1758 = vpop.f32.mrf.mxu0
        %v1759 = vadd.f32 0.0, %v1758
        %v1760 = vpop.f32.mrf.mxu0
        %v1761 = vadd.f32 0.0, %v1760
        %1762 = vmatmul.bf16.gmra.mxu0 %v1676
        %v1763 = vpop.f32.mrf.mxu0
        %v1764 = vadd.f32 0.0, %v1763
        %v1765 = vpop.f32.mrf.mxu0
        %v1766 = vadd.f32 0.0, %v1765
        %1767 = vdwg.mxu0
        %1768 = vmatpush.bf16.msra.mxu0 0
        %1769 = vmatpush.bf16.msra.mxu0 0
        %1770 = vmatpush.bf16.msra.mxu0 0
        %1771 = vmatpush.bf16.msra.mxu0 0
        %1772 = vmatpush.bf16.msra.mxu0 0
        %1773 = vmatpush.bf16.msra.mxu0 0
        %1774 = vmatpush.bf16.msra.mxu0 0
        %1775 = vmatpush.bf16.msra.mxu0 %v1585
        %1776 = vmatmul.bf16.gmra.mxu0 %v1688
        %v1777 = vpop.f32.mrf.mxu0
        %v1778 = vadd.f32 %v1724, %v1777
        %v1779 = vpop.f32.mrf.mxu0
        %v1780 = vadd.f32 %v1726, %v1779
        %1781 = vmatmul.bf16.gmra.mxu0 %v1691
        %v1782 = vpop.f32.mrf.mxu0
        %v1783 = vadd.f32 %v1729, %v1782
        %v1784 = vpop.f32.mrf.mxu0
        %v1785 = vadd.f32 %v1731, %v1784
        %1786 = vmatmul.bf16.gmra.mxu0 %v1694
        %v1787 = vpop.f32.mrf.mxu0
        %v1788 = vadd.f32 %v1734, %v1787
        %v1789 = vpop.f32.mrf.mxu0
        %v1790 = vadd.f32 %v1736, %v1789
        %1791 = vmatmul.bf16.gmra.mxu0 %v1697
        %v1792 = vpop.f32.mrf.mxu0
        %v1793 = vadd.f32 %v1739, %v1792
        %v1794 = vpop.f32.mrf.mxu0
        %v1795 = vadd.f32 %v1741, %v1794
        %1796 = vmatmul.bf16.gmra.mxu0 %v1700
        %v1797 = vpop.f32.mrf.mxu0
        %v1798 = vadd.f32 %v1744, %v1797
        %v1799 = vpop.f32.mrf.mxu0
        %v1800 = vadd.f32 %v1746, %v1799
        %1801 = vmatmul.bf16.gmra.mxu0 %v1703
        %v1802 = vpop.f32.mrf.mxu0
        %v1803 = vadd.f32 %v1749, %v1802
        %v1804 = vpop.f32.mrf.mxu0
        %v1805 = vadd.f32 %v1751, %v1804
        %1806 = vmatmul.bf16.gmra.mxu0 %v1706
        %v1807 = vpop.f32.mrf.mxu0
        %v1808 = vadd.f32 %v1754, %v1807
        %v1809 = vpop.f32.mrf.mxu0
        %v1810 = vadd.f32 %v1756, %v1809
        %1811 = vmatmul.bf16.gmra.mxu0 %v1709
        %v1812 = vpop.f32.mrf.mxu0
        %v1813 = vadd.f32 %v1759, %v1812
        %v1814 = vpop.f32.mrf.mxu0
        %v1815 = vadd.f32 %v1761, %v1814
        %1816 = vmatmul.bf16.gmra.mxu0 %v1712
        %v1817 = vpop.f32.mrf.mxu0
        %v1818 = vadd.f32 %v1764, %v1817
        %v1819 = vpop.f32.mrf.mxu0
        %v1820 = vadd.f32 %v1766, %v1819
        %1821 = vdwg.mxu0
        %s1822 = scalar_lea.vmem %s5, 144
        %v1823 = vld [vmem:[%s1822] sm:$0xff]
        %v1824 = vld [vmem:[%s1822 + $0x8] sm:$0xff]
        %v1825 = vld [vmem:[%s1822 + $0x10] sm:$0xff]
        %v1826 = vld [vmem:[%s1822 + $0x18] sm:$0xff]
        %v1827 = vld [vmem:[%s1822 + $0x20] sm:$0xff]
        %v1828 = vld [vmem:[%s1822 + $0x28] sm:$0xff]
        %v1829 = vld [vmem:[%s1822 + $0x30] sm:$0xff]
        %v1830 = vld [vmem:[%s1822 + $0x38] sm:$0xff]
        %v1831 = vld [vmem:[%s1822 + $0x40] sm:$0xff]
        %v1832 = vld [vmem:[%s1822 + $0x48] sm:$0xff]
        %v1833 = vld [vmem:[%s1822 + $0x50] sm:$0xff]
        %v1834 = vld [vmem:[%s1822 + $0x58] sm:$0xff]
        %v1835 = vld [vmem:[%s1822 + $0x60] sm:$0xff]
        %v1836 = vld [vmem:[%s1822 + $0x68] sm:$0xff]
        %v1837 = vld [vmem:[%s1822 + $0x70] sm:$0xff]
        %v1838 = vld [vmem:[%s1822 + $0x78] sm:$0xff]
        %v1839 = vld [vmem:[%s1822 + $0x80] sm:$0xff]
        %v1840 = vld [vmem:[%s1822 + $0x88] sm:$0xff]
        %v1859 = vunpack.c.l.b16 %v1823
        %v1860 = vunpack.c.h.b16 %v1823
        %v1861 = vunpack.c.l.b16 %v1824
        %v1862 = vunpack.c.h.b16 %v1824
        %v1863 = vunpack.c.l.b16 %v1825
        %v1864 = vunpack.c.h.b16 %v1825
        %v1865 = vunpack.c.l.b16 %v1826
        %v1866 = vunpack.c.h.b16 %v1826
        %v1867 = vunpack.c.l.b16 %v1827
        %v1868 = vunpack.c.h.b16 %v1827
        %v1869 = vunpack.c.l.b16 %v1828
        %v1870 = vunpack.c.h.b16 %v1828
        %v1871 = vunpack.c.l.b16 %v1829
        %v1872 = vunpack.c.h.b16 %v1829
        %v1873 = vunpack.c.l.b16 %v1830
        %v1874 = vunpack.c.h.b16 %v1830
        %v1875 = vunpack.c.l.b16 %v1831
        %v1876 = vunpack.c.h.b16 %v1831
        %v1877 = vunpack.c.l.b16 %v1832
        %v1878 = vunpack.c.h.b16 %v1832
        %v1879 = vunpack.c.l.b16 %v1833
        %v1880 = vunpack.c.h.b16 %v1833
        %v1881 = vunpack.c.l.b16 %v1834
        %v1882 = vunpack.c.h.b16 %v1834
        %v1883 = vunpack.c.l.b16 %v1835
        %v1884 = vunpack.c.h.b16 %v1835
        %v1885 = vunpack.c.l.b16 %v1836
        %v1886 = vunpack.c.h.b16 %v1836
        %v1887 = vunpack.c.l.b16 %v1837
        %v1888 = vunpack.c.h.b16 %v1837
        %v1889 = vunpack.c.l.b16 %v1838
        %v1890 = vunpack.c.h.b16 %v1838
        %v1891 = vunpack.c.l.b16 %v1839
        %v1892 = vunpack.c.h.b16 %v1839
        %v1893 = vunpack.c.l.b16 %v1840
        %v1894 = vunpack.c.h.b16 %v1840
        %v1895 = vpack.c.b16 %v1861, %v1859
        %v1896 = vpack.c.b16 %v1862, %v1860
        %v1897 = vpack.c.b16 %v1865, %v1863
        %v1898 = vpack.c.b16 %v1866, %v1864
        %v1899 = vpack.c.b16 %v1869, %v1867
        %v1900 = vpack.c.b16 %v1870, %v1868
        %v1901 = vpack.c.b16 %v1873, %v1871
        %v1902 = vpack.c.b16 %v1874, %v1872
        %v1903 = vpack.c.b16 %v1877, %v1875
        %v1904 = vpack.c.b16 %v1878, %v1876
        %v1905 = vpack.c.b16 %v1881, %v1879
        %v1906 = vpack.c.b16 %v1882, %v1880
        %v1907 = vpack.c.b16 %v1885, %v1883
        %v1908 = vpack.c.b16 %v1886, %v1884
        %v1909 = vpack.c.b16 %v1889, %v1887
        %v1910 = vpack.c.b16 %v1890, %v1888
        %v1911 = vpack.c.b16 %v1893, %v1891
        %v1912 = vpack.c.b16 %v1894, %v1892
        %v1923 = vsel %vm944, %v1896, 0
        %v1926 = vsel %vm944, %v1898, 0
        %v1929 = vsel %vm944, %v1900, 0
        %v1932 = vsel %vm944, %v1902, 0
        %v1935 = vsel %vm944, %v1904, 0
        %v1938 = vsel %vm944, %v1906, 0
        %v1941 = vsel %vm944, %v1908, 0
        %v1944 = vsel %vm944, %v1910, 0
        %v1947 = vsel %vm944, %v1912, 0
        %1949 = vmatpush.bf16.msra.mxu0 %v1584
        %1950 = vmatpush.bf16.msra.mxu0 %v1583
        %1951 = vmatpush.bf16.msra.mxu0 %v1582
        %1952 = vmatpush.bf16.msra.mxu0 %v1581
        %1953 = vmatpush.bf16.msra.mxu0 %v1580
        %1954 = vmatpush.bf16.msra.mxu0 %v1579
        %1955 = vmatpush.bf16.msra.mxu0 %v1578
        %1956 = vmatpush.bf16.msra.mxu0 %v1577
        %1957 = vmatmul.bf16.gmra.mxu0 %v1895
        %v1958 = vpop.f32.mrf.mxu0
        %v1959 = vadd.f32 0.0, %v1958
        %v1960 = vpop.f32.mrf.mxu0
        %v1961 = vadd.f32 0.0, %v1960
        %1962 = vmatmul.bf16.gmra.mxu0 %v1897
        %v1963 = vpop.f32.mrf.mxu0
        %v1964 = vadd.f32 0.0, %v1963
        %v1965 = vpop.f32.mrf.mxu0
        %v1966 = vadd.f32 0.0, %v1965
        %1967 = vmatmul.bf16.gmra.mxu0 %v1899
        %v1968 = vpop.f32.mrf.mxu0
        %v1969 = vadd.f32 0.0, %v1968
        %v1970 = vpop.f32.mrf.mxu0
        %v1971 = vadd.f32 0.0, %v1970
        %1972 = vmatmul.bf16.gmra.mxu0 %v1901
        %v1973 = vpop.f32.mrf.mxu0
        %v1974 = vadd.f32 0.0, %v1973
        %v1975 = vpop.f32.mrf.mxu0
        %v1976 = vadd.f32 0.0, %v1975
        %1977 = vmatmul.bf16.gmra.mxu0 %v1903
        %v1978 = vpop.f32.mrf.mxu0
        %v1979 = vadd.f32 0.0, %v1978
        %v1980 = vpop.f32.mrf.mxu0
        %v1981 = vadd.f32 0.0, %v1980
        %1982 = vmatmul.bf16.gmra.mxu0 %v1905
        %v1983 = vpop.f32.mrf.mxu0
        %v1984 = vadd.f32 0.0, %v1983
        %v1985 = vpop.f32.mrf.mxu0
        %v1986 = vadd.f32 0.0, %v1985
        %1987 = vmatmul.bf16.gmra.mxu0 %v1907
        %v1988 = vpop.f32.mrf.mxu0
        %v1989 = vadd.f32 0.0, %v1988
        %v1990 = vpop.f32.mrf.mxu0
        %v1991 = vadd.f32 0.0, %v1990
        %1992 = vmatmul.bf16.gmra.mxu0 %v1909
        %v1993 = vpop.f32.mrf.mxu0
        %v1994 = vadd.f32 0.0, %v1993
        %v1995 = vpop.f32.mrf.mxu0
        %v1996 = vadd.f32 0.0, %v1995
        %1997 = vmatmul.bf16.gmra.mxu0 %v1911
        %v1998 = vpop.f32.mrf.mxu0
        %v1999 = vadd.f32 0.0, %v1998
        %v2000 = vpop.f32.mrf.mxu0
        %v2001 = vadd.f32 0.0, %v2000
        %2002 = vdwg.mxu0
        %2003 = vmatpush.bf16.msra.mxu0 0
        %2004 = vmatpush.bf16.msra.mxu0 0
        %2005 = vmatpush.bf16.msra.mxu0 0
        %2006 = vmatpush.bf16.msra.mxu0 0
        %2007 = vmatpush.bf16.msra.mxu0 0
        %2008 = vmatpush.bf16.msra.mxu0 0
        %2009 = vmatpush.bf16.msra.mxu0 0
        %2010 = vmatpush.bf16.msra.mxu0 %v1585
        %2011 = vmatmul.bf16.gmra.mxu0 %v1923
        %v2012 = vpop.f32.mrf.mxu0
        %v2013 = vadd.f32 %v1959, %v2012
        %v2014 = vpop.f32.mrf.mxu0
        %v2015 = vadd.f32 %v1961, %v2014
        %2016 = vmatmul.bf16.gmra.mxu0 %v1926
        %v2017 = vpop.f32.mrf.mxu0
        %v2018 = vadd.f32 %v1964, %v2017
        %v2019 = vpop.f32.mrf.mxu0
        %v2020 = vadd.f32 %v1966, %v2019
        %2021 = vmatmul.bf16.gmra.mxu0 %v1929
        %v2022 = vpop.f32.mrf.mxu0
        %v2023 = vadd.f32 %v1969, %v2022
        %v2024 = vpop.f32.mrf.mxu0
        %v2025 = vadd.f32 %v1971, %v2024
        %2026 = vmatmul.bf16.gmra.mxu0 %v1932
        %v2027 = vpop.f32.mrf.mxu0
        %v2028 = vadd.f32 %v1974, %v2027
        %v2029 = vpop.f32.mrf.mxu0
        %v2030 = vadd.f32 %v1976, %v2029
        %2031 = vmatmul.bf16.gmra.mxu0 %v1935
        %v2032 = vpop.f32.mrf.mxu0
        %v2033 = vadd.f32 %v1979, %v2032
        %v2034 = vpop.f32.mrf.mxu0
        %v2035 = vadd.f32 %v1981, %v2034
        %2036 = vmatmul.bf16.gmra.mxu0 %v1938
        %v2037 = vpop.f32.mrf.mxu0
        %v2038 = vadd.f32 %v1984, %v2037
        %v2039 = vpop.f32.mrf.mxu0
        %v2040 = vadd.f32 %v1986, %v2039
        %2041 = vmatmul.bf16.gmra.mxu0 %v1941
        %v2042 = vpop.f32.mrf.mxu0
        %v2043 = vadd.f32 %v1989, %v2042
        %v2044 = vpop.f32.mrf.mxu0
        %v2045 = vadd.f32 %v1991, %v2044
        %2046 = vmatmul.bf16.gmra.mxu0 %v1944
        %v2047 = vpop.f32.mrf.mxu0
        %v2048 = vadd.f32 %v1994, %v2047
        %v2049 = vpop.f32.mrf.mxu0
        %v2050 = vadd.f32 %v1996, %v2049
        %2051 = vmatmul.bf16.gmra.mxu0 %v1947
        %v2052 = vpop.f32.mrf.mxu0
        %v2053 = vadd.f32 %v1999, %v2052
        %v2054 = vpop.f32.mrf.mxu0
        %v2055 = vadd.f32 %v2001, %v2054
        %2056 = vdwg.mxu0
        %v2057 = vperm.slane %v1586, 0
        %v2058 = vmul.f32 %v1778, %v2057
        %v2059 = vmul.f32 %v1780, %v2057
        %v2060 = vmul.f32 %v1783, %v2057
        %v2061 = vmul.f32 %v1785, %v2057
        %v2062 = vmul.f32 %v1788, %v2057
        %v2063 = vmul.f32 %v1790, %v2057
        %v2064 = vmul.f32 %v1793, %v2057
        %v2065 = vmul.f32 %v1795, %v2057
        %v2066 = vmul.f32 %v1798, %v2057
        %v2067 = vmul.f32 %v1800, %v2057
        %v2068 = vmul.f32 %v1803, %v2057
        %v2069 = vmul.f32 %v1805, %v2057
        %v2070 = vmul.f32 %v1808, %v2057
        %v2071 = vmul.f32 %v1810, %v2057
        %v2072 = vmul.f32 %v1813, %v2057
        %v2073 = vmul.f32 %v1815, %v2057
        %v2074 = vmul.f32 %v1818, %v2057
        %v2075 = vmul.f32 %v1820, %v2057
        %v2076 = vadd.f32 %v2058, 0.0
        %v2077 = vadd.f32 %v2059, 0.0
        %v2078 = vadd.f32 %v2060, 0.0
        %v2079 = vadd.f32 %v2061, 0.0
        %v2080 = vadd.f32 %v2062, 0.0
        %v2081 = vadd.f32 %v2063, 0.0
        %v2082 = vadd.f32 %v2064, 0.0
        %v2083 = vadd.f32 %v2065, 0.0
        %v2084 = vadd.f32 %v2066, 0.0
        %v2085 = vadd.f32 %v2067, 0.0
        %v2086 = vadd.f32 %v2068, 0.0
        %v2087 = vadd.f32 %v2069, 0.0
        %v2088 = vadd.f32 %v2070, 0.0
        %v2089 = vadd.f32 %v2071, 0.0
        %v2090 = vadd.f32 %v2072, 0.0
        %v2091 = vadd.f32 %v2073, 0.0
        %v2092 = vadd.f32 %v2074, 0.0
        %v2093 = vadd.f32 %v2075, 0.0
        %v2094 = vperm.slane %v1586, 1
        %v2095 = vmul.f32 %v1559, %v2094
        %v2096 = vmul.f32 %v1560, %v2094
        %v2097 = vmul.f32 %v1561, %v2094
        %v2098 = vmul.f32 %v1562, %v2094
        %v2099 = vmul.f32 %v1563, %v2094
        %v2100 = vmul.f32 %v1564, %v2094
        %v2101 = vmul.f32 %v1565, %v2094
        %v2102 = vmul.f32 %v1566, %v2094
        %v2103 = vmul.f32 %v1567, %v2094
        %v2104 = vmul.f32 %v1568, %v2094
        %v2105 = vmul.f32 %v1569, %v2094
        %v2106 = vmul.f32 %v1570, %v2094
        %v2107 = vmul.f32 %v1571, %v2094
        %v2108 = vmul.f32 %v1572, %v2094
        %v2109 = vmul.f32 %v1573, %v2094
        %v2110 = vmul.f32 %v1574, %v2094
        %v2111 = vmul.f32 %v1575, %v2094
        %v2112 = vmul.f32 %v1576, %v2094
        %v2113 = vadd.f32 %v2076, %v2095
        %v2114 = vadd.f32 %v2077, %v2096
        %v2115 = vadd.f32 %v2078, %v2097
        %v2116 = vadd.f32 %v2079, %v2098
        %v2117 = vadd.f32 %v2080, %v2099
        %v2118 = vadd.f32 %v2081, %v2100
        %v2119 = vadd.f32 %v2082, %v2101
        %v2120 = vadd.f32 %v2083, %v2102
        %v2121 = vadd.f32 %v2084, %v2103
        %v2122 = vadd.f32 %v2085, %v2104
        %v2123 = vadd.f32 %v2086, %v2105
        %v2124 = vadd.f32 %v2087, %v2106
        %v2125 = vadd.f32 %v2088, %v2107
        %v2126 = vadd.f32 %v2089, %v2108
        %v2127 = vadd.f32 %v2090, %v2109
        %v2128 = vadd.f32 %v2091, %v2110
        %v2129 = vadd.f32 %v2092, %v2111
        %v2130 = vadd.f32 %v2093, %v2112
        %v2131 = vperm.slane %v1586, 2
        %v2132 = vmul.f32 %v2013, %v2131
        %v2133 = vmul.f32 %v2015, %v2131
        %v2134 = vmul.f32 %v2018, %v2131
        %v2135 = vmul.f32 %v2020, %v2131
        %v2136 = vmul.f32 %v2023, %v2131
        %v2137 = vmul.f32 %v2025, %v2131
        %v2138 = vmul.f32 %v2028, %v2131
        %v2139 = vmul.f32 %v2030, %v2131
        %v2140 = vmul.f32 %v2033, %v2131
        %v2141 = vmul.f32 %v2035, %v2131
        %v2142 = vmul.f32 %v2038, %v2131
        %v2143 = vmul.f32 %v2040, %v2131
        %v2144 = vmul.f32 %v2043, %v2131
        %v2145 = vmul.f32 %v2045, %v2131
        %v2146 = vmul.f32 %v2048, %v2131
        %v2147 = vmul.f32 %v2050, %v2131
        %v2148 = vmul.f32 %v2053, %v2131
        %v2149 = vmul.f32 %v2055, %v2131
        %v2150 = vadd.f32 %v2113, %v2132
        %v2151 = vadd.f32 %v2114, %v2133
        %v2152 = vadd.f32 %v2115, %v2134
        %v2153 = vadd.f32 %v2116, %v2135
        %v2154 = vadd.f32 %v2117, %v2136
        %v2155 = vadd.f32 %v2118, %v2137
        %v2156 = vadd.f32 %v2119, %v2138
        %v2157 = vadd.f32 %v2120, %v2139
        %v2158 = vadd.f32 %v2121, %v2140
        %v2159 = vadd.f32 %v2122, %v2141
        %v2160 = vadd.f32 %v2123, %v2142
        %v2161 = vadd.f32 %v2124, %v2143
        %v2162 = vadd.f32 %v2125, %v2144
        %v2163 = vadd.f32 %v2126, %v2145
        %v2164 = vadd.f32 %v2127, %v2146
        %v2165 = vadd.f32 %v2128, %v2147
        %v2166 = vadd.f32 %v2129, %v2148
        %v2167 = vadd.f32 %v2130, %v2149
        %v2168 = vld [vmem:[%s6] sm:$0xff]
        %v2169 = vld [vmem:[%s6 + $0x8] sm:$0xff]
        %v2170 = vld [vmem:[%s6 + $0x10] sm:$0xff]
        %v2171 = vld [vmem:[%s6 + $0x18] sm:$0xff]
        %v2172 = vld [vmem:[%s6 + $0x20] sm:$0xff]
        %v2173 = vld [vmem:[%s6 + $0x28] sm:$0xff]
        %v2174 = vld [vmem:[%s6 + $0x30] sm:$0xff]
        %v2175 = vld [vmem:[%s6 + $0x38] sm:$0xff]
        %v2176 = vld [vmem:[%s6 + $0x40] sm:$0xff]
        %v2177 = vld [vmem:[%s6 + $0x48] sm:$0xff]
        %v2178 = vld [vmem:[%s6 + $0x50] sm:$0xff]
        %v2179 = vld [vmem:[%s6 + $0x58] sm:$0xff]
        %v2180 = vld [vmem:[%s6 + $0x60] sm:$0xff]
        %v2181 = vld [vmem:[%s6 + $0x68] sm:$0xff]
        %v2182 = vld [vmem:[%s6 + $0x70] sm:$0xff]
        %v2183 = vld [vmem:[%s6 + $0x78] sm:$0xff]
        %v2184 = vld [vmem:[%s6 + $0x80] sm:$0xff]
        %v2185 = vld [vmem:[%s6 + $0x88] sm:$0xff]
        %v2186 = vpack.c.bf16 %v2151, %v2150
        %v2187 = vpack.c.bf16 %v2153, %v2152
        %v2188 = vpack.c.bf16 %v2155, %v2154
        %v2189 = vpack.c.bf16 %v2157, %v2156
        %v2190 = vpack.c.bf16 %v2159, %v2158
        %v2191 = vpack.c.bf16 %v2161, %v2160
        %v2192 = vpack.c.bf16 %v2163, %v2162
        %v2193 = vpack.c.bf16 %v2165, %v2164
        %v2194 = vpack.c.bf16 %v2167, %v2166
        %v2195 = vperm.slane %v1586, 3
        %v2196 = vmul.f32 %v1778, %v2195
        %v2197 = vmul.f32 %v1780, %v2195
        %v2198 = vmul.f32 %v1783, %v2195
        %v2199 = vmul.f32 %v1785, %v2195
        %v2200 = vmul.f32 %v1788, %v2195
        %v2201 = vmul.f32 %v1790, %v2195
        %v2202 = vmul.f32 %v1793, %v2195
        %v2203 = vmul.f32 %v1795, %v2195
        %v2204 = vmul.f32 %v1798, %v2195
        %v2205 = vmul.f32 %v1800, %v2195
        %v2206 = vmul.f32 %v1803, %v2195
        %v2207 = vmul.f32 %v1805, %v2195
        %v2208 = vmul.f32 %v1808, %v2195
        %v2209 = vmul.f32 %v1810, %v2195
        %v2210 = vmul.f32 %v1813, %v2195
        %v2211 = vmul.f32 %v1815, %v2195
        %v2212 = vmul.f32 %v1818, %v2195
        %v2213 = vmul.f32 %v1820, %v2195
        %v2214 = vadd.f32 %v2196, 0.0
        %v2215 = vadd.f32 %v2197, 0.0
        %v2216 = vadd.f32 %v2198, 0.0
        %v2217 = vadd.f32 %v2199, 0.0
        %v2218 = vadd.f32 %v2200, 0.0
        %v2219 = vadd.f32 %v2201, 0.0
        %v2220 = vadd.f32 %v2202, 0.0
        %v2221 = vadd.f32 %v2203, 0.0
        %v2222 = vadd.f32 %v2204, 0.0
        %v2223 = vadd.f32 %v2205, 0.0
        %v2224 = vadd.f32 %v2206, 0.0
        %v2225 = vadd.f32 %v2207, 0.0
        %v2226 = vadd.f32 %v2208, 0.0
        %v2227 = vadd.f32 %v2209, 0.0
        %v2228 = vadd.f32 %v2210, 0.0
        %v2229 = vadd.f32 %v2211, 0.0
        %v2230 = vadd.f32 %v2212, 0.0
        %v2231 = vadd.f32 %v2213, 0.0
        %v2232 = vperm.slane %v1586, 4
        %v2233 = vmul.f32 %v1559, %v2232
        %v2234 = vmul.f32 %v1560, %v2232
        %v2235 = vmul.f32 %v1561, %v2232
        %v2236 = vmul.f32 %v1562, %v2232
        %v2237 = vmul.f32 %v1563, %v2232
        %v2238 = vmul.f32 %v1564, %v2232
        %v2239 = vmul.f32 %v1565, %v2232
        %v2240 = vmul.f32 %v1566, %v2232
        %v2241 = vmul.f32 %v1567, %v2232
        %v2242 = vmul.f32 %v1568, %v2232
        %v2243 = vmul.f32 %v1569, %v2232
        %v2244 = vmul.f32 %v1570, %v2232
        %v2245 = vmul.f32 %v1571, %v2232
        %v2246 = vmul.f32 %v1572, %v2232
        %v2247 = vmul.f32 %v1573, %v2232
        %v2248 = vmul.f32 %v1574, %v2232
        %v2249 = vmul.f32 %v1575, %v2232
        %v2250 = vmul.f32 %v1576, %v2232
        %v2251 = vadd.f32 %v2214, %v2233
        %v2252 = vadd.f32 %v2215, %v2234
        %v2253 = vadd.f32 %v2216, %v2235
        %v2254 = vadd.f32 %v2217, %v2236
        %v2255 = vadd.f32 %v2218, %v2237
        %v2256 = vadd.f32 %v2219, %v2238
        %v2257 = vadd.f32 %v2220, %v2239
        %v2258 = vadd.f32 %v2221, %v2240
        %v2259 = vadd.f32 %v2222, %v2241
        %v2260 = vadd.f32 %v2223, %v2242
        %v2261 = vadd.f32 %v2224, %v2243
        %v2262 = vadd.f32 %v2225, %v2244
        %v2263 = vadd.f32 %v2226, %v2245
        %v2264 = vadd.f32 %v2227, %v2246
        %v2265 = vadd.f32 %v2228, %v2247
        %v2266 = vadd.f32 %v2229, %v2248
        %v2267 = vadd.f32 %v2230, %v2249
        %v2268 = vadd.f32 %v2231, %v2250
        %v2269 = vperm.slane %v1586, 5
        %v2270 = vmul.f32 %v2013, %v2269
        %v2271 = vmul.f32 %v2015, %v2269
        %v2272 = vmul.f32 %v2018, %v2269
        %v2273 = vmul.f32 %v2020, %v2269
        %v2274 = vmul.f32 %v2023, %v2269
        %v2275 = vmul.f32 %v2025, %v2269
        %v2276 = vmul.f32 %v2028, %v2269
        %v2277 = vmul.f32 %v2030, %v2269
        %v2278 = vmul.f32 %v2033, %v2269
        %v2279 = vmul.f32 %v2035, %v2269
        %v2280 = vmul.f32 %v2038, %v2269
        %v2281 = vmul.f32 %v2040, %v2269
        %v2282 = vmul.f32 %v2043, %v2269
        %v2283 = vmul.f32 %v2045, %v2269
        %v2284 = vmul.f32 %v2048, %v2269
        %v2285 = vmul.f32 %v2050, %v2269
        %v2286 = vmul.f32 %v2053, %v2269
        %v2287 = vmul.f32 %v2055, %v2269
        %v2288 = vadd.f32 %v2251, %v2270
        %v2289 = vadd.f32 %v2252, %v2271
        %v2290 = vadd.f32 %v2253, %v2272
        %v2291 = vadd.f32 %v2254, %v2273
        %v2292 = vadd.f32 %v2255, %v2274
        %v2293 = vadd.f32 %v2256, %v2275
        %v2294 = vadd.f32 %v2257, %v2276
        %v2295 = vadd.f32 %v2258, %v2277
        %v2296 = vadd.f32 %v2259, %v2278
        %v2297 = vadd.f32 %v2260, %v2279
        %v2298 = vadd.f32 %v2261, %v2280
        %v2299 = vadd.f32 %v2262, %v2281
        %v2300 = vadd.f32 %v2263, %v2282
        %v2301 = vadd.f32 %v2264, %v2283
        %v2302 = vadd.f32 %v2265, %v2284
        %v2303 = vadd.f32 %v2266, %v2285
        %v2304 = vadd.f32 %v2267, %v2286
        %v2305 = vadd.f32 %v2268, %v2287
        %v2324 = vunpack.c.l.b16 %v2168
        %v2325 = vunpack.c.h.b16 %v2168
        %v2326 = vunpack.c.l.b16 %v2169
        %v2327 = vunpack.c.h.b16 %v2169
        %v2328 = vunpack.c.l.b16 %v2170
        %v2329 = vunpack.c.h.b16 %v2170
        %v2330 = vunpack.c.l.b16 %v2171
        %v2331 = vunpack.c.h.b16 %v2171
        %v2332 = vunpack.c.l.b16 %v2172
        %v2333 = vunpack.c.h.b16 %v2172
        %v2334 = vunpack.c.l.b16 %v2173
        %v2335 = vunpack.c.h.b16 %v2173
        %v2336 = vunpack.c.l.b16 %v2174
        %v2337 = vunpack.c.h.b16 %v2174
        %v2338 = vunpack.c.l.b16 %v2175
        %v2339 = vunpack.c.h.b16 %v2175
        %v2340 = vunpack.c.l.b16 %v2176
        %v2341 = vunpack.c.h.b16 %v2176
        %v2342 = vunpack.c.l.b16 %v2177
        %v2343 = vunpack.c.h.b16 %v2177
        %v2344 = vunpack.c.l.b16 %v2178
        %v2345 = vunpack.c.h.b16 %v2178
        %v2346 = vunpack.c.l.b16 %v2179
        %v2347 = vunpack.c.h.b16 %v2179
        %v2348 = vunpack.c.l.b16 %v2180
        %v2349 = vunpack.c.h.b16 %v2180
        %v2350 = vunpack.c.l.b16 %v2181
        %v2351 = vunpack.c.h.b16 %v2181
        %v2352 = vunpack.c.l.b16 %v2182
        %v2353 = vunpack.c.h.b16 %v2182
        %v2354 = vunpack.c.l.b16 %v2183
        %v2355 = vunpack.c.h.b16 %v2183
        %v2356 = vunpack.c.l.b16 %v2184
        %v2357 = vunpack.c.h.b16 %v2184
        %v2358 = vunpack.c.l.b16 %v2185
        %v2359 = vunpack.c.h.b16 %v2185
        %v2360 = vpack.c.b16 %v2326, %v2324
        %v2361 = vpack.c.b16 %v2327, %v2325
        %v2362 = vpack.c.b16 %v2330, %v2328
        %v2363 = vpack.c.b16 %v2331, %v2329
        %v2364 = vpack.c.b16 %v2334, %v2332
        %v2365 = vpack.c.b16 %v2335, %v2333
        %v2366 = vpack.c.b16 %v2338, %v2336
        %v2367 = vpack.c.b16 %v2339, %v2337
        %v2368 = vpack.c.b16 %v2342, %v2340
        %v2369 = vpack.c.b16 %v2343, %v2341
        %v2370 = vpack.c.b16 %v2346, %v2344
        %v2371 = vpack.c.b16 %v2347, %v2345
        %v2372 = vpack.c.b16 %v2350, %v2348
        %v2373 = vpack.c.b16 %v2351, %v2349
        %v2374 = vpack.c.b16 %v2354, %v2352
        %v2375 = vpack.c.b16 %v2355, %v2353
        %v2376 = vpack.c.b16 %v2358, %v2356
        %v2377 = vpack.c.b16 %v2359, %v2357
        %v2388 = vsel %vm944, %v2361, 0
        %v2391 = vsel %vm944, %v2363, 0
        %v2394 = vsel %vm944, %v2365, 0
        %v2397 = vsel %vm944, %v2367, 0
        %v2400 = vsel %vm944, %v2369, 0
        %v2403 = vsel %vm944, %v2371, 0
        %v2406 = vsel %vm944, %v2373, 0
        %v2409 = vsel %vm944, %v2375, 0
        %v2412 = vsel %vm944, %v2377, 0
        %2414 = vmatpush.bf16.msra.mxu0 %v2193
        %2415 = vmatpush.bf16.msra.mxu0 %v2192
        %2416 = vmatpush.bf16.msra.mxu0 %v2191
        %2417 = vmatpush.bf16.msra.mxu0 %v2190
        %2418 = vmatpush.bf16.msra.mxu0 %v2189
        %2419 = vmatpush.bf16.msra.mxu0 %v2188
        %2420 = vmatpush.bf16.msra.mxu0 %v2187
        %2421 = vmatpush.bf16.msra.mxu0 %v2186
        %2422 = vmatmul.bf16.gmra.mxu0 %v2360
        %v2423 = vpop.f32.mrf.mxu0
        %v2424 = vadd.f32 %v2288, %v2423
        %v2425 = vpop.f32.mrf.mxu0
        %v2426 = vadd.f32 %v2289, %v2425
        %2427 = vmatmul.bf16.gmra.mxu0 %v2362
        %v2428 = vpop.f32.mrf.mxu0
        %v2429 = vadd.f32 %v2290, %v2428
        %v2430 = vpop.f32.mrf.mxu0
        %v2431 = vadd.f32 %v2291, %v2430
        %2432 = vmatmul.bf16.gmra.mxu0 %v2364
        %v2433 = vpop.f32.mrf.mxu0
        %v2434 = vadd.f32 %v2292, %v2433
        %v2435 = vpop.f32.mrf.mxu0
        %v2436 = vadd.f32 %v2293, %v2435
        %2437 = vmatmul.bf16.gmra.mxu0 %v2366
        %v2438 = vpop.f32.mrf.mxu0
        %v2439 = vadd.f32 %v2294, %v2438
        %v2440 = vpop.f32.mrf.mxu0
        %v2441 = vadd.f32 %v2295, %v2440
        %2442 = vmatmul.bf16.gmra.mxu0 %v2368
        %v2443 = vpop.f32.mrf.mxu0
        %v2444 = vadd.f32 %v2296, %v2443
        %v2445 = vpop.f32.mrf.mxu0
        %v2446 = vadd.f32 %v2297, %v2445
        %2447 = vmatmul.bf16.gmra.mxu0 %v2370
        %v2448 = vpop.f32.mrf.mxu0
        %v2449 = vadd.f32 %v2298, %v2448
        %v2450 = vpop.f32.mrf.mxu0
        %v2451 = vadd.f32 %v2299, %v2450
        %2452 = vmatmul.bf16.gmra.mxu0 %v2372
        %v2453 = vpop.f32.mrf.mxu0
        %v2454 = vadd.f32 %v2300, %v2453
        %v2455 = vpop.f32.mrf.mxu0
        %v2456 = vadd.f32 %v2301, %v2455
        %2457 = vmatmul.bf16.gmra.mxu0 %v2374
        %v2458 = vpop.f32.mrf.mxu0
        %v2459 = vadd.f32 %v2302, %v2458
        %v2460 = vpop.f32.mrf.mxu0
        %v2461 = vadd.f32 %v2303, %v2460
        %2462 = vmatmul.bf16.gmra.mxu0 %v2376
        %v2463 = vpop.f32.mrf.mxu0
        %v2464 = vadd.f32 %v2304, %v2463
        %v2465 = vpop.f32.mrf.mxu0
        %v2466 = vadd.f32 %v2305, %v2465
        %2467 = vdwg.mxu0
        %2468 = vmatpush.bf16.msra.mxu0 0
        %2469 = vmatpush.bf16.msra.mxu0 0
        %2470 = vmatpush.bf16.msra.mxu0 0
        %2471 = vmatpush.bf16.msra.mxu0 0
        %2472 = vmatpush.bf16.msra.mxu0 0
        %2473 = vmatpush.bf16.msra.mxu0 0
        %2474 = vmatpush.bf16.msra.mxu0 0
        %2475 = vmatpush.bf16.msra.mxu0 %v2194
        %2476 = vmatmul.bf16.gmra.mxu0 %v2388
        %v2477 = vpop.f32.mrf.mxu0
        %v2478 = vadd.f32 %v2424, %v2477
        %v2479 = vpop.f32.mrf.mxu0
        %v2480 = vadd.f32 %v2426, %v2479
        %2481 = vmatmul.bf16.gmra.mxu0 %v2391
        %v2482 = vpop.f32.mrf.mxu0
        %v2483 = vadd.f32 %v2429, %v2482
        %v2484 = vpop.f32.mrf.mxu0
        %v2485 = vadd.f32 %v2431, %v2484
        %2486 = vmatmul.bf16.gmra.mxu0 %v2394
        %v2487 = vpop.f32.mrf.mxu0
        %v2488 = vadd.f32 %v2434, %v2487
        %v2489 = vpop.f32.mrf.mxu0
        %v2490 = vadd.f32 %v2436, %v2489
        %2491 = vmatmul.bf16.gmra.mxu0 %v2397
        %v2492 = vpop.f32.mrf.mxu0
        %v2493 = vadd.f32 %v2439, %v2492
        %v2494 = vpop.f32.mrf.mxu0
        %v2495 = vadd.f32 %v2441, %v2494
        %2496 = vmatmul.bf16.gmra.mxu0 %v2400
        %v2497 = vpop.f32.mrf.mxu0
        %v2498 = vadd.f32 %v2444, %v2497
        %v2499 = vpop.f32.mrf.mxu0
        %v2500 = vadd.f32 %v2446, %v2499
        %2501 = vmatmul.bf16.gmra.mxu0 %v2403
        %v2502 = vpop.f32.mrf.mxu0
        %v2503 = vadd.f32 %v2449, %v2502
        %v2504 = vpop.f32.mrf.mxu0
        %v2505 = vadd.f32 %v2451, %v2504
        %2506 = vmatmul.bf16.gmra.mxu0 %v2406
        %v2507 = vpop.f32.mrf.mxu0
        %v2508 = vadd.f32 %v2454, %v2507
        %v2509 = vpop.f32.mrf.mxu0
        %v2510 = vadd.f32 %v2456, %v2509
        %2511 = vmatmul.bf16.gmra.mxu0 %v2409
        %v2512 = vpop.f32.mrf.mxu0
        %v2513 = vadd.f32 %v2459, %v2512
        %v2514 = vpop.f32.mrf.mxu0
        %v2515 = vadd.f32 %v2461, %v2514
        %2516 = vmatmul.bf16.gmra.mxu0 %v2412
        %v2517 = vpop.f32.mrf.mxu0
        %v2518 = vadd.f32 %v2464, %v2517
        %v2519 = vpop.f32.mrf.mxu0
        %v2520 = vadd.f32 %v2466, %v2519
        %2521 = vdwg.mxu0
        %v2522 = vperm.slane %v1586, 6
        %v2523 = vmul.f32 %v1778, %v2522
        %v2524 = vmul.f32 %v1780, %v2522
        %v2525 = vmul.f32 %v1783, %v2522
        %v2526 = vmul.f32 %v1785, %v2522
        %v2527 = vmul.f32 %v1788, %v2522
        %v2528 = vmul.f32 %v1790, %v2522
        %v2529 = vmul.f32 %v1793, %v2522
        %v2530 = vmul.f32 %v1795, %v2522
        %v2531 = vmul.f32 %v1798, %v2522
        %v2532 = vmul.f32 %v1800, %v2522
        %v2533 = vmul.f32 %v1803, %v2522
        %v2534 = vmul.f32 %v1805, %v2522
        %v2535 = vmul.f32 %v1808, %v2522
        %v2536 = vmul.f32 %v1810, %v2522
        %v2537 = vmul.f32 %v1813, %v2522
        %v2538 = vmul.f32 %v1815, %v2522
        %v2539 = vmul.f32 %v1818, %v2522
        %v2540 = vmul.f32 %v1820, %v2522
        %v2541 = vadd.f32 %v2523, 0.0
        %v2542 = vadd.f32 %v2524, 0.0
        %v2543 = vadd.f32 %v2525, 0.0
        %v2544 = vadd.f32 %v2526, 0.0
        %v2545 = vadd.f32 %v2527, 0.0
        %v2546 = vadd.f32 %v2528, 0.0
        %v2547 = vadd.f32 %v2529, 0.0
        %v2548 = vadd.f32 %v2530, 0.0
        %v2549 = vadd.f32 %v2531, 0.0
        %v2550 = vadd.f32 %v2532, 0.0
        %v2551 = vadd.f32 %v2533, 0.0
        %v2552 = vadd.f32 %v2534, 0.0
        %v2553 = vadd.f32 %v2535, 0.0
        %v2554 = vadd.f32 %v2536, 0.0
        %v2555 = vadd.f32 %v2537, 0.0
        %v2556 = vadd.f32 %v2538, 0.0
        %v2557 = vadd.f32 %v2539, 0.0
        %v2558 = vadd.f32 %v2540, 0.0
        %v2559 = vperm.slane %v1586, 7
        %v2560 = vmul.f32 %v1559, %v2559
        %v2561 = vmul.f32 %v1560, %v2559
        %v2562 = vmul.f32 %v1561, %v2559
        %v2563 = vmul.f32 %v1562, %v2559
        %v2564 = vmul.f32 %v1563, %v2559
        %v2565 = vmul.f32 %v1564, %v2559
        %v2566 = vmul.f32 %v1565, %v2559
        %v2567 = vmul.f32 %v1566, %v2559
        %v2568 = vmul.f32 %v1567, %v2559
        %v2569 = vmul.f32 %v1568, %v2559
        %v2570 = vmul.f32 %v1569, %v2559
        %v2571 = vmul.f32 %v1570, %v2559
        %v2572 = vmul.f32 %v1571, %v2559
        %v2573 = vmul.f32 %v1572, %v2559
        %v2574 = vmul.f32 %v1573, %v2559
        %v2575 = vmul.f32 %v1574, %v2559
        %v2576 = vmul.f32 %v1575, %v2559
        %v2577 = vmul.f32 %v1576, %v2559
        %v2578 = vadd.f32 %v2541, %v2560
        %v2579 = vadd.f32 %v2542, %v2561
        %v2580 = vadd.f32 %v2543, %v2562
        %v2581 = vadd.f32 %v2544, %v2563
        %v2582 = vadd.f32 %v2545, %v2564
        %v2583 = vadd.f32 %v2546, %v2565
        %v2584 = vadd.f32 %v2547, %v2566
        %v2585 = vadd.f32 %v2548, %v2567
        %v2586 = vadd.f32 %v2549, %v2568
        %v2587 = vadd.f32 %v2550, %v2569
        %v2588 = vadd.f32 %v2551, %v2570
        %v2589 = vadd.f32 %v2552, %v2571
        %v2590 = vadd.f32 %v2553, %v2572
        %v2591 = vadd.f32 %v2554, %v2573
        %v2592 = vadd.f32 %v2555, %v2574
        %v2593 = vadd.f32 %v2556, %v2575
        %v2594 = vadd.f32 %v2557, %v2576
        %v2595 = vadd.f32 %v2558, %v2577
        %v2596 = vperm.slane %v1587, 0
        %v2597 = vmul.f32 %v2013, %v2596
        %v2598 = vmul.f32 %v2015, %v2596
        %v2599 = vmul.f32 %v2018, %v2596
        %v2600 = vmul.f32 %v2020, %v2596
        %v2601 = vmul.f32 %v2023, %v2596
        %v2602 = vmul.f32 %v2025, %v2596
        %v2603 = vmul.f32 %v2028, %v2596
        %v2604 = vmul.f32 %v2030, %v2596
        %v2605 = vmul.f32 %v2033, %v2596
        %v2606 = vmul.f32 %v2035, %v2596
        %v2607 = vmul.f32 %v2038, %v2596
        %v2608 = vmul.f32 %v2040, %v2596
        %v2609 = vmul.f32 %v2043, %v2596
        %v2610 = vmul.f32 %v2045, %v2596
        %v2611 = vmul.f32 %v2048, %v2596
        %v2612 = vmul.f32 %v2050, %v2596
        %v2613 = vmul.f32 %v2053, %v2596
        %v2614 = vmul.f32 %v2055, %v2596
        %v2615 = vadd.f32 %v2578, %v2597
        %v2616 = vadd.f32 %v2579, %v2598
        %v2617 = vadd.f32 %v2580, %v2599
        %v2618 = vadd.f32 %v2581, %v2600
        %v2619 = vadd.f32 %v2582, %v2601
        %v2620 = vadd.f32 %v2583, %v2602
        %v2621 = vadd.f32 %v2584, %v2603
        %v2622 = vadd.f32 %v2585, %v2604
        %v2623 = vadd.f32 %v2586, %v2605
        %v2624 = vadd.f32 %v2587, %v2606
        %v2625 = vadd.f32 %v2588, %v2607
        %v2626 = vadd.f32 %v2589, %v2608
        %v2627 = vadd.f32 %v2590, %v2609
        %v2628 = vadd.f32 %v2591, %v2610
        %v2629 = vadd.f32 %v2592, %v2611
        %v2630 = vadd.f32 %v2593, %v2612
        %v2631 = vadd.f32 %v2594, %v2613
        %v2632 = vadd.f32 %v2595, %v2614
        %s2633 = scalar_lea.vmem %s6, 144
        %v2634 = vld [vmem:[%s2633] sm:$0xff]
        %v2635 = vld [vmem:[%s2633 + $0x8] sm:$0xff]
        %v2636 = vld [vmem:[%s2633 + $0x10] sm:$0xff]
        %v2637 = vld [vmem:[%s2633 + $0x18] sm:$0xff]
        %v2638 = vld [vmem:[%s2633 + $0x20] sm:$0xff]
        %v2639 = vld [vmem:[%s2633 + $0x28] sm:$0xff]
        %v2640 = vld [vmem:[%s2633 + $0x30] sm:$0xff]
        %v2641 = vld [vmem:[%s2633 + $0x38] sm:$0xff]
        %v2642 = vld [vmem:[%s2633 + $0x40] sm:$0xff]
        %v2643 = vld [vmem:[%s2633 + $0x48] sm:$0xff]
        %v2644 = vld [vmem:[%s2633 + $0x50] sm:$0xff]
        %v2645 = vld [vmem:[%s2633 + $0x58] sm:$0xff]
        %v2646 = vld [vmem:[%s2633 + $0x60] sm:$0xff]
        %v2647 = vld [vmem:[%s2633 + $0x68] sm:$0xff]
        %v2648 = vld [vmem:[%s2633 + $0x70] sm:$0xff]
        %v2649 = vld [vmem:[%s2633 + $0x78] sm:$0xff]
        %v2650 = vld [vmem:[%s2633 + $0x80] sm:$0xff]
        %v2651 = vld [vmem:[%s2633 + $0x88] sm:$0xff]
        %v2652 = vpack.c.bf16 %v2616, %v2615
        %v2653 = vpack.c.bf16 %v2618, %v2617
        %v2654 = vpack.c.bf16 %v2620, %v2619
        %v2655 = vpack.c.bf16 %v2622, %v2621
        %v2656 = vpack.c.bf16 %v2624, %v2623
        %v2657 = vpack.c.bf16 %v2626, %v2625
        %v2658 = vpack.c.bf16 %v2628, %v2627
        %v2659 = vpack.c.bf16 %v2630, %v2629
        %v2660 = vpack.c.bf16 %v2632, %v2631
        %v2679 = vunpack.c.l.b16 %v2634
        %v2680 = vunpack.c.h.b16 %v2634
        %v2681 = vunpack.c.l.b16 %v2635
        %v2682 = vunpack.c.h.b16 %v2635
        %v2683 = vunpack.c.l.b16 %v2636
        %v2684 = vunpack.c.h.b16 %v2636
        %v2685 = vunpack.c.l.b16 %v2637
        %v2686 = vunpack.c.h.b16 %v2637
        %v2687 = vunpack.c.l.b16 %v2638
        %v2688 = vunpack.c.h.b16 %v2638
        %v2689 = vunpack.c.l.b16 %v2639
        %v2690 = vunpack.c.h.b16 %v2639
        %v2691 = vunpack.c.l.b16 %v2640
        %v2692 = vunpack.c.h.b16 %v2640
        %v2693 = vunpack.c.l.b16 %v2641
        %v2694 = vunpack.c.h.b16 %v2641
        %v2695 = vunpack.c.l.b16 %v2642
        %v2696 = vunpack.c.h.b16 %v2642
        %v2697 = vunpack.c.l.b16 %v2643
        %v2698 = vunpack.c.h.b16 %v2643
        %v2699 = vunpack.c.l.b16 %v2644
        %v2700 = vunpack.c.h.b16 %v2644
        %v2701 = vunpack.c.l.b16 %v2645
        %v2702 = vunpack.c.h.b16 %v2645
        %v2703 = vunpack.c.l.b16 %v2646
        %v2704 = vunpack.c.h.b16 %v2646
        %v2705 = vunpack.c.l.b16 %v2647
        %v2706 = vunpack.c.h.b16 %v2647
        %v2707 = vunpack.c.l.b16 %v2648
        %v2708 = vunpack.c.h.b16 %v2648
        %v2709 = vunpack.c.l.b16 %v2649
        %v2710 = vunpack.c.h.b16 %v2649
        %v2711 = vunpack.c.l.b16 %v2650
        %v2712 = vunpack.c.h.b16 %v2650
        %v2713 = vunpack.c.l.b16 %v2651
        %v2714 = vunpack.c.h.b16 %v2651
        %v2715 = vpack.c.b16 %v2681, %v2679
        %v2716 = vpack.c.b16 %v2682, %v2680
        %v2717 = vpack.c.b16 %v2685, %v2683
        %v2718 = vpack.c.b16 %v2686, %v2684
        %v2719 = vpack.c.b16 %v2689, %v2687
        %v2720 = vpack.c.b16 %v2690, %v2688
        %v2721 = vpack.c.b16 %v2693, %v2691
        %v2722 = vpack.c.b16 %v2694, %v2692
        %v2723 = vpack.c.b16 %v2697, %v2695
        %v2724 = vpack.c.b16 %v2698, %v2696
        %v2725 = vpack.c.b16 %v2701, %v2699
        %v2726 = vpack.c.b16 %v2702, %v2700
        %v2727 = vpack.c.b16 %v2705, %v2703
        %v2728 = vpack.c.b16 %v2706, %v2704
        %v2729 = vpack.c.b16 %v2709, %v2707
        %v2730 = vpack.c.b16 %v2710, %v2708
        %v2731 = vpack.c.b16 %v2713, %v2711
        %v2732 = vpack.c.b16 %v2714, %v2712
        %v2743 = vsel %vm944, %v2716, 0
        %v2746 = vsel %vm944, %v2718, 0
        %v2749 = vsel %vm944, %v2720, 0
        %v2752 = vsel %vm944, %v2722, 0
        %v2755 = vsel %vm944, %v2724, 0
        %v2758 = vsel %vm944, %v2726, 0
        %v2761 = vsel %vm944, %v2728, 0
        %v2764 = vsel %vm944, %v2730, 0
        %v2767 = vsel %vm944, %v2732, 0
        %2769 = vmatpush.bf16.msra.mxu0 %v2659
        %2770 = vmatpush.bf16.msra.mxu0 %v2658
        %2771 = vmatpush.bf16.msra.mxu0 %v2657
        %2772 = vmatpush.bf16.msra.mxu0 %v2656
        %2773 = vmatpush.bf16.msra.mxu0 %v2655
        %2774 = vmatpush.bf16.msra.mxu0 %v2654
        %2775 = vmatpush.bf16.msra.mxu0 %v2653
        %2776 = vmatpush.bf16.msra.mxu0 %v2652
        %2777 = vmatmul.bf16.gmra.mxu0 %v2715
        %v2778 = vpop.f32.mrf.mxu0
        %v2779 = vadd.f32 0.0, %v2778
        %v2780 = vpop.f32.mrf.mxu0
        %v2781 = vadd.f32 0.0, %v2780
        %2782 = vmatmul.bf16.gmra.mxu0 %v2717
        %v2783 = vpop.f32.mrf.mxu0
        %v2784 = vadd.f32 0.0, %v2783
        %v2785 = vpop.f32.mrf.mxu0
        %v2786 = vadd.f32 0.0, %v2785
        %2787 = vmatmul.bf16.gmra.mxu0 %v2719
        %v2788 = vpop.f32.mrf.mxu0
        %v2789 = vadd.f32 0.0, %v2788
        %v2790 = vpop.f32.mrf.mxu0
        %v2791 = vadd.f32 0.0, %v2790
        %2792 = vmatmul.bf16.gmra.mxu0 %v2721
        %v2793 = vpop.f32.mrf.mxu0
        %v2794 = vadd.f32 0.0, %v2793
        %v2795 = vpop.f32.mrf.mxu0
        %v2796 = vadd.f32 0.0, %v2795
        %2797 = vmatmul.bf16.gmra.mxu0 %v2723
        %v2798 = vpop.f32.mrf.mxu0
        %v2799 = vadd.f32 0.0, %v2798
        %v2800 = vpop.f32.mrf.mxu0
        %v2801 = vadd.f32 0.0, %v2800
        %2802 = vmatmul.bf16.gmra.mxu0 %v2725
        %v2803 = vpop.f32.mrf.mxu0
        %v2804 = vadd.f32 0.0, %v2803
        %v2805 = vpop.f32.mrf.mxu0
        %v2806 = vadd.f32 0.0, %v2805
        %2807 = vmatmul.bf16.gmra.mxu0 %v2727
        %v2808 = vpop.f32.mrf.mxu0
        %v2809 = vadd.f32 0.0, %v2808
        %v2810 = vpop.f32.mrf.mxu0
        %v2811 = vadd.f32 0.0, %v2810
        %2812 = vmatmul.bf16.gmra.mxu0 %v2729
        %v2813 = vpop.f32.mrf.mxu0
        %v2814 = vadd.f32 0.0, %v2813
        %v2815 = vpop.f32.mrf.mxu0
        %v2816 = vadd.f32 0.0, %v2815
        %2817 = vmatmul.bf16.gmra.mxu0 %v2731
        %v2818 = vpop.f32.mrf.mxu0
        %v2819 = vadd.f32 0.0, %v2818
        %v2820 = vpop.f32.mrf.mxu0
        %v2821 = vadd.f32 0.0, %v2820
        %2822 = vdwg.mxu0
        %2823 = vmatpush.bf16.msra.mxu0 0
        %2824 = vmatpush.bf16.msra.mxu0 0
        %2825 = vmatpush.bf16.msra.mxu0 0
        %2826 = vmatpush.bf16.msra.mxu0 0
        %2827 = vmatpush.bf16.msra.mxu0 0
        %2828 = vmatpush.bf16.msra.mxu0 0
        %2829 = vmatpush.bf16.msra.mxu0 0
        %2830 = vmatpush.bf16.msra.mxu0 %v2660
        %2831 = vmatmul.bf16.gmra.mxu0 %v2743
        %v2832 = vpop.f32.mrf.mxu0
        %v2833 = vadd.f32 %v2779, %v2832
        %v2834 = vpop.f32.mrf.mxu0
        %v2835 = vadd.f32 %v2781, %v2834
        %2836 = vmatmul.bf16.gmra.mxu0 %v2746
        %v2837 = vpop.f32.mrf.mxu0
        %v2838 = vadd.f32 %v2784, %v2837
        %v2839 = vpop.f32.mrf.mxu0
        %v2840 = vadd.f32 %v2786, %v2839
        %2841 = vmatmul.bf16.gmra.mxu0 %v2749
        %v2842 = vpop.f32.mrf.mxu0
        %v2843 = vadd.f32 %v2789, %v2842
        %v2844 = vpop.f32.mrf.mxu0
        %v2845 = vadd.f32 %v2791, %v2844
        %2846 = vmatmul.bf16.gmra.mxu0 %v2752
        %v2847 = vpop.f32.mrf.mxu0
        %v2848 = vadd.f32 %v2794, %v2847
        %v2849 = vpop.f32.mrf.mxu0
        %v2850 = vadd.f32 %v2796, %v2849
        %2851 = vmatmul.bf16.gmra.mxu0 %v2755
        %v2852 = vpop.f32.mrf.mxu0
        %v2853 = vadd.f32 %v2799, %v2852
        %v2854 = vpop.f32.mrf.mxu0
        %v2855 = vadd.f32 %v2801, %v2854
        %2856 = vmatmul.bf16.gmra.mxu0 %v2758
        %v2857 = vpop.f32.mrf.mxu0
        %v2858 = vadd.f32 %v2804, %v2857
        %v2859 = vpop.f32.mrf.mxu0
        %v2860 = vadd.f32 %v2806, %v2859
        %2861 = vmatmul.bf16.gmra.mxu0 %v2761
        %v2862 = vpop.f32.mrf.mxu0
        %v2863 = vadd.f32 %v2809, %v2862
        %v2864 = vpop.f32.mrf.mxu0
        %v2865 = vadd.f32 %v2811, %v2864
        %2866 = vmatmul.bf16.gmra.mxu0 %v2764
        %v2867 = vpop.f32.mrf.mxu0
        %v2868 = vadd.f32 %v2814, %v2867
        %v2869 = vpop.f32.mrf.mxu0
        %v2870 = vadd.f32 %v2816, %v2869
        %2871 = vmatmul.bf16.gmra.mxu0 %v2767
        %v2872 = vpop.f32.mrf.mxu0
        %v2873 = vadd.f32 %v2819, %v2872
        %v2874 = vpop.f32.mrf.mxu0
        %v2875 = vadd.f32 %v2821, %v2874
        %2876 = vdwg.mxu0
        %v2877 = vadd.f32 %v2478, %v2833
        %v2878 = vadd.f32 %v2480, %v2835
        %v2879 = vadd.f32 %v2483, %v2838
        %v2880 = vadd.f32 %v2485, %v2840
        %v2881 = vadd.f32 %v2488, %v2843
        %v2882 = vadd.f32 %v2490, %v2845
        %v2883 = vadd.f32 %v2493, %v2848
        %v2884 = vadd.f32 %v2495, %v2850
        %v2885 = vadd.f32 %v2498, %v2853
        %v2886 = vadd.f32 %v2500, %v2855
        %v2887 = vadd.f32 %v2503, %v2858
        %v2888 = vadd.f32 %v2505, %v2860
        %v2889 = vadd.f32 %v2508, %v2863
        %v2890 = vadd.f32 %v2510, %v2865
        %v2891 = vadd.f32 %v2513, %v2868
        %v2892 = vadd.f32 %v2515, %v2870
        %v2893 = vadd.f32 %v2518, %v2873
        %v2894 = vadd.f32 %v2520, %v2875
        %v2895 = vadd.f32 %v1559, %v2877
        %v2896 = vadd.f32 %v1560, %v2878
        %v2897 = vadd.f32 %v1561, %v2879
        %v2898 = vadd.f32 %v1562, %v2880
        %v2899 = vadd.f32 %v1563, %v2881
        %v2900 = vadd.f32 %v1564, %v2882
        %v2901 = vadd.f32 %v1565, %v2883
        %v2902 = vadd.f32 %v1566, %v2884
        %v2903 = vadd.f32 %v1567, %v2885
        %v2904 = vadd.f32 %v1568, %v2886
        %v2905 = vadd.f32 %v1569, %v2887
        %v2906 = vadd.f32 %v1570, %v2888
        %v2907 = vadd.f32 %v1571, %v2889
        %v2908 = vadd.f32 %v1572, %v2890
        %v2909 = vadd.f32 %v1573, %v2891
        %v2910 = vadd.f32 %v1574, %v2892
        %v2911 = vadd.f32 %v1575, %v2893
        %v2912 = vadd.f32 %v1576, %v2894
        %v2913 = vpack.c.bf16 %v2896, %v2895
        %v2914 = vpack.c.bf16 %v2898, %v2897
        %v2915 = vpack.c.bf16 %v2900, %v2899
        %v2916 = vpack.c.bf16 %v2902, %v2901
        %v2917 = vpack.c.bf16 %v2904, %v2903
        %v2918 = vpack.c.bf16 %v2906, %v2905
        %v2919 = vpack.c.bf16 %v2908, %v2907
        %v2920 = vpack.c.bf16 %v2910, %v2909
        %v2921 = vpack.c.bf16 %v2912, %v2911
        %v2922 = vld [vmem:[%s8] sm:$0xf]
        %v2923 = vld [vmem:[%s8 + $0x4] sm:$0xf]
        %v2924 = vld [vmem:[%s8 + $0x8] sm:$0xf]
        %v2925 = vld [vmem:[%s8 + $0xc] sm:$0xf]
        %v2926 = vld [vmem:[#allocation4] sm:$0x1]
        %v2928 = vperm.slane %v2926, 0
        %v2934 = vunpack.c.l.b16 %v2922
        %v2935 = vunpack.c.l.b16 %v2923
        %v2936 = vunpack.c.l.b16 %v2924
        %v2937 = vunpack.c.l.b16 %v2925
        %v2938 = vpack.c.b16 %v2935, %v2934
        %v2939 = vpack.c.b16 %v2937, %v2936
        %v2943 = vsel %vm556, %v2913, 0
        %v2946 = vsel %vm556, %v2914, 0
        %v2949 = vsel %vm556, %v2915, 0
        %v2952 = vsel %vm556, %v2916, 0
        %v2955 = vsel %vm556, %v2917, 0
        %v2958 = vsel %vm556, %v2918, 0
        %v2961 = vsel %vm556, %v2919, 0
        %v2964 = vsel %vm556, %v2920, 0
        %v2967 = vsel %vm556, %v2921, 0
        %2969 = vmatpush.bf16.msra.mxu0 0
        %2970 = vmatpush.bf16.msra.mxu0 0
        %2971 = vmatpush.bf16.msra.mxu0 0
        %2972 = vmatpush.bf16.msra.mxu0 0
        %2973 = vmatpush.bf16.msra.mxu0 0
        %2974 = vmatpush.bf16.msra.mxu0 0
        %2975 = vmatpush.bf16.msra.mxu0 %v2939
        %2976 = vmatpush.bf16.msra.mxu0 %v2938
        %2977 = vmatmul.bf16.gmra.mxu0 %v2943
        %v2978 = vpop.f32.mrf.mxu0
        %v2979 = vadd.f32 %v2928, %v2978
        %v2980 = vpop.f32.mrf.mxu0
        %v2981 = vadd.f32 %v2928, %v2980
        %2982 = vmatmul.bf16.gmra.mxu0 %v2946
        %v2983 = vpop.f32.mrf.mxu0
        %v2984 = vadd.f32 %v2928, %v2983
        %v2985 = vpop.f32.mrf.mxu0
        %v2986 = vadd.f32 %v2928, %v2985
        %2987 = vmatmul.bf16.gmra.mxu0 %v2949
        %v2988 = vpop.f32.mrf.mxu0
        %v2989 = vadd.f32 %v2928, %v2988
        %v2990 = vpop.f32.mrf.mxu0
        %v2991 = vadd.f32 %v2928, %v2990
        %2992 = vmatmul.bf16.gmra.mxu0 %v2952
        %v2993 = vpop.f32.mrf.mxu0
        %v2994 = vadd.f32 %v2928, %v2993
        %v2995 = vpop.f32.mrf.mxu0
        %v2996 = vadd.f32 %v2928, %v2995
        %2997 = vmatmul.bf16.gmra.mxu0 %v2955
        %v2998 = vpop.f32.mrf.mxu0
        %v2999 = vadd.f32 %v2928, %v2998
        %v3000 = vpop.f32.mrf.mxu0
        %v3001 = vadd.f32 %v2928, %v3000
        %3002 = vmatmul.bf16.gmra.mxu0 %v2958
        %v3003 = vpop.f32.mrf.mxu0
        %v3004 = vadd.f32 %v2928, %v3003
        %v3005 = vpop.f32.mrf.mxu0
        %v3006 = vadd.f32 %v2928, %v3005
        %3007 = vmatmul.bf16.gmra.mxu0 %v2961
        %v3008 = vpop.f32.mrf.mxu0
        %v3009 = vadd.f32 %v2928, %v3008
        %v3010 = vpop.f32.mrf.mxu0
        %v3011 = vadd.f32 %v2928, %v3010
        %3012 = vmatmul.bf16.gmra.mxu0 %v2964
        %v3013 = vpop.f32.mrf.mxu0
        %v3014 = vadd.f32 %v2928, %v3013
        %v3015 = vpop.f32.mrf.mxu0
        %v3016 = vadd.f32 %v2928, %v3015
        %3017 = vmatmul.bf16.gmra.mxu0 %v2967
        %v3018 = vpop.f32.mrf.mxu0
        %v3019 = vadd.f32 %v2928, %v3018
        %v3020 = vpop.f32.mrf.mxu0
        %v3021 = vadd.f32 %v2928, %v3020
        %3022 = vdwg.mxu0
        %v3023 = vmax.f32 %v2979, 0.0
        %v3024 = vmax.f32 %v2981, 0.0
        %v3025 = vmax.f32 %v2984, 0.0
        %v3026 = vmax.f32 %v2986, 0.0
        %v3027 = vmax.f32 %v2989, 0.0
        %v3028 = vmax.f32 %v2991, 0.0
        %v3029 = vmax.f32 %v2994, 0.0
        %v3030 = vmax.f32 %v2996, 0.0
        %v3031 = vmax.f32 %v2999, 0.0
        %v3032 = vmax.f32 %v3001, 0.0
        %v3033 = vmax.f32 %v3004, 0.0
        %v3034 = vmax.f32 %v3006, 0.0
        %v3035 = vmax.f32 %v3009, 0.0
        %v3036 = vmax.f32 %v3011, 0.0
        %v3037 = vmax.f32 %v3014, 0.0
        %v3038 = vmax.f32 %v3016, 0.0
        %v3039 = vmax.f32 %v3019, 0.0
        %v3040 = vmax.f32 %v3021, 0.0
        %v3041 = vmin.f32 %v3023, 6.0
        %v3042 = vmin.f32 %v3024, 6.0
        %v3043 = vmin.f32 %v3025, 6.0
        %v3044 = vmin.f32 %v3026, 6.0
        %v3045 = vmin.f32 %v3027, 6.0
        %v3046 = vmin.f32 %v3028, 6.0
        %v3047 = vmin.f32 %v3029, 6.0
        %v3048 = vmin.f32 %v3030, 6.0
        %v3049 = vmin.f32 %v3031, 6.0
        %v3050 = vmin.f32 %v3032, 6.0
        %v3051 = vmin.f32 %v3033, 6.0
        %v3052 = vmin.f32 %v3034, 6.0
        %v3053 = vmin.f32 %v3035, 6.0
        %v3054 = vmin.f32 %v3036, 6.0
        %v3055 = vmin.f32 %v3037, 6.0
        %v3056 = vmin.f32 %v3038, 6.0
        %v3057 = vmin.f32 %v3039, 6.0
        %v3058 = vmin.f32 %v3040, 6.0
        %v3059 = vpack.c.bf16 %v3042, %v3041
        %v3060 = vpack.c.bf16 %v3044, %v3043
        %v3061 = vpack.c.bf16 %v3046, %v3045
        %v3062 = vpack.c.bf16 %v3048, %v3047
        %v3063 = vpack.c.bf16 %v3050, %v3049
        %v3064 = vpack.c.bf16 %v3052, %v3051
        %v3065 = vpack.c.bf16 %v3054, %v3053
        %v3066 = vpack.c.bf16 %v3056, %v3055
        %v3067 = vpack.c.bf16 %v3058, %v3057
        %v3068 = vld [vmem:[%s10] sm:$0xf]
        %v3069 = vld [vmem:[%s10 + $0x4] sm:$0xf]
        %v3070 = vld [vmem:[%s10 + $0x8] sm:$0xf]
        %v3071 = vld [vmem:[%s10 + $0xc] sm:$0xf]
        %v3072 = vld [vmem:[%s10 + $0x10] sm:$0xf]
        %v3073 = vld [vmem:[%s10 + $0x14] sm:$0xf]
        %v3074 = vld [vmem:[%s10 + $0x18] sm:$0xf]
        %v3075 = vld [vmem:[%s10 + $0x1c] sm:$0xf]
        %v3076 = vld [vmem:[#allocation6] sm:$0x1]
        %v3078 = vperm.slane %v3076, 0
        %v3088 = vunpack.c.l.b16 %v3068
        %v3089 = vunpack.c.l.b16 %v3069
        %v3090 = vunpack.c.l.b16 %v3070
        %v3091 = vunpack.c.l.b16 %v3071
        %v3092 = vunpack.c.l.b16 %v3072
        %v3093 = vunpack.c.l.b16 %v3073
        %v3094 = vunpack.c.l.b16 %v3074
        %v3095 = vunpack.c.l.b16 %v3075
        %v3096 = vpack.c.b16 %v3089, %v3088
        %v3097 = vpack.c.b16 %v3091, %v3090
        %v3098 = vpack.c.b16 %v3093, %v3092
        %v3099 = vpack.c.b16 %v3095, %v3094
        %vm3104 = vcmask 523264
        %v3106 = vsel %vm3104, %v3059, 0
        %v3109 = vsel %vm3104, %v3060, 0
        %v3112 = vsel %vm3104, %v3061, 0
        %v3115 = vsel %vm3104, %v3062, 0
        %v3118 = vsel %vm3104, %v3063, 0
        %v3121 = vsel %vm3104, %v3064, 0
        %v3124 = vsel %vm3104, %v3065, 0
        %v3127 = vsel %vm3104, %v3066, 0
        %v3130 = vsel %vm3104, %v3067, 0
        %3132 = vmatpush.bf16.msra.mxu0 0
        %3133 = vmatpush.bf16.msra.mxu0 0
        %3134 = vmatpush.bf16.msra.mxu0 0
        %3135 = vmatpush.bf16.msra.mxu0 0
        %3136 = vmatpush.bf16.msra.mxu0 %v3099
        %3137 = vmatpush.bf16.msra.mxu0 %v3098
        %3138 = vmatpush.bf16.msra.mxu0 %v3097
        %3139 = vmatpush.bf16.msra.mxu0 %v3096
        %3140 = vmatmul.bf16.gmra.mxu0 %v3106
        %v3141 = vpop.f32.mrf.mxu0
        %v3142 = vadd.f32 %v3078, %v3141
        %v3143 = vpop.f32.mrf.mxu0
        %v3144 = vadd.f32 %v3078, %v3143
        %3145 = vmatmul.bf16.gmra.mxu0 %v3109
        %v3146 = vpop.f32.mrf.mxu0
        %v3147 = vadd.f32 %v3078, %v3146
        %v3148 = vpop.f32.mrf.mxu0
        %v3149 = vadd.f32 %v3078, %v3148
        %3150 = vmatmul.bf16.gmra.mxu0 %v3112
        %v3151 = vpop.f32.mrf.mxu0
        %v3152 = vadd.f32 %v3078, %v3151
        %v3153 = vpop.f32.mrf.mxu0
        %v3154 = vadd.f32 %v3078, %v3153
        %3155 = vmatmul.bf16.gmra.mxu0 %v3115
        %v3156 = vpop.f32.mrf.mxu0
        %v3157 = vadd.f32 %v3078, %v3156
        %v3158 = vpop.f32.mrf.mxu0
        %v3159 = vadd.f32 %v3078, %v3158
        %3160 = vmatmul.bf16.gmra.mxu0 %v3118
        %v3161 = vpop.f32.mrf.mxu0
        %v3162 = vadd.f32 %v3078, %v3161
        %v3163 = vpop.f32.mrf.mxu0
        %v3164 = vadd.f32 %v3078, %v3163
        %3165 = vmatmul.bf16.gmra.mxu0 %v3121
        %v3166 = vpop.f32.mrf.mxu0
        %v3167 = vadd.f32 %v3078, %v3166
        %v3168 = vpop.f32.mrf.mxu0
        %v3169 = vadd.f32 %v3078, %v3168
        %3170 = vmatmul.bf16.gmra.mxu0 %v3124
        %v3171 = vpop.f32.mrf.mxu0
        %v3172 = vadd.f32 %v3078, %v3171
        %v3173 = vpop.f32.mrf.mxu0
        %v3174 = vadd.f32 %v3078, %v3173
        %3175 = vmatmul.bf16.gmra.mxu0 %v3127
        %v3176 = vpop.f32.mrf.mxu0
        %v3177 = vadd.f32 %v3078, %v3176
        %v3178 = vpop.f32.mrf.mxu0
        %v3179 = vadd.f32 %v3078, %v3178
        %3180 = vmatmul.bf16.gmra.mxu0 %v3130
        %v3181 = vpop.f32.mrf.mxu0
        %v3182 = vadd.f32 %v3078, %v3181
        %v3183 = vpop.f32.mrf.mxu0
        %v3184 = vadd.f32 %v3078, %v3183
        %3185 = vdwg.mxu0
        %v3186 = vadd.f32 %v2895, %v3142
        %v3187 = vadd.f32 %v2896, %v3144
        %v3188 = vadd.f32 %v2897, %v3147
        %v3189 = vadd.f32 %v2898, %v3149
        %v3190 = vadd.f32 %v2899, %v3152
        %v3191 = vadd.f32 %v2900, %v3154
        %v3192 = vadd.f32 %v2901, %v3157
        %v3193 = vadd.f32 %v2902, %v3159
        %v3194 = vadd.f32 %v2903, %v3162
        %v3195 = vadd.f32 %v2904, %v3164
        %v3196 = vadd.f32 %v2905, %v3167
        %v3197 = vadd.f32 %v2906, %v3169
        %v3198 = vadd.f32 %v2907, %v3172
        %v3199 = vadd.f32 %v2908, %v3174
        %v3200 = vadd.f32 %v2909, %v3177
        %v3201 = vadd.f32 %v2910, %v3179
        %v3202 = vadd.f32 %v2911, %v3182
        %v3203 = vadd.f32 %v2912, %v3184
        %v3204 = vpack.c.bf16 %v3186, %v3186
        %v3205 = vpack.c.bf16 %v3187, %v3187
        %v3206 = vpack.c.bf16 %v3188, %v3188
        %v3207 = vpack.c.bf16 %v3189, %v3189
        %v3208 = vpack.c.bf16 %v3190, %v3190
        %v3209 = vpack.c.bf16 %v3191, %v3191
        %v3210 = vpack.c.bf16 %v3192, %v3192
        %v3211 = vpack.c.bf16 %v3193, %v3193
        %v3212 = vpack.c.bf16 %v3194, %v3194
        %v3213 = vpack.c.bf16 %v3195, %v3195
        %v3214 = vpack.c.bf16 %v3196, %v3196
        %v3215 = vpack.c.bf16 %v3197, %v3197
        %v3216 = vpack.c.bf16 %v3198, %v3198
        %v3217 = vpack.c.bf16 %v3199, %v3199
        %v3218 = vpack.c.bf16 %v3200, %v3200
        %v3219 = vpack.c.bf16 %v3201, %v3201
        %v3220 = vpack.c.bf16 %v3202, %v3202
        %v3221 = vpack.c.bf16 %v3203, %v3203
        %vm3222 = vcmask 257024
        %3223 = vst.msk [vmem:[%s457] sm:$0xf] %vm3222, %v3204
        %3224 = vst.msk [vmem:[%s457 + $0x4] sm:$0xf] %vm3222, %v3205
        %3225 = vst.msk [vmem:[%s457 + $0x8] sm:$0xf] %vm3222, %v3206
        %3226 = vst.msk [vmem:[%s457 + $0xc] sm:$0xf] %vm3222, %v3207
        %3227 = vst.msk [vmem:[%s457 + $0x10] sm:$0xf] %vm3222, %v3208
        %3228 = vst.msk [vmem:[%s457 + $0x14] sm:$0xf] %vm3222, %v3209
        %3229 = vst.msk [vmem:[%s457 + $0x18] sm:$0xf] %vm3222, %v3210
        %3230 = vst.msk [vmem:[%s457 + $0x1c] sm:$0xf] %vm3222, %v3211
        %3231 = vst.msk [vmem:[%s457 + $0x20] sm:$0xf] %vm3222, %v3212
        %3232 = vst.msk [vmem:[%s457 + $0x24] sm:$0xf] %vm3222, %v3213
        %3233 = vst.msk [vmem:[%s457 + $0x28] sm:$0xf] %vm3222, %v3214
        %3234 = vst.msk [vmem:[%s457 + $0x2c] sm:$0xf] %vm3222, %v3215
        %3235 = vst.msk [vmem:[%s457 + $0x30] sm:$0xf] %vm3222, %v3216
        %3236 = vst.msk [vmem:[%s457 + $0x34] sm:$0xf] %vm3222, %v3217
        %3237 = vst.msk [vmem:[%s457 + $0x38] sm:$0xf] %vm3222, %v3218
        %3238 = vst.msk [vmem:[%s457 + $0x3c] sm:$0xf] %vm3222, %v3219
        %3239 = vst.msk [vmem:[%s457 + $0x40] sm:$0xf] %vm3222, %v3220
        %3240 = vst.msk [vmem:[%s457 + $0x44] sm:$0xf] %vm3222, %v3221
        %p3241 = scmp.lt.s32.totalorder %s25, 1
        %s3242 = scalar_select %p3241, %s25, 1
        %s3243 = smul.addr %s3242, 18
        %s3244 = smul.addr %s3243, 4
        %s3245 = scalar_lea.vmem %s12, %s3244
        // Predicated region
        $region81: #{_lambda_.16} parent=67 // pred_check
          %p3246 = pneg %p300
        $region82: #{_lambda_.16} parent=67 // pred_check_branch
          %3248 = sbr.rel (%p3246) target = $region84
        $region83: #{_lambda_.16} parent=67 // pred_region
          _
        $region84: #{_lambda_.16} parent=67 // pred_fallthru
          _
      $region68: #{_lambda_.16} parent=5 // pred_fallthru
        _
      %p3249 = scmp.le.s32.totalorder 2, %s20
      // Predicated region
      $region85: #{_lambda_.16} parent=5 // pred_check
        %p3250 = pneg %p3249
      $region86: #{_lambda_.16} parent=5 // pred_check_branch
        %3252 = sbr.rel (%p3250) target = $region88
      $region87: #{_lambda_.16} parent=5 // pred_region
        %s3253 = ssub.s32 %s20, 2
        // Predicated region
        $region89: #{_lambda_.16} parent=87 // pred_check
          %p3254 = pneg %p306
        $region90: #{_lambda_.16} parent=87 // pred_check_branch
          %3256 = sbr.rel (%p3254) target = $region92
        $region91: #{_lambda_.16} parent=87 // pred_region
          %p3257 = scmp.lt.s32.totalorder %s26, 1
          %s3258 = scalar_select %p3257, %s26, 1
          %s3259 = smul.addr %s3258, 18
          %s3260 = smul.addr %s3259, 4
          %s3261 = scalar_lea.vmem %s12, %s3260
        $region92: #{_lambda_.16} parent=87 // pred_fallthru
          _
      $region88: #{_lambda_.16} parent=5 // pred_fallthru
        _
    $region6: #{_lambda_.16} parent=1 // loop_footer
      %s24 = sadd.s32 1, %s20
    $region7: #{_lambda_.16} parent=1 // loop_footer_branch
      %19 = sbr.rel target = $region3
    $region8: #{_lambda_.16} parent=1 // loop_exit
      _
    %3262 = vsyncpa [#allocation3], 1
    %s3263 = scalar_lea.sflag [#allocation3], 1
    %3264 = vsyncpa %s3263, 1
    %3265 = vsyncpa [#allocation5], 1

// kernel: _lambda_.17
$region0: #{_lambda_.17}
  #allocation0 [shape = 'u32[]', space=smem, size = 0x4, offset = 0x4, fixed_abs, tag = 'smem constant byte address 0x4 - core index']
  #allocation1 [shape = 'u32[72,128]{1,0:T(1,128)}', space=vmem, size = 0x9000, scoped, tag = 'internal scratch']
  %s0 = inlined_call_operand.vmem [shape: bf16[72,128], index: 0, kind: input, shape index: {}]
  %s1 = inlined_call_operand.vmem [shape: bf16[128,64], index: 1, kind: input, shape index: {}]
  %s2 = inlined_call_operand.vmem [shape: f32[1,64], index: 2, kind: input, shape index: {}]
  %s3 = inlined_call_operand.vmem [shape: bf16[72,64], index: 3, kind: output, shape index: {}]
  %s4 = sld [smem:[#allocation0]]
  $region22: #{_lambda_.17} parent=0
    _
  %s6 = ssub.s32 1, %s4
  %s7 = scalar_select 0, %s6, %s4
  // Predicated region
  $region2: #{_lambda_.17} parent=0 // pred_check
    _
  $region3: #{_lambda_.17} parent=0 // pred_check_branch
    %9 = sbr.rel (0) target = $region5
  $region4: #{_lambda_.17} parent=0 // pred_region
    _
  $region5: #{_lambda_.17} parent=0 // pred_fallthru
    _
  // Predicated region
  $region6: #{_lambda_.17} parent=0 // pred_check
    _
  $region7: #{_lambda_.17} parent=0 // pred_check_branch
    %11 = sbr.rel (0) target = $region9
  $region8: #{_lambda_.17} parent=0 // pred_region
    _
  $region9: #{_lambda_.17} parent=0 // pred_fallthru
    _
  // Predicated region
  $region10: #{_lambda_.17} parent=0 // pred_check
    _
  $region11: #{_lambda_.17} parent=0 // pred_check_branch
    %13 = sbr.rel (0) target = $region13
  $region12: #{_lambda_.17} parent=0 // pred_region
    _
  $region13: #{_lambda_.17} parent=0 // pred_fallthru
    _
  %v14 = vld [vmem:[%s0] sm:$0xf]
  %v15 = vld [vmem:[%s0 + $0x4] sm:$0xf]
  %v16 = vld [vmem:[%s0 + $0x8] sm:$0xf]
  %v17 = vld [vmem:[%s0 + $0xc] sm:$0xf]
  %v18 = vld [vmem:[%s0 + $0x10] sm:$0xf]
  %v19 = vld [vmem:[%s0 + $0x14] sm:$0xf]
  %v20 = vld [vmem:[%s0 + $0x18] sm:$0xf]
  %v21 = vld [vmem:[%s0 + $0x1c] sm:$0xf]
  %v22 = vld [vmem:[%s0 + $0x20] sm:$0xf]
  %v23 = vld [vmem:[%s1] sm:$0xf]
  %v24 = vld [vmem:[%s1 + $0x4] sm:$0xf]
  %v25 = vld [vmem:[%s1 + $0x8] sm:$0xf]
  %v26 = vld [vmem:[%s1 + $0xc] sm:$0xf]
  %v27 = vld [vmem:[%s1 + $0x10] sm:$0xf]
  %v28 = vld [vmem:[%s1 + $0x14] sm:$0xf]
  %v29 = vld [vmem:[%s1 + $0x18] sm:$0xf]
  %v30 = vld [vmem:[%s1 + $0x1c] sm:$0xf]
  %v31 = vld [vmem:[%s1 + $0x20] sm:$0xf]
  %v32 = vld [vmem:[%s1 + $0x24] sm:$0xf]
  %v33 = vld [vmem:[%s1 + $0x28] sm:$0xf]
  %v34 = vld [vmem:[%s1 + $0x2c] sm:$0xf]
  %v35 = vld [vmem:[%s1 + $0x30] sm:$0xf]
  %v36 = vld [vmem:[%s1 + $0x34] sm:$0xf]
  %v37 = vld [vmem:[%s1 + $0x38] sm:$0xf]
  %v38 = vld [vmem:[%s1 + $0x3c] sm:$0xf]
  %v39 = vld [vmem:[%s2] sm:$0x1]
  %v41 = vperm.slane %v39, 0
  %v52 = vunpack.c.l.b16 %v14
  %v53 = vunpack.c.l.b16 %v15
  %v54 = vunpack.c.l.b16 %v16
  %v55 = vunpack.c.l.b16 %v17
  %v56 = vunpack.c.l.b16 %v18
  %v57 = vunpack.c.l.b16 %v19
  %v58 = vunpack.c.l.b16 %v20
  %v59 = vunpack.c.l.b16 %v21
  %v60 = vunpack.c.l.b16 %v22
  %v61 = vpack.c.b16 %v53, %v52
  %v62 = vpack.c.b16 %v55, %v54
  %v63 = vpack.c.b16 %v57, %v56
  %v64 = vpack.c.b16 %v59, %v58
  %v65 = vpack.c.b16 %v60, %v60
  %v87 = vunpack.c.l.b16 %v23
  %v88 = vunpack.c.l.b16 %v24
  %v89 = vunpack.c.l.b16 %v25
  %v90 = vunpack.c.l.b16 %v26
  %v91 = vunpack.c.l.b16 %v27
  %v92 = vunpack.c.l.b16 %v28
  %v93 = vunpack.c.l.b16 %v29
  %v94 = vunpack.c.l.b16 %v30
  %v95 = vunpack.c.l.b16 %v31
  %v96 = vunpack.c.l.b16 %v32
  %v97 = vunpack.c.l.b16 %v33
  %v98 = vunpack.c.l.b16 %v34
  %v99 = vunpack.c.l.b16 %v35
  %v100 = vunpack.c.l.b16 %v36
  %v101 = vunpack.c.l.b16 %v37
  %v102 = vunpack.c.l.b16 %v38
  %v103 = vpack.c.b16 %v88, %v87
  %v104 = vpack.c.b16 %v90, %v89
  %v105 = vpack.c.b16 %v92, %v91
  %v106 = vpack.c.b16 %v94, %v93
  %v107 = vpack.c.b16 %v96, %v95
  %v108 = vpack.c.b16 %v98, %v97
  %v109 = vpack.c.b16 %v100, %v99
  %v110 = vpack.c.b16 %v102, %v101
  %119 = vmatpush.bf16.msra.mxu0 %v110
  %120 = vmatpush.bf16.msra.mxu0 %v109
  %121 = vmatpush.bf16.msra.mxu0 %v108
  %122 = vmatpush.bf16.msra.mxu0 %v107
  %123 = vmatpush.bf16.msra.mxu0 %v106
  %124 = vmatpush.bf16.msra.mxu0 %v105
  %125 = vmatpush.bf16.msra.mxu0 %v104
  %126 = vmatpush.bf16.msra.mxu0 %v103
  %127 = vmatmul.bf16.gmra.mxu0 %v61
  %v128 = vpop.f32.mrf.mxu0
  %v129 = vadd.f32 %v41, %v128
  %v130 = vpop.f32.mrf.mxu0
  %v131 = vadd.f32 %v41, %v130
  %132 = vmatmul.bf16.gmra.mxu0 %v62
  %v133 = vpop.f32.mrf.mxu0
  %v134 = vadd.f32 %v41, %v133
  %v135 = vpop.f32.mrf.mxu0
  %v136 = vadd.f32 %v41, %v135
  %137 = vmatmul.bf16.gmra.mxu0 %v63
  %v138 = vpop.f32.mrf.mxu0
  %v139 = vadd.f32 %v41, %v138
  %v140 = vpop.f32.mrf.mxu0
  %v141 = vadd.f32 %v41, %v140
  %142 = vmatmul.bf16.gmra.mxu0 %v64
  %v143 = vpop.f32.mrf.mxu0
  %v144 = vadd.f32 %v41, %v143
  %v145 = vpop.f32.mrf.mxu0
  %v146 = vadd.f32 %v41, %v145
  %147 = vmatmul.bf16.gmra.mxu0 %v65
  %v148 = vpop.f32.mrf.mxu0
  %v149 = vadd.f32 %v41, %v148
  %v150 = vpop.f32.mrf.mxu0
  %151 = vdwg.mxu0
  %v152 = vpack.c.bf16 %v129, %v129
  %v153 = vpack.c.bf16 %v131, %v131
  %v154 = vpack.c.bf16 %v134, %v134
  %v155 = vpack.c.bf16 %v136, %v136
  %v156 = vpack.c.bf16 %v139, %v139
  %v157 = vpack.c.bf16 %v141, %v141
  %v158 = vpack.c.bf16 %v144, %v144
  %v159 = vpack.c.bf16 %v146, %v146
  %v160 = vpack.c.bf16 %v149, %v149
  %vm161 = vcmask 519168
  %162 = vst.msk [vmem:[%s3] sm:$0xf] %vm161, %v152
  %163 = vst.msk [vmem:[%s3 + $0x4] sm:$0xf] %vm161, %v153
  %164 = vst.msk [vmem:[%s3 + $0x8] sm:$0xf] %vm161, %v154
  %165 = vst.msk [vmem:[%s3 + $0xc] sm:$0xf] %vm161, %v155
  %166 = vst.msk [vmem:[%s3 + $0x10] sm:$0xf] %vm161, %v156
  %167 = vst.msk [vmem:[%s3 + $0x14] sm:$0xf] %vm161, %v157
  %168 = vst.msk [vmem:[%s3 + $0x18] sm:$0xf] %vm161, %v158
  %169 = vst.msk [vmem:[%s3 + $0x1c] sm:$0xf] %vm161, %v159
  %170 = vst.msk [vmem:[%s3 + $0x20] sm:$0xf] %vm161, %v160
  // Predicated region
  $region14: #{_lambda_.17} parent=0 // pred_check
    _
  $region15: #{_lambda_.17} parent=0 // pred_check_branch
    %172 = sbr.rel (0) target = $region17
  $region16: #{_lambda_.17} parent=0 // pred_region
    _
  $region17: #{_lambda_.17} parent=0 // pred_fallthru
    _
  // Predicated region
  $region18: #{_lambda_.17} parent=0 // pred_check
    _
  $region19: #{_lambda_.17} parent=0 // pred_check_branch
    %174 = sbr.rel (0) target = $region21
  $region20: #{_lambda_.17} parent=0 // pred_region
    _
  $region21: #{_lambda_.17} parent=0 // pred_fallthru
    _

// kernel: _lambda_.18
$region0: #{_lambda_.18}
  #allocation0 [shape = 'u32[]', space=smem, size = 0x4, offset = 0x4, fixed_abs, tag = 'smem constant byte address 0x4 - core index']
  #allocation1 [shape = 'u32[72,128]{1,0:T(1,128)}', space=vmem, size = 0x9000, scoped, tag = 'internal scratch']
  %s0 = inlined_call_operand.vmem [shape: bf16[2,36,64], index: 0, kind: input, shape index: {}]
  %s1 = inlined_call_operand.vmem [shape: bf16[64,192], index: 1, kind: input, shape index: {}]
  %s2 = inlined_call_operand.vmem [shape: f32[2,36,36], index: 2, kind: input, shape index: {}]
  %s3 = inlined_call_operand.vmem [shape: bf16[64,64], index: 3, kind: input, shape index: {}]
  %s4 = inlined_call_operand.vmem [shape: f32[1,64], index: 4, kind: input, shape index: {}]
  %s5 = inlined_call_operand.vmem [shape: bf16[2,36,36], index: 5, kind: input, shape index: {}]
  %s6 = inlined_call_operand.vmem [shape: bf16[2,36,36], index: 6, kind: input, shape index: {}]
  %s7 = inlined_call_operand.vmem [shape: f32[9,64], index: 7, kind: input, shape index: {}]
  %s8 = inlined_call_operand.vmem [shape: bf16[64,128], index: 8, kind: input, shape index: {}]
  %s9 = inlined_call_operand.vmem [shape: f32[1,128], index: 9, kind: input, shape index: {}]
  %s10 = inlined_call_operand.vmem [shape: bf16[128,64], index: 10, kind: input, shape index: {}]
  %s11 = inlined_call_operand.vmem [shape: f32[1,64], index: 11, kind: input, shape index: {}]
  %s12 = inlined_call_operand.vmem [shape: bf16[2,36,64], index: 12, kind: output, shape index: {}]
  %s13 = sld [smem:[#allocation0]]
  $region81: #{_lambda_.18} parent=0
    _
  %s15 = ssub.s32 1, %s13
  %s16 = scalar_select 0, %s15, %s13
  loop: start=0, step=1, limit=4
  $region2: #{_lambda_.18} parent=0 // loop_pre_header
    _
  $region3: #{_lambda_.18} parent=0 // loop_header
    %s18 = sphi 0, %s22
    %p19 = scmp.ge.s32.totalorder %s18, 4
    %s28 = sphi 0, %s30
    %s31 = sphi 0, %s28
    %s32 = sphi 0, %s31
    %s48 = sphi 0, %s32
    %s52 = sphi 0, %s52
    %s54 = sphi 0, %s52
    %s55 = sphi 0, %s54
    %s69 = sphi 0, %s55
    %s73 = sphi 0, %s73
    %s75 = sphi 0, %s73
    %s76 = sphi 0, %s75
    %s90 = sphi 0, %s76
    %s94 = sphi 0, %s94
    %s96 = sphi 0, %s94
    %s97 = sphi 0, %s96
    %s111 = sphi 0, %s97
    %s115 = sphi 0, %s115
    %s117 = sphi 0, %s115
    %s118 = sphi 0, %s117
    %s132 = sphi 0, %s118
    %s136 = sphi 0, %s136
    %s138 = sphi 0, %s136
    %s139 = sphi 0, %s138
    %s153 = sphi 0, %s139
    %s157 = sphi 0, %s157
    %s159 = sphi 0, %s157
    %s160 = sphi 0, %s159
    %s174 = sphi 0, %s160
    %s178 = sphi 0, %s178
    %s180 = sphi 0, %s178
    %s181 = sphi 0, %s180
    %s195 = sphi 0, %s181
    %s199 = sphi 0, %s199
    %s201 = sphi 0, %s199
    %s202 = sphi 0, %s201
    %s216 = sphi 0, %s202
    %s220 = sphi 0, %s220
    %s222 = sphi 0, %s220
    %s223 = sphi 0, %s222
    %s237 = sphi 0, %s223
    %s241 = sphi 0, %s241
    %s243 = sphi 0, %s241
    %s244 = sphi 0, %s243
    %s258 = sphi 0, %s244
    %s262 = sphi 0, %s262
    %s264 = sphi 0, %s262
    %s265 = sphi 0, %s264
    %s279 = sphi 0, %s265
    %s285 = sphi 0, %s287
    %s288 = sphi 0, %s285
    %s289 = sphi 0, %s288
    %s305 = sphi 0, %s289
  $region4: #{_lambda_.18} parent=0 // loop_header_branch
    %21 = sbr.rel (%p19) target = $region8
  $region5: #{_lambda_.18} parent=0 // loop_body
    %s23 = ssub.s32 %s18, 1
    %s24 = ssub.s32 %s18, 2
    %s25 = sadd.s32 %s18, 1
    %s26 = ssub.s32 %s18, %s25
    %p27 = scmp.eq.s32.totalorder %s26, 0
    %s29 = sadd.s32 %s28, 1
    %s30 = scalar_select %p27, %s28, %s29
    %p33 = pneg %p27
    %p34 = scmp.eq.s32.totalorder %s18, 1
    %p35 = por %p33, %p34
    %p36 = scmp.ne.s32.totalorder %s28, %s31
    %p37 = scmp.eq.s32.totalorder %s18, 0
    %p38 = por %p36, %p37
    %p39 = scmp.ne.s32.totalorder %s28, %s31
    %p40 = scmp.eq.s32.totalorder %s23, 1
    %p41 = por %p39, %p40
    %p42 = scmp.ne.s32.totalorder %s31, %s32
    %p43 = scmp.eq.s32.totalorder %s23, 0
    %p44 = por %p42, %p43
    %p45 = scmp.ne.s32.totalorder %s31, %s32
    %p46 = scmp.eq.s32.totalorder %s24, 1
    %p47 = por %p45, %p46
    %p49 = scmp.ne.s32.totalorder %s32, %s48
    %p50 = scmp.eq.s32.totalorder %s24, 0
    %p51 = por %p49, %p50
    %s53 = sadd.s32 %s52, 1
    %p56 = scmp.eq.s32.totalorder %s18, 1
    %p57 = scmp.ne.s32.totalorder %s52, %s54
    %p58 = scmp.eq.s32.totalorder %s18, 0
    %p59 = por %p57, %p58
    %p60 = scmp.ne.s32.totalorder %s52, %s54
    %p61 = scmp.eq.s32.totalorder %s23, 1
    %p62 = por %p60, %p61
    %p63 = scmp.ne.s32.totalorder %s54, %s55
    %p64 = scmp.eq.s32.totalorder %s23, 0
    %p65 = por %p63, %p64
    %p66 = scmp.ne.s32.totalorder %s54, %s55
    %p67 = scmp.eq.s32.totalorder %s24, 1
    %p68 = por %p66, %p67
    %p70 = scmp.ne.s32.totalorder %s55, %s69
    %p71 = scmp.eq.s32.totalorder %s24, 0
    %p72 = por %p70, %p71
    %s74 = sadd.s32 %s73, 1
    %p77 = scmp.eq.s32.totalorder %s18, 1
    %p78 = scmp.ne.s32.totalorder %s73, %s75
    %p79 = scmp.eq.s32.totalorder %s18, 0
    %p80 = por %p78, %p79
    %p81 = scmp.ne.s32.totalorder %s73, %s75
    %p82 = scmp.eq.s32.totalorder %s23, 1
    %p83 = por %p81, %p82
    %p84 = scmp.ne.s32.totalorder %s75, %s76
    %p85 = scmp.eq.s32.totalorder %s23, 0
    %p86 = por %p84, %p85
    %p87 = scmp.ne.s32.totalorder %s75, %s76
    %p88 = scmp.eq.s32.totalorder %s24, 1
    %p89 = por %p87, %p88
    %p91 = scmp.ne.s32.totalorder %s76, %s90
    %p92 = scmp.eq.s32.totalorder %s24, 0
    %p93 = por %p91, %p92
    %s95 = sadd.s32 %s94, 1
    %p98 = scmp.eq.s32.totalorder %s18, 1
    %p99 = scmp.ne.s32.totalorder %s94, %s96
    %p100 = scmp.eq.s32.totalorder %s18, 0
    %p101 = por %p99, %p100
    %p102 = scmp.ne.s32.totalorder %s94, %s96
    %p103 = scmp.eq.s32.totalorder %s23, 1
    %p104 = por %p102, %p103
    %p105 = scmp.ne.s32.totalorder %s96, %s97
    %p106 = scmp.eq.s32.totalorder %s23, 0
    %p107 = por %p105, %p106
    %p108 = scmp.ne.s32.totalorder %s96, %s97
    %p109 = scmp.eq.s32.totalorder %s24, 1
    %p110 = por %p108, %p109
    %p112 = scmp.ne.s32.totalorder %s97, %s111
    %p113 = scmp.eq.s32.totalorder %s24, 0
    %p114 = por %p112, %p113
    %s116 = sadd.s32 %s115, 1
    %p119 = scmp.eq.s32.totalorder %s18, 1
    %p120 = scmp.ne.s32.totalorder %s115, %s117
    %p121 = scmp.eq.s32.totalorder %s18, 0
    %p122 = por %p120, %p121
    %p123 = scmp.ne.s32.totalorder %s115, %s117
    %p124 = scmp.eq.s32.totalorder %s23, 1
    %p125 = por %p123, %p124
    %p126 = scmp.ne.s32.totalorder %s117, %s118
    %p127 = scmp.eq.s32.totalorder %s23, 0
    %p128 = por %p126, %p127
    %p129 = scmp.ne.s32.totalorder %s117, %s118
    %p130 = scmp.eq.s32.totalorder %s24, 1
    %p131 = por %p129, %p130
    %p133 = scmp.ne.s32.totalorder %s118, %s132
    %p134 = scmp.eq.s32.totalorder %s24, 0
    %p135 = por %p133, %p134
    %s137 = sadd.s32 %s136, 1
    %p140 = scmp.eq.s32.totalorder %s18, 1
    %p141 = scmp.ne.s32.totalorder %s136, %s138
    %p142 = scmp.eq.s32.totalorder %s18, 0
    %p143 = por %p141, %p142
    %p144 = scmp.ne.s32.totalorder %s136, %s138
    %p145 = scmp.eq.s32.totalorder %s23, 1
    %p146 = por %p144, %p145
    %p147 = scmp.ne.s32.totalorder %s138, %s139
    %p148 = scmp.eq.s32.totalorder %s23, 0
    %p149 = por %p147, %p148
    %p150 = scmp.ne.s32.totalorder %s138, %s139
    %p151 = scmp.eq.s32.totalorder %s24, 1
    %p152 = por %p150, %p151
    %p154 = scmp.ne.s32.totalorder %s139, %s153
    %p155 = scmp.eq.s32.totalorder %s24, 0
    %p156 = por %p154, %p155
    %s158 = sadd.s32 %s157, 1
    %p161 = scmp.eq.s32.totalorder %s18, 1
    %p162 = scmp.ne.s32.totalorder %s157, %s159
    %p163 = scmp.eq.s32.totalorder %s18, 0
    %p164 = por %p162, %p163
    %p165 = scmp.ne.s32.totalorder %s157, %s159
    %p166 = scmp.eq.s32.totalorder %s23, 1
    %p167 = por %p165, %p166
    %p168 = scmp.ne.s32.totalorder %s159, %s160
    %p169 = scmp.eq.s32.totalorder %s23, 0
    %p170 = por %p168, %p169
    %p171 = scmp.ne.s32.totalorder %s159, %s160
    %p172 = scmp.eq.s32.totalorder %s24, 1
    %p173 = por %p171, %p172
    %p175 = scmp.ne.s32.totalorder %s160, %s174
    %p176 = scmp.eq.s32.totalorder %s24, 0
    %p177 = por %p175, %p176
    %s179 = sadd.s32 %s178, 1
    %p182 = scmp.eq.s32.totalorder %s18, 1
    %p183 = scmp.ne.s32.totalorder %s178, %s180
    %p184 = scmp.eq.s32.totalorder %s18, 0
    %p185 = por %p183, %p184
    %p186 = scmp.ne.s32.totalorder %s178, %s180
    %p187 = scmp.eq.s32.totalorder %s23, 1
    %p188 = por %p186, %p187
    %p189 = scmp.ne.s32.totalorder %s180, %s181
    %p190 = scmp.eq.s32.totalorder %s23, 0
    %p191 = por %p189, %p190
    %p192 = scmp.ne.s32.totalorder %s180, %s181
    %p193 = scmp.eq.s32.totalorder %s24, 1
    %p194 = por %p192, %p193
    %p196 = scmp.ne.s32.totalorder %s181, %s195
    %p197 = scmp.eq.s32.totalorder %s24, 0
    %p198 = por %p196, %p197
    %s200 = sadd.s32 %s199, 1
    %p203 = scmp.eq.s32.totalorder %s18, 1
    %p204 = scmp.ne.s32.totalorder %s199, %s201
    %p205 = scmp.eq.s32.totalorder %s18, 0
    %p206 = por %p204, %p205
    %p207 = scmp.ne.s32.totalorder %s199, %s201
    %p208 = scmp.eq.s32.totalorder %s23, 1
    %p209 = por %p207, %p208
    %p210 = scmp.ne.s32.totalorder %s201, %s202
    %p211 = scmp.eq.s32.totalorder %s23, 0
    %p212 = por %p210, %p211
    %p213 = scmp.ne.s32.totalorder %s201, %s202
    %p214 = scmp.eq.s32.totalorder %s24, 1
    %p215 = por %p213, %p214
    %p217 = scmp.ne.s32.totalorder %s202, %s216
    %p218 = scmp.eq.s32.totalorder %s24, 0
    %p219 = por %p217, %p218
    %s221 = sadd.s32 %s220, 1
    %p224 = scmp.eq.s32.totalorder %s18, 1
    %p225 = scmp.ne.s32.totalorder %s220, %s222
    %p226 = scmp.eq.s32.totalorder %s18, 0
    %p227 = por %p225, %p226
    %p228 = scmp.ne.s32.totalorder %s220, %s222
    %p229 = scmp.eq.s32.totalorder %s23, 1
    %p230 = por %p228, %p229
    %p231 = scmp.ne.s32.totalorder %s222, %s223
    %p232 = scmp.eq.s32.totalorder %s23, 0
    %p233 = por %p231, %p232
    %p234 = scmp.ne.s32.totalorder %s222, %s223
    %p235 = scmp.eq.s32.totalorder %s24, 1
    %p236 = por %p234, %p235
    %p238 = scmp.ne.s32.totalorder %s223, %s237
    %p239 = scmp.eq.s32.totalorder %s24, 0
    %p240 = por %p238, %p239
    %s242 = sadd.s32 %s241, 1
    %p245 = scmp.eq.s32.totalorder %s18, 1
    %p246 = scmp.ne.s32.totalorder %s241, %s243
    %p247 = scmp.eq.s32.totalorder %s18, 0
    %p248 = por %p246, %p247
    %p249 = scmp.ne.s32.totalorder %s241, %s243
    %p250 = scmp.eq.s32.totalorder %s23, 1
    %p251 = por %p249, %p250
    %p252 = scmp.ne.s32.totalorder %s243, %s244
    %p253 = scmp.eq.s32.totalorder %s23, 0
    %p254 = por %p252, %p253
    %p255 = scmp.ne.s32.totalorder %s243, %s244
    %p256 = scmp.eq.s32.totalorder %s24, 1
    %p257 = por %p255, %p256
    %p259 = scmp.ne.s32.totalorder %s244, %s258
    %p260 = scmp.eq.s32.totalorder %s24, 0
    %p261 = por %p259, %p260
    %s263 = sadd.s32 %s262, 1
    %p266 = scmp.eq.s32.totalorder %s18, 1
    %p267 = scmp.ne.s32.totalorder %s262, %s264
    %p268 = scmp.eq.s32.totalorder %s18, 0
    %p269 = por %p267, %p268
    %p270 = scmp.ne.s32.totalorder %s262, %s264
    %p271 = scmp.eq.s32.totalorder %s23, 1
    %p272 = por %p270, %p271
    %p273 = scmp.ne.s32.totalorder %s264, %s265
    %p274 = scmp.eq.s32.totalorder %s23, 0
    %p275 = por %p273, %p274
    %p276 = scmp.ne.s32.totalorder %s264, %s265
    %p277 = scmp.eq.s32.totalorder %s24, 1
    %p278 = por %p276, %p277
    %p280 = scmp.ne.s32.totalorder %s265, %s279
    %p281 = scmp.eq.s32.totalorder %s24, 0
    %p282 = por %p280, %p281
    %s283 = ssub.s32 %s18, %s25
    %p284 = scmp.eq.s32.totalorder %s283, 0
    %s286 = sadd.s32 %s285, 1
    %s287 = scalar_select %p284, %s285, %s286
    %p290 = pneg %p284
    %p291 = scmp.eq.s32.totalorder %s18, 1
    %p292 = por %p290, %p291
    %p293 = scmp.ne.s32.totalorder %s285, %s288
    %p294 = scmp.eq.s32.totalorder %s18, 0
    %p295 = por %p293, %p294
    %p296 = scmp.ne.s32.totalorder %s285, %s288
    %p297 = scmp.eq.s32.totalorder %s23, 1
    %p298 = por %p296, %p297
    %p299 = scmp.ne.s32.totalorder %s288, %s289
    %p300 = scmp.eq.s32.totalorder %s23, 0
    %p301 = por %p299, %p300
    %p302 = scmp.ne.s32.totalorder %s288, %s289
    %p303 = scmp.eq.s32.totalorder %s24, 1
    %p304 = por %p302, %p303
    %p306 = scmp.ne.s32.totalorder %s289, %s305
    %p307 = scmp.eq.s32.totalorder %s24, 0
    %p308 = por %p306, %p307
    %p309 = scmp.le.s32.totalorder 1, %s18
    %p310 = scmp.lt.s32.totalorder %s18, 3
    %p311 = pnand %p309, %p310
    %p312 = pneg %p311
    // Predicated region
    $region9: #{_lambda_.18} parent=5 // pred_check
      _
    $region10: #{_lambda_.18} parent=5 // pred_check_branch
      %314 = sbr.rel (%p311) target = $region12
    $region11: #{_lambda_.18} parent=5 // pred_region
      %s315 = ssub.s32 %s18, 1
      // Predicated region
      $region13: #{_lambda_.18} parent=11 // pred_check
        %p316 = pneg %p65
      $region14: #{_lambda_.18} parent=11 // pred_check_branch
        %318 = sbr.rel (%p316) target = $region16
      $region15: #{_lambda_.18} parent=11 // pred_region
        _
      $region16: #{_lambda_.18} parent=11 // pred_fallthru
        _
      // Predicated region
      $region17: #{_lambda_.18} parent=11 // pred_check
        %p319 = pneg %p86
      $region18: #{_lambda_.18} parent=11 // pred_check_branch
        %321 = sbr.rel (%p319) target = $region20
      $region19: #{_lambda_.18} parent=11 // pred_region
        _
      $region20: #{_lambda_.18} parent=11 // pred_fallthru
        _
      // Predicated region
      $region21: #{_lambda_.18} parent=11 // pred_check
        %p322 = pneg %p107
      $region22: #{_lambda_.18} parent=11 // pred_check_branch
        %324 = sbr.rel (%p322) target = $region24
      $region23: #{_lambda_.18} parent=11 // pred_region
        _
      $region24: #{_lambda_.18} parent=11 // pred_fallthru
        _
      // Predicated region
      $region25: #{_lambda_.18} parent=11 // pred_check
        %p325 = pneg %p128
      $region26: #{_lambda_.18} parent=11 // pred_check_branch
        %327 = sbr.rel (%p325) target = $region28
      $region27: #{_lambda_.18} parent=11 // pred_region
        _
      $region28: #{_lambda_.18} parent=11 // pred_fallthru
        _
      // Predicated region
      $region29: #{_lambda_.18} parent=11 // pred_check
        %p328 = pneg %p149
      $region30: #{_lambda_.18} parent=11 // pred_check_branch
        %330 = sbr.rel (%p328) target = $region32
      $region31: #{_lambda_.18} parent=11 // pred_region
        _
      $region32: #{_lambda_.18} parent=11 // pred_fallthru
        _
      // Predicated region
      $region33: #{_lambda_.18} parent=11 // pred_check
        %p331 = pneg %p170
      $region34: #{_lambda_.18} parent=11 // pred_check_branch
        %333 = sbr.rel (%p331) target = $region36
      $region35: #{_lambda_.18} parent=11 // pred_region
        _
      $region36: #{_lambda_.18} parent=11 // pred_fallthru
        _
      // Predicated region
      $region37: #{_lambda_.18} parent=11 // pred_check
        %p334 = pneg %p191
      $region38: #{_lambda_.18} parent=11 // pred_check_branch
        %336 = sbr.rel (%p334) target = $region40
      $region39: #{_lambda_.18} parent=11 // pred_region
        _
      $region40: #{_lambda_.18} parent=11 // pred_fallthru
        _
      // Predicated region
      $region41: #{_lambda_.18} parent=11 // pred_check
        %p337 = pneg %p212
      $region42: #{_lambda_.18} parent=11 // pred_check_branch
        %339 = sbr.rel (%p337) target = $region44
      $region43: #{_lambda_.18} parent=11 // pred_region
        _
      $region44: #{_lambda_.18} parent=11 // pred_fallthru
        _
      // Predicated region
      $region45: #{_lambda_.18} parent=11 // pred_check
        %p340 = pneg %p233
      $region46: #{_lambda_.18} parent=11 // pred_check_branch
        %342 = sbr.rel (%p340) target = $region48
      $region47: #{_lambda_.18} parent=11 // pred_region
        _
      $region48: #{_lambda_.18} parent=11 // pred_fallthru
        _
      // Predicated region
      $region49: #{_lambda_.18} parent=11 // pred_check
        %p343 = pneg %p254
      $region50: #{_lambda_.18} parent=11 // pred_check_branch
        %345 = sbr.rel (%p343) target = $region52
      $region51: #{_lambda_.18} parent=11 // pred_region
        _
      $region52: #{_lambda_.18} parent=11 // pred_fallthru
        _
      // Predicated region
      $region53: #{_lambda_.18} parent=11 // pred_check
        %p346 = pneg %p275
      $region54: #{_lambda_.18} parent=11 // pred_check_branch
        %348 = sbr.rel (%p346) target = $region56
      $region55: #{_lambda_.18} parent=11 // pred_region
        _
      $region56: #{_lambda_.18} parent=11 // pred_fallthru
        _
    $region12: #{_lambda_.18} parent=5 // pred_fallthru
      _
    %p349 = scmp.lt.s32.totalorder %s18, 2
    // Predicated region
    $region57: #{_lambda_.18} parent=5 // pred_check
      %p350 = pneg %p349
    $region58: #{_lambda_.18} parent=5 // pred_check_branch
      %352 = sbr.rel (%p350) target = $region60
    $region59: #{_lambda_.18} parent=5 // pred_region
      // Predicated region
      $region61: #{_lambda_.18} parent=59 // pred_check
        %p353 = pneg %p38
      $region62: #{_lambda_.18} parent=59 // pred_check_branch
        %355 = sbr.rel (%p353) target = $region64
      $region63: #{_lambda_.18} parent=59 // pred_region
        %p356 = scmp.lt.s32.totalorder %s18, 1
        %s357 = scalar_select %p356, %s18, 1
        %s358 = smul.addr %s357, 5
        %s359 = smul.addr %s358, 4
        %s360 = scalar_lea.vmem %s0, %s359
      $region64: #{_lambda_.18} parent=59 // pred_fallthru
        _
    $region60: #{_lambda_.18} parent=5 // pred_fallthru
      _
    %p361 = scmp.le.s32.totalorder 1, %s18
    %p362 = scmp.lt.s32.totalorder %s18, 3
    %p363 = pnand %p361, %p362
    %p364 = pneg %p363
    // Predicated region
    $region65: #{_lambda_.18} parent=5 // pred_check
      _
    $region66: #{_lambda_.18} parent=5 // pred_check_branch
      %366 = sbr.rel (%p363) target = $region68
    $region67: #{_lambda_.18} parent=5 // pred_region
      %s367 = ssub.s32 %s18, 1
      %p368 = scmp.lt.s32.totalorder %s23, 1
      %s369 = scalar_select %p368, %s23, 1
      %s370 = smul.addr %s369, 5
      %s371 = smul.addr %s370, 4
      %s372 = scalar_lea.vmem %s0, %s371
      %p373 = pneg %p44
      %p374 = pneg %p41
      %p375 = pneg %p65
      %p376 = pneg %p62
      %p377 = pneg %p86
      %p378 = pneg %p83
      %p379 = pneg %p107
      %p380 = pneg %p104
      %p381 = pneg %p128
      %p382 = pneg %p125
      %p383 = pneg %p149
      %p384 = pneg %p146
      %p385 = pneg %p170
      %p386 = pneg %p167
      %p387 = pneg %p191
      %p388 = pneg %p188
      %p389 = pneg %p212
      %p390 = pneg %p209
      %p391 = pneg %p233
      %p392 = pneg %p230
      %p393 = pneg %p254
      %p394 = pneg %p251
      %p395 = pneg %p275
      %p396 = pneg %p272
      %p397 = pneg %p301
      %p398 = pneg %p298
      %p399 = scmp.lt.s32.totalorder %s23, 1
      %s400 = scalar_select %p399, %s23, 1
      %s401 = smul.addr %s400, 5
      %s402 = smul.addr %s401, 4
      %s403 = scalar_lea.vmem %s12, %s402
      %p404 = scmp.lt.s32.totalorder %s23, 1
      %s405 = scalar_select %p404, %s23, 1
      %s406 = smul.addr %s405, 5
      %s407 = smul.addr %s406, 4
      %s408 = scalar_lea.vmem %s0, %s407
      %p409 = scmp.lt.s32.totalorder %s23, 1
      %s410 = scalar_select %p409, %s23, 1
      %s411 = smul.addr %s410, 5
      %s412 = smul.addr %s411, 4
      %s413 = scalar_lea.vmem %s12, %s412
      %v415 = vld [vmem:[%s408] sm:$0xf]
      %v416 = vld [vmem:[%s408 + $0x4] sm:$0xf]
      %v417 = vld [vmem:[%s408 + $0x8] sm:$0xf]
      %v418 = vld [vmem:[%s408 + $0xc] sm:$0xf]
      %v419 = vld [vmem:[%s408 + $0x10] sm:$0x3]
      %v420 = vunpack.c.l.bf16 %v415
      %v421 = vunpack.c.l.bf16 %v416
      %v422 = vunpack.c.l.bf16 %v417
      %v423 = vunpack.c.l.bf16 %v418
      %v424 = vunpack.c.l.bf16 %v419
      %v425 = vld [vmem:[%s1] sm:$0xff]
      %v426 = vld [vmem:[%s1 + $0x8] sm:$0xff]
      %v427 = vld [vmem:[%s1 + $0x10] sm:$0xff]
      %v428 = vld [vmem:[%s1 + $0x18] sm:$0xff]
      %v429 = vld [vmem:[%s1 + $0x20] sm:$0xff]
      %v430 = vld [vmem:[%s1 + $0x28] sm:$0xff]
      %v431 = vld [vmem:[%s1 + $0x30] sm:$0xff]
      %v432 = vld [vmem:[%s1 + $0x38] sm:$0xff]
      %v438 = vunpack.c.l.b16 %v415
      %v439 = vunpack.c.l.b16 %v416
      %v440 = vunpack.c.l.b16 %v417
      %v441 = vunpack.c.l.b16 %v418
      %v442 = vunpack.c.l.b16 %v419
      %v443 = vpack.c.b16 %v439, %v438
      %v444 = vpack.c.b16 %v441, %v440
      %v445 = vpack.c.b16 %v442, %v442
      %v454 = vunpack.c.l.b16 %v425
      %v455 = vunpack.c.h.b16 %v425
      %v456 = vunpack.c.l.b16 %v426
      %v457 = vunpack.c.h.b16 %v426
      %v458 = vunpack.c.l.b16 %v427
      %v459 = vunpack.c.h.b16 %v427
      %v460 = vunpack.c.l.b16 %v428
      %v461 = vunpack.c.h.b16 %v428
      %v462 = vunpack.c.l.b16 %v429
      %v463 = vunpack.c.h.b16 %v429
      %v464 = vunpack.c.l.b16 %v430
      %v465 = vunpack.c.h.b16 %v430
      %v466 = vunpack.c.l.b16 %v431
      %v467 = vunpack.c.h.b16 %v431
      %v468 = vunpack.c.l.b16 %v432
      %v469 = vunpack.c.h.b16 %v432
      %v470 = vpack.c.b16 %v456, %v454
      %v471 = vpack.c.b16 %v457, %v455
      %v472 = vpack.c.b16 %v460, %v458
      %v473 = vpack.c.b16 %v461, %v459
      %v474 = vpack.c.b16 %v464, %v462
      %v475 = vpack.c.b16 %v465, %v463
      %v476 = vpack.c.b16 %v468, %v466
      %v477 = vpack.c.b16 %v469, %v467
      %vm486 = vcmask 523264
      %v488 = vsel %vm486, %v443, 0
      %v491 = vsel %vm486, %v444, 0
      %v494 = vsel %vm486, %v445, 0
      %496 = vmatpush.bf16.msra.mxu0 0
      %497 = vmatpush.bf16.msra.mxu0 0
      %498 = vmatpush.bf16.msra.mxu0 0
      %499 = vmatpush.bf16.msra.mxu0 0
      %500 = vmatpush.bf16.msra.mxu0 %v476
      %501 = vmatpush.bf16.msra.mxu0 %v474
      %502 = vmatpush.bf16.msra.mxu0 %v472
      %503 = vmatpush.bf16.msra.mxu0 %v470
      %504 = vmatmul.bf16.gmra.mxu0 %v488
      %v505 = vpop.f32.mrf.mxu0
      %v506 = vadd.f32 0.0, %v505
      %v507 = vpop.f32.mrf.mxu0
      %v508 = vadd.f32 0.0, %v507
      %509 = vmatmul.bf16.gmra.mxu0 %v491
      %v510 = vpop.f32.mrf.mxu0
      %v511 = vadd.f32 0.0, %v510
      %v512 = vpop.f32.mrf.mxu0
      %v513 = vadd.f32 0.0, %v512
      %514 = vmatmul.bf16.gmra.mxu0 %v494
      %v515 = vpop.f32.mrf.mxu0
      %v516 = vadd.f32 0.0, %v515
      %v517 = vpop.f32.mrf.mxu0
      %518 = vdwg.mxu0
      %519 = vmatpush.bf16.msra.mxu0 0
      %520 = vmatpush.bf16.msra.mxu0 0
      %521 = vmatpush.bf16.msra.mxu0 0
      %522 = vmatpush.bf16.msra.mxu0 0
      %523 = vmatpush.bf16.msra.mxu0 %v477
      %524 = vmatpush.bf16.msra.mxu0 %v475
      %525 = vmatpush.bf16.msra.mxu0 %v473
      %526 = vmatpush.bf16.msra.mxu0 %v471
      %527 = vmatmul.bf16.gmra.mxu0 %v488
      %v528 = vpop.f32.mrf.mxu0
      %v529 = vadd.f32 0.0, %v528
      %v530 = vpop.f32.mrf.mxu0
      %v531 = vadd.f32 0.0, %v530
      %532 = vmatmul.bf16.gmra.mxu0 %v491
      %v533 = vpop.f32.mrf.mxu0
      %v534 = vadd.f32 0.0, %v533
      %v535 = vpop.f32.mrf.mxu0
      %v536 = vadd.f32 0.0, %v535
      %537 = vmatmul.bf16.gmra.mxu0 %v494
      %v538 = vpop.f32.mrf.mxu0
      %v539 = vadd.f32 0.0, %v538
      %v540 = vpop.f32.mrf.mxu0
      %541 = vdwg.mxu0
      %v542 = vpack.c.bf16 %v508, %v506
      %v543 = vpack.c.bf16 %v513, %v511
      %v544 = vpack.c.bf16 %v516, %v516
      %v545 = vpack.c.bf16 %v531, %v529
      %v546 = vpack.c.bf16 %v536, %v534
      %v547 = vpack.c.bf16 %v539, %v539
      %551 = vrot.lane.b32.xlu0 %v542, 64
      %v552 = vpop.permute.xlu0 %551
      %553 = vrot.lane.b32.xlu0 %v543, 64
      %v554 = vpop.permute.xlu0 %553
      %555 = vrot.lane.b32.xlu0 %v544, 64
      %v556 = vpop.permute.xlu0 %555
      %vm557 = vcmask 261120
      %v559 = vsel %vm557, %v542, 0
      %v562 = vsel %vm557, %v543, 0
      %v565 = vsel %vm557, %v544, 0
      %v568 = vsel %vm557, %v552, 0
      %v571 = vsel %vm557, %v554, 0
      %v574 = vsel %vm557, %v556, 0
      %576 = vmatpush.bf16.xpose.msra.mxu0 0
      %577 = vmatpush.bf16.xpose.msra.mxu0 0
      %578 = vmatpush.bf16.xpose.msra.mxu0 0
      %579 = vmatpush.bf16.xpose.msra.mxu0 0
      %580 = vmatpush.bf16.xpose.msra.mxu0 0
      %581 = vmatpush.bf16.xpose.msra.mxu0 %v574
      %582 = vmatpush.bf16.xpose.msra.mxu0 %v571
      %583 = vmatpush.bf16.xpose.msra.mxu0 %v568
      %584 = vmatmul.bf16.gmra.mxu0 %v559
      %v585 = vpop.f32.mrf.mxu0
      %v586 = vadd.f32 0.0, %v585
      %v587 = vpop.f32.mrf.mxu0
      %v588 = vadd.f32 0.0, %v587
      %589 = vmatmul.bf16.gmra.mxu0 %v562
      %v590 = vpop.f32.mrf.mxu0
      %v591 = vadd.f32 0.0, %v590
      %v592 = vpop.f32.mrf.mxu0
      %v593 = vadd.f32 0.0, %v592
      %594 = vmatmul.bf16.gmra.mxu0 %v565
      %v595 = vpop.f32.mrf.mxu0
      %v596 = vadd.f32 0.0, %v595
      %v597 = vpop.f32.mrf.mxu0
      %598 = vdwg.mxu0
      %v599 = vmul.f32 %v586, 0.17677669
      %v600 = vmul.f32 %v588, 0.17677669
      %v601 = vmul.f32 %v591, 0.17677669
      %v602 = vmul.f32 %v593, 0.17677669
      %v603 = vmul.f32 %v596, 0.17677669
      %v604 = vld [vmem:[%s2] sm:$0xff]
      %v605 = vld [vmem:[%s2 + $0x8] sm:$0xff]
      %v606 = vld [vmem:[%s2 + $0x10] sm:$0xff]
      %v607 = vld [vmem:[%s2 + $0x18] sm:$0xff]
      %v608 = vld [vmem:[%s2 + $0x20] sm:$0xf]
      %v609 = vadd.f32 %v599, %v604
      %v610 = vadd.f32 %v600, %v605
      %v611 = vadd.f32 %v601, %v606
      %v612 = vadd.f32 %v602, %v607
      %v613 = vadd.f32 %v603, %v608
      %vm614 = vcmask 293888
      %v615 = vsel %vm614, %v609, -inf
      %616 = vmax.xlane.f32.xlu0 %v615
      %v617 = vpop.xlane.xlu0 %616
      %v618 = vsel %vm614, %v610, -inf
      %619 = vmax.xlane.f32.xlu0 %v618
      %v620 = vpop.xlane.xlu0 %619
      %v621 = vsel %vm614, %v611, -inf
      %622 = vmax.xlane.f32.xlu0 %v621
      %v623 = vpop.xlane.xlu0 %622
      %v624 = vsel %vm614, %v612, -inf
      %625 = vmax.xlane.f32.xlu0 %v624
      %v626 = vpop.xlane.xlu0 %625
      %vm627 = vcmask 289792
      %v628 = vsel %vm627, %v613, -inf
      %629 = vmax.xlane.f32.xlu0 %v628
      %v630 = vpop.xlane.xlu0 %629
      %v631 = vsub.f32 %v609, %v617
      %v632 = vsub.f32 %v610, %v620
      %v633 = vsub.f32 %v611, %v623
      %v634 = vsub.f32 %v612, %v626
      %v635 = vsub.f32 %v613, %v630
      %v636 = vmul.f32 %v631, 1.442695
      %v637 = vpow.pop %v636
      %v638 = vmul.f32 %v632, 1.442695
      %v639 = vpow.pop %v638
      %v640 = vmul.f32 %v633, 1.442695
      %v641 = vpow.pop %v640
      %v642 = vmul.f32 %v634, 1.442695
      %v643 = vpow.pop %v642
      %v644 = vmul.f32 %v635, 1.442695
      %v645 = vpow.pop %v644
      %v646 = vsel %vm614, %v637, 0.0
      %647 = vadd.xlane.f32.xlu0 %v646
      %v648 = vpop.xlane.xlu0 %647
      %v649 = vsel %vm614, %v639, 0.0
      %650 = vadd.xlane.f32.xlu0 %v649
      %v651 = vpop.xlane.xlu0 %650
      %v652 = vsel %vm614, %v641, 0.0
      %653 = vadd.xlane.f32.xlu0 %v652
      %v654 = vpop.xlane.xlu0 %653
      %v655 = vsel %vm614, %v643, 0.0
      %656 = vadd.xlane.f32.xlu0 %v655
      %v657 = vpop.xlane.xlu0 %656
      %v658 = vsel %vm627, %v645, 0.0
      %659 = vadd.xlane.f32.xlu0 %v658
      %v660 = vpop.xlane.xlu0 %659
      %v661 = vrcp.pop %v648
      %v662 = vrcp.pop %v651
      %v663 = vrcp.pop %v654
      %v664 = vrcp.pop %v657
      %v665 = vrcp.pop %v660
      %v666 = vmul.f32 %v637, %v661
      %v667 = vmul.f32 %v639, %v662
      %v668 = vmul.f32 %v641, %v663
      %v669 = vmul.f32 %v643, %v664
      %v670 = vmul.f32 %v645, %v665
      %v671 = vpack.c.bf16 %v667, %v666
      %v672 = vpack.c.bf16 %v669, %v668
      %v673 = vpack.c.bf16 %v670, %v670
      %v675 = vsel %vm614, %v671, 0
      %v678 = vsel %vm614, %v672, 0
      %v681 = vsel %vm614, %v673, 0
      %vm683 = vcmask 1041408
      %v685 = vsel %vm683, %v547, 0
      %687 = vmatpush.bf16.msra.mxu0 0
      %688 = vmatpush.bf16.msra.mxu0 0
      %689 = vmatpush.bf16.msra.mxu0 0
      %690 = vmatpush.bf16.msra.mxu0 0
      %691 = vmatpush.bf16.msra.mxu0 0
      %692 = vmatpush.bf16.msra.mxu0 %v685
      %693 = vmatpush.bf16.msra.mxu0 %v546
      %694 = vmatpush.bf16.msra.mxu0 %v545
      %695 = vmatmul.bf16.gmra.mxu0 %v675
      %v696 = vpop.f32.mrf.mxu0
      %v697 = vadd.f32 0.0, %v696
      %v698 = vpop.f32.mrf.mxu0
      %v699 = vadd.f32 0.0, %v698
      %700 = vmatmul.bf16.gmra.mxu0 %v678
      %v701 = vpop.f32.mrf.mxu0
      %v702 = vadd.f32 0.0, %v701
      %v703 = vpop.f32.mrf.mxu0
      %v704 = vadd.f32 0.0, %v703
      %705 = vmatmul.bf16.gmra.mxu0 %v681
      %v706 = vpop.f32.mrf.mxu0
      %v707 = vadd.f32 0.0, %v706
      %v708 = vpop.f32.mrf.mxu0
      %709 = vdwg.mxu0
      %v710 = vpack.c.bf16 %v699, %v697
      %v711 = vpack.c.bf16 %v704, %v702
      %v712 = vpack.c.bf16 %v707, %v707
      %v713 = vld [vmem:[%s3] sm:$0xf]
      %v714 = vld [vmem:[%s3 + $0x4] sm:$0xf]
      %v715 = vld [vmem:[%s3 + $0x8] sm:$0xf]
      %v716 = vld [vmem:[%s3 + $0xc] sm:$0xf]
      %717 = vrot.lane.b32.xlu0 %v542, 96
      %v718 = vpop.permute.xlu0 %717
      %719 = vrot.lane.b32.xlu0 %v543, 96
      %v720 = vpop.permute.xlu0 %719
      %721 = vrot.lane.b32.xlu0 %v544, 96
      %v722 = vpop.permute.xlu0 %721
      %723 = vrot.lane.b32.xlu0 %v542, 32
      %v724 = vpop.permute.xlu0 %723
      %725 = vrot.lane.b32.xlu0 %v543, 32
      %v726 = vpop.permute.xlu0 %725
      %727 = vrot.lane.b32.xlu0 %v544, 32
      %v728 = vpop.permute.xlu0 %727
      %v730 = vsel %vm557, %v718, 0
      %v733 = vsel %vm557, %v720, 0
      %v736 = vsel %vm557, %v722, 0
      %v739 = vsel %vm557, %v724, 0
      %v742 = vsel %vm557, %v726, 0
      %v745 = vsel %vm557, %v728, 0
      %747 = vmatpush.bf16.xpose.msra.mxu0 0
      %748 = vmatpush.bf16.xpose.msra.mxu0 0
      %749 = vmatpush.bf16.xpose.msra.mxu0 0
      %750 = vmatpush.bf16.xpose.msra.mxu0 0
      %751 = vmatpush.bf16.xpose.msra.mxu0 0
      %752 = vmatpush.bf16.xpose.msra.mxu0 %v745
      %753 = vmatpush.bf16.xpose.msra.mxu0 %v742
      %754 = vmatpush.bf16.xpose.msra.mxu0 %v739
      %755 = vmatmul.bf16.gmra.mxu0 %v730
      %v756 = vpop.f32.mrf.mxu0
      %v757 = vadd.f32 0.0, %v756
      %v758 = vpop.f32.mrf.mxu0
      %v759 = vadd.f32 0.0, %v758
      %760 = vmatmul.bf16.gmra.mxu0 %v733
      %v761 = vpop.f32.mrf.mxu0
      %v762 = vadd.f32 0.0, %v761
      %v763 = vpop.f32.mrf.mxu0
      %v764 = vadd.f32 0.0, %v763
      %765 = vmatmul.bf16.gmra.mxu0 %v736
      %v766 = vpop.f32.mrf.mxu0
      %v767 = vadd.f32 0.0, %v766
      %v768 = vpop.f32.mrf.mxu0
      %769 = vdwg.mxu0
      %v770 = vmul.f32 %v757, 0.17677669
      %v771 = vmul.f32 %v759, 0.17677669
      %v772 = vmul.f32 %v762, 0.17677669
      %v773 = vmul.f32 %v764, 0.17677669
      %v774 = vmul.f32 %v767, 0.17677669
      %s775 = scalar_lea.vmem %s2, 40
      %v776 = vld [vmem:[%s775] sm:$0xff]
      %v777 = vld [vmem:[%s775 + $0x8] sm:$0xff]
      %v778 = vld [vmem:[%s775 + $0x10] sm:$0xff]
      %v779 = vld [vmem:[%s775 + $0x18] sm:$0xff]
      %v780 = vld [vmem:[%s775 + $0x20] sm:$0xf]
      %v781 = vadd.f32 %v770, %v776
      %v782 = vadd.f32 %v771, %v777
      %v783 = vadd.f32 %v772, %v778
      %v784 = vadd.f32 %v773, %v779
      %v785 = vadd.f32 %v774, %v780
      %v786 = vsel %vm614, %v781, -inf
      %787 = vmax.xlane.f32.xlu0 %v786
      %v788 = vpop.xlane.xlu0 %787
      %v789 = vsel %vm614, %v782, -inf
      %790 = vmax.xlane.f32.xlu0 %v789
      %v791 = vpop.xlane.xlu0 %790
      %v792 = vsel %vm614, %v783, -inf
      %793 = vmax.xlane.f32.xlu0 %v792
      %v794 = vpop.xlane.xlu0 %793
      %v795 = vsel %vm614, %v784, -inf
      %796 = vmax.xlane.f32.xlu0 %v795
      %v797 = vpop.xlane.xlu0 %796
      %v798 = vsel %vm627, %v785, -inf
      %799 = vmax.xlane.f32.xlu0 %v798
      %v800 = vpop.xlane.xlu0 %799
      %v801 = vsub.f32 %v781, %v788
      %v802 = vsub.f32 %v782, %v791
      %v803 = vsub.f32 %v783, %v794
      %v804 = vsub.f32 %v784, %v797
      %v805 = vsub.f32 %v785, %v800
      %v806 = vmul.f32 %v801, 1.442695
      %v807 = vpow.pop %v806
      %v808 = vmul.f32 %v802, 1.442695
      %v809 = vpow.pop %v808
      %v810 = vmul.f32 %v803, 1.442695
      %v811 = vpow.pop %v810
      %v812 = vmul.f32 %v804, 1.442695
      %v813 = vpow.pop %v812
      %v814 = vmul.f32 %v805, 1.442695
      %v815 = vpow.pop %v814
      %v816 = vsel %vm614, %v807, 0.0
      %817 = vadd.xlane.f32.xlu0 %v816
      %v818 = vpop.xlane.xlu0 %817
      %v819 = vsel %vm614, %v809, 0.0
      %820 = vadd.xlane.f32.xlu0 %v819
      %v821 = vpop.xlane.xlu0 %820
      %v822 = vsel %vm614, %v811, 0.0
      %823 = vadd.xlane.f32.xlu0 %v822
      %v824 = vpop.xlane.xlu0 %823
      %v825 = vsel %vm614, %v813, 0.0
      %826 = vadd.xlane.f32.xlu0 %v825
      %v827 = vpop.xlane.xlu0 %826
      %v828 = vsel %vm627, %v815, 0.0
      %829 = vadd.xlane.f32.xlu0 %v828
      %v830 = vpop.xlane.xlu0 %829
      %v831 = vrcp.pop %v818
      %v832 = vrcp.pop %v821
      %v833 = vrcp.pop %v824
      %v834 = vrcp.pop %v827
      %v835 = vrcp.pop %v830
      %v836 = vmul.f32 %v807, %v831
      %v837 = vmul.f32 %v809, %v832
      %v838 = vmul.f32 %v811, %v833
      %v839 = vmul.f32 %v813, %v834
      %v840 = vmul.f32 %v815, %v835
      %v841 = vpack.c.bf16 %v837, %v836
      %v842 = vpack.c.bf16 %v839, %v838
      %v843 = vpack.c.bf16 %v840, %v840
      %847 = vrot.lane.b32.xlu0 %v545, 96
      %v848 = vpop.permute.xlu0 %847
      %849 = vrot.lane.b32.xlu0 %v546, 96
      %v850 = vpop.permute.xlu0 %849
      %851 = vrot.lane.b32.xlu0 %v547, 96
      %v852 = vpop.permute.xlu0 %851
      %v856 = vsel %vm614, %v841, 0
      %v859 = vsel %vm614, %v842, 0
      %v862 = vsel %vm614, %v843, 0
      %v865 = vsel %vm683, %v852, 0
      %867 = vmatpush.bf16.msra.mxu0 0
      %868 = vmatpush.bf16.msra.mxu0 0
      %869 = vmatpush.bf16.msra.mxu0 0
      %870 = vmatpush.bf16.msra.mxu0 0
      %871 = vmatpush.bf16.msra.mxu0 0
      %872 = vmatpush.bf16.msra.mxu0 %v865
      %873 = vmatpush.bf16.msra.mxu0 %v850
      %874 = vmatpush.bf16.msra.mxu0 %v848
      %875 = vmatmul.bf16.gmra.mxu0 %v856
      %v876 = vpop.f32.mrf.mxu0
      %v877 = vadd.f32 0.0, %v876
      %v878 = vpop.f32.mrf.mxu0
      %v879 = vadd.f32 0.0, %v878
      %880 = vmatmul.bf16.gmra.mxu0 %v859
      %v881 = vpop.f32.mrf.mxu0
      %v882 = vadd.f32 0.0, %v881
      %v883 = vpop.f32.mrf.mxu0
      %v884 = vadd.f32 0.0, %v883
      %885 = vmatmul.bf16.gmra.mxu0 %v862
      %v886 = vpop.f32.mrf.mxu0
      %v887 = vadd.f32 0.0, %v886
      %v888 = vpop.f32.mrf.mxu0
      %889 = vdwg.mxu0
      %v890 = vpack.c.bf16 %v879, %v877
      %v891 = vpack.c.bf16 %v884, %v882
      %v892 = vpack.c.bf16 %v887, %v887
      %v893 = vld [vmem:[%s3 + $0x10] sm:$0xf]
      %v894 = vld [vmem:[%s3 + $0x14] sm:$0xf]
      %v895 = vld [vmem:[%s3 + $0x18] sm:$0xf]
      %v896 = vld [vmem:[%s3 + $0x1c] sm:$0xf]
      %v901 = vunpack.c.l.b16 %v893
      %v902 = vunpack.c.l.b16 %v894
      %v903 = vunpack.c.l.b16 %v895
      %v904 = vunpack.c.l.b16 %v896
      %v905 = vpack.c.b16 %v902, %v901
      %v906 = vpack.c.b16 %v904, %v903
      %v910 = vsel %vm557, %v890, 0
      %v913 = vsel %vm557, %v891, 0
      %v916 = vsel %vm557, %v892, 0
      %918 = vmatpush.bf16.msra.mxu0 0
      %919 = vmatpush.bf16.msra.mxu0 0
      %920 = vmatpush.bf16.msra.mxu0 0
      %921 = vmatpush.bf16.msra.mxu0 0
      %922 = vmatpush.bf16.msra.mxu0 0
      %923 = vmatpush.bf16.msra.mxu0 0
      %924 = vmatpush.bf16.msra.mxu0 %v906
      %925 = vmatpush.bf16.msra.mxu0 %v905
      %926 = vmatmul.bf16.gmra.mxu0 %v910
      %v927 = vpop.f32.mrf.mxu0
      %v928 = vadd.f32 0.0, %v927
      %v929 = vpop.f32.mrf.mxu0
      %v930 = vadd.f32 0.0, %v929
      %931 = vmatmul.bf16.gmra.mxu0 %v913
      %v932 = vpop.f32.mrf.mxu0
      %v933 = vadd.f32 0.0, %v932
      %v934 = vpop.f32.mrf.mxu0
      %v935 = vadd.f32 0.0, %v934
      %936 = vmatmul.bf16.gmra.mxu0 %v916
      %v937 = vpop.f32.mrf.mxu0
      %v938 = vadd.f32 0.0, %v937
      %v939 = vpop.f32.mrf.mxu0
      %940 = vdwg.mxu0
      %v945 = vunpack.c.l.b16 %v713
      %v946 = vunpack.c.l.b16 %v714
      %v947 = vunpack.c.l.b16 %v715
      %v948 = vunpack.c.l.b16 %v716
      %v949 = vpack.c.b16 %v946, %v945
      %v950 = vpack.c.b16 %v948, %v947
      %v954 = vsel %vm557, %v710, 0
      %v957 = vsel %vm557, %v711, 0
      %v960 = vsel %vm557, %v712, 0
      %962 = vmatpush.bf16.msra.mxu0 0
      %963 = vmatpush.bf16.msra.mxu0 0
      %964 = vmatpush.bf16.msra.mxu0 0
      %965 = vmatpush.bf16.msra.mxu0 0
      %966 = vmatpush.bf16.msra.mxu0 0
      %967 = vmatpush.bf16.msra.mxu0 0
      %968 = vmatpush.bf16.msra.mxu0 %v950
      %969 = vmatpush.bf16.msra.mxu0 %v949
      %970 = vmatmul.bf16.gmra.mxu0 %v954
      %v971 = vpop.f32.mrf.mxu0
      %v972 = vadd.f32 %v928, %v971
      %v973 = vpop.f32.mrf.mxu0
      %v974 = vadd.f32 %v930, %v973
      %975 = vmatmul.bf16.gmra.mxu0 %v957
      %v976 = vpop.f32.mrf.mxu0
      %v977 = vadd.f32 %v933, %v976
      %v978 = vpop.f32.mrf.mxu0
      %v979 = vadd.f32 %v935, %v978
      %980 = vmatmul.bf16.gmra.mxu0 %v960
      %v981 = vpop.f32.mrf.mxu0
      %v982 = vadd.f32 %v938, %v981
      %v983 = vpop.f32.mrf.mxu0
      %984 = vdwg.mxu0
      %v985 = vadd.f32 %v420, %v972
      %v986 = vadd.f32 %v421, %v974
      %v987 = vadd.f32 %v422, %v977
      %v988 = vadd.f32 %v423, %v979
      %v989 = vadd.f32 %v424, %v982
      %v990 = vld [vmem:[%s4] sm:$0x1]
      %v992 = vperm.slane %v990, 0
      %v994 = vadd.f32 %v985, %v992
      %v995 = vadd.f32 %v986, %v992
      %v996 = vadd.f32 %v987, %v992
      %v997 = vadd.f32 %v988, %v992
      %v998 = vadd.f32 %v989, %v992
      %v999 = vpack.c.bf16 %v995, %v994
      %v1000 = vpack.c.bf16 %v997, %v996
      %v1001 = vpack.c.bf16 %v998, %v998
      %v1002 = vld [vmem:[%s7] sm:$0xff]
      %v1003 = vld [vmem:[%s7 + $0x8] sm:$0x1]
      %v1004 = vld [vmem:[%s5] sm:$0xf]
      %v1005 = vld [vmem:[%s5 + $0x4] sm:$0xf]
      %v1006 = vld [vmem:[%s5 + $0x8] sm:$0xf]
      %v1007 = vld [vmem:[%s5 + $0xc] sm:$0xf]
      %v1008 = vld [vmem:[%s5 + $0x10] sm:$0x3]
      %v1014 = vunpack.c.l.b16 %v1004
      %v1015 = vunpack.c.l.b16 %v1005
      %v1016 = vunpack.c.l.b16 %v1006
      %v1017 = vunpack.c.l.b16 %v1007
      %v1018 = vunpack.c.l.b16 %v1008
      %v1019 = vpack.c.b16 %v1015, %v1014
      %v1020 = vpack.c.b16 %v1017, %v1016
      %v1021 = vpack.c.b16 %v1018, %v1018
      %v1023 = vsel %vm614, %v1019, 0
      %v1026 = vsel %vm614, %v1020, 0
      %v1029 = vsel %vm614, %v1021, 0
      %v1032 = vsel %vm683, %v1001, 0
      %1034 = vmatpush.bf16.msra.mxu0 0
      %1035 = vmatpush.bf16.msra.mxu0 0
      %1036 = vmatpush.bf16.msra.mxu0 0
      %1037 = vmatpush.bf16.msra.mxu0 0
      %1038 = vmatpush.bf16.msra.mxu0 0
      %1039 = vmatpush.bf16.msra.mxu0 %v1032
      %1040 = vmatpush.bf16.msra.mxu0 %v1000
      %1041 = vmatpush.bf16.msra.mxu0 %v999
      %1042 = vmatmul.bf16.gmra.mxu0 %v1023
      %v1043 = vpop.f32.mrf.mxu0
      %v1044 = vadd.f32 0.0, %v1043
      %v1045 = vpop.f32.mrf.mxu0
      %v1046 = vadd.f32 0.0, %v1045
      %1047 = vmatmul.bf16.gmra.mxu0 %v1026
      %v1048 = vpop.f32.mrf.mxu0
      %v1049 = vadd.f32 0.0, %v1048
      %v1050 = vpop.f32.mrf.mxu0
      %v1051 = vadd.f32 0.0, %v1050
      %1052 = vmatmul.bf16.gmra.mxu0 %v1029
      %v1053 = vpop.f32.mrf.mxu0
      %v1054 = vadd.f32 0.0, %v1053
      %v1055 = vpop.f32.mrf.mxu0
      %1056 = vdwg.mxu0
      %s1057 = scalar_lea.vmem %s5, 20
      %v1058 = vld [vmem:[%s1057] sm:$0xf]
      %v1059 = vld [vmem:[%s1057 + $0x4] sm:$0xf]
      %v1060 = vld [vmem:[%s1057 + $0x8] sm:$0xf]
      %v1061 = vld [vmem:[%s1057 + $0xc] sm:$0xf]
      %v1062 = vld [vmem:[%s1057 + $0x10] sm:$0x3]
      %v1068 = vunpack.c.l.b16 %v1058
      %v1069 = vunpack.c.l.b16 %v1059
      %v1070 = vunpack.c.l.b16 %v1060
      %v1071 = vunpack.c.l.b16 %v1061
      %v1072 = vunpack.c.l.b16 %v1062
      %v1073 = vpack.c.b16 %v1069, %v1068
      %v1074 = vpack.c.b16 %v1071, %v1070
      %v1075 = vpack.c.b16 %v1072, %v1072
      %v1077 = vsel %vm614, %v1073, 0
      %v1080 = vsel %vm614, %v1074, 0
      %v1083 = vsel %vm614, %v1075, 0
      %1085 = vmatpush.bf16.msra.mxu0 0
      %1086 = vmatpush.bf16.msra.mxu0 0
      %1087 = vmatpush.bf16.msra.mxu0 0
      %1088 = vmatpush.bf16.msra.mxu0 0
      %1089 = vmatpush.bf16.msra.mxu0 0
      %1090 = vmatpush.bf16.msra.mxu0 %v1032
      %1091 = vmatpush.bf16.msra.mxu0 %v1000
      %1092 = vmatpush.bf16.msra.mxu0 %v999
      %1093 = vmatmul.bf16.gmra.mxu0 %v1077
      %v1094 = vpop.f32.mrf.mxu0
      %v1095 = vadd.f32 0.0, %v1094
      %v1096 = vpop.f32.mrf.mxu0
      %v1097 = vadd.f32 0.0, %v1096
      %1098 = vmatmul.bf16.gmra.mxu0 %v1080
      %v1099 = vpop.f32.mrf.mxu0
      %v1100 = vadd.f32 0.0, %v1099
      %v1101 = vpop.f32.mrf.mxu0
      %v1102 = vadd.f32 0.0, %v1101
      %1103 = vmatmul.bf16.gmra.mxu0 %v1083
      %v1104 = vpop.f32.mrf.mxu0
      %v1105 = vadd.f32 0.0, %v1104
      %v1106 = vpop.f32.mrf.mxu0
      %1107 = vdwg.mxu0
      %v1108 = vperm.slane %v1002, 0
      %v1109 = vmul.f32 %v1044, %v1108
      %v1110 = vmul.f32 %v1046, %v1108
      %v1111 = vmul.f32 %v1049, %v1108
      %v1112 = vmul.f32 %v1051, %v1108
      %v1113 = vmul.f32 %v1054, %v1108
      %v1114 = vadd.f32 %v1109, 0.0
      %v1115 = vadd.f32 %v1110, 0.0
      %v1116 = vadd.f32 %v1111, 0.0
      %v1117 = vadd.f32 %v1112, 0.0
      %v1118 = vadd.f32 %v1113, 0.0
      %v1119 = vperm.slane %v1002, 1
      %v1120 = vmul.f32 %v994, %v1119
      %v1121 = vmul.f32 %v995, %v1119
      %v1122 = vmul.f32 %v996, %v1119
      %v1123 = vmul.f32 %v997, %v1119
      %v1124 = vmul.f32 %v998, %v1119
      %v1125 = vadd.f32 %v1114, %v1120
      %v1126 = vadd.f32 %v1115, %v1121
      %v1127 = vadd.f32 %v1116, %v1122
      %v1128 = vadd.f32 %v1117, %v1123
      %v1129 = vadd.f32 %v1118, %v1124
      %v1130 = vperm.slane %v1002, 2
      %v1131 = vmul.f32 %v1095, %v1130
      %v1132 = vmul.f32 %v1097, %v1130
      %v1133 = vmul.f32 %v1100, %v1130
      %v1134 = vmul.f32 %v1102, %v1130
      %v1135 = vmul.f32 %v1105, %v1130
      %v1136 = vadd.f32 %v1125, %v1131
      %v1137 = vadd.f32 %v1126, %v1132
      %v1138 = vadd.f32 %v1127, %v1133
      %v1139 = vadd.f32 %v1128, %v1134
      %v1140 = vadd.f32 %v1129, %v1135
      %v1141 = vld [vmem:[%s6] sm:$0xf]
      %v1142 = vld [vmem:[%s6 + $0x4] sm:$0xf]
      %v1143 = vld [vmem:[%s6 + $0x8] sm:$0xf]
      %v1144 = vld [vmem:[%s6 + $0xc] sm:$0xf]
      %v1145 = vld [vmem:[%s6 + $0x10] sm:$0x3]
      %v1146 = vpack.c.bf16 %v1137, %v1136
      %v1147 = vpack.c.bf16 %v1139, %v1138
      %v1148 = vpack.c.bf16 %v1140, %v1140
      %v1149 = vperm.slane %v1002, 3
      %v1150 = vmul.f32 %v1044, %v1149
      %v1151 = vmul.f32 %v1046, %v1149
      %v1152 = vmul.f32 %v1049, %v1149
      %v1153 = vmul.f32 %v1051, %v1149
      %v1154 = vmul.f32 %v1054, %v1149
      %v1155 = vadd.f32 %v1150, 0.0
      %v1156 = vadd.f32 %v1151, 0.0
      %v1157 = vadd.f32 %v1152, 0.0
      %v1158 = vadd.f32 %v1153, 0.0
      %v1159 = vadd.f32 %v1154, 0.0
      %v1160 = vperm.slane %v1002, 4
      %v1161 = vmul.f32 %v994, %v1160
      %v1162 = vmul.f32 %v995, %v1160
      %v1163 = vmul.f32 %v996, %v1160
      %v1164 = vmul.f32 %v997, %v1160
      %v1165 = vmul.f32 %v998, %v1160
      %v1166 = vadd.f32 %v1155, %v1161
      %v1167 = vadd.f32 %v1156, %v1162
      %v1168 = vadd.f32 %v1157, %v1163
      %v1169 = vadd.f32 %v1158, %v1164
      %v1170 = vadd.f32 %v1159, %v1165
      %v1171 = vperm.slane %v1002, 5
      %v1172 = vmul.f32 %v1095, %v1171
      %v1173 = vmul.f32 %v1097, %v1171
      %v1174 = vmul.f32 %v1100, %v1171
      %v1175 = vmul.f32 %v1102, %v1171
      %v1176 = vmul.f32 %v1105, %v1171
      %v1177 = vadd.f32 %v1166, %v1172
      %v1178 = vadd.f32 %v1167, %v1173
      %v1179 = vadd.f32 %v1168, %v1174
      %v1180 = vadd.f32 %v1169, %v1175
      %v1181 = vadd.f32 %v1170, %v1176
      %v1187 = vunpack.c.l.b16 %v1141
      %v1188 = vunpack.c.l.b16 %v1142
      %v1189 = vunpack.c.l.b16 %v1143
      %v1190 = vunpack.c.l.b16 %v1144
      %v1191 = vunpack.c.l.b16 %v1145
      %v1192 = vpack.c.b16 %v1188, %v1187
      %v1193 = vpack.c.b16 %v1190, %v1189
      %v1194 = vpack.c.b16 %v1191, %v1191
      %v1196 = vsel %vm614, %v1192, 0
      %v1199 = vsel %vm614, %v1193, 0
      %v1202 = vsel %vm614, %v1194, 0
      %v1205 = vsel %vm683, %v1148, 0
      %1207 = vmatpush.bf16.msra.mxu0 0
      %1208 = vmatpush.bf16.msra.mxu0 0
      %1209 = vmatpush.bf16.msra.mxu0 0
      %1210 = vmatpush.bf16.msra.mxu0 0
      %1211 = vmatpush.bf16.msra.mxu0 0
      %1212 = vmatpush.bf16.msra.mxu0 %v1205
      %1213 = vmatpush.bf16.msra.mxu0 %v1147
      %1214 = vmatpush.bf16.msra.mxu0 %v1146
      %1215 = vmatmul.bf16.gmra.mxu0 %v1196
      %v1216 = vpop.f32.mrf.mxu0
      %v1217 = vadd.f32 %v1177, %v1216
      %v1218 = vpop.f32.mrf.mxu0
      %v1219 = vadd.f32 %v1178, %v1218
      %1220 = vmatmul.bf16.gmra.mxu0 %v1199
      %v1221 = vpop.f32.mrf.mxu0
      %v1222 = vadd.f32 %v1179, %v1221
      %v1223 = vpop.f32.mrf.mxu0
      %v1224 = vadd.f32 %v1180, %v1223
      %1225 = vmatmul.bf16.gmra.mxu0 %v1202
      %v1226 = vpop.f32.mrf.mxu0
      %v1227 = vadd.f32 %v1181, %v1226
      %v1228 = vpop.f32.mrf.mxu0
      %1229 = vdwg.mxu0
      %v1230 = vperm.slane %v1002, 6
      %v1231 = vmul.f32 %v1044, %v1230
      %v1232 = vmul.f32 %v1046, %v1230
      %v1233 = vmul.f32 %v1049, %v1230
      %v1234 = vmul.f32 %v1051, %v1230
      %v1235 = vmul.f32 %v1054, %v1230
      %v1236 = vadd.f32 %v1231, 0.0
      %v1237 = vadd.f32 %v1232, 0.0
      %v1238 = vadd.f32 %v1233, 0.0
      %v1239 = vadd.f32 %v1234, 0.0
      %v1240 = vadd.f32 %v1235, 0.0
      %v1241 = vperm.slane %v1002, 7
      %v1242 = vmul.f32 %v994, %v1241
      %v1243 = vmul.f32 %v995, %v1241
      %v1244 = vmul.f32 %v996, %v1241
      %v1245 = vmul.f32 %v997, %v1241
      %v1246 = vmul.f32 %v998, %v1241
      %v1247 = vadd.f32 %v1236, %v1242
      %v1248 = vadd.f32 %v1237, %v1243
      %v1249 = vadd.f32 %v1238, %v1244
      %v1250 = vadd.f32 %v1239, %v1245
      %v1251 = vadd.f32 %v1240, %v1246
      %v1252 = vperm.slane %v1003, 0
      %v1253 = vmul.f32 %v1095, %v1252
      %v1254 = vmul.f32 %v1097, %v1252
      %v1255 = vmul.f32 %v1100, %v1252
      %v1256 = vmul.f32 %v1102, %v1252
      %v1257 = vmul.f32 %v1105, %v1252
      %v1258 = vadd.f32 %v1247, %v1253
      %v1259 = vadd.f32 %v1248, %v1254
      %v1260 = vadd.f32 %v1249, %v1255
      %v1261 = vadd.f32 %v1250, %v1256
      %v1262 = vadd.f32 %v1251, %v1257
      %s1263 = scalar_lea.vmem %s6, 20
      %v1264 = vld [vmem:[%s1263] sm:$0xf]
      %v1265 = vld [vmem:[%s1263 + $0x4] sm:$0xf]
      %v1266 = vld [vmem:[%s1263 + $0x8] sm:$0xf]
      %v1267 = vld [vmem:[%s1263 + $0xc] sm:$0xf]
      %v1268 = vld [vmem:[%s1263 + $0x10] sm:$0x3]
      %v1269 = vpack.c.bf16 %v1259, %v1258
      %v1270 = vpack.c.bf16 %v1261, %v1260
      %v1271 = vpack.c.bf16 %v1262, %v1262
      %v1277 = vunpack.c.l.b16 %v1264
      %v1278 = vunpack.c.l.b16 %v1265
      %v1279 = vunpack.c.l.b16 %v1266
      %v1280 = vunpack.c.l.b16 %v1267
      %v1281 = vunpack.c.l.b16 %v1268
      %v1282 = vpack.c.b16 %v1278, %v1277
      %v1283 = vpack.c.b16 %v1280, %v1279
      %v1284 = vpack.c.b16 %v1281, %v1281
      %v1286 = vsel %vm614, %v1282, 0
      %v1289 = vsel %vm614, %v1283, 0
      %v1292 = vsel %vm614, %v1284, 0
      %v1295 = vsel %vm683, %v1271, 0
      %1297 = vmatpush.bf16.msra.mxu0 0
      %1298 = vmatpush.bf16.msra.mxu0 0
      %1299 = vmatpush.bf16.msra.mxu0 0
      %1300 = vmatpush.bf16.msra.mxu0 0
      %1301 = vmatpush.bf16.msra.mxu0 0
      %1302 = vmatpush.bf16.msra.mxu0 %v1295
      %1303 = vmatpush.bf16.msra.mxu0 %v1270
      %1304 = vmatpush.bf16.msra.mxu0 %v1269
      %1305 = vmatmul.bf16.gmra.mxu0 %v1286
      %v1306 = vpop.f32.mrf.mxu0
      %v1307 = vadd.f32 0.0, %v1306
      %v1308 = vpop.f32.mrf.mxu0
      %v1309 = vadd.f32 0.0, %v1308
      %1310 = vmatmul.bf16.gmra.mxu0 %v1289
      %v1311 = vpop.f32.mrf.mxu0
      %v1312 = vadd.f32 0.0, %v1311
      %v1313 = vpop.f32.mrf.mxu0
      %v1314 = vadd.f32 0.0, %v1313
      %1315 = vmatmul.bf16.gmra.mxu0 %v1292
      %v1316 = vpop.f32.mrf.mxu0
      %v1317 = vadd.f32 0.0, %v1316
      %v1318 = vpop.f32.mrf.mxu0
      %1319 = vdwg.mxu0
      %v1320 = vadd.f32 %v1217, %v1307
      %v1321 = vadd.f32 %v1219, %v1309
      %v1322 = vadd.f32 %v1222, %v1312
      %v1323 = vadd.f32 %v1224, %v1314
      %v1324 = vadd.f32 %v1227, %v1317
      %v1325 = vadd.f32 %v994, %v1320
      %v1326 = vadd.f32 %v995, %v1321
      %v1327 = vadd.f32 %v996, %v1322
      %v1328 = vadd.f32 %v997, %v1323
      %v1329 = vadd.f32 %v998, %v1324
      %v1330 = vpack.c.bf16 %v1326, %v1325
      %v1331 = vpack.c.bf16 %v1328, %v1327
      %v1332 = vpack.c.bf16 %v1329, %v1329
      %v1333 = vld [vmem:[%s8] sm:$0xf]
      %v1334 = vld [vmem:[%s8 + $0x4] sm:$0xf]
      %v1335 = vld [vmem:[%s8 + $0x8] sm:$0xf]
      %v1336 = vld [vmem:[%s8 + $0xc] sm:$0xf]
      %v1337 = vld [vmem:[%s8 + $0x10] sm:$0xf]
      %v1338 = vld [vmem:[%s8 + $0x14] sm:$0xf]
      %v1339 = vld [vmem:[%s8 + $0x18] sm:$0xf]
      %v1340 = vld [vmem:[%s8 + $0x1c] sm:$0xf]
      %v1341 = vld [vmem:[%s9] sm:$0x1]
      %v1343 = vperm.slane %v1341, 0
      %v1353 = vunpack.c.l.b16 %v1333
      %v1354 = vunpack.c.l.b16 %v1334
      %v1355 = vunpack.c.l.b16 %v1335
      %v1356 = vunpack.c.l.b16 %v1336
      %v1357 = vunpack.c.l.b16 %v1337
      %v1358 = vunpack.c.l.b16 %v1338
      %v1359 = vunpack.c.l.b16 %v1339
      %v1360 = vunpack.c.l.b16 %v1340
      %v1361 = vpack.c.b16 %v1354, %v1353
      %v1362 = vpack.c.b16 %v1356, %v1355
      %v1363 = vpack.c.b16 %v1358, %v1357
      %v1364 = vpack.c.b16 %v1360, %v1359
      %v1370 = vsel %vm486, %v1330, 0
      %v1373 = vsel %vm486, %v1331, 0
      %v1376 = vsel %vm486, %v1332, 0
      %1378 = vmatpush.bf16.msra.mxu0 0
      %1379 = vmatpush.bf16.msra.mxu0 0
      %1380 = vmatpush.bf16.msra.mxu0 0
      %1381 = vmatpush.bf16.msra.mxu0 0
      %1382 = vmatpush.bf16.msra.mxu0 %v1364
      %1383 = vmatpush.bf16.msra.mxu0 %v1363
      %1384 = vmatpush.bf16.msra.mxu0 %v1362
      %1385 = vmatpush.bf16.msra.mxu0 %v1361
      %1386 = vmatmul.bf16.gmra.mxu0 %v1370
      %v1387 = vpop.f32.mrf.mxu0
      %v1388 = vadd.f32 %v1343, %v1387
      %v1389 = vpop.f32.mrf.mxu0
      %v1390 = vadd.f32 %v1343, %v1389
      %1391 = vmatmul.bf16.gmra.mxu0 %v1373
      %v1392 = vpop.f32.mrf.mxu0
      %v1393 = vadd.f32 %v1343, %v1392
      %v1394 = vpop.f32.mrf.mxu0
      %v1395 = vadd.f32 %v1343, %v1394
      %1396 = vmatmul.bf16.gmra.mxu0 %v1376
      %v1397 = vpop.f32.mrf.mxu0
      %v1398 = vadd.f32 %v1343, %v1397
      %v1399 = vpop.f32.mrf.mxu0
      %1400 = vdwg.mxu0
      %v1401 = vmax.f32 %v1388, 0.0
      %v1402 = vmax.f32 %v1390, 0.0
      %v1403 = vmax.f32 %v1393, 0.0
      %v1404 = vmax.f32 %v1395, 0.0
      %v1405 = vmax.f32 %v1398, 0.0
      %v1406 = vmin.f32 %v1401, 6.0
      %v1407 = vmin.f32 %v1402, 6.0
      %v1408 = vmin.f32 %v1403, 6.0
      %v1409 = vmin.f32 %v1404, 6.0
      %v1410 = vmin.f32 %v1405, 6.0
      %v1411 = vpack.c.bf16 %v1407, %v1406
      %v1412 = vpack.c.bf16 %v1409, %v1408
      %v1413 = vpack.c.bf16 %v1410, %v1410
      %v1414 = vld [vmem:[%s10] sm:$0xf]
      %v1415 = vld [vmem:[%s10 + $0x4] sm:$0xf]
      %v1416 = vld [vmem:[%s10 + $0x8] sm:$0xf]
      %v1417 = vld [vmem:[%s10 + $0xc] sm:$0xf]
      %v1418 = vld [vmem:[%s10 + $0x10] sm:$0xf]
      %v1419 = vld [vmem:[%s10 + $0x14] sm:$0xf]
      %v1420 = vld [vmem:[%s10 + $0x18] sm:$0xf]
      %v1421 = vld [vmem:[%s10 + $0x1c] sm:$0xf]
      %v1422 = vld [vmem:[%s10 + $0x20] sm:$0xf]
      %v1423 = vld [vmem:[%s10 + $0x24] sm:$0xf]
      %v1424 = vld [vmem:[%s10 + $0x28] sm:$0xf]
      %v1425 = vld [vmem:[%s10 + $0x2c] sm:$0xf]
      %v1426 = vld [vmem:[%s10 + $0x30] sm:$0xf]
      %v1427 = vld [vmem:[%s10 + $0x34] sm:$0xf]
      %v1428 = vld [vmem:[%s10 + $0x38] sm:$0xf]
      %v1429 = vld [vmem:[%s10 + $0x3c] sm:$0xf]
      %v1430 = vld [vmem:[%s11] sm:$0x1]
      %v1432 = vperm.slane %v1430, 0
      %v1450 = vunpack.c.l.b16 %v1414
      %v1451 = vunpack.c.l.b16 %v1415
      %v1452 = vunpack.c.l.b16 %v1416
      %v1453 = vunpack.c.l.b16 %v1417
      %v1454 = vunpack.c.l.b16 %v1418
      %v1455 = vunpack.c.l.b16 %v1419
      %v1456 = vunpack.c.l.b16 %v1420
      %v1457 = vunpack.c.l.b16 %v1421
      %v1458 = vunpack.c.l.b16 %v1422
      %v1459 = vunpack.c.l.b16 %v1423
      %v1460 = vunpack.c.l.b16 %v1424
      %v1461 = vunpack.c.l.b16 %v1425
      %v1462 = vunpack.c.l.b16 %v1426
      %v1463 = vunpack.c.l.b16 %v1427
      %v1464 = vunpack.c.l.b16 %v1428
      %v1465 = vunpack.c.l.b16 %v1429
      %v1466 = vpack.c.b16 %v1451, %v1450
      %v1467 = vpack.c.b16 %v1453, %v1452
      %v1468 = vpack.c.b16 %v1455, %v1454
      %v1469 = vpack.c.b16 %v1457, %v1456
      %v1470 = vpack.c.b16 %v1459, %v1458
      %v1471 = vpack.c.b16 %v1461, %v1460
      %v1472 = vpack.c.b16 %v1463, %v1462
      %v1473 = vpack.c.b16 %v1465, %v1464
      %1482 = vmatpush.bf16.msra.mxu0 %v1473
      %1483 = vmatpush.bf16.msra.mxu0 %v1472
      %1484 = vmatpush.bf16.msra.mxu0 %v1471
      %1485 = vmatpush.bf16.msra.mxu0 %v1470
      %1486 = vmatpush.bf16.msra.mxu0 %v1469
      %1487 = vmatpush.bf16.msra.mxu0 %v1468
      %1488 = vmatpush.bf16.msra.mxu0 %v1467
      %1489 = vmatpush.bf16.msra.mxu0 %v1466
      %1490 = vmatmul.bf16.gmra.mxu0 %v1411
      %v1491 = vpop.f32.mrf.mxu0
      %v1492 = vadd.f32 %v1432, %v1491
      %v1493 = vpop.f32.mrf.mxu0
      %v1494 = vadd.f32 %v1432, %v1493
      %1495 = vmatmul.bf16.gmra.mxu0 %v1412
      %v1496 = vpop.f32.mrf.mxu0
      %v1497 = vadd.f32 %v1432, %v1496
      %v1498 = vpop.f32.mrf.mxu0
      %v1499 = vadd.f32 %v1432, %v1498
      %1500 = vmatmul.bf16.gmra.mxu0 %v1413
      %v1501 = vpop.f32.mrf.mxu0
      %v1502 = vadd.f32 %v1432, %v1501
      %v1503 = vpop.f32.mrf.mxu0
      %1504 = vdwg.mxu0
      %v1505 = vadd.f32 %v1325, %v1492
      %v1506 = vadd.f32 %v1326, %v1494
      %v1507 = vadd.f32 %v1327, %v1497
      %v1508 = vadd.f32 %v1328, %v1499
      %v1509 = vadd.f32 %v1329, %v1502
      %v1510 = vpack.c.bf16 %v1505, %v1505
      %v1511 = vpack.c.bf16 %v1506, %v1506
      %v1512 = vpack.c.bf16 %v1507, %v1507
      %v1513 = vpack.c.bf16 %v1508, %v1508
      %v1514 = vpack.c.bf16 %v1509, %v1509
      %vm1515 = vcmask 519168
      %1516 = vst.msk [vmem:[%s413] sm:$0xf] %vm1515, %v1510
      %1517 = vst.msk [vmem:[%s413 + $0x4] sm:$0xf] %vm1515, %v1511
      %1518 = vst.msk [vmem:[%s413 + $0x8] sm:$0xf] %vm1515, %v1512
      %1519 = vst.msk [vmem:[%s413 + $0xc] sm:$0xf] %vm1515, %v1513
      %vm1520 = vcmask 517120
      %1521 = vst.msk [vmem:[%s413 + $0x10] sm:$0x3] %vm1520, %v1514
      %p1522 = scmp.lt.s32.totalorder %s23, 1
      %s1523 = scalar_select %p1522, %s23, 1
      %s1524 = smul.addr %s1523, 5
      %s1525 = smul.addr %s1524, 4
      %s1526 = scalar_lea.vmem %s12, %s1525
      // Predicated region
      $region69: #{_lambda_.18} parent=67 // pred_check
        %p1527 = pneg %p298
      $region70: #{_lambda_.18} parent=67 // pred_check_branch
        %1529 = sbr.rel (%p1527) target = $region72
      $region71: #{_lambda_.18} parent=67 // pred_region
        _
      $region72: #{_lambda_.18} parent=67 // pred_fallthru
        _
    $region68: #{_lambda_.18} parent=5 // pred_fallthru
      _
    %p1530 = scmp.le.s32.totalorder 2, %s18
    // Predicated region
    $region73: #{_lambda_.18} parent=5 // pred_check
      %p1531 = pneg %p1530
    $region74: #{_lambda_.18} parent=5 // pred_check_branch
      %1533 = sbr.rel (%p1531) target = $region76
    $region75: #{_lambda_.18} parent=5 // pred_region
      %s1534 = ssub.s32 %s18, 2
      // Predicated region
      $region77: #{_lambda_.18} parent=75 // pred_check
        %p1535 = pneg %p304
      $region78: #{_lambda_.18} parent=75 // pred_check_branch
        %1537 = sbr.rel (%p1535) target = $region80
      $region79: #{_lambda_.18} parent=75 // pred_region
        %p1538 = scmp.lt.s32.totalorder %s24, 1
        %s1539 = scalar_select %p1538, %s24, 1
        %s1540 = smul.addr %s1539, 5
        %s1541 = smul.addr %s1540, 4
        %s1542 = scalar_lea.vmem %s12, %s1541
      $region80: #{_lambda_.18} parent=75 // pred_fallthru
        _
    $region76: #{_lambda_.18} parent=5 // pred_fallthru
      _
  $region6: #{_lambda_.18} parent=0 // loop_footer
    %s22 = sadd.s32 1, %s18
  $region7: #{_lambda_.18} parent=0 // loop_footer_branch
    %17 = sbr.rel target = $region3
  $region8: #{_lambda_.18} parent=0 // loop_exit
    _

</llo_original>
